<compile_context>
chip_gen: v6e
topology: v6e:2x2x1
jax: 0.10.0
libtpu: 0.0.40
codegen_flags: <defaults>
</compile_context>

<pallas_src>
import functools

import jax
import jax.numpy as jnp
from jax import lax
from jax.experimental import pallas as pl
from jax.experimental.pallas import tpu as pltpu

_GROUP = 256              # points per tile row (lanes) = matmul N width
_SUB = 8                  # rows processed per inner step (one sublane group)
_DEFAULT_BLOCK_ROWS = 256  # tile rows per grid step (256 x 256 = 64K points / step)


def _round_up(x, m):
    return ((x + m - 1) // m) * m


def _kicc_kernel(ldr_ref, w1b_ref, b1b_ref, whp_ref, bhp_ref, out_ref, sp_ref):
    """One (block_rows, 256) lane-dense tile of points.

    ldr_ref : VMEM (br, G)  f32   LDR values, lane-dense
    w1b_ref : VMEM (Hp, G)  f32   w1[h] broadcast along lanes
    b1b_ref : VMEM (Hp, G)  f32   b1[h] broadcast along lanes
    whp_ref : VMEM (8, Hp)  f32   rows 0..2 = [wx, wr, wy], rows 3..7 = 0
    bhp_ref : VMEM (8, G)   f32   rows 0..2 = [bx, br, by] (lane-broadcast), rest 0
    out_ref : VMEM (br, G)  f32   softplus(hdr)
    sp_ref  : VMEM (8, G)   f32   scratch staging one sublane-group of results
    """
    n_rows, group = ldr_ref.shape
    hidden = w1b_ref.shape[0]

    @pl.loop(0, n_rows // _SUB)
    def _(c):
        row0 = pl.multiple_of(c * _SUB, _SUB)
        ldr_chunk = ldr_ref[pl.ds(row0, _SUB), :]          # (8, G) aligned load

        whp = whp_ref[...]                                 # (8, Hp)
        bhp = bhp_ref[...]                                 # (8, G)

        for r in range(_SUB):                              # static unroll
            ldr_row = ldr_chunk[r:r + 1, :]                # (1, G)
            # Sublane broadcast (cheap direction): hidden units on sublanes,
            # points on lanes.
            ldr_b = jnp.broadcast_to(ldr_row, (hidden, group))
            comm = jnp.maximum(ldr_b * w1b_ref[...] + b1b_ref[...], 0.0)  # (Hp, G)

            # All three heads in one K=hidden MXU matmul; result rows 0..2 are
            # lane-dense x/r/y aligned with ldr_row.
            heads = jnp.dot(whp, comm,
                            preferred_element_type=jnp.float32,
                            precision=lax.Precision.HIGHEST) + bhp        # (8, G)

            x_out = jnp.maximum(heads[0:1, :], 0.0)
            r_out = jnp.maximum(heads[1:2, :], 0.0)
            y_out = heads[2:3, :]
            hdr = ldr_row + x_out * r_out + y_out                          # (1, G)

            # Numerically stable softplus (matches torch.nn.Softplus, beta=1).
            sp = jnp.maximum(hdr, 0.0) + jnp.log1p(jnp.exp(-jnp.abs(hdr)))
            sp_ref[r:r + 1, :] = sp                        # static sublane store

        out_ref[pl.ds(row0, _SUB), :] = sp_ref[...].astype(out_ref.dtype)


@functools.partial(jax.jit, static_argnames=("block_rows",))
def kicc_forward(ldr, w1, b1, w_heads, b_heads, *, block_rows=_DEFAULT_BLOCK_ROWS):
    """ldr: (..., 1) array (any leading shape). Returns softplus(hdr), same shape/dtype."""
    orig_shape = ldr.shape
    orig_dtype = ldr.dtype

    flat = ldr.reshape(-1).astype(jnp.float32)
    n = flat.shape[0]
    hidden = w1.shape[0]
    hp = _round_up(hidden, 8)

    # ---- weight prep (tiny, built once per call outside the kernel) -------------
    w1f = jnp.zeros((hp,), jnp.float32).at[:hidden].set(w1.astype(jnp.float32))
    b1f = jnp.zeros((hp,), jnp.float32).at[:hidden].set(b1.astype(jnp.float32))
    w1b = jnp.broadcast_to(w1f[:, None], (hp, _GROUP))            # (Hp, G) VMEM
    b1b = jnp.broadcast_to(b1f[:, None], (hp, _GROUP))            # (Hp, G) VMEM
    whp = jnp.zeros((8, hp), jnp.float32).at[:3, :hidden].set(
        w_heads.astype(jnp.float32))                              # (8, Hp) VMEM
    bhp = jnp.zeros((8, _GROUP), jnp.float32).at[:3, :].set(
        jnp.broadcast_to(b_heads.astype(jnp.float32)[:, None], (3, _GROUP)))

    # ---- point tiling ------------------------------------------------------------
    rows = pl.cdiv(n, _GROUP)
    steps = max(1, pl.cdiv(rows, block_rows))
    if rows >= 2 * _SUB:
        steps = max(steps, 2)       # >= 2 grid steps so both v7x TensorCores get work
    br = _round_up(pl.cdiv(rows, steps), _SUB)
    rows_padded = _round_up(rows, br)
    n_padded = rows_padded * _GROUP
    if n_padded != n:               # only pad when the point count does not tile
        flat = jnp.pad(flat, (0, n_padded - n))
    x2d = flat.reshape(rows_padded, _GROUP)                       # lane-dense layout

    out = pl.pallas_call(
        _kicc_kernel,
        out_shape=jax.ShapeDtypeStruct((rows_padded, _GROUP), jnp.float32),
        grid_spec=pltpu.PrefetchScalarGridSpec(
            num_scalar_prefetch=0,
            grid=(rows_padded // br,),
            in_specs=[
                pl.BlockSpec((br, _GROUP), lambda i: (i, 0)),     # ldr tile
                pl.BlockSpec((hp, _GROUP), lambda i: (0, 0)),     # w1 (pre-broadcast)
                pl.BlockSpec((hp, _GROUP), lambda i: (0, 0)),     # b1 (pre-broadcast)
                pl.BlockSpec((8, hp), lambda i: (0, 0)),          # head weights (pad 8)
                pl.BlockSpec((8, _GROUP), lambda i: (0, 0)),      # head biases (pad 8)
            ],
            out_specs=pl.BlockSpec((br, _GROUP), lambda i: (i, 0)),
            scratch_shapes=[pltpu.VMEM((_SUB, _GROUP), jnp.float32)],
        ),
        compiler_params=pltpu.CompilerParams(
            dimension_semantics=("parallel",)),
    )(x2d, w1b, b1b, whp, bhp)

    out_flat = out.reshape(-1)
    if n_padded != n:
        out_flat = out_flat[:n]
    return out_flat.reshape(orig_shape).astype(orig_dtype)


def init_params(key, hidden_dim=128):
    """Deterministic synthetic parameters with nn.Linear-like semantics."""
    ks = jax.random.split(key, 8)
    w1 = jax.random.normal(ks[0], (hidden_dim,), jnp.float32) * 0.5   # Linear(1,H).weight[:,0]
    b1 = jax.random.normal(ks[1], (hidden_dim,), jnp.float32) * 0.1
    wx = jax.random.normal(ks[2], (hidden_dim,), jnp.float32) * 0.1   # Linear(H,1).weight[0,:]
    bx = jax.random.normal(ks[3], (), jnp.float32) * 0.1
    wr = jax.random.normal(ks[4], (hidden_dim,), jnp.float32) * 0.1
    br_ = jax.random.normal(ks[5], (), jnp.float32) * 0.1
    wy = jax.random.normal(ks[6], (hidden_dim,), jnp.float32) * 0.1
    by = jax.random.normal(ks[7], (), jnp.float32) * 0.1
    w_heads = jnp.stack([wx, wr, wy], axis=0)      # (3, H)
    b_heads = jnp.stack([bx, br_, by], axis=0)     # (3,)
    return w1, b1, w_heads, b_heads


def reference_forward(ldr, w1, b1, w_heads, b_heads):
    """Pure-JAX reference mirroring the PyTorch module (f32 math)."""
    ldr2d = ldr.reshape(-1, 1).astype(jnp.float32)
    comm = jax.nn.relu(ldr2d * w1[None, :] + b1[None, :])
    outs = jnp.dot(comm, w_heads.T, precision=lax.Precision.HIGHEST) + b_heads[None, :]
    x_out = jax.nn.relu(outs[:, 0:1])
    r_out = jax.nn.relu(outs[:, 1:2])
    y_out = outs[:, 2:3]
    hdr = ldr2d + x_out * r_out + y_out
    return jax.nn.softplus(hdr).reshape(ldr.shape).astype(ldr.dtype)


if __name__ == "__main__":
    key = jax.random.PRNGKey(0)
    k_param, k_a, k_b = jax.random.split(key, 3)

    hidden_dim = 128
    w1, b1, w_heads, b_heads = init_params(k_param, hidden_dim)

    # LDR radiance values in [0, 1): NeRF-style (rays, samples, 1) plus a ragged
    # flat batch that is not a multiple of the tile size (exercises pad + slice).
    ldr_a = jax.random.uniform(k_a, (4, 64, 1), jnp.float32)
    ldr_b = jax.random.uniform(k_b, (777, 1), jnp.float32)

    for ldr in (ldr_a, ldr_b):
        out = jax.block_until_ready(kicc_forward(ldr, w1, b1, w_heads, b_heads))
        ref = reference_forward(ldr, w1, b1, w_heads, b_heads)
        assert out.shape == ldr.shape and out.dtype == ldr.dtype
        assert jnp.allclose(out, ref, atol=1e-4, rtol=1e-4), "mismatch vs JAX reference"

    print("KERNEL_OK")
</pallas_src>

<mosaic_0001>
module attributes {stable_mosaic.version = 11 : i64} {
  func.func @_kicc_kernel(%arg0: i32, %arg1: memref<8x256xf32, #tpu.memory_space<vmem>>, %arg2: memref<128x256xf32, #tpu.memory_space<vmem>>, %arg3: memref<128x256xf32, #tpu.memory_space<vmem>>, %arg4: memref<8x128xf32, #tpu.memory_space<vmem>>, %arg5: memref<8x256xf32, #tpu.memory_space<vmem>>, %arg6: memref<8x256xf32, #tpu.memory_space<vmem>>, %arg7: memref<8x256xf32, #tpu.memory_space<vmem>>) attributes {dimension_semantics = [#tpu.dimension_semantics<parallel>], iteration_bounds = array<i64: 1>, scalar_prefetch = 0 : i64, scratch_operands = 1 : i64, tpu.core_type = #tpu.core_type<tc>, window_params = [{transform_indices = @transform_0, window_bounds = array<i64: 8, 256>}, {pipeline_mode = #tpu.pipeline_mode<synchronous>, transform_indices = @transform_1, window_bounds = array<i64: 128, 256>}, {pipeline_mode = #tpu.pipeline_mode<synchronous>, transform_indices = @transform_2, window_bounds = array<i64: 128, 256>}, {pipeline_mode = #tpu.pipeline_mode<synchronous>, transform_indices = @transform_3, window_bounds = array<i64: 8, 128>}, {pipeline_mode = #tpu.pipeline_mode<synchronous>, transform_indices = @transform_4, window_bounds = array<i64: 8, 256>}, {transform_indices = @transform_5, window_bounds = array<i64: 8, 256>}]} {
    %c0_i32 = arith.constant 0 : i32
    %c1_i32 = arith.constant 1 : i32
    %0 = arith.muli %c0_i32, %c1_i32 : i32
    %c0_i32_0 = arith.constant 0 : i32
    %1 = arith.addi %c0_i32_0, %0 : i32
    %c8_i32 = arith.constant 8 : i32
    %2 = arith.muli %1, %c8_i32 : i32
    %3 = tpu.assume_multiple %2, 8 : i32
    %4 = arith.index_cast %3 : i32 to index
    %c0 = arith.constant 0 : index
    %5 = vector.load %arg1[%4, %c0] : memref<8x256xf32, #tpu.memory_space<vmem>>, vector<8x256xf32>
    %c0_1 = arith.constant 0 : index
    %c0_2 = arith.constant 0 : index
    %6 = vector.load %arg4[%c0_1, %c0_2] : memref<8x128xf32, #tpu.memory_space<vmem>>, vector<8x128xf32>
    %c0_3 = arith.constant 0 : index
    %c0_4 = arith.constant 0 : index
    %7 = vector.load %arg5[%c0_3, %c0_4] : memref<8x256xf32, #tpu.memory_space<vmem>>, vector<8x256xf32>
    %8 = vector.extract_strided_slice %5 {offsets = [0, 0], sizes = [1, 256], strides = [1, 1]} : vector<8x256xf32> to vector<1x256xf32>
    %9 = vector.shape_cast %8 : vector<1x256xf32> to vector<1x256xf32>
    %10 = vector.broadcast %9 : vector<1x256xf32> to vector<128x256xf32>
    %c0_5 = arith.constant 0 : index
    %c0_6 = arith.constant 0 : index
    %11 = vector.load %arg2[%c0_5, %c0_6] : memref<128x256xf32, #tpu.memory_space<vmem>>, vector<128x256xf32>
    %12 = arith.mulf %10, %11 : vector<128x256xf32>
    %c0_7 = arith.constant 0 : index
    %c0_8 = arith.constant 0 : index
    %13 = vector.load %arg3[%c0_7, %c0_8] : memref<128x256xf32, #tpu.memory_space<vmem>>, vector<128x256xf32>
    %14 = arith.addf %12, %13 : vector<128x256xf32>
    %cst = arith.constant 0.000000e+00 : f32
    %15 = vector.broadcast %cst : f32 to vector<128x256xf32>
    %16 = arith.maximumf %14, %15 : vector<128x256xf32>
    %cst_9 = arith.constant dense<0.000000e+00> : vector<8x256xf32>
    %17 = tpu.matmul %6, %16, %cst_9 {dimension_numbers = #tpu.dot_dimension_numbers<[1], [0], [0], [1], [0, 0, 1, 1], [], []>, precision = #tpu.contract_precision<fp32>} : vector<8x128xf32>, vector<128x256xf32>, vector<8x256xf32> -> vector<8x256xf32>
    %18 = arith.addf %17, %7 : vector<8x256xf32>
    %19 = vector.extract_strided_slice %18 {offsets = [0, 0], sizes = [1, 256], strides = [1, 1]} : vector<8x256xf32> to vector<1x256xf32>
    %cst_10 = arith.constant 0.000000e+00 : f32
    %20 = vector.broadcast %cst_10 : f32 to vector<1x256xf32>
    %21 = arith.maximumf %19, %20 : vector<1x256xf32>
    %22 = vector.extract_strided_slice %18 {offsets = [1, 0], sizes = [1, 256], strides = [1, 1]} : vector<8x256xf32> to vector<1x256xf32>
    %cst_11 = arith.constant 0.000000e+00 : f32
    %23 = vector.broadcast %cst_11 : f32 to vector<1x256xf32>
    %24 = arith.maximumf %22, %23 : vector<1x256xf32>
    %25 = vector.extract_strided_slice %18 {offsets = [2, 0], sizes = [1, 256], strides = [1, 1]} : vector<8x256xf32> to vector<1x256xf32>
    %26 = arith.mulf %21, %24 : vector<1x256xf32>
    %27 = arith.addf %8, %26 : vector<1x256xf32>
    %28 = arith.addf %27, %25 : vector<1x256xf32>
    %cst_12 = arith.constant 0.000000e+00 : f32
    %29 = vector.broadcast %cst_12 : f32 to vector<1x256xf32>
    %30 = arith.maximumf %28, %29 : vector<1x256xf32>
    %31 = math.absf %28 : vector<1x256xf32>
    %cst_13 = arith.constant 0.000000e+00 : f32
    %32 = vector.broadcast %cst_13 : f32 to vector<1x256xf32>
    %33 = arith.subf %32, %31 : vector<1x256xf32>
    %34 = math.exp %33 : vector<1x256xf32>
    %35 = math.log1p %34 : vector<1x256xf32>
    %36 = arith.addf %30, %35 : vector<1x256xf32>
    %c0_14 = arith.constant 0 : index
    %c0_15 = arith.constant 0 : index
    %37 = vector.load %arg7[%c0_14, %c0_15] : memref<8x256xf32, #tpu.memory_space<vmem>>, vector<1x256xf32>
    tpu.vector_store %arg7[%c0_14, %c0_15], %36 {strides = array<i32>} : memref<8x256xf32, #tpu.memory_space<vmem>>, vector<1x256xf32>,
    %38 = vector.extract_strided_slice %5 {offsets = [1, 0], sizes = [1, 256], strides = [1, 1]} : vector<8x256xf32> to vector<1x256xf32>
    %39 = vector.shape_cast %38 : vector<1x256xf32> to vector<1x256xf32>
    %40 = vector.broadcast %39 : vector<1x256xf32> to vector<128x256xf32>
    %c0_16 = arith.constant 0 : index
    %c0_17 = arith.constant 0 : index
    %41 = vector.load %arg2[%c0_16, %c0_17] : memref<128x256xf32, #tpu.memory_space<vmem>>, vector<128x256xf32>
    %42 = arith.mulf %40, %41 : vector<128x256xf32>
    %c0_18 = arith.constant 0 : index
    %c0_19 = arith.constant 0 : index
    %43 = vector.load %arg3[%c0_18, %c0_19] : memref<128x256xf32, #tpu.memory_space<vmem>>, vector<128x256xf32>
    %44 = arith.addf %42, %43 : vector<128x256xf32>
    %cst_20 = arith.constant 0.000000e+00 : f32
    %45 = vector.broadcast %cst_20 : f32 to vector<128x256xf32>
    %46 = arith.maximumf %44, %45 : vector<128x256xf32>
    %cst_21 = arith.constant dense<0.000000e+00> : vector<8x256xf32>
    %47 = tpu.matmul %6, %46, %cst_21 {dimension_numbers = #tpu.dot_dimension_numbers<[1], [0], [0], [1], [0, 0, 1, 1], [], []>, precision = #tpu.contract_precision<fp32>} : vector<8x128xf32>, vector<128x256xf32>, vector<8x256xf32> -> vector<8x256xf32>
    %48 = arith.addf %47, %7 : vector<8x256xf32>
    %49 = vector.extract_strided_slice %48 {offsets = [0, 0], sizes = [1, 256], strides = [1, 1]} : vector<8x256xf32> to vector<1x256xf32>
    %cst_22 = arith.constant 0.000000e+00 : f32
    %50 = vector.broadcast %cst_22 : f32 to vector<1x256xf32>
    %51 = arith.maximumf %49, %50 : vector<1x256xf32>
    %52 = vector.extract_strided_slice %48 {offsets = [1, 0], sizes = [1, 256], strides = [1, 1]} : vector<8x256xf32> to vector<1x256xf32>
    %cst_23 = arith.constant 0.000000e+00 : f32
    %53 = vector.broadcast %cst_23 : f32 to vector<1x256xf32>
    %54 = arith.maximumf %52, %53 : vector<1x256xf32>
    %55 = vector.extract_strided_slice %48 {offsets = [2, 0], sizes = [1, 256], strides = [1, 1]} : vector<8x256xf32> to vector<1x256xf32>
    %56 = arith.mulf %51, %54 : vector<1x256xf32>
    %57 = arith.addf %38, %56 : vector<1x256xf32>
    %58 = arith.addf %57, %55 : vector<1x256xf32>
    %cst_24 = arith.constant 0.000000e+00 : f32
    %59 = vector.broadcast %cst_24 : f32 to vector<1x256xf32>
    %60 = arith.maximumf %58, %59 : vector<1x256xf32>
    %61 = math.absf %58 : vector<1x256xf32>
    %cst_25 = arith.constant 0.000000e+00 : f32
    %62 = vector.broadcast %cst_25 : f32 to vector<1x256xf32>
    %63 = arith.subf %62, %61 : vector<1x256xf32>
    %64 = math.exp %63 : vector<1x256xf32>
    %65 = math.log1p %64 : vector<1x256xf32>
    %66 = arith.addf %60, %65 : vector<1x256xf32>
    %c1 = arith.constant 1 : index
    %c0_26 = arith.constant 0 : index
    %67 = vector.load %arg7[%c1, %c0_26] : memref<8x256xf32, #tpu.memory_space<vmem>>, vector<1x256xf32>
    tpu.vector_store %arg7[%c1, %c0_26], %66 {strides = array<i32>} : memref<8x256xf32, #tpu.memory_space<vmem>>, vector<1x256xf32>,
    %68 = vector.extract_strided_slice %5 {offsets = [2, 0], sizes = [1, 256], strides = [1, 1]} : vector<8x256xf32> to vector<1x256xf32>
    %69 = vector.shape_cast %68 : vector<1x256xf32> to vector<1x256xf32>
    %70 = vector.broadcast %69 : vector<1x256xf32> to vector<128x256xf32>
    %c0_27 = arith.constant 0 : index
    %c0_28 = arith.constant 0 : index
    %71 = vector.load %arg2[%c0_27, %c0_28] : memref<128x256xf32, #tpu.memory_space<vmem>>, vector<128x256xf32>
    %72 = arith.mulf %70, %71 : vector<128x256xf32>
    %c0_29 = arith.constant 0 : index
    %c0_30 = arith.constant 0 : index
    %73 = vector.load %arg3[%c0_29, %c0_30] : memref<128x256xf32, #tpu.memory_space<vmem>>, vector<128x256xf32>
    %74 = arith.addf %72, %73 : vector<128x256xf32>
    %cst_31 = arith.constant 0.000000e+00 : f32
    %75 = vector.broadcast %cst_31 : f32 to vector<128x256xf32>
    %76 = arith.maximumf %74, %75 : vector<128x256xf32>
    %cst_32 = arith.constant dense<0.000000e+00> : vector<8x256xf32>
    %77 = tpu.matmul %6, %76, %cst_32 {dimension_numbers = #tpu.dot_dimension_numbers<[1], [0], [0], [1], [0, 0, 1, 1], [], []>, precision = #tpu.contract_precision<fp32>} : vector<8x128xf32>, vector<128x256xf32>, vector<8x256xf32> -> vector<8x256xf32>
    %78 = arith.addf %77, %7 : vector<8x256xf32>
    %79 = vector.extract_strided_slice %78 {offsets = [0, 0], sizes = [1, 256], strides = [1, 1]} : vector<8x256xf32> to vector<1x256xf32>
    %cst_33 = arith.constant 0.000000e+00 : f32
    %80 = vector.broadcast %cst_33 : f32 to vector<1x256xf32>
    %81 = arith.maximumf %79, %80 : vector<1x256xf32>
    %82 = vector.extract_strided_slice %78 {offsets = [1, 0], sizes = [1, 256], strides = [1, 1]} : vector<8x256xf32> to vector<1x256xf32>
    %cst_34 = arith.constant 0.000000e+00 : f32
    %83 = vector.broadcast %cst_34 : f32 to vector<1x256xf32>
    %84 = arith.maximumf %82, %83 : vector<1x256xf32>
    %85 = vector.extract_strided_slice %78 {offsets = [2, 0], sizes = [1, 256], strides = [1, 1]} : vector<8x256xf32> to vector<1x256xf32>
    %86 = arith.mulf %81, %84 : vector<1x256xf32>
    %87 = arith.addf %68, %86 : vector<1x256xf32>
    %88 = arith.addf %87, %85 : vector<1x256xf32>
    %cst_35 = arith.constant 0.000000e+00 : f32
    %89 = vector.broadcast %cst_35 : f32 to vector<1x256xf32>
    %90 = arith.maximumf %88, %89 : vector<1x256xf32>
    %91 = math.absf %88 : vector<1x256xf32>
    %cst_36 = arith.constant 0.000000e+00 : f32
    %92 = vector.broadcast %cst_36 : f32 to vector<1x256xf32>
    %93 = arith.subf %92, %91 : vector<1x256xf32>
    %94 = math.exp %93 : vector<1x256xf32>
    %95 = math.log1p %94 : vector<1x256xf32>
    %96 = arith.addf %90, %95 : vector<1x256xf32>
    %c2 = arith.constant 2 : index
    %c0_37 = arith.constant 0 : index
    %97 = vector.load %arg7[%c2, %c0_37] : memref<8x256xf32, #tpu.memory_space<vmem>>, vector<1x256xf32>
    tpu.vector_store %arg7[%c2, %c0_37], %96 {strides = array<i32>} : memref<8x256xf32, #tpu.memory_space<vmem>>, vector<1x256xf32>,
    %98 = vector.extract_strided_slice %5 {offsets = [3, 0], sizes = [1, 256], strides = [1, 1]} : vector<8x256xf32> to vector<1x256xf32>
    %99 = vector.shape_cast %98 : vector<1x256xf32> to vector<1x256xf32>
    %100 = vector.broadcast %99 : vector<1x256xf32> to vector<128x256xf32>
    %c0_38 = arith.constant 0 : index
    %c0_39 = arith.constant 0 : index
    %101 = vector.load %arg2[%c0_38, %c0_39] : memref<128x256xf32, #tpu.memory_space<vmem>>, vector<128x256xf32>
    %102 = arith.mulf %100, %101 : vector<128x256xf32>
    %c0_40 = arith.constant 0 : index
    %c0_41 = arith.constant 0 : index
    %103 = vector.load %arg3[%c0_40, %c0_41] : memref<128x256xf32, #tpu.memory_space<vmem>>, vector<128x256xf32>
    %104 = arith.addf %102, %103 : vector<128x256xf32>
    %cst_42 = arith.constant 0.000000e+00 : f32
    %105 = vector.broadcast %cst_42 : f32 to vector<128x256xf32>
    %106 = arith.maximumf %104, %105 : vector<128x256xf32>
    %cst_43 = arith.constant dense<0.000000e+00> : vector<8x256xf32>
    %107 = tpu.matmul %6, %106, %cst_43 {dimension_numbers = #tpu.dot_dimension_numbers<[1], [0], [0], [1], [0, 0, 1, 1], [], []>, precision = #tpu.contract_precision<fp32>} : vector<8x128xf32>, vector<128x256xf32>, vector<8x256xf32> -> vector<8x256xf32>
    %108 = arith.addf %107, %7 : vector<8x256xf32>
    %109 = vector.extract_strided_slice %108 {offsets = [0, 0], sizes = [1, 256], strides = [1, 1]} : vector<8x256xf32> to vector<1x256xf32>
    %cst_44 = arith.constant 0.000000e+00 : f32
    %110 = vector.broadcast %cst_44 : f32 to vector<1x256xf32>
    %111 = arith.maximumf %109, %110 : vector<1x256xf32>
    %112 = vector.extract_strided_slice %108 {offsets = [1, 0], sizes = [1, 256], strides = [1, 1]} : vector<8x256xf32> to vector<1x256xf32>
    %cst_45 = arith.constant 0.000000e+00 : f32
    %113 = vector.broadcast %cst_45 : f32 to vector<1x256xf32>
    %114 = arith.maximumf %112, %113 : vector<1x256xf32>
    %115 = vector.extract_strided_slice %108 {offsets = [2, 0], sizes = [1, 256], strides = [1, 1]} : vector<8x256xf32> to vector<1x256xf32>
    %116 = arith.mulf %111, %114 : vector<1x256xf32>
    %117 = arith.addf %98, %116 : vector<1x256xf32>
    %118 = arith.addf %117, %115 : vector<1x256xf32>
    %cst_46 = arith.constant 0.000000e+00 : f32
    %119 = vector.broadcast %cst_46 : f32 to vector<1x256xf32>
    %120 = arith.maximumf %118, %119 : vector<1x256xf32>
    %121 = math.absf %118 : vector<1x256xf32>
    %cst_47 = arith.constant 0.000000e+00 : f32
    %122 = vector.broadcast %cst_47 : f32 to vector<1x256xf32>
    %123 = arith.subf %122, %121 : vector<1x256xf32>
    %124 = math.exp %123 : vector<1x256xf32>
    %125 = math.log1p %124 : vector<1x256xf32>
    %126 = arith.addf %120, %125 : vector<1x256xf32>
    %c3 = arith.constant 3 : index
    %c0_48 = arith.constant 0 : index
    %127 = vector.load %arg7[%c3, %c0_48] : memref<8x256xf32, #tpu.memory_space<vmem>>, vector<1x256xf32>
    tpu.vector_store %arg7[%c3, %c0_48], %126 {strides = array<i32>} : memref<8x256xf32, #tpu.memory_space<vmem>>, vector<1x256xf32>,
    %128 = vector.extract_strided_slice %5 {offsets = [4, 0], sizes = [1, 256], strides = [1, 1]} : vector<8x256xf32> to vector<1x256xf32>
    %129 = vector.shape_cast %128 : vector<1x256xf32> to vector<1x256xf32>
    %130 = vector.broadcast %129 : vector<1x256xf32> to vector<128x256xf32>
    %c0_49 = arith.constant 0 : index
    %c0_50 = arith.constant 0 : index
    %131 = vector.load %arg2[%c0_49, %c0_50] : memref<128x256xf32, #tpu.memory_space<vmem>>, vector<128x256xf32>
    %132 = arith.mulf %130, %131 : vector<128x256xf32>
    %c0_51 = arith.constant 0 : index
    %c0_52 = arith.constant 0 : index
    %133 = vector.load %arg3[%c0_51, %c0_52] : memref<128x256xf32, #tpu.memory_space<vmem>>, vector<128x256xf32>
    %134 = arith.addf %132, %133 : vector<128x256xf32>
    %cst_53 = arith.constant 0.000000e+00 : f32
    %135 = vector.broadcast %cst_53 : f32 to vector<128x256xf32>
    %136 = arith.maximumf %134, %135 : vector<128x256xf32>
    %cst_54 = arith.constant dense<0.000000e+00> : vector<8x256xf32>
    %137 = tpu.matmul %6, %136, %cst_54 {dimension_numbers = #tpu.dot_dimension_numbers<[1], [0], [0], [1], [0, 0, 1, 1], [], []>, precision = #tpu.contract_precision<fp32>} : vector<8x128xf32>, vector<128x256xf32>, vector<8x256xf32> -> vector<8x256xf32>
    %138 = arith.addf %137, %7 : vector<8x256xf32>
    %139 = vector.extract_strided_slice %138 {offsets = [0, 0], sizes = [1, 256], strides = [1, 1]} : vector<8x256xf32> to vector<1x256xf32>
    %cst_55 = arith.constant 0.000000e+00 : f32
    %140 = vector.broadcast %cst_55 : f32 to vector<1x256xf32>
    %141 = arith.maximumf %139, %140 : vector<1x256xf32>
    %142 = vector.extract_strided_slice %138 {offsets = [1, 0], sizes = [1, 256], strides = [1, 1]} : vector<8x256xf32> to vector<1x256xf32>
    %cst_56 = arith.constant 0.000000e+00 : f32
    %143 = vector.broadcast %cst_56 : f32 to vector<1x256xf32>
    %144 = arith.maximumf %142, %143 : vector<1x256xf32>
    %145 = vector.extract_strided_slice %138 {offsets = [2, 0], sizes = [1, 256], strides = [1, 1]} : vector<8x256xf32> to vector<1x256xf32>
    %146 = arith.mulf %141, %144 : vector<1x256xf32>
    %147 = arith.addf %128, %146 : vector<1x256xf32>
    %148 = arith.addf %147, %145 : vector<1x256xf32>
    %cst_57 = arith.constant 0.000000e+00 : f32
    %149 = vector.broadcast %cst_57 : f32 to vector<1x256xf32>
    %150 = arith.maximumf %148, %149 : vector<1x256xf32>
    %151 = math.absf %148 : vector<1x256xf32>
    %cst_58 = arith.constant 0.000000e+00 : f32
    %152 = vector.broadcast %cst_58 : f32 to vector<1x256xf32>
    %153 = arith.subf %152, %151 : vector<1x256xf32>
    %154 = math.exp %153 : vector<1x256xf32>
    %155 = math.log1p %154 : vector<1x256xf32>
    %156 = arith.addf %150, %155 : vector<1x256xf32>
    %c4 = arith.constant 4 : index
    %c0_59 = arith.constant 0 : index
    %157 = vector.load %arg7[%c4, %c0_59] : memref<8x256xf32, #tpu.memory_space<vmem>>, vector<1x256xf32>
    tpu.vector_store %arg7[%c4, %c0_59], %156 {strides = array<i32>} : memref<8x256xf32, #tpu.memory_space<vmem>>, vector<1x256xf32>,
    %158 = vector.extract_strided_slice %5 {offsets = [5, 0], sizes = [1, 256], strides = [1, 1]} : vector<8x256xf32> to vector<1x256xf32>
    %159 = vector.shape_cast %158 : vector<1x256xf32> to vector<1x256xf32>
    %160 = vector.broadcast %159 : vector<1x256xf32> to vector<128x256xf32>
    %c0_60 = arith.constant 0 : index
    %c0_61 = arith.constant 0 : index
    %161 = vector.load %arg2[%c0_60, %c0_61] : memref<128x256xf32, #tpu.memory_space<vmem>>, vector<128x256xf32>
    %162 = arith.mulf %160, %161 : vector<128x256xf32>
    %c0_62 = arith.constant 0 : index
    %c0_63 = arith.constant 0 : index
    %163 = vector.load %arg3[%c0_62, %c0_63] : memref<128x256xf32, #tpu.memory_space<vmem>>, vector<128x256xf32>
    %164 = arith.addf %162, %163 : vector<128x256xf32>
    %cst_64 = arith.constant 0.000000e+00 : f32
    %165 = vector.broadcast %cst_64 : f32 to vector<128x256xf32>
    %166 = arith.maximumf %164, %165 : vector<128x256xf32>
    %cst_65 = arith.constant dense<0.000000e+00> : vector<8x256xf32>
    %167 = tpu.matmul %6, %166, %cst_65 {dimension_numbers = #tpu.dot_dimension_numbers<[1], [0], [0], [1], [0, 0, 1, 1], [], []>, precision = #tpu.contract_precision<fp32>} : vector<8x128xf32>, vector<128x256xf32>, vector<8x256xf32> -> vector<8x256xf32>
    %168 = arith.addf %167, %7 : vector<8x256xf32>
    %169 = vector.extract_strided_slice %168 {offsets = [0, 0], sizes = [1, 256], strides = [1, 1]} : vector<8x256xf32> to vector<1x256xf32>
    %cst_66 = arith.constant 0.000000e+00 : f32
    %170 = vector.broadcast %cst_66 : f32 to vector<1x256xf32>
    %171 = arith.maximumf %169, %170 : vector<1x256xf32>
    %172 = vector.extract_strided_slice %168 {offsets = [1, 0], sizes = [1, 256], strides = [1, 1]} : vector<8x256xf32> to vector<1x256xf32>
    %cst_67 = arith.constant 0.000000e+00 : f32
    %173 = vector.broadcast %cst_67 : f32 to vector<1x256xf32>
    %174 = arith.maximumf %172, %173 : vector<1x256xf32>
    %175 = vector.extract_strided_slice %168 {offsets = [2, 0], sizes = [1, 256], strides = [1, 1]} : vector<8x256xf32> to vector<1x256xf32>
    %176 = arith.mulf %171, %174 : vector<1x256xf32>
    %177 = arith.addf %158, %176 : vector<1x256xf32>
    %178 = arith.addf %177, %175 : vector<1x256xf32>
    %cst_68 = arith.constant 0.000000e+00 : f32
    %179 = vector.broadcast %cst_68 : f32 to vector<1x256xf32>
    %180 = arith.maximumf %178, %179 : vector<1x256xf32>
    %181 = math.absf %178 : vector<1x256xf32>
    %cst_69 = arith.constant 0.000000e+00 : f32
    %182 = vector.broadcast %cst_69 : f32 to vector<1x256xf32>
    %183 = arith.subf %182, %181 : vector<1x256xf32>
    %184 = math.exp %183 : vector<1x256xf32>
    %185 = math.log1p %184 : vector<1x256xf32>
    %186 = arith.addf %180, %185 : vector<1x256xf32>
    %c5 = arith.constant 5 : index
    %c0_70 = arith.constant 0 : index
    %187 = vector.load %arg7[%c5, %c0_70] : memref<8x256xf32, #tpu.memory_space<vmem>>, vector<1x256xf32>
    tpu.vector_store %arg7[%c5, %c0_70], %186 {strides = array<i32>} : memref<8x256xf32, #tpu.memory_space<vmem>>, vector<1x256xf32>,
    %188 = vector.extract_strided_slice %5 {offsets = [6, 0], sizes = [1, 256], strides = [1, 1]} : vector<8x256xf32> to vector<1x256xf32>
    %189 = vector.shape_cast %188 : vector<1x256xf32> to vector<1x256xf32>
    %190 = vector.broadcast %189 : vector<1x256xf32> to vector<128x256xf32>
    %c0_71 = arith.constant 0 : index
    %c0_72 = arith.constant 0 : index
    %191 = vector.load %arg2[%c0_71, %c0_72] : memref<128x256xf32, #tpu.memory_space<vmem>>, vector<128x256xf32>
    %192 = arith.mulf %190, %191 : vector<128x256xf32>
    %c0_73 = arith.constant 0 : index
    %c0_74 = arith.constant 0 : index
    %193 = vector.load %arg3[%c0_73, %c0_74] : memref<128x256xf32, #tpu.memory_space<vmem>>, vector<128x256xf32>
    %194 = arith.addf %192, %193 : vector<128x256xf32>
    %cst_75 = arith.constant 0.000000e+00 : f32
    %195 = vector.broadcast %cst_75 : f32 to vector<128x256xf32>
    %196 = arith.maximumf %194, %195 : vector<128x256xf32>
    %cst_76 = arith.constant dense<0.000000e+00> : vector<8x256xf32>
    %197 = tpu.matmul %6, %196, %cst_76 {dimension_numbers = #tpu.dot_dimension_numbers<[1], [0], [0], [1], [0, 0, 1, 1], [], []>, precision = #tpu.contract_precision<fp32>} : vector<8x128xf32>, vector<128x256xf32>, vector<8x256xf32> -> vector<8x256xf32>
    %198 = arith.addf %197, %7 : vector<8x256xf32>
    %199 = vector.extract_strided_slice %198 {offsets = [0, 0], sizes = [1, 256], strides = [1, 1]} : vector<8x256xf32> to vector<1x256xf32>
    %cst_77 = arith.constant 0.000000e+00 : f32
    %200 = vector.broadcast %cst_77 : f32 to vector<1x256xf32>
    %201 = arith.maximumf %199, %200 : vector<1x256xf32>
    %202 = vector.extract_strided_slice %198 {offsets = [1, 0], sizes = [1, 256], strides = [1, 1]} : vector<8x256xf32> to vector<1x256xf32>
    %cst_78 = arith.constant 0.000000e+00 : f32
    %203 = vector.broadcast %cst_78 : f32 to vector<1x256xf32>
    %204 = arith.maximumf %202, %203 : vector<1x256xf32>
    %205 = vector.extract_strided_slice %198 {offsets = [2, 0], sizes = [1, 256], strides = [1, 1]} : vector<8x256xf32> to vector<1x256xf32>
    %206 = arith.mulf %201, %204 : vector<1x256xf32>
    %207 = arith.addf %188, %206 : vector<1x256xf32>
    %208 = arith.addf %207, %205 : vector<1x256xf32>
    %cst_79 = arith.constant 0.000000e+00 : f32
    %209 = vector.broadcast %cst_79 : f32 to vector<1x256xf32>
    %210 = arith.maximumf %208, %209 : vector<1x256xf32>
    %211 = math.absf %208 : vector<1x256xf32>
    %cst_80 = arith.constant 0.000000e+00 : f32
    %212 = vector.broadcast %cst_80 : f32 to vector<1x256xf32>
    %213 = arith.subf %212, %211 : vector<1x256xf32>
    %214 = math.exp %213 : vector<1x256xf32>
    %215 = math.log1p %214 : vector<1x256xf32>
    %216 = arith.addf %210, %215 : vector<1x256xf32>
    %c6 = arith.constant 6 : index
    %c0_81 = arith.constant 0 : index
    %217 = vector.load %arg7[%c6, %c0_81] : memref<8x256xf32, #tpu.memory_space<vmem>>, vector<1x256xf32>
    tpu.vector_store %arg7[%c6, %c0_81], %216 {strides = array<i32>} : memref<8x256xf32, #tpu.memory_space<vmem>>, vector<1x256xf32>,
    %218 = vector.extract_strided_slice %5 {offsets = [7, 0], sizes = [1, 256], strides = [1, 1]} : vector<8x256xf32> to vector<1x256xf32>
    %219 = vector.shape_cast %218 : vector<1x256xf32> to vector<1x256xf32>
    %220 = vector.broadcast %219 : vector<1x256xf32> to vector<128x256xf32>
    %c0_82 = arith.constant 0 : index
    %c0_83 = arith.constant 0 : index
    %221 = vector.load %arg2[%c0_82, %c0_83] : memref<128x256xf32, #tpu.memory_space<vmem>>, vector<128x256xf32>
    %222 = arith.mulf %220, %221 : vector<128x256xf32>
    %c0_84 = arith.constant 0 : index
    %c0_85 = arith.constant 0 : index
    %223 = vector.load %arg3[%c0_84, %c0_85] : memref<128x256xf32, #tpu.memory_space<vmem>>, vector<128x256xf32>
    %224 = arith.addf %222, %223 : vector<128x256xf32>
    %cst_86 = arith.constant 0.000000e+00 : f32
    %225 = vector.broadcast %cst_86 : f32 to vector<128x256xf32>
    %226 = arith.maximumf %224, %225 : vector<128x256xf32>
    %cst_87 = arith.constant dense<0.000000e+00> : vector<8x256xf32>
    %227 = tpu.matmul %6, %226, %cst_87 {dimension_numbers = #tpu.dot_dimension_numbers<[1], [0], [0], [1], [0, 0, 1, 1], [], []>, precision = #tpu.contract_precision<fp32>} : vector<8x128xf32>, vector<128x256xf32>, vector<8x256xf32> -> vector<8x256xf32>
    %228 = arith.addf %227, %7 : vector<8x256xf32>
    %229 = vector.extract_strided_slice %228 {offsets = [0, 0], sizes = [1, 256], strides = [1, 1]} : vector<8x256xf32> to vector<1x256xf32>
    %cst_88 = arith.constant 0.000000e+00 : f32
    %230 = vector.broadcast %cst_88 : f32 to vector<1x256xf32>
    %231 = arith.maximumf %229, %230 : vector<1x256xf32>
    %232 = vector.extract_strided_slice %228 {offsets = [1, 0], sizes = [1, 256], strides = [1, 1]} : vector<8x256xf32> to vector<1x256xf32>
    %cst_89 = arith.constant 0.000000e+00 : f32
    %233 = vector.broadcast %cst_89 : f32 to vector<1x256xf32>
    %234 = arith.maximumf %232, %233 : vector<1x256xf32>
    %235 = vector.extract_strided_slice %228 {offsets = [2, 0], sizes = [1, 256], strides = [1, 1]} : vector<8x256xf32> to vector<1x256xf32>
    %236 = arith.mulf %231, %234 : vector<1x256xf32>
    %237 = arith.addf %218, %236 : vector<1x256xf32>
    %238 = arith.addf %237, %235 : vector<1x256xf32>
    %cst_90 = arith.constant 0.000000e+00 : f32
    %239 = vector.broadcast %cst_90 : f32 to vector<1x256xf32>
    %240 = arith.maximumf %238, %239 : vector<1x256xf32>
    %241 = math.absf %238 : vector<1x256xf32>
    %cst_91 = arith.constant 0.000000e+00 : f32
    %242 = vector.broadcast %cst_91 : f32 to vector<1x256xf32>
    %243 = arith.subf %242, %241 : vector<1x256xf32>
    %244 = math.exp %243 : vector<1x256xf32>
    %245 = math.log1p %244 : vector<1x256xf32>
    %246 = arith.addf %240, %245 : vector<1x256xf32>
    %c7 = arith.constant 7 : index
    %c0_92 = arith.constant 0 : index
    %247 = vector.load %arg7[%c7, %c0_92] : memref<8x256xf32, #tpu.memory_space<vmem>>, vector<1x256xf32>
    tpu.vector_store %arg7[%c7, %c0_92], %246 {strides = array<i32>} : memref<8x256xf32, #tpu.memory_space<vmem>>, vector<1x256xf32>,
    %c0_93 = arith.constant 0 : index
    %c0_94 = arith.constant 0 : index
    %248 = vector.load %arg7[%c0_93, %c0_94] : memref<8x256xf32, #tpu.memory_space<vmem>>, vector<8x256xf32>
    %249 = arith.index_cast %3 : i32 to index
    %c0_95 = arith.constant 0 : index
    %250 = vector.load %arg6[%249, %c0_95] : memref<8x256xf32, #tpu.memory_space<vmem>>, vector<8x256xf32>
    tpu.vector_store %arg6[%249, %c0_95], %248 {strides = array<i32>} : memref<8x256xf32, #tpu.memory_space<vmem>>, vector<8x256xf32>,
    %c1_i32_96 = arith.constant 1 : i32
    return
  }
  func.func @transform_0(%arg0: i32) -> (i32, i32) {
    %c0_i32 = arith.constant 0 : i32
    %c0_i32_0 = arith.constant 0 : i32
    return %arg0, %c0_i32 : i32, i32
  }
  func.func @transform_1(%arg0: i32) -> (i32, i32) {
    %c0_i32 = arith.constant 0 : i32
    %c0_i32_0 = arith.constant 0 : i32
    %c0_i32_1 = arith.constant 0 : i32
    return %c0_i32, %c0_i32_0 : i32, i32
  }
  func.func @transform_2(%arg0: i32) -> (i32, i32) {
    %c0_i32 = arith.constant 0 : i32
    %c0_i32_0 = arith.constant 0 : i32
    %c0_i32_1 = arith.constant 0 : i32
    return %c0_i32, %c0_i32_0 : i32, i32
  }
  func.func @transform_3(%arg0: i32) -> (i32, i32) {
    %c0_i32 = arith.constant 0 : i32
    %c0_i32_0 = arith.constant 0 : i32
    %c0_i32_1 = arith.constant 0 : i32
    return %c0_i32, %c0_i32_0 : i32, i32
  }
  func.func @transform_4(%arg0: i32) -> (i32, i32) {
    %c0_i32 = arith.constant 0 : i32
    %c0_i32_0 = arith.constant 0 : i32
    %c0_i32_1 = arith.constant 0 : i32
    return %c0_i32, %c0_i32_0 : i32, i32
  }
  func.func @transform_5(%arg0: i32) -> (i32, i32) {
    %c0_i32 = arith.constant 0 : i32
    %c0_i32_0 = arith.constant 0 : i32
    return %arg0, %c0_i32 : i32, i32
  }
}

</mosaic_0001>

<llo_original>
// kernel: kicc_forward.1
$region0: #{kicc_forward.1}
  #allocation0 [shape = 'u32[]', space=smem, size = 0x4, offset = 0x4, fixed_abs, tag = 'smem constant byte address 0x4 - core index']
  #allocation1 [shape = 'u32[144,128]{1,0:T(1,128)}', space=vmem, size = 0x12000, scoped, tag = 'internal scratch']
  #allocation2 [shape = 'f32[8,256]{1,0:T(8,128)}', space=vmem, size = 0x2000, scoped, tag = 'scratch operand']
  %s0 = inlined_call_operand.vmem [shape: f32[8,256], index: 0, kind: input, shape index: {}]
  %s1 = inlined_call_operand.vmem [shape: f32[128,256], index: 1, kind: input, shape index: {}]
  %s2 = inlined_call_operand.vmem [shape: f32[128,256], index: 2, kind: input, shape index: {}]
  %s3 = inlined_call_operand.vmem [shape: f32[8,128], index: 3, kind: input, shape index: {}]
  %s4 = inlined_call_operand.vmem [shape: f32[8,256], index: 4, kind: input, shape index: {}]
  %s5 = inlined_call_operand.vmem [shape: f32[8,256], index: 5, kind: output, shape index: {}]
  %s6 = sld [smem:[#allocation0]]
  $region30: #{kicc_forward.1} parent=0
    _
  %s8 = ssub.s32 1, %s6
  %s9 = scalar_select 0, %s8, %s6
  // Predicated region
  $region2: #{kicc_forward.1} parent=0 // pred_check
    _
  $region3: #{kicc_forward.1} parent=0 // pred_check_branch
    %11 = sbr.rel (0) target = $region5
  $region4: #{kicc_forward.1} parent=0 // pred_region
    _
  $region5: #{kicc_forward.1} parent=0 // pred_fallthru
    _
  // Predicated region
  $region6: #{kicc_forward.1} parent=0 // pred_check
    _
  $region7: #{kicc_forward.1} parent=0 // pred_check_branch
    %13 = sbr.rel (0) target = $region9
  $region8: #{kicc_forward.1} parent=0 // pred_region
    _
  $region9: #{kicc_forward.1} parent=0 // pred_fallthru
    _
  // Predicated region
  $region10: #{kicc_forward.1} parent=0 // pred_check
    _
  $region11: #{kicc_forward.1} parent=0 // pred_check_branch
    %15 = sbr.rel (0) target = $region13
  $region12: #{kicc_forward.1} parent=0 // pred_region
    _
  $region13: #{kicc_forward.1} parent=0 // pred_fallthru
    _
  // Predicated region
  $region14: #{kicc_forward.1} parent=0 // pred_check
    _
  $region15: #{kicc_forward.1} parent=0 // pred_check_branch
    %17 = sbr.rel (0) target = $region17
  $region16: #{kicc_forward.1} parent=0 // pred_region
    _
  $region17: #{kicc_forward.1} parent=0 // pred_fallthru
    _
  // Predicated region
  $region18: #{kicc_forward.1} parent=0 // pred_check
    _
  $region19: #{kicc_forward.1} parent=0 // pred_check_branch
    %19 = sbr.rel (0) target = $region21
  $region20: #{kicc_forward.1} parent=0 // pred_region
    _
  $region21: #{kicc_forward.1} parent=0 // pred_fallthru
    _
  %s20 = smul.u32 0, 2
  %s21 = smul.addr %s20, 8
  %s22 = scalar_lea.vmem %s0, %s21
  %v23 = vld [vmem:[%s22] sm:$0xff]
  %v24 = vld [vmem:[%s22 + $0x8] sm:$0xff]
  %v25 = vld [vmem:[%s3] sm:$0xff]
  %v26 = vld [vmem:[%s4] sm:$0xff]
  %v27 = vld [vmem:[%s4 + $0x8] sm:$0xff]
  %v28 = vlaneseq
  %v29 = vshrl.u32 %v28, 7
  %v30 = vsub.s32 0, %v29
  %v31 = vrot.slane %v23, %v30
  %v32 = vlaneseq
  %v33 = vshrl.u32 %v32, 7
  %v34 = vsub.s32 0, %v33
  %v35 = vrot.slane %v24, %v34
  %v36 = vld [vmem:[%s1] sm:$0xff]
  %v37 = vld [vmem:[%s1 + $0x8] sm:$0xff]
  %v38 = vld [vmem:[%s1 + $0x10] sm:$0xff]
  %v39 = vld [vmem:[%s1 + $0x18] sm:$0xff]
  %v40 = vld [vmem:[%s1 + $0x20] sm:$0xff]
  %v41 = vld [vmem:[%s1 + $0x28] sm:$0xff]
  %v42 = vld [vmem:[%s1 + $0x30] sm:$0xff]
  %v43 = vld [vmem:[%s1 + $0x38] sm:$0xff]
  %v44 = vld [vmem:[%s1 + $0x40] sm:$0xff]
  %v45 = vld [vmem:[%s1 + $0x48] sm:$0xff]
  %v46 = vld [vmem:[%s1 + $0x50] sm:$0xff]
  %v47 = vld [vmem:[%s1 + $0x58] sm:$0xff]
  %v48 = vld [vmem:[%s1 + $0x60] sm:$0xff]
  %v49 = vld [vmem:[%s1 + $0x68] sm:$0xff]
  %v50 = vld [vmem:[%s1 + $0x70] sm:$0xff]
  %v51 = vld [vmem:[%s1 + $0x78] sm:$0xff]
  %v52 = vld [vmem:[%s1 + $0x80] sm:$0xff]
  %v53 = vld [vmem:[%s1 + $0x88] sm:$0xff]
  %v54 = vld [vmem:[%s1 + $0x90] sm:$0xff]
  %v55 = vld [vmem:[%s1 + $0x98] sm:$0xff]
  %v56 = vld [vmem:[%s1 + $0xa0] sm:$0xff]
  %v57 = vld [vmem:[%s1 + $0xa8] sm:$0xff]
  %v58 = vld [vmem:[%s1 + $0xb0] sm:$0xff]
  %v59 = vld [vmem:[%s1 + $0xb8] sm:$0xff]
  %v60 = vld [vmem:[%s1 + $0xc0] sm:$0xff]
  %v61 = vld [vmem:[%s1 + $0xc8] sm:$0xff]
  %v62 = vld [vmem:[%s1 + $0xd0] sm:$0xff]
  %v63 = vld [vmem:[%s1 + $0xd8] sm:$0xff]
  %v64 = vld [vmem:[%s1 + $0xe0] sm:$0xff]
  %v65 = vld [vmem:[%s1 + $0xe8] sm:$0xff]
  %v66 = vld [vmem:[%s1 + $0xf0] sm:$0xff]
  %v67 = vld [vmem:[%s1 + $0xf8] sm:$0xff]
  %v68 = vmul.f32 %v31, %v36
  %v69 = vmul.f32 %v35, %v37
  %v70 = vmul.f32 %v31, %v38
  %v71 = vmul.f32 %v35, %v39
  %v72 = vmul.f32 %v31, %v40
  %v73 = vmul.f32 %v35, %v41
  %v74 = vmul.f32 %v31, %v42
  %v75 = vmul.f32 %v35, %v43
  %v76 = vmul.f32 %v31, %v44
  %v77 = vmul.f32 %v35, %v45
  %v78 = vmul.f32 %v31, %v46
  %v79 = vmul.f32 %v35, %v47
  %v80 = vmul.f32 %v31, %v48
  %v81 = vmul.f32 %v35, %v49
  %v82 = vmul.f32 %v31, %v50
  %v83 = vmul.f32 %v35, %v51
  %v84 = vmul.f32 %v31, %v52
  %v85 = vmul.f32 %v35, %v53
  %v86 = vmul.f32 %v31, %v54
  %v87 = vmul.f32 %v35, %v55
  %v88 = vmul.f32 %v31, %v56
  %v89 = vmul.f32 %v35, %v57
  %v90 = vmul.f32 %v31, %v58
  %v91 = vmul.f32 %v35, %v59
  %v92 = vmul.f32 %v31, %v60
  %v93 = vmul.f32 %v35, %v61
  %v94 = vmul.f32 %v31, %v62
  %v95 = vmul.f32 %v35, %v63
  %v96 = vmul.f32 %v31, %v64
  %v97 = vmul.f32 %v35, %v65
  %v98 = vmul.f32 %v31, %v66
  %v99 = vmul.f32 %v35, %v67
  %v100 = vld [vmem:[%s2] sm:$0xff]
  %v101 = vld [vmem:[%s2 + $0x8] sm:$0xff]
  %v102 = vld [vmem:[%s2 + $0x10] sm:$0xff]
  %v103 = vld [vmem:[%s2 + $0x18] sm:$0xff]
  %v104 = vld [vmem:[%s2 + $0x20] sm:$0xff]
  %v105 = vld [vmem:[%s2 + $0x28] sm:$0xff]
  %v106 = vld [vmem:[%s2 + $0x30] sm:$0xff]
  %v107 = vld [vmem:[%s2 + $0x38] sm:$0xff]
  %v108 = vld [vmem:[%s2 + $0x40] sm:$0xff]
  %v109 = vld [vmem:[%s2 + $0x48] sm:$0xff]
  %v110 = vld [vmem:[%s2 + $0x50] sm:$0xff]
  %v111 = vld [vmem:[%s2 + $0x58] sm:$0xff]
  %v112 = vld [vmem:[%s2 + $0x60] sm:$0xff]
  %v113 = vld [vmem:[%s2 + $0x68] sm:$0xff]
  %v114 = vld [vmem:[%s2 + $0x70] sm:$0xff]
  %v115 = vld [vmem:[%s2 + $0x78] sm:$0xff]
  %v116 = vld [vmem:[%s2 + $0x80] sm:$0xff]
  %v117 = vld [vmem:[%s2 + $0x88] sm:$0xff]
  %v118 = vld [vmem:[%s2 + $0x90] sm:$0xff]
  %v119 = vld [vmem:[%s2 + $0x98] sm:$0xff]
  %v120 = vld [vmem:[%s2 + $0xa0] sm:$0xff]
  %v121 = vld [vmem:[%s2 + $0xa8] sm:$0xff]
  %v122 = vld [vmem:[%s2 + $0xb0] sm:$0xff]
  %v123 = vld [vmem:[%s2 + $0xb8] sm:$0xff]
  %v124 = vld [vmem:[%s2 + $0xc0] sm:$0xff]
  %v125 = vld [vmem:[%s2 + $0xc8] sm:$0xff]
  %v126 = vld [vmem:[%s2 + $0xd0] sm:$0xff]
  %v127 = vld [vmem:[%s2 + $0xd8] sm:$0xff]
  %v128 = vld [vmem:[%s2 + $0xe0] sm:$0xff]
  %v129 = vld [vmem:[%s2 + $0xe8] sm:$0xff]
  %v130 = vld [vmem:[%s2 + $0xf0] sm:$0xff]
  %v131 = vld [vmem:[%s2 + $0xf8] sm:$0xff]
  %v132 = vadd.f32 %v68, %v100
  %v133 = vadd.f32 %v69, %v101
  %v134 = vadd.f32 %v70, %v102
  %v135 = vadd.f32 %v71, %v103
  %v136 = vadd.f32 %v72, %v104
  %v137 = vadd.f32 %v73, %v105
  %v138 = vadd.f32 %v74, %v106
  %v139 = vadd.f32 %v75, %v107
  %v140 = vadd.f32 %v76, %v108
  %v141 = vadd.f32 %v77, %v109
  %v142 = vadd.f32 %v78, %v110
  %v143 = vadd.f32 %v79, %v111
  %v144 = vadd.f32 %v80, %v112
  %v145 = vadd.f32 %v81, %v113
  %v146 = vadd.f32 %v82, %v114
  %v147 = vadd.f32 %v83, %v115
  %v148 = vadd.f32 %v84, %v116
  %v149 = vadd.f32 %v85, %v117
  %v150 = vadd.f32 %v86, %v118
  %v151 = vadd.f32 %v87, %v119
  %v152 = vadd.f32 %v88, %v120
  %v153 = vadd.f32 %v89, %v121
  %v154 = vadd.f32 %v90, %v122
  %v155 = vadd.f32 %v91, %v123
  %v156 = vadd.f32 %v92, %v124
  %v157 = vadd.f32 %v93, %v125
  %v158 = vadd.f32 %v94, %v126
  %v159 = vadd.f32 %v95, %v127
  %v160 = vadd.f32 %v96, %v128
  %v161 = vadd.f32 %v97, %v129
  %v162 = vadd.f32 %v98, %v130
  %v163 = vadd.f32 %v99, %v131
  %v164 = vmax.f32 %v132, 0.0
  %v165 = vmax.f32 %v133, 0.0
  %v166 = vmax.f32 %v134, 0.0
  %v167 = vmax.f32 %v135, 0.0
  %v168 = vmax.f32 %v136, 0.0
  %v169 = vmax.f32 %v137, 0.0
  %v170 = vmax.f32 %v138, 0.0
  %v171 = vmax.f32 %v139, 0.0
  %v172 = vmax.f32 %v140, 0.0
  %v173 = vmax.f32 %v141, 0.0
  %v174 = vmax.f32 %v142, 0.0
  %v175 = vmax.f32 %v143, 0.0
  %v176 = vmax.f32 %v144, 0.0
  %v177 = vmax.f32 %v145, 0.0
  %v178 = vmax.f32 %v146, 0.0
  %v179 = vmax.f32 %v147, 0.0
  %v180 = vmax.f32 %v148, 0.0
  %v181 = vmax.f32 %v149, 0.0
  %v182 = vmax.f32 %v150, 0.0
  %v183 = vmax.f32 %v151, 0.0
  %v184 = vmax.f32 %v152, 0.0
  %v185 = vmax.f32 %v153, 0.0
  %v186 = vmax.f32 %v154, 0.0
  %v187 = vmax.f32 %v155, 0.0
  %v188 = vmax.f32 %v156, 0.0
  %v189 = vmax.f32 %v157, 0.0
  %v190 = vmax.f32 %v158, 0.0
  %v191 = vmax.f32 %v159, 0.0
  %v192 = vmax.f32 %v160, 0.0
  %v193 = vmax.f32 %v161, 0.0
  %v194 = vmax.f32 %v162, 0.0
  %v195 = vmax.f32 %v163, 0.0
  %v196 = vand.u32 %v195, 4294901760
  %197 = vmatprep.subr.mxu0 %v196
  %v198 = vand.u32 %v194, 4294901760
  %199 = vmatpush1.msra.mxu0 %v198
  %v200 = vand.u32 %v193, 4294901760
  %201 = vmatprep.subr.mxu0 %v200
  %v202 = vand.u32 %v192, 4294901760
  %203 = vmatpush1.msra.mxu0 %v202
  %v204 = vand.u32 %v191, 4294901760
  %205 = vmatprep.subr.mxu0 %v204
  %v206 = vand.u32 %v190, 4294901760
  %207 = vmatpush1.msra.mxu0 %v206
  %v208 = vand.u32 %v189, 4294901760
  %209 = vmatprep.subr.mxu0 %v208
  %v210 = vand.u32 %v188, 4294901760
  %211 = vmatpush1.msra.mxu0 %v210
  %v212 = vand.u32 %v187, 4294901760
  %213 = vmatprep.subr.mxu0 %v212
  %v214 = vand.u32 %v186, 4294901760
  %215 = vmatpush1.msra.mxu0 %v214
  %v216 = vand.u32 %v185, 4294901760
  %217 = vmatprep.subr.mxu0 %v216
  %v218 = vand.u32 %v184, 4294901760
  %219 = vmatpush1.msra.mxu0 %v218
  %v220 = vand.u32 %v183, 4294901760
  %221 = vmatprep.subr.mxu0 %v220
  %v222 = vand.u32 %v182, 4294901760
  %223 = vmatpush1.msra.mxu0 %v222
  %v224 = vand.u32 %v181, 4294901760
  %225 = vmatprep.subr.mxu0 %v224
  %v226 = vand.u32 %v180, 4294901760
  %227 = vmatpush1.msra.mxu0 %v226
  %v228 = vand.u32 %v179, 4294901760
  %229 = vmatprep.subr.mxu0 %v228
  %v230 = vand.u32 %v178, 4294901760
  %231 = vmatpush1.msra.mxu0 %v230
  %v232 = vand.u32 %v177, 4294901760
  %233 = vmatprep.subr.mxu0 %v232
  %v234 = vand.u32 %v176, 4294901760
  %235 = vmatpush1.msra.mxu0 %v234
  %v236 = vand.u32 %v175, 4294901760
  %237 = vmatprep.subr.mxu0 %v236
  %v238 = vand.u32 %v174, 4294901760
  %239 = vmatpush1.msra.mxu0 %v238
  %v240 = vand.u32 %v173, 4294901760
  %241 = vmatprep.subr.mxu0 %v240
  %v242 = vand.u32 %v172, 4294901760
  %243 = vmatpush1.msra.mxu0 %v242
  %v244 = vand.u32 %v171, 4294901760
  %245 = vmatprep.subr.mxu0 %v244
  %v246 = vand.u32 %v170, 4294901760
  %247 = vmatpush1.msra.mxu0 %v246
  %v248 = vand.u32 %v169, 4294901760
  %249 = vmatprep.subr.mxu0 %v248
  %v250 = vand.u32 %v168, 4294901760
  %251 = vmatpush1.msra.mxu0 %v250
  %v252 = vand.u32 %v167, 4294901760
  %253 = vmatprep.subr.mxu0 %v252
  %v254 = vand.u32 %v166, 4294901760
  %255 = vmatpush1.msra.mxu0 %v254
  %v256 = vand.u32 %v165, 4294901760
  %257 = vmatprep.subr.mxu0 %v256
  %v258 = vand.u32 %v164, 4294901760
  %259 = vmatpush1.msra.mxu0 %v258
  %260 = vmatprep.subr.mxu0 0.0
  %261 = vmatpush2.msra.mxu0 0.0
  %262 = vmatprep.subr.mxu0 0.0
  %263 = vmatpush2.msra.mxu0 0.0
  %264 = vmatprep.subr.mxu0 0.0
  %265 = vmatpush2.msra.mxu0 0.0
  %266 = vmatprep.subr.mxu0 0.0
  %267 = vmatpush2.msra.mxu0 0.0
  %268 = vmatprep.subr.mxu0 0.0
  %269 = vmatpush2.msra.mxu0 0.0
  %270 = vmatprep.subr.mxu0 0.0
  %271 = vmatpush2.msra.mxu0 0.0
  %272 = vmatprep.subr.mxu0 0.0
  %273 = vmatpush2.msra.mxu0 0.0
  %274 = vmatprep.subr.mxu0 0.0
  %275 = vmatpush2.msra.mxu0 0.0
  %276 = vmatprep.subr.mxu0 0.0
  %277 = vmatpush2.msra.mxu0 0.0
  %278 = vmatprep.subr.mxu0 0.0
  %279 = vmatpush2.msra.mxu0 0.0
  %280 = vmatprep.subr.mxu0 0.0
  %281 = vmatpush2.msra.mxu0 0.0
  %282 = vmatprep.subr.mxu0 0.0
  %283 = vmatpush2.msra.mxu0 0.0
  %284 = vmatprep.subr.mxu0 0.0
  %285 = vmatpush2.msra.mxu0 0.0
  %286 = vmatprep.subr.mxu0 0.0
  %287 = vmatpush2.msra.mxu0 0.0
  %288 = vmatprep.subr.mxu0 0.0
  %289 = vmatpush2.msra.mxu0 0.0
  %290 = vmatprep.subr.mxu0 0.0
  %291 = vmatpush2.msra.mxu0 0.0
  %292 = vmatprep.mubr.f32.mxu0 0.0
  %v293 = vand.u32 %v25, 4294901760
  %v294 = vsub.f32 %v25, %v293
  %v295 = vand.u32 %v294, 4294901760
  %v296 = vsub.f32 %v294, %v295
  %v297 = vand.u32 %v296, 4294901760
  %298 = vmatmul.mubr.f32.gmra.mxu0 %v297
  %v299 = vpop.f32.mrf.mxu0
  %v300 = vadd.f32 %v26, %v299
  %v301 = vpop.f32.mrf.mxu0
  %v302 = vadd.f32 %v27, %v301
  %303 = vdwg.mxu0
  %v304 = vand.u32 %v195, 4294901760
  %v305 = vsub.f32 %v195, %v304
  %v306 = vand.u32 %v305, 4294901760
  %v307 = vsub.f32 %v305, %v306
  %v308 = vand.u32 %v307, 4294901760
  %309 = vmatprep.subr.mxu0 %v308
  %v310 = vand.u32 %v194, 4294901760
  %v311 = vsub.f32 %v194, %v310
  %v312 = vand.u32 %v311, 4294901760
  %v313 = vsub.f32 %v311, %v312
  %v314 = vand.u32 %v313, 4294901760
  %315 = vmatpush1.msra.mxu0 %v314
  %v316 = vand.u32 %v193, 4294901760
  %v317 = vsub.f32 %v193, %v316
  %v318 = vand.u32 %v317, 4294901760
  %v319 = vsub.f32 %v317, %v318
  %v320 = vand.u32 %v319, 4294901760
  %321 = vmatprep.subr.mxu0 %v320
  %v322 = vand.u32 %v192, 4294901760
  %v323 = vsub.f32 %v192, %v322
  %v324 = vand.u32 %v323, 4294901760
  %v325 = vsub.f32 %v323, %v324
  %v326 = vand.u32 %v325, 4294901760
  %327 = vmatpush1.msra.mxu0 %v326
  %v328 = vand.u32 %v191, 4294901760
  %v329 = vsub.f32 %v191, %v328
  %v330 = vand.u32 %v329, 4294901760
  %v331 = vsub.f32 %v329, %v330
  %v332 = vand.u32 %v331, 4294901760
  %333 = vmatprep.subr.mxu0 %v332
  %v334 = vand.u32 %v190, 4294901760
  %v335 = vsub.f32 %v190, %v334
  %v336 = vand.u32 %v335, 4294901760
  %v337 = vsub.f32 %v335, %v336
  %v338 = vand.u32 %v337, 4294901760
  %339 = vmatpush1.msra.mxu0 %v338
  %v340 = vand.u32 %v189, 4294901760
  %v341 = vsub.f32 %v189, %v340
  %v342 = vand.u32 %v341, 4294901760
  %v343 = vsub.f32 %v341, %v342
  %v344 = vand.u32 %v343, 4294901760
  %345 = vmatprep.subr.mxu0 %v344
  %v346 = vand.u32 %v188, 4294901760
  %v347 = vsub.f32 %v188, %v346
  %v348 = vand.u32 %v347, 4294901760
  %v349 = vsub.f32 %v347, %v348
  %v350 = vand.u32 %v349, 4294901760
  %351 = vmatpush1.msra.mxu0 %v350
  %v352 = vand.u32 %v187, 4294901760
  %v353 = vsub.f32 %v187, %v352
  %v354 = vand.u32 %v353, 4294901760
  %v355 = vsub.f32 %v353, %v354
  %v356 = vand.u32 %v355, 4294901760
  %357 = vmatprep.subr.mxu0 %v356
  %v358 = vand.u32 %v186, 4294901760
  %v359 = vsub.f32 %v186, %v358
  %v360 = vand.u32 %v359, 4294901760
  %v361 = vsub.f32 %v359, %v360
  %v362 = vand.u32 %v361, 4294901760
  %363 = vmatpush1.msra.mxu0 %v362
  %v364 = vand.u32 %v185, 4294901760
  %v365 = vsub.f32 %v185, %v364
  %v366 = vand.u32 %v365, 4294901760
  %v367 = vsub.f32 %v365, %v366
  %v368 = vand.u32 %v367, 4294901760
  %369 = vmatprep.subr.mxu0 %v368
  %v370 = vand.u32 %v184, 4294901760
  %v371 = vsub.f32 %v184, %v370
  %v372 = vand.u32 %v371, 4294901760
  %v373 = vsub.f32 %v371, %v372
  %v374 = vand.u32 %v373, 4294901760
  %375 = vmatpush1.msra.mxu0 %v374
  %v376 = vand.u32 %v183, 4294901760
  %v377 = vsub.f32 %v183, %v376
  %v378 = vand.u32 %v377, 4294901760
  %v379 = vsub.f32 %v377, %v378
  %v380 = vand.u32 %v379, 4294901760
  %381 = vmatprep.subr.mxu0 %v380
  %v382 = vand.u32 %v182, 4294901760
  %v383 = vsub.f32 %v182, %v382
  %v384 = vand.u32 %v383, 4294901760
  %v385 = vsub.f32 %v383, %v384
  %v386 = vand.u32 %v385, 4294901760
  %387 = vmatpush1.msra.mxu0 %v386
  %v388 = vand.u32 %v181, 4294901760
  %v389 = vsub.f32 %v181, %v388
  %v390 = vand.u32 %v389, 4294901760
  %v391 = vsub.f32 %v389, %v390
  %v392 = vand.u32 %v391, 4294901760
  %393 = vmatprep.subr.mxu0 %v392
  %v394 = vand.u32 %v180, 4294901760
  %v395 = vsub.f32 %v180, %v394
  %v396 = vand.u32 %v395, 4294901760
  %v397 = vsub.f32 %v395, %v396
  %v398 = vand.u32 %v397, 4294901760
  %399 = vmatpush1.msra.mxu0 %v398
  %v400 = vand.u32 %v179, 4294901760
  %v401 = vsub.f32 %v179, %v400
  %v402 = vand.u32 %v401, 4294901760
  %v403 = vsub.f32 %v401, %v402
  %v404 = vand.u32 %v403, 4294901760
  %405 = vmatprep.subr.mxu0 %v404
  %v406 = vand.u32 %v178, 4294901760
  %v407 = vsub.f32 %v178, %v406
  %v408 = vand.u32 %v407, 4294901760
  %v409 = vsub.f32 %v407, %v408
  %v410 = vand.u32 %v409, 4294901760
  %411 = vmatpush1.msra.mxu0 %v410
  %v412 = vand.u32 %v177, 4294901760
  %v413 = vsub.f32 %v177, %v412
  %v414 = vand.u32 %v413, 4294901760
  %v415 = vsub.f32 %v413, %v414
  %v416 = vand.u32 %v415, 4294901760
  %417 = vmatprep.subr.mxu0 %v416
  %v418 = vand.u32 %v176, 4294901760
  %v419 = vsub.f32 %v176, %v418
  %v420 = vand.u32 %v419, 4294901760
  %v421 = vsub.f32 %v419, %v420
  %v422 = vand.u32 %v421, 4294901760
  %423 = vmatpush1.msra.mxu0 %v422
  %v424 = vand.u32 %v175, 4294901760
  %v425 = vsub.f32 %v175, %v424
  %v426 = vand.u32 %v425, 4294901760
  %v427 = vsub.f32 %v425, %v426
  %v428 = vand.u32 %v427, 4294901760
  %429 = vmatprep.subr.mxu0 %v428
  %v430 = vand.u32 %v174, 4294901760
  %v431 = vsub.f32 %v174, %v430
  %v432 = vand.u32 %v431, 4294901760
  %v433 = vsub.f32 %v431, %v432
  %v434 = vand.u32 %v433, 4294901760
  %435 = vmatpush1.msra.mxu0 %v434
  %v436 = vand.u32 %v173, 4294901760
  %v437 = vsub.f32 %v173, %v436
  %v438 = vand.u32 %v437, 4294901760
  %v439 = vsub.f32 %v437, %v438
  %v440 = vand.u32 %v439, 4294901760
  %441 = vmatprep.subr.mxu0 %v440
  %v442 = vand.u32 %v172, 4294901760
  %v443 = vsub.f32 %v172, %v442
  %v444 = vand.u32 %v443, 4294901760
  %v445 = vsub.f32 %v443, %v444
  %v446 = vand.u32 %v445, 4294901760
  %447 = vmatpush1.msra.mxu0 %v446
  %v448 = vand.u32 %v171, 4294901760
  %v449 = vsub.f32 %v171, %v448
  %v450 = vand.u32 %v449, 4294901760
  %v451 = vsub.f32 %v449, %v450
  %v452 = vand.u32 %v451, 4294901760
  %453 = vmatprep.subr.mxu0 %v452
  %v454 = vand.u32 %v170, 4294901760
  %v455 = vsub.f32 %v170, %v454
  %v456 = vand.u32 %v455, 4294901760
  %v457 = vsub.f32 %v455, %v456
  %v458 = vand.u32 %v457, 4294901760
  %459 = vmatpush1.msra.mxu0 %v458
  %v460 = vand.u32 %v169, 4294901760
  %v461 = vsub.f32 %v169, %v460
  %v462 = vand.u32 %v461, 4294901760
  %v463 = vsub.f32 %v461, %v462
  %v464 = vand.u32 %v463, 4294901760
  %465 = vmatprep.subr.mxu0 %v464
  %v466 = vand.u32 %v168, 4294901760
  %v467 = vsub.f32 %v168, %v466
  %v468 = vand.u32 %v467, 4294901760
  %v469 = vsub.f32 %v467, %v468
  %v470 = vand.u32 %v469, 4294901760
  %471 = vmatpush1.msra.mxu0 %v470
  %v472 = vand.u32 %v167, 4294901760
  %v473 = vsub.f32 %v167, %v472
  %v474 = vand.u32 %v473, 4294901760
  %v475 = vsub.f32 %v473, %v474
  %v476 = vand.u32 %v475, 4294901760
  %477 = vmatprep.subr.mxu0 %v476
  %v478 = vand.u32 %v166, 4294901760
  %v479 = vsub.f32 %v166, %v478
  %v480 = vand.u32 %v479, 4294901760
  %v481 = vsub.f32 %v479, %v480
  %v482 = vand.u32 %v481, 4294901760
  %483 = vmatpush1.msra.mxu0 %v482
  %v484 = vand.u32 %v165, 4294901760
  %v485 = vsub.f32 %v165, %v484
  %v486 = vand.u32 %v485, 4294901760
  %v487 = vsub.f32 %v485, %v486
  %v488 = vand.u32 %v487, 4294901760
  %489 = vmatprep.subr.mxu0 %v488
  %v490 = vand.u32 %v164, 4294901760
  %v491 = vsub.f32 %v164, %v490
  %v492 = vand.u32 %v491, 4294901760
  %v493 = vsub.f32 %v491, %v492
  %v494 = vand.u32 %v493, 4294901760
  %495 = vmatpush1.msra.mxu0 %v494
  %496 = vmatprep.subr.mxu0 0.0
  %497 = vmatpush2.msra.mxu0 0.0
  %498 = vmatprep.subr.mxu0 0.0
  %499 = vmatpush2.msra.mxu0 0.0
  %500 = vmatprep.subr.mxu0 0.0
  %501 = vmatpush2.msra.mxu0 0.0
  %502 = vmatprep.subr.mxu0 0.0
  %503 = vmatpush2.msra.mxu0 0.0
  %504 = vmatprep.subr.mxu0 0.0
  %505 = vmatpush2.msra.mxu0 0.0
  %506 = vmatprep.subr.mxu0 0.0
  %507 = vmatpush2.msra.mxu0 0.0
  %508 = vmatprep.subr.mxu0 0.0
  %509 = vmatpush2.msra.mxu0 0.0
  %510 = vmatprep.subr.mxu0 0.0
  %511 = vmatpush2.msra.mxu0 0.0
  %512 = vmatprep.subr.mxu0 0.0
  %513 = vmatpush2.msra.mxu0 0.0
  %514 = vmatprep.subr.mxu0 0.0
  %515 = vmatpush2.msra.mxu0 0.0
  %516 = vmatprep.subr.mxu0 0.0
  %517 = vmatpush2.msra.mxu0 0.0
  %518 = vmatprep.subr.mxu0 0.0
  %519 = vmatpush2.msra.mxu0 0.0
  %520 = vmatprep.subr.mxu0 0.0
  %521 = vmatpush2.msra.mxu0 0.0
  %522 = vmatprep.subr.mxu0 0.0
  %523 = vmatpush2.msra.mxu0 0.0
  %524 = vmatprep.subr.mxu0 0.0
  %525 = vmatpush2.msra.mxu0 0.0
  %526 = vmatprep.subr.mxu0 0.0
  %527 = vmatpush2.msra.mxu0 0.0
  %528 = vmatprep.mubr.f32.mxu0 0.0
  %v529 = vand.u32 %v25, 4294901760
  %530 = vmatmul.mubr.f32.gmra.mxu0 %v529
  %v531 = vpop.f32.mrf.mxu0
  %v532 = vadd.f32 %v300, %v531
  %v533 = vpop.f32.mrf.mxu0
  %v534 = vadd.f32 %v302, %v533
  %535 = vdwg.mxu0
  %v536 = vand.u32 %v195, 4294901760
  %v537 = vsub.f32 %v195, %v536
  %538 = vmatprep.subr.mxu0 %v537
  %v539 = vand.u32 %v194, 4294901760
  %v540 = vsub.f32 %v194, %v539
  %541 = vmatpush1.msra.mxu0 %v540
  %v542 = vand.u32 %v193, 4294901760
  %v543 = vsub.f32 %v193, %v542
  %544 = vmatprep.subr.mxu0 %v543
  %v545 = vand.u32 %v192, 4294901760
  %v546 = vsub.f32 %v192, %v545
  %547 = vmatpush1.msra.mxu0 %v546
  %v548 = vand.u32 %v191, 4294901760
  %v549 = vsub.f32 %v191, %v548
  %550 = vmatprep.subr.mxu0 %v549
  %v551 = vand.u32 %v190, 4294901760
  %v552 = vsub.f32 %v190, %v551
  %553 = vmatpush1.msra.mxu0 %v552
  %v554 = vand.u32 %v189, 4294901760
  %v555 = vsub.f32 %v189, %v554
  %556 = vmatprep.subr.mxu0 %v555
  %v557 = vand.u32 %v188, 4294901760
  %v558 = vsub.f32 %v188, %v557
  %559 = vmatpush1.msra.mxu0 %v558
  %v560 = vand.u32 %v187, 4294901760
  %v561 = vsub.f32 %v187, %v560
  %562 = vmatprep.subr.mxu0 %v561
  %v563 = vand.u32 %v186, 4294901760
  %v564 = vsub.f32 %v186, %v563
  %565 = vmatpush1.msra.mxu0 %v564
  %v566 = vand.u32 %v185, 4294901760
  %v567 = vsub.f32 %v185, %v566
  %568 = vmatprep.subr.mxu0 %v567
  %v569 = vand.u32 %v184, 4294901760
  %v570 = vsub.f32 %v184, %v569
  %571 = vmatpush1.msra.mxu0 %v570
  %v572 = vand.u32 %v183, 4294901760
  %v573 = vsub.f32 %v183, %v572
  %574 = vmatprep.subr.mxu0 %v573
  %v575 = vand.u32 %v182, 4294901760
  %v576 = vsub.f32 %v182, %v575
  %577 = vmatpush1.msra.mxu0 %v576
  %v578 = vand.u32 %v181, 4294901760
  %v579 = vsub.f32 %v181, %v578
  %580 = vmatprep.subr.mxu0 %v579
  %v581 = vand.u32 %v180, 4294901760
  %v582 = vsub.f32 %v180, %v581
  %583 = vmatpush1.msra.mxu0 %v582
  %v584 = vand.u32 %v179, 4294901760
  %v585 = vsub.f32 %v179, %v584
  %586 = vmatprep.subr.mxu0 %v585
  %v587 = vand.u32 %v178, 4294901760
  %v588 = vsub.f32 %v178, %v587
  %589 = vmatpush1.msra.mxu0 %v588
  %v590 = vand.u32 %v177, 4294901760
  %v591 = vsub.f32 %v177, %v590
  %592 = vmatprep.subr.mxu0 %v591
  %v593 = vand.u32 %v176, 4294901760
  %v594 = vsub.f32 %v176, %v593
  %595 = vmatpush1.msra.mxu0 %v594
  %v596 = vand.u32 %v175, 4294901760
  %v597 = vsub.f32 %v175, %v596
  %598 = vmatprep.subr.mxu0 %v597
  %v599 = vand.u32 %v174, 4294901760
  %v600 = vsub.f32 %v174, %v599
  %601 = vmatpush1.msra.mxu0 %v600
  %v602 = vand.u32 %v173, 4294901760
  %v603 = vsub.f32 %v173, %v602
  %604 = vmatprep.subr.mxu0 %v603
  %v605 = vand.u32 %v172, 4294901760
  %v606 = vsub.f32 %v172, %v605
  %607 = vmatpush1.msra.mxu0 %v606
  %v608 = vand.u32 %v171, 4294901760
  %v609 = vsub.f32 %v171, %v608
  %610 = vmatprep.subr.mxu0 %v609
  %v611 = vand.u32 %v170, 4294901760
  %v612 = vsub.f32 %v170, %v611
  %613 = vmatpush1.msra.mxu0 %v612
  %v614 = vand.u32 %v169, 4294901760
  %v615 = vsub.f32 %v169, %v614
  %616 = vmatprep.subr.mxu0 %v615
  %v617 = vand.u32 %v168, 4294901760
  %v618 = vsub.f32 %v168, %v617
  %619 = vmatpush1.msra.mxu0 %v618
  %v620 = vand.u32 %v167, 4294901760
  %v621 = vsub.f32 %v167, %v620
  %622 = vmatprep.subr.mxu0 %v621
  %v623 = vand.u32 %v166, 4294901760
  %v624 = vsub.f32 %v166, %v623
  %625 = vmatpush1.msra.mxu0 %v624
  %v626 = vand.u32 %v165, 4294901760
  %v627 = vsub.f32 %v165, %v626
  %628 = vmatprep.subr.mxu0 %v627
  %v629 = vand.u32 %v164, 4294901760
  %v630 = vsub.f32 %v164, %v629
  %631 = vmatpush1.msra.mxu0 %v630
  %632 = vmatprep.subr.mxu0 0.0
  %633 = vmatpush2.msra.mxu0 0.0
  %634 = vmatprep.subr.mxu0 0.0
  %635 = vmatpush2.msra.mxu0 0.0
  %636 = vmatprep.subr.mxu0 0.0
  %637 = vmatpush2.msra.mxu0 0.0
  %638 = vmatprep.subr.mxu0 0.0
  %639 = vmatpush2.msra.mxu0 0.0
  %640 = vmatprep.subr.mxu0 0.0
  %641 = vmatpush2.msra.mxu0 0.0
  %642 = vmatprep.subr.mxu0 0.0
  %643 = vmatpush2.msra.mxu0 0.0
  %644 = vmatprep.subr.mxu0 0.0
  %645 = vmatpush2.msra.mxu0 0.0
  %646 = vmatprep.subr.mxu0 0.0
  %647 = vmatpush2.msra.mxu0 0.0
  %648 = vmatprep.subr.mxu0 0.0
  %649 = vmatpush2.msra.mxu0 0.0
  %650 = vmatprep.subr.mxu0 0.0
  %651 = vmatpush2.msra.mxu0 0.0
  %652 = vmatprep.subr.mxu0 0.0
  %653 = vmatpush2.msra.mxu0 0.0
  %654 = vmatprep.subr.mxu0 0.0
  %655 = vmatpush2.msra.mxu0 0.0
  %656 = vmatprep.subr.mxu0 0.0
  %657 = vmatpush2.msra.mxu0 0.0
  %658 = vmatprep.subr.mxu0 0.0
  %659 = vmatpush2.msra.mxu0 0.0
  %660 = vmatprep.subr.mxu0 0.0
  %661 = vmatpush2.msra.mxu0 0.0
  %662 = vmatprep.subr.mxu0 0.0
  %663 = vmatpush2.msra.mxu0 0.0
  %664 = vmatprep.mubr.f32.mxu0 0.0
  %v665 = vand.u32 %v25, 4294901760
  %v666 = vsub.f32 %v25, %v665
  %667 = vmatmul.mubr.f32.gmra.mxu0 %v666
  %v668 = vpop.f32.mrf.mxu0
  %v669 = vadd.f32 %v532, %v668
  %v670 = vpop.f32.mrf.mxu0
  %v671 = vadd.f32 %v534, %v670
  %672 = vdwg.mxu0
  %v673 = vand.u32 %v195, 4294901760
  %674 = vmatprep.subr.mxu0 %v673
  %v675 = vand.u32 %v194, 4294901760
  %676 = vmatpush1.msra.mxu0 %v675
  %v677 = vand.u32 %v193, 4294901760
  %678 = vmatprep.subr.mxu0 %v677
  %v679 = vand.u32 %v192, 4294901760
  %680 = vmatpush1.msra.mxu0 %v679
  %v681 = vand.u32 %v191, 4294901760
  %682 = vmatprep.subr.mxu0 %v681
  %v683 = vand.u32 %v190, 4294901760
  %684 = vmatpush1.msra.mxu0 %v683
  %v685 = vand.u32 %v189, 4294901760
  %686 = vmatprep.subr.mxu0 %v685
  %v687 = vand.u32 %v188, 4294901760
  %688 = vmatpush1.msra.mxu0 %v687
  %v689 = vand.u32 %v187, 4294901760
  %690 = vmatprep.subr.mxu0 %v689
  %v691 = vand.u32 %v186, 4294901760
  %692 = vmatpush1.msra.mxu0 %v691
  %v693 = vand.u32 %v185, 4294901760
  %694 = vmatprep.subr.mxu0 %v693
  %v695 = vand.u32 %v184, 4294901760
  %696 = vmatpush1.msra.mxu0 %v695
  %v697 = vand.u32 %v183, 4294901760
  %698 = vmatprep.subr.mxu0 %v697
  %v699 = vand.u32 %v182, 4294901760
  %700 = vmatpush1.msra.mxu0 %v699
  %v701 = vand.u32 %v181, 4294901760
  %702 = vmatprep.subr.mxu0 %v701
  %v703 = vand.u32 %v180, 4294901760
  %704 = vmatpush1.msra.mxu0 %v703
  %v705 = vand.u32 %v179, 4294901760
  %706 = vmatprep.subr.mxu0 %v705
  %v707 = vand.u32 %v178, 4294901760
  %708 = vmatpush1.msra.mxu0 %v707
  %v709 = vand.u32 %v177, 4294901760
  %710 = vmatprep.subr.mxu0 %v709
  %v711 = vand.u32 %v176, 4294901760
  %712 = vmatpush1.msra.mxu0 %v711
  %v713 = vand.u32 %v175, 4294901760
  %714 = vmatprep.subr.mxu0 %v713
  %v715 = vand.u32 %v174, 4294901760
  %716 = vmatpush1.msra.mxu0 %v715
  %v717 = vand.u32 %v173, 4294901760
  %718 = vmatprep.subr.mxu0 %v717
  %v719 = vand.u32 %v172, 4294901760
  %720 = vmatpush1.msra.mxu0 %v719
  %v721 = vand.u32 %v171, 4294901760
  %722 = vmatprep.subr.mxu0 %v721
  %v723 = vand.u32 %v170, 4294901760
  %724 = vmatpush1.msra.mxu0 %v723
  %v725 = vand.u32 %v169, 4294901760
  %726 = vmatprep.subr.mxu0 %v725
  %v727 = vand.u32 %v168, 4294901760
  %728 = vmatpush1.msra.mxu0 %v727
  %v729 = vand.u32 %v167, 4294901760
  %730 = vmatprep.subr.mxu0 %v729
  %v731 = vand.u32 %v166, 4294901760
  %732 = vmatpush1.msra.mxu0 %v731
  %v733 = vand.u32 %v165, 4294901760
  %734 = vmatprep.subr.mxu0 %v733
  %v735 = vand.u32 %v164, 4294901760
  %736 = vmatpush1.msra.mxu0 %v735
  %737 = vmatprep.subr.mxu0 0.0
  %738 = vmatpush2.msra.mxu0 0.0
  %739 = vmatprep.subr.mxu0 0.0
  %740 = vmatpush2.msra.mxu0 0.0
  %741 = vmatprep.subr.mxu0 0.0
  %742 = vmatpush2.msra.mxu0 0.0
  %743 = vmatprep.subr.mxu0 0.0
  %744 = vmatpush2.msra.mxu0 0.0
  %745 = vmatprep.subr.mxu0 0.0
  %746 = vmatpush2.msra.mxu0 0.0
  %747 = vmatprep.subr.mxu0 0.0
  %748 = vmatpush2.msra.mxu0 0.0
  %749 = vmatprep.subr.mxu0 0.0
  %750 = vmatpush2.msra.mxu0 0.0
  %751 = vmatprep.subr.mxu0 0.0
  %752 = vmatpush2.msra.mxu0 0.0
  %753 = vmatprep.subr.mxu0 0.0
  %754 = vmatpush2.msra.mxu0 0.0
  %755 = vmatprep.subr.mxu0 0.0
  %756 = vmatpush2.msra.mxu0 0.0
  %757 = vmatprep.subr.mxu0 0.0
  %758 = vmatpush2.msra.mxu0 0.0
  %759 = vmatprep.subr.mxu0 0.0
  %760 = vmatpush2.msra.mxu0 0.0
  %761 = vmatprep.subr.mxu0 0.0
  %762 = vmatpush2.msra.mxu0 0.0
  %763 = vmatprep.subr.mxu0 0.0
  %764 = vmatpush2.msra.mxu0 0.0
  %765 = vmatprep.subr.mxu0 0.0
  %766 = vmatpush2.msra.mxu0 0.0
  %767 = vmatprep.subr.mxu0 0.0
  %768 = vmatpush2.msra.mxu0 0.0
  %769 = vmatprep.mubr.f32.mxu0 0.0
  %v770 = vand.u32 %v25, 4294901760
  %v771 = vsub.f32 %v25, %v770
  %v772 = vand.u32 %v771, 4294901760
  %773 = vmatmul.mubr.f32.gmra.mxu0 %v772
  %v774 = vpop.f32.mrf.mxu0
  %v775 = vadd.f32 %v669, %v774
  %v776 = vpop.f32.mrf.mxu0
  %v777 = vadd.f32 %v671, %v776
  %778 = vdwg.mxu0
  %v779 = vand.u32 %v195, 4294901760
  %v780 = vsub.f32 %v195, %v779
  %v781 = vand.u32 %v780, 4294901760
  %782 = vmatprep.subr.mxu0 %v781
  %v783 = vand.u32 %v194, 4294901760
  %v784 = vsub.f32 %v194, %v783
  %v785 = vand.u32 %v784, 4294901760
  %786 = vmatpush1.msra.mxu0 %v785
  %v787 = vand.u32 %v193, 4294901760
  %v788 = vsub.f32 %v193, %v787
  %v789 = vand.u32 %v788, 4294901760
  %790 = vmatprep.subr.mxu0 %v789
  %v791 = vand.u32 %v192, 4294901760
  %v792 = vsub.f32 %v192, %v791
  %v793 = vand.u32 %v792, 4294901760
  %794 = vmatpush1.msra.mxu0 %v793
  %v795 = vand.u32 %v191, 4294901760
  %v796 = vsub.f32 %v191, %v795
  %v797 = vand.u32 %v796, 4294901760
  %798 = vmatprep.subr.mxu0 %v797
  %v799 = vand.u32 %v190, 4294901760
  %v800 = vsub.f32 %v190, %v799
  %v801 = vand.u32 %v800, 4294901760
  %802 = vmatpush1.msra.mxu0 %v801
  %v803 = vand.u32 %v189, 4294901760
  %v804 = vsub.f32 %v189, %v803
  %v805 = vand.u32 %v804, 4294901760
  %806 = vmatprep.subr.mxu0 %v805
  %v807 = vand.u32 %v188, 4294901760
  %v808 = vsub.f32 %v188, %v807
  %v809 = vand.u32 %v808, 4294901760
  %810 = vmatpush1.msra.mxu0 %v809
  %v811 = vand.u32 %v187, 4294901760
  %v812 = vsub.f32 %v187, %v811
  %v813 = vand.u32 %v812, 4294901760
  %814 = vmatprep.subr.mxu0 %v813
  %v815 = vand.u32 %v186, 4294901760
  %v816 = vsub.f32 %v186, %v815
  %v817 = vand.u32 %v816, 4294901760
  %818 = vmatpush1.msra.mxu0 %v817
  %v819 = vand.u32 %v185, 4294901760
  %v820 = vsub.f32 %v185, %v819
  %v821 = vand.u32 %v820, 4294901760
  %822 = vmatprep.subr.mxu0 %v821
  %v823 = vand.u32 %v184, 4294901760
  %v824 = vsub.f32 %v184, %v823
  %v825 = vand.u32 %v824, 4294901760
  %826 = vmatpush1.msra.mxu0 %v825
  %v827 = vand.u32 %v183, 4294901760
  %v828 = vsub.f32 %v183, %v827
  %v829 = vand.u32 %v828, 4294901760
  %830 = vmatprep.subr.mxu0 %v829
  %v831 = vand.u32 %v182, 4294901760
  %v832 = vsub.f32 %v182, %v831
  %v833 = vand.u32 %v832, 4294901760
  %834 = vmatpush1.msra.mxu0 %v833
  %v835 = vand.u32 %v181, 4294901760
  %v836 = vsub.f32 %v181, %v835
  %v837 = vand.u32 %v836, 4294901760
  %838 = vmatprep.subr.mxu0 %v837
  %v839 = vand.u32 %v180, 4294901760
  %v840 = vsub.f32 %v180, %v839
  %v841 = vand.u32 %v840, 4294901760
  %842 = vmatpush1.msra.mxu0 %v841
  %v843 = vand.u32 %v179, 4294901760
  %v844 = vsub.f32 %v179, %v843
  %v845 = vand.u32 %v844, 4294901760
  %846 = vmatprep.subr.mxu0 %v845
  %v847 = vand.u32 %v178, 4294901760
  %v848 = vsub.f32 %v178, %v847
  %v849 = vand.u32 %v848, 4294901760
  %850 = vmatpush1.msra.mxu0 %v849
  %v851 = vand.u32 %v177, 4294901760
  %v852 = vsub.f32 %v177, %v851
  %v853 = vand.u32 %v852, 4294901760
  %854 = vmatprep.subr.mxu0 %v853
  %v855 = vand.u32 %v176, 4294901760
  %v856 = vsub.f32 %v176, %v855
  %v857 = vand.u32 %v856, 4294901760
  %858 = vmatpush1.msra.mxu0 %v857
  %v859 = vand.u32 %v175, 4294901760
  %v860 = vsub.f32 %v175, %v859
  %v861 = vand.u32 %v860, 4294901760
  %862 = vmatprep.subr.mxu0 %v861
  %v863 = vand.u32 %v174, 4294901760
  %v864 = vsub.f32 %v174, %v863
  %v865 = vand.u32 %v864, 4294901760
  %866 = vmatpush1.msra.mxu0 %v865
  %v867 = vand.u32 %v173, 4294901760
  %v868 = vsub.f32 %v173, %v867
  %v869 = vand.u32 %v868, 4294901760
  %870 = vmatprep.subr.mxu0 %v869
  %v871 = vand.u32 %v172, 4294901760
  %v872 = vsub.f32 %v172, %v871
  %v873 = vand.u32 %v872, 4294901760
  %874 = vmatpush1.msra.mxu0 %v873
  %v875 = vand.u32 %v171, 4294901760
  %v876 = vsub.f32 %v171, %v875
  %v877 = vand.u32 %v876, 4294901760
  %878 = vmatprep.subr.mxu0 %v877
  %v879 = vand.u32 %v170, 4294901760
  %v880 = vsub.f32 %v170, %v879
  %v881 = vand.u32 %v880, 4294901760
  %882 = vmatpush1.msra.mxu0 %v881
  %v883 = vand.u32 %v169, 4294901760
  %v884 = vsub.f32 %v169, %v883
  %v885 = vand.u32 %v884, 4294901760
  %886 = vmatprep.subr.mxu0 %v885
  %v887 = vand.u32 %v168, 4294901760
  %v888 = vsub.f32 %v168, %v887
  %v889 = vand.u32 %v888, 4294901760
  %890 = vmatpush1.msra.mxu0 %v889
  %v891 = vand.u32 %v167, 4294901760
  %v892 = vsub.f32 %v167, %v891
  %v893 = vand.u32 %v892, 4294901760
  %894 = vmatprep.subr.mxu0 %v893
  %v895 = vand.u32 %v166, 4294901760
  %v896 = vsub.f32 %v166, %v895
  %v897 = vand.u32 %v896, 4294901760
  %898 = vmatpush1.msra.mxu0 %v897
  %v899 = vand.u32 %v165, 4294901760
  %v900 = vsub.f32 %v165, %v899
  %v901 = vand.u32 %v900, 4294901760
  %902 = vmatprep.subr.mxu0 %v901
  %v903 = vand.u32 %v164, 4294901760
  %v904 = vsub.f32 %v164, %v903
  %v905 = vand.u32 %v904, 4294901760
  %906 = vmatpush1.msra.mxu0 %v905
  %907 = vmatprep.subr.mxu0 0.0
  %908 = vmatpush2.msra.mxu0 0.0
  %909 = vmatprep.subr.mxu0 0.0
  %910 = vmatpush2.msra.mxu0 0.0
  %911 = vmatprep.subr.mxu0 0.0
  %912 = vmatpush2.msra.mxu0 0.0
  %913 = vmatprep.subr.mxu0 0.0
  %914 = vmatpush2.msra.mxu0 0.0
  %915 = vmatprep.subr.mxu0 0.0
  %916 = vmatpush2.msra.mxu0 0.0
  %917 = vmatprep.subr.mxu0 0.0
  %918 = vmatpush2.msra.mxu0 0.0
  %919 = vmatprep.subr.mxu0 0.0
  %920 = vmatpush2.msra.mxu0 0.0
  %921 = vmatprep.subr.mxu0 0.0
  %922 = vmatpush2.msra.mxu0 0.0
  %923 = vmatprep.subr.mxu0 0.0
  %924 = vmatpush2.msra.mxu0 0.0
  %925 = vmatprep.subr.mxu0 0.0
  %926 = vmatpush2.msra.mxu0 0.0
  %927 = vmatprep.subr.mxu0 0.0
  %928 = vmatpush2.msra.mxu0 0.0
  %929 = vmatprep.subr.mxu0 0.0
  %930 = vmatpush2.msra.mxu0 0.0
  %931 = vmatprep.subr.mxu0 0.0
  %932 = vmatpush2.msra.mxu0 0.0
  %933 = vmatprep.subr.mxu0 0.0
  %934 = vmatpush2.msra.mxu0 0.0
  %935 = vmatprep.subr.mxu0 0.0
  %936 = vmatpush2.msra.mxu0 0.0
  %937 = vmatprep.subr.mxu0 0.0
  %938 = vmatpush2.msra.mxu0 0.0
  %939 = vmatprep.mubr.f32.mxu0 0.0
  %v940 = vand.u32 %v25, 4294901760
  %941 = vmatmul.mubr.f32.gmra.mxu0 %v940
  %v942 = vpop.f32.mrf.mxu0
  %v943 = vadd.f32 %v775, %v942
  %v944 = vpop.f32.mrf.mxu0
  %v945 = vadd.f32 %v777, %v944
  %946 = vdwg.mxu0
  %v947 = vand.u32 %v195, 4294901760
  %948 = vmatprep.subr.mxu0 %v947
  %v949 = vand.u32 %v194, 4294901760
  %950 = vmatpush1.msra.mxu0 %v949
  %v951 = vand.u32 %v193, 4294901760
  %952 = vmatprep.subr.mxu0 %v951
  %v953 = vand.u32 %v192, 4294901760
  %954 = vmatpush1.msra.mxu0 %v953
  %v955 = vand.u32 %v191, 4294901760
  %956 = vmatprep.subr.mxu0 %v955
  %v957 = vand.u32 %v190, 4294901760
  %958 = vmatpush1.msra.mxu0 %v957
  %v959 = vand.u32 %v189, 4294901760
  %960 = vmatprep.subr.mxu0 %v959
  %v961 = vand.u32 %v188, 4294901760
  %962 = vmatpush1.msra.mxu0 %v961
  %v963 = vand.u32 %v187, 4294901760
  %964 = vmatprep.subr.mxu0 %v963
  %v965 = vand.u32 %v186, 4294901760
  %966 = vmatpush1.msra.mxu0 %v965
  %v967 = vand.u32 %v185, 4294901760
  %968 = vmatprep.subr.mxu0 %v967
  %v969 = vand.u32 %v184, 4294901760
  %970 = vmatpush1.msra.mxu0 %v969
  %v971 = vand.u32 %v183, 4294901760
  %972 = vmatprep.subr.mxu0 %v971
  %v973 = vand.u32 %v182, 4294901760
  %974 = vmatpush1.msra.mxu0 %v973
  %v975 = vand.u32 %v181, 4294901760
  %976 = vmatprep.subr.mxu0 %v975
  %v977 = vand.u32 %v180, 4294901760
  %978 = vmatpush1.msra.mxu0 %v977
  %v979 = vand.u32 %v179, 4294901760
  %980 = vmatprep.subr.mxu0 %v979
  %v981 = vand.u32 %v178, 4294901760
  %982 = vmatpush1.msra.mxu0 %v981
  %v983 = vand.u32 %v177, 4294901760
  %984 = vmatprep.subr.mxu0 %v983
  %v985 = vand.u32 %v176, 4294901760
  %986 = vmatpush1.msra.mxu0 %v985
  %v987 = vand.u32 %v175, 4294901760
  %988 = vmatprep.subr.mxu0 %v987
  %v989 = vand.u32 %v174, 4294901760
  %990 = vmatpush1.msra.mxu0 %v989
  %v991 = vand.u32 %v173, 4294901760
  %992 = vmatprep.subr.mxu0 %v991
  %v993 = vand.u32 %v172, 4294901760
  %994 = vmatpush1.msra.mxu0 %v993
  %v995 = vand.u32 %v171, 4294901760
  %996 = vmatprep.subr.mxu0 %v995
  %v997 = vand.u32 %v170, 4294901760
  %998 = vmatpush1.msra.mxu0 %v997
  %v999 = vand.u32 %v169, 4294901760
  %1000 = vmatprep.subr.mxu0 %v999
  %v1001 = vand.u32 %v168, 4294901760
  %1002 = vmatpush1.msra.mxu0 %v1001
  %v1003 = vand.u32 %v167, 4294901760
  %1004 = vmatprep.subr.mxu0 %v1003
  %v1005 = vand.u32 %v166, 4294901760
  %1006 = vmatpush1.msra.mxu0 %v1005
  %v1007 = vand.u32 %v165, 4294901760
  %1008 = vmatprep.subr.mxu0 %v1007
  %v1009 = vand.u32 %v164, 4294901760
  %1010 = vmatpush1.msra.mxu0 %v1009
  %1011 = vmatprep.subr.mxu0 0.0
  %1012 = vmatpush2.msra.mxu0 0.0
  %1013 = vmatprep.subr.mxu0 0.0
  %1014 = vmatpush2.msra.mxu0 0.0
  %1015 = vmatprep.subr.mxu0 0.0
  %1016 = vmatpush2.msra.mxu0 0.0
  %1017 = vmatprep.subr.mxu0 0.0
  %1018 = vmatpush2.msra.mxu0 0.0
  %1019 = vmatprep.subr.mxu0 0.0
  %1020 = vmatpush2.msra.mxu0 0.0
  %1021 = vmatprep.subr.mxu0 0.0
  %1022 = vmatpush2.msra.mxu0 0.0
  %1023 = vmatprep.subr.mxu0 0.0
  %1024 = vmatpush2.msra.mxu0 0.0
  %1025 = vmatprep.subr.mxu0 0.0
  %1026 = vmatpush2.msra.mxu0 0.0
  %1027 = vmatprep.subr.mxu0 0.0
  %1028 = vmatpush2.msra.mxu0 0.0
  %1029 = vmatprep.subr.mxu0 0.0
  %1030 = vmatpush2.msra.mxu0 0.0
  %1031 = vmatprep.subr.mxu0 0.0
  %1032 = vmatpush2.msra.mxu0 0.0
  %1033 = vmatprep.subr.mxu0 0.0
  %1034 = vmatpush2.msra.mxu0 0.0
  %1035 = vmatprep.subr.mxu0 0.0
  %1036 = vmatpush2.msra.mxu0 0.0
  %1037 = vmatprep.subr.mxu0 0.0
  %1038 = vmatpush2.msra.mxu0 0.0
  %1039 = vmatprep.subr.mxu0 0.0
  %1040 = vmatpush2.msra.mxu0 0.0
  %1041 = vmatprep.subr.mxu0 0.0
  %1042 = vmatpush2.msra.mxu0 0.0
  %1043 = vmatprep.mubr.f32.mxu0 0.0
  %v1044 = vand.u32 %v25, 4294901760
  %1045 = vmatmul.mubr.f32.gmra.mxu0 %v1044
  %v1046 = vpop.f32.mrf.mxu0
  %v1047 = vadd.f32 %v943, %v1046
  %v1048 = vpop.f32.mrf.mxu0
  %v1049 = vadd.f32 %v945, %v1048
  %1050 = vdwg.mxu0
  %v1051 = vmax.f32 %v1047, 0.0
  %v1052 = vmax.f32 %v1049, 0.0
  %v1055 = vrot.slane %v1051, 1
  %v1056 = vrot.slane %v1052, 1
  %v1059 = vmul.f32 %v1051, %v1055
  %v1060 = vmul.f32 %v1052, %v1056
  %v1061 = vadd.f32 %v23, %v1059
  %v1062 = vadd.f32 %v24, %v1060
  %v1065 = vrot.slane %v1047, 2
  %v1066 = vrot.slane %v1049, 2
  %v1069 = vadd.f32 %v1061, %v1065
  %v1070 = vadd.f32 %v1062, %v1066
  %v1071 = vmax.f32 %v1069, 0.0
  %v1072 = vmax.f32 %v1070, 0.0
  %v1073 = vand.u32 2147483647, %v1069
  %v1074 = vand.u32 2147483647, %v1070
  %v1075 = vsub.f32 0.0, %v1073
  %v1076 = vsub.f32 0.0, %v1074
  %v1077 = vmul.f32 %v1075, 1.442695
  %v1078 = vpow.pop %v1077
  %v1079 = vmul.f32 %v1076, 1.442695
  %v1080 = vpow.pop %v1079
  %v1081 = vadd.f32 %v1078, 1.0
  %v1082 = vlog2.pop %v1081
  %v1083 = vmul.f32 %v1082, 0.6931472
  %v1084 = vmul.f32 -0.5, %v1078
  %v1085 = vadd.f32 %v1084, 1.0
  %v1086 = vmul.f32 %v1085, %v1078
  %v1087 = vand.u32 2147483647, %v1078
  %vm1088 = vcmp.lt.f32.partialorder %v1087, 0.0004427343
  %v1089 = vsel %vm1088, %v1086, %v1083
  %v1090 = vadd.f32 %v1080, 1.0
  %v1091 = vlog2.pop %v1090
  %v1092 = vmul.f32 %v1091, 0.6931472
  %v1093 = vmul.f32 -0.5, %v1080
  %v1094 = vadd.f32 %v1093, 1.0
  %v1095 = vmul.f32 %v1094, %v1080
  %v1096 = vand.u32 2147483647, %v1080
  %vm1097 = vcmp.lt.f32.partialorder %v1096, 0.0004427343
  %v1098 = vsel %vm1097, %v1095, %v1092
  %v1099 = vadd.f32 %v1071, %v1089
  %v1100 = vadd.f32 %v1072, %v1098
  %v1103 = vcombine.low %v1099, %v1100
  %v1105 = vunpack.c.l.s4 1966171168
  %v1106 = vunpack.c.0.s8 %v1105
  %v1107 = vlaneseq
  %v1108 = vshrl.u32 %v1107, 7
  %v1109 = vsub.s32 %v1106, %v1108
  %v1110 = vrot.slane %v1103, %v1109
  %v1112 = vunpack.c.l.s4 1966171168
  %v1113 = vunpack.c.0.s8 %v1112
  %v1114 = vlaneseq
  %v1115 = vshrl.u32 %v1114, 7
  %v1116 = vsub.s32 %v1113, %v1115
  %v1117 = vrot.slane %v1110, %v1116
  %v1119 = vlaneseq
  %vm1120 = vcmp.ge.s32.totalorder %v1119, 0
  %vm1121 = vcmp.lt.s32.totalorder %v1119, 256
  %vm1122 = vmand %vm1120, %vm1121
  %1123 = vst.msk [vmem:[#allocation2] ss:$8 sm:$0x3] %vm1122, %v1117
  %1124 = vst.msk [vmem:[#allocation2] ss:$8 sm:$0x0] %vm1122, %v1117
  %v1125 = vlaneseq
  %v1126 = vshrl.u32 %v1125, 7
  %v1127 = vsub.s32 1, %v1126
  %v1128 = vrot.slane %v23, %v1127
  %v1129 = vlaneseq
  %v1130 = vshrl.u32 %v1129, 7
  %v1131 = vsub.s32 1, %v1130
  %v1132 = vrot.slane %v24, %v1131
  %v1133 = vld [vmem:[%s1] sm:$0xff]
  %v1134 = vld [vmem:[%s1 + $0x8] sm:$0xff]
  %v1135 = vld [vmem:[%s1 + $0x10] sm:$0xff]
  %v1136 = vld [vmem:[%s1 + $0x18] sm:$0xff]
  %v1137 = vld [vmem:[%s1 + $0x20] sm:$0xff]
  %v1138 = vld [vmem:[%s1 + $0x28] sm:$0xff]
  %v1139 = vld [vmem:[%s1 + $0x30] sm:$0xff]
  %v1140 = vld [vmem:[%s1 + $0x38] sm:$0xff]
  %v1141 = vld [vmem:[%s1 + $0x40] sm:$0xff]
  %v1142 = vld [vmem:[%s1 + $0x48] sm:$0xff]
  %v1143 = vld [vmem:[%s1 + $0x50] sm:$0xff]
  %v1144 = vld [vmem:[%s1 + $0x58] sm:$0xff]
  %v1145 = vld [vmem:[%s1 + $0x60] sm:$0xff]
  %v1146 = vld [vmem:[%s1 + $0x68] sm:$0xff]
  %v1147 = vld [vmem:[%s1 + $0x70] sm:$0xff]
  %v1148 = vld [vmem:[%s1 + $0x78] sm:$0xff]
  %v1149 = vld [vmem:[%s1 + $0x80] sm:$0xff]
  %v1150 = vld [vmem:[%s1 + $0x88] sm:$0xff]
  %v1151 = vld [vmem:[%s1 + $0x90] sm:$0xff]
  %v1152 = vld [vmem:[%s1 + $0x98] sm:$0xff]
  %v1153 = vld [vmem:[%s1 + $0xa0] sm:$0xff]
  %v1154 = vld [vmem:[%s1 + $0xa8] sm:$0xff]
  %v1155 = vld [vmem:[%s1 + $0xb0] sm:$0xff]
  %v1156 = vld [vmem:[%s1 + $0xb8] sm:$0xff]
  %v1157 = vld [vmem:[%s1 + $0xc0] sm:$0xff]
  %v1158 = vld [vmem:[%s1 + $0xc8] sm:$0xff]
  %v1159 = vld [vmem:[%s1 + $0xd0] sm:$0xff]
  %v1160 = vld [vmem:[%s1 + $0xd8] sm:$0xff]
  %v1161 = vld [vmem:[%s1 + $0xe0] sm:$0xff]
  %v1162 = vld [vmem:[%s1 + $0xe8] sm:$0xff]
  %v1163 = vld [vmem:[%s1 + $0xf0] sm:$0xff]
  %v1164 = vld [vmem:[%s1 + $0xf8] sm:$0xff]
  %v1165 = vmul.f32 %v1128, %v1133
  %v1166 = vmul.f32 %v1132, %v1134
  %v1167 = vmul.f32 %v1128, %v1135
  %v1168 = vmul.f32 %v1132, %v1136
  %v1169 = vmul.f32 %v1128, %v1137
  %v1170 = vmul.f32 %v1132, %v1138
  %v1171 = vmul.f32 %v1128, %v1139
  %v1172 = vmul.f32 %v1132, %v1140
  %v1173 = vmul.f32 %v1128, %v1141
  %v1174 = vmul.f32 %v1132, %v1142
  %v1175 = vmul.f32 %v1128, %v1143
  %v1176 = vmul.f32 %v1132, %v1144
  %v1177 = vmul.f32 %v1128, %v1145
  %v1178 = vmul.f32 %v1132, %v1146
  %v1179 = vmul.f32 %v1128, %v1147
  %v1180 = vmul.f32 %v1132, %v1148
  %v1181 = vmul.f32 %v1128, %v1149
  %v1182 = vmul.f32 %v1132, %v1150
  %v1183 = vmul.f32 %v1128, %v1151
  %v1184 = vmul.f32 %v1132, %v1152
  %v1185 = vmul.f32 %v1128, %v1153
  %v1186 = vmul.f32 %v1132, %v1154
  %v1187 = vmul.f32 %v1128, %v1155
  %v1188 = vmul.f32 %v1132, %v1156
  %v1189 = vmul.f32 %v1128, %v1157
  %v1190 = vmul.f32 %v1132, %v1158
  %v1191 = vmul.f32 %v1128, %v1159
  %v1192 = vmul.f32 %v1132, %v1160
  %v1193 = vmul.f32 %v1128, %v1161
  %v1194 = vmul.f32 %v1132, %v1162
  %v1195 = vmul.f32 %v1128, %v1163
  %v1196 = vmul.f32 %v1132, %v1164
  %v1197 = vld [vmem:[%s2] sm:$0xff]
  %v1198 = vld [vmem:[%s2 + $0x8] sm:$0xff]
  %v1199 = vld [vmem:[%s2 + $0x10] sm:$0xff]
  %v1200 = vld [vmem:[%s2 + $0x18] sm:$0xff]
  %v1201 = vld [vmem:[%s2 + $0x20] sm:$0xff]
  %v1202 = vld [vmem:[%s2 + $0x28] sm:$0xff]
  %v1203 = vld [vmem:[%s2 + $0x30] sm:$0xff]
  %v1204 = vld [vmem:[%s2 + $0x38] sm:$0xff]
  %v1205 = vld [vmem:[%s2 + $0x40] sm:$0xff]
  %v1206 = vld [vmem:[%s2 + $0x48] sm:$0xff]
  %v1207 = vld [vmem:[%s2 + $0x50] sm:$0xff]
  %v1208 = vld [vmem:[%s2 + $0x58] sm:$0xff]
  %v1209 = vld [vmem:[%s2 + $0x60] sm:$0xff]
  %v1210 = vld [vmem:[%s2 + $0x68] sm:$0xff]
  %v1211 = vld [vmem:[%s2 + $0x70] sm:$0xff]
  %v1212 = vld [vmem:[%s2 + $0x78] sm:$0xff]
  %v1213 = vld [vmem:[%s2 + $0x80] sm:$0xff]
  %v1214 = vld [vmem:[%s2 + $0x88] sm:$0xff]
  %v1215 = vld [vmem:[%s2 + $0x90] sm:$0xff]
  %v1216 = vld [vmem:[%s2 + $0x98] sm:$0xff]
  %v1217 = vld [vmem:[%s2 + $0xa0] sm:$0xff]
  %v1218 = vld [vmem:[%s2 + $0xa8] sm:$0xff]
  %v1219 = vld [vmem:[%s2 + $0xb0] sm:$0xff]
  %v1220 = vld [vmem:[%s2 + $0xb8] sm:$0xff]
  %v1221 = vld [vmem:[%s2 + $0xc0] sm:$0xff]
  %v1222 = vld [vmem:[%s2 + $0xc8] sm:$0xff]
  %v1223 = vld [vmem:[%s2 + $0xd0] sm:$0xff]
  %v1224 = vld [vmem:[%s2 + $0xd8] sm:$0xff]
  %v1225 = vld [vmem:[%s2 + $0xe0] sm:$0xff]
  %v1226 = vld [vmem:[%s2 + $0xe8] sm:$0xff]
  %v1227 = vld [vmem:[%s2 + $0xf0] sm:$0xff]
  %v1228 = vld [vmem:[%s2 + $0xf8] sm:$0xff]
  %v1229 = vadd.f32 %v1165, %v1197
  %v1230 = vadd.f32 %v1166, %v1198
  %v1231 = vadd.f32 %v1167, %v1199
  %v1232 = vadd.f32 %v1168, %v1200
  %v1233 = vadd.f32 %v1169, %v1201
  %v1234 = vadd.f32 %v1170, %v1202
  %v1235 = vadd.f32 %v1171, %v1203
  %v1236 = vadd.f32 %v1172, %v1204
  %v1237 = vadd.f32 %v1173, %v1205
  %v1238 = vadd.f32 %v1174, %v1206
  %v1239 = vadd.f32 %v1175, %v1207
  %v1240 = vadd.f32 %v1176, %v1208
  %v1241 = vadd.f32 %v1177, %v1209
  %v1242 = vadd.f32 %v1178, %v1210
  %v1243 = vadd.f32 %v1179, %v1211
  %v1244 = vadd.f32 %v1180, %v1212
  %v1245 = vadd.f32 %v1181, %v1213
  %v1246 = vadd.f32 %v1182, %v1214
  %v1247 = vadd.f32 %v1183, %v1215
  %v1248 = vadd.f32 %v1184, %v1216
  %v1249 = vadd.f32 %v1185, %v1217
  %v1250 = vadd.f32 %v1186, %v1218
  %v1251 = vadd.f32 %v1187, %v1219
  %v1252 = vadd.f32 %v1188, %v1220
  %v1253 = vadd.f32 %v1189, %v1221
  %v1254 = vadd.f32 %v1190, %v1222
  %v1255 = vadd.f32 %v1191, %v1223
  %v1256 = vadd.f32 %v1192, %v1224
  %v1257 = vadd.f32 %v1193, %v1225
  %v1258 = vadd.f32 %v1194, %v1226
  %v1259 = vadd.f32 %v1195, %v1227
  %v1260 = vadd.f32 %v1196, %v1228
  %v1261 = vmax.f32 %v1229, 0.0
  %v1262 = vmax.f32 %v1230, 0.0
  %v1263 = vmax.f32 %v1231, 0.0
  %v1264 = vmax.f32 %v1232, 0.0
  %v1265 = vmax.f32 %v1233, 0.0
  %v1266 = vmax.f32 %v1234, 0.0
  %v1267 = vmax.f32 %v1235, 0.0
  %v1268 = vmax.f32 %v1236, 0.0
  %v1269 = vmax.f32 %v1237, 0.0
  %v1270 = vmax.f32 %v1238, 0.0
  %v1271 = vmax.f32 %v1239, 0.0
  %v1272 = vmax.f32 %v1240, 0.0
  %v1273 = vmax.f32 %v1241, 0.0
  %v1274 = vmax.f32 %v1242, 0.0
  %v1275 = vmax.f32 %v1243, 0.0
  %v1276 = vmax.f32 %v1244, 0.0
  %v1277 = vmax.f32 %v1245, 0.0
  %v1278 = vmax.f32 %v1246, 0.0
  %v1279 = vmax.f32 %v1247, 0.0
  %v1280 = vmax.f32 %v1248, 0.0
  %v1281 = vmax.f32 %v1249, 0.0
  %v1282 = vmax.f32 %v1250, 0.0
  %v1283 = vmax.f32 %v1251, 0.0
  %v1284 = vmax.f32 %v1252, 0.0
  %v1285 = vmax.f32 %v1253, 0.0
  %v1286 = vmax.f32 %v1254, 0.0
  %v1287 = vmax.f32 %v1255, 0.0
  %v1288 = vmax.f32 %v1256, 0.0
  %v1289 = vmax.f32 %v1257, 0.0
  %v1290 = vmax.f32 %v1258, 0.0
  %v1291 = vmax.f32 %v1259, 0.0
  %v1292 = vmax.f32 %v1260, 0.0
  %v1293 = vand.u32 %v1292, 4294901760
  %1294 = vmatprep.subr.mxu0 %v1293
  %v1295 = vand.u32 %v1291, 4294901760
  %1296 = vmatpush1.msra.mxu0 %v1295
  %v1297 = vand.u32 %v1290, 4294901760
  %1298 = vmatprep.subr.mxu0 %v1297
  %v1299 = vand.u32 %v1289, 4294901760
  %1300 = vmatpush1.msra.mxu0 %v1299
  %v1301 = vand.u32 %v1288, 4294901760
  %1302 = vmatprep.subr.mxu0 %v1301
  %v1303 = vand.u32 %v1287, 4294901760
  %1304 = vmatpush1.msra.mxu0 %v1303
  %v1305 = vand.u32 %v1286, 4294901760
  %1306 = vmatprep.subr.mxu0 %v1305
  %v1307 = vand.u32 %v1285, 4294901760
  %1308 = vmatpush1.msra.mxu0 %v1307
  %v1309 = vand.u32 %v1284, 4294901760
  %1310 = vmatprep.subr.mxu0 %v1309
  %v1311 = vand.u32 %v1283, 4294901760
  %1312 = vmatpush1.msra.mxu0 %v1311
  %v1313 = vand.u32 %v1282, 4294901760
  %1314 = vmatprep.subr.mxu0 %v1313
  %v1315 = vand.u32 %v1281, 4294901760
  %1316 = vmatpush1.msra.mxu0 %v1315
  %v1317 = vand.u32 %v1280, 4294901760
  %1318 = vmatprep.subr.mxu0 %v1317
  %v1319 = vand.u32 %v1279, 4294901760
  %1320 = vmatpush1.msra.mxu0 %v1319
  %v1321 = vand.u32 %v1278, 4294901760
  %1322 = vmatprep.subr.mxu0 %v1321
  %v1323 = vand.u32 %v1277, 4294901760
  %1324 = vmatpush1.msra.mxu0 %v1323
  %v1325 = vand.u32 %v1276, 4294901760
  %1326 = vmatprep.subr.mxu0 %v1325
  %v1327 = vand.u32 %v1275, 4294901760
  %1328 = vmatpush1.msra.mxu0 %v1327
  %v1329 = vand.u32 %v1274, 4294901760
  %1330 = vmatprep.subr.mxu0 %v1329
  %v1331 = vand.u32 %v1273, 4294901760
  %1332 = vmatpush1.msra.mxu0 %v1331
  %v1333 = vand.u32 %v1272, 4294901760
  %1334 = vmatprep.subr.mxu0 %v1333
  %v1335 = vand.u32 %v1271, 4294901760
  %1336 = vmatpush1.msra.mxu0 %v1335
  %v1337 = vand.u32 %v1270, 4294901760
  %1338 = vmatprep.subr.mxu0 %v1337
  %v1339 = vand.u32 %v1269, 4294901760
  %1340 = vmatpush1.msra.mxu0 %v1339
  %v1341 = vand.u32 %v1268, 4294901760
  %1342 = vmatprep.subr.mxu0 %v1341
  %v1343 = vand.u32 %v1267, 4294901760
  %1344 = vmatpush1.msra.mxu0 %v1343
  %v1345 = vand.u32 %v1266, 4294901760
  %1346 = vmatprep.subr.mxu0 %v1345
  %v1347 = vand.u32 %v1265, 4294901760
  %1348 = vmatpush1.msra.mxu0 %v1347
  %v1349 = vand.u32 %v1264, 4294901760
  %1350 = vmatprep.subr.mxu0 %v1349
  %v1351 = vand.u32 %v1263, 4294901760
  %1352 = vmatpush1.msra.mxu0 %v1351
  %v1353 = vand.u32 %v1262, 4294901760
  %1354 = vmatprep.subr.mxu0 %v1353
  %v1355 = vand.u32 %v1261, 4294901760
  %1356 = vmatpush1.msra.mxu0 %v1355
  %1357 = vmatprep.subr.mxu0 0.0
  %1358 = vmatpush2.msra.mxu0 0.0
  %1359 = vmatprep.subr.mxu0 0.0
  %1360 = vmatpush2.msra.mxu0 0.0
  %1361 = vmatprep.subr.mxu0 0.0
  %1362 = vmatpush2.msra.mxu0 0.0
  %1363 = vmatprep.subr.mxu0 0.0
  %1364 = vmatpush2.msra.mxu0 0.0
  %1365 = vmatprep.subr.mxu0 0.0
  %1366 = vmatpush2.msra.mxu0 0.0
  %1367 = vmatprep.subr.mxu0 0.0
  %1368 = vmatpush2.msra.mxu0 0.0
  %1369 = vmatprep.subr.mxu0 0.0
  %1370 = vmatpush2.msra.mxu0 0.0
  %1371 = vmatprep.subr.mxu0 0.0
  %1372 = vmatpush2.msra.mxu0 0.0
  %1373 = vmatprep.subr.mxu0 0.0
  %1374 = vmatpush2.msra.mxu0 0.0
  %1375 = vmatprep.subr.mxu0 0.0
  %1376 = vmatpush2.msra.mxu0 0.0
  %1377 = vmatprep.subr.mxu0 0.0
  %1378 = vmatpush2.msra.mxu0 0.0
  %1379 = vmatprep.subr.mxu0 0.0
  %1380 = vmatpush2.msra.mxu0 0.0
  %1381 = vmatprep.subr.mxu0 0.0
  %1382 = vmatpush2.msra.mxu0 0.0
  %1383 = vmatprep.subr.mxu0 0.0
  %1384 = vmatpush2.msra.mxu0 0.0
  %1385 = vmatprep.subr.mxu0 0.0
  %1386 = vmatpush2.msra.mxu0 0.0
  %1387 = vmatprep.subr.mxu0 0.0
  %1388 = vmatpush2.msra.mxu0 0.0
  %1389 = vmatprep.mubr.f32.mxu0 0.0
  %v1390 = vand.u32 %v25, 4294901760
  %v1391 = vsub.f32 %v25, %v1390
  %v1392 = vand.u32 %v1391, 4294901760
  %v1393 = vsub.f32 %v1391, %v1392
  %v1394 = vand.u32 %v1393, 4294901760
  %1395 = vmatmul.mubr.f32.gmra.mxu0 %v1394
  %v1396 = vpop.f32.mrf.mxu0
  %v1397 = vadd.f32 %v26, %v1396
  %v1398 = vpop.f32.mrf.mxu0
  %v1399 = vadd.f32 %v27, %v1398
  %1400 = vdwg.mxu0
  %v1401 = vand.u32 %v1292, 4294901760
  %v1402 = vsub.f32 %v1292, %v1401
  %v1403 = vand.u32 %v1402, 4294901760
  %v1404 = vsub.f32 %v1402, %v1403
  %v1405 = vand.u32 %v1404, 4294901760
  %1406 = vmatprep.subr.mxu0 %v1405
  %v1407 = vand.u32 %v1291, 4294901760
  %v1408 = vsub.f32 %v1291, %v1407
  %v1409 = vand.u32 %v1408, 4294901760
  %v1410 = vsub.f32 %v1408, %v1409
  %v1411 = vand.u32 %v1410, 4294901760
  %1412 = vmatpush1.msra.mxu0 %v1411
  %v1413 = vand.u32 %v1290, 4294901760
  %v1414 = vsub.f32 %v1290, %v1413
  %v1415 = vand.u32 %v1414, 4294901760
  %v1416 = vsub.f32 %v1414, %v1415
  %v1417 = vand.u32 %v1416, 4294901760
  %1418 = vmatprep.subr.mxu0 %v1417
  %v1419 = vand.u32 %v1289, 4294901760
  %v1420 = vsub.f32 %v1289, %v1419
  %v1421 = vand.u32 %v1420, 4294901760
  %v1422 = vsub.f32 %v1420, %v1421
  %v1423 = vand.u32 %v1422, 4294901760
  %1424 = vmatpush1.msra.mxu0 %v1423
  %v1425 = vand.u32 %v1288, 4294901760
  %v1426 = vsub.f32 %v1288, %v1425
  %v1427 = vand.u32 %v1426, 4294901760
  %v1428 = vsub.f32 %v1426, %v1427
  %v1429 = vand.u32 %v1428, 4294901760
  %1430 = vmatprep.subr.mxu0 %v1429
  %v1431 = vand.u32 %v1287, 4294901760
  %v1432 = vsub.f32 %v1287, %v1431
  %v1433 = vand.u32 %v1432, 4294901760
  %v1434 = vsub.f32 %v1432, %v1433
  %v1435 = vand.u32 %v1434, 4294901760
  %1436 = vmatpush1.msra.mxu0 %v1435
  %v1437 = vand.u32 %v1286, 4294901760
  %v1438 = vsub.f32 %v1286, %v1437
  %v1439 = vand.u32 %v1438, 4294901760
  %v1440 = vsub.f32 %v1438, %v1439
  %v1441 = vand.u32 %v1440, 4294901760
  %1442 = vmatprep.subr.mxu0 %v1441
  %v1443 = vand.u32 %v1285, 4294901760
  %v1444 = vsub.f32 %v1285, %v1443
  %v1445 = vand.u32 %v1444, 4294901760
  %v1446 = vsub.f32 %v1444, %v1445
  %v1447 = vand.u32 %v1446, 4294901760
  %1448 = vmatpush1.msra.mxu0 %v1447
  %v1449 = vand.u32 %v1284, 4294901760
  %v1450 = vsub.f32 %v1284, %v1449
  %v1451 = vand.u32 %v1450, 4294901760
  %v1452 = vsub.f32 %v1450, %v1451
  %v1453 = vand.u32 %v1452, 4294901760
  %1454 = vmatprep.subr.mxu0 %v1453
  %v1455 = vand.u32 %v1283, 4294901760
  %v1456 = vsub.f32 %v1283, %v1455
  %v1457 = vand.u32 %v1456, 4294901760
  %v1458 = vsub.f32 %v1456, %v1457
  %v1459 = vand.u32 %v1458, 4294901760
  %1460 = vmatpush1.msra.mxu0 %v1459
  %v1461 = vand.u32 %v1282, 4294901760
  %v1462 = vsub.f32 %v1282, %v1461
  %v1463 = vand.u32 %v1462, 4294901760
  %v1464 = vsub.f32 %v1462, %v1463
  %v1465 = vand.u32 %v1464, 4294901760
  %1466 = vmatprep.subr.mxu0 %v1465
  %v1467 = vand.u32 %v1281, 4294901760
  %v1468 = vsub.f32 %v1281, %v1467
  %v1469 = vand.u32 %v1468, 4294901760
  %v1470 = vsub.f32 %v1468, %v1469
  %v1471 = vand.u32 %v1470, 4294901760
  %1472 = vmatpush1.msra.mxu0 %v1471
  %v1473 = vand.u32 %v1280, 4294901760
  %v1474 = vsub.f32 %v1280, %v1473
  %v1475 = vand.u32 %v1474, 4294901760
  %v1476 = vsub.f32 %v1474, %v1475
  %v1477 = vand.u32 %v1476, 4294901760
  %1478 = vmatprep.subr.mxu0 %v1477
  %v1479 = vand.u32 %v1279, 4294901760
  %v1480 = vsub.f32 %v1279, %v1479
  %v1481 = vand.u32 %v1480, 4294901760
  %v1482 = vsub.f32 %v1480, %v1481
  %v1483 = vand.u32 %v1482, 4294901760
  %1484 = vmatpush1.msra.mxu0 %v1483
  %v1485 = vand.u32 %v1278, 4294901760
  %v1486 = vsub.f32 %v1278, %v1485
  %v1487 = vand.u32 %v1486, 4294901760
  %v1488 = vsub.f32 %v1486, %v1487
  %v1489 = vand.u32 %v1488, 4294901760
  %1490 = vmatprep.subr.mxu0 %v1489
  %v1491 = vand.u32 %v1277, 4294901760
  %v1492 = vsub.f32 %v1277, %v1491
  %v1493 = vand.u32 %v1492, 4294901760
  %v1494 = vsub.f32 %v1492, %v1493
  %v1495 = vand.u32 %v1494, 4294901760
  %1496 = vmatpush1.msra.mxu0 %v1495
  %v1497 = vand.u32 %v1276, 4294901760
  %v1498 = vsub.f32 %v1276, %v1497
  %v1499 = vand.u32 %v1498, 4294901760
  %v1500 = vsub.f32 %v1498, %v1499
  %v1501 = vand.u32 %v1500, 4294901760
  %1502 = vmatprep.subr.mxu0 %v1501
  %v1503 = vand.u32 %v1275, 4294901760
  %v1504 = vsub.f32 %v1275, %v1503
  %v1505 = vand.u32 %v1504, 4294901760
  %v1506 = vsub.f32 %v1504, %v1505
  %v1507 = vand.u32 %v1506, 4294901760
  %1508 = vmatpush1.msra.mxu0 %v1507
  %v1509 = vand.u32 %v1274, 4294901760
  %v1510 = vsub.f32 %v1274, %v1509
  %v1511 = vand.u32 %v1510, 4294901760
  %v1512 = vsub.f32 %v1510, %v1511
  %v1513 = vand.u32 %v1512, 4294901760
  %1514 = vmatprep.subr.mxu0 %v1513
  %v1515 = vand.u32 %v1273, 4294901760
  %v1516 = vsub.f32 %v1273, %v1515
  %v1517 = vand.u32 %v1516, 4294901760
  %v1518 = vsub.f32 %v1516, %v1517
  %v1519 = vand.u32 %v1518, 4294901760
  %1520 = vmatpush1.msra.mxu0 %v1519
  %v1521 = vand.u32 %v1272, 4294901760
  %v1522 = vsub.f32 %v1272, %v1521
  %v1523 = vand.u32 %v1522, 4294901760
  %v1524 = vsub.f32 %v1522, %v1523
  %v1525 = vand.u32 %v1524, 4294901760
  %1526 = vmatprep.subr.mxu0 %v1525
  %v1527 = vand.u32 %v1271, 4294901760
  %v1528 = vsub.f32 %v1271, %v1527
  %v1529 = vand.u32 %v1528, 4294901760
  %v1530 = vsub.f32 %v1528, %v1529
  %v1531 = vand.u32 %v1530, 4294901760
  %1532 = vmatpush1.msra.mxu0 %v1531
  %v1533 = vand.u32 %v1270, 4294901760
  %v1534 = vsub.f32 %v1270, %v1533
  %v1535 = vand.u32 %v1534, 4294901760
  %v1536 = vsub.f32 %v1534, %v1535
  %v1537 = vand.u32 %v1536, 4294901760
  %1538 = vmatprep.subr.mxu0 %v1537
  %v1539 = vand.u32 %v1269, 4294901760
  %v1540 = vsub.f32 %v1269, %v1539
  %v1541 = vand.u32 %v1540, 4294901760
  %v1542 = vsub.f32 %v1540, %v1541
  %v1543 = vand.u32 %v1542, 4294901760
  %1544 = vmatpush1.msra.mxu0 %v1543
  %v1545 = vand.u32 %v1268, 4294901760
  %v1546 = vsub.f32 %v1268, %v1545
  %v1547 = vand.u32 %v1546, 4294901760
  %v1548 = vsub.f32 %v1546, %v1547
  %v1549 = vand.u32 %v1548, 4294901760
  %1550 = vmatprep.subr.mxu0 %v1549
  %v1551 = vand.u32 %v1267, 4294901760
  %v1552 = vsub.f32 %v1267, %v1551
  %v1553 = vand.u32 %v1552, 4294901760
  %v1554 = vsub.f32 %v1552, %v1553
  %v1555 = vand.u32 %v1554, 4294901760
  %1556 = vmatpush1.msra.mxu0 %v1555
  %v1557 = vand.u32 %v1266, 4294901760
  %v1558 = vsub.f32 %v1266, %v1557
  %v1559 = vand.u32 %v1558, 4294901760
  %v1560 = vsub.f32 %v1558, %v1559
  %v1561 = vand.u32 %v1560, 4294901760
  %1562 = vmatprep.subr.mxu0 %v1561
  %v1563 = vand.u32 %v1265, 4294901760
  %v1564 = vsub.f32 %v1265, %v1563
  %v1565 = vand.u32 %v1564, 4294901760
  %v1566 = vsub.f32 %v1564, %v1565
  %v1567 = vand.u32 %v1566, 4294901760
  %1568 = vmatpush1.msra.mxu0 %v1567
  %v1569 = vand.u32 %v1264, 4294901760
  %v1570 = vsub.f32 %v1264, %v1569
  %v1571 = vand.u32 %v1570, 4294901760
  %v1572 = vsub.f32 %v1570, %v1571
  %v1573 = vand.u32 %v1572, 4294901760
  %1574 = vmatprep.subr.mxu0 %v1573
  %v1575 = vand.u32 %v1263, 4294901760
  %v1576 = vsub.f32 %v1263, %v1575
  %v1577 = vand.u32 %v1576, 4294901760
  %v1578 = vsub.f32 %v1576, %v1577
  %v1579 = vand.u32 %v1578, 4294901760
  %1580 = vmatpush1.msra.mxu0 %v1579
  %v1581 = vand.u32 %v1262, 4294901760
  %v1582 = vsub.f32 %v1262, %v1581
  %v1583 = vand.u32 %v1582, 4294901760
  %v1584 = vsub.f32 %v1582, %v1583
  %v1585 = vand.u32 %v1584, 4294901760
  %1586 = vmatprep.subr.mxu0 %v1585
  %v1587 = vand.u32 %v1261, 4294901760
  %v1588 = vsub.f32 %v1261, %v1587
  %v1589 = vand.u32 %v1588, 4294901760
  %v1590 = vsub.f32 %v1588, %v1589
  %v1591 = vand.u32 %v1590, 4294901760
  %1592 = vmatpush1.msra.mxu0 %v1591
  %1593 = vmatprep.subr.mxu0 0.0
  %1594 = vmatpush2.msra.mxu0 0.0
  %1595 = vmatprep.subr.mxu0 0.0
  %1596 = vmatpush2.msra.mxu0 0.0
  %1597 = vmatprep.subr.mxu0 0.0
  %1598 = vmatpush2.msra.mxu0 0.0
  %1599 = vmatprep.subr.mxu0 0.0
  %1600 = vmatpush2.msra.mxu0 0.0
  %1601 = vmatprep.subr.mxu0 0.0
  %1602 = vmatpush2.msra.mxu0 0.0
  %1603 = vmatprep.subr.mxu0 0.0
  %1604 = vmatpush2.msra.mxu0 0.0
  %1605 = vmatprep.subr.mxu0 0.0
  %1606 = vmatpush2.msra.mxu0 0.0
  %1607 = vmatprep.subr.mxu0 0.0
  %1608 = vmatpush2.msra.mxu0 0.0
  %1609 = vmatprep.subr.mxu0 0.0
  %1610 = vmatpush2.msra.mxu0 0.0
  %1611 = vmatprep.subr.mxu0 0.0
  %1612 = vmatpush2.msra.mxu0 0.0
  %1613 = vmatprep.subr.mxu0 0.0
  %1614 = vmatpush2.msra.mxu0 0.0
  %1615 = vmatprep.subr.mxu0 0.0
  %1616 = vmatpush2.msra.mxu0 0.0
  %1617 = vmatprep.subr.mxu0 0.0
  %1618 = vmatpush2.msra.mxu0 0.0
  %1619 = vmatprep.subr.mxu0 0.0
  %1620 = vmatpush2.msra.mxu0 0.0
  %1621 = vmatprep.subr.mxu0 0.0
  %1622 = vmatpush2.msra.mxu0 0.0
  %1623 = vmatprep.subr.mxu0 0.0
  %1624 = vmatpush2.msra.mxu0 0.0
  %1625 = vmatprep.mubr.f32.mxu0 0.0
  %v1626 = vand.u32 %v25, 4294901760
  %1627 = vmatmul.mubr.f32.gmra.mxu0 %v1626
  %v1628 = vpop.f32.mrf.mxu0
  %v1629 = vadd.f32 %v1397, %v1628
  %v1630 = vpop.f32.mrf.mxu0
  %v1631 = vadd.f32 %v1399, %v1630
  %1632 = vdwg.mxu0
  %v1633 = vand.u32 %v1292, 4294901760
  %v1634 = vsub.f32 %v1292, %v1633
  %1635 = vmatprep.subr.mxu0 %v1634
  %v1636 = vand.u32 %v1291, 4294901760
  %v1637 = vsub.f32 %v1291, %v1636
  %1638 = vmatpush1.msra.mxu0 %v1637
  %v1639 = vand.u32 %v1290, 4294901760
  %v1640 = vsub.f32 %v1290, %v1639
  %1641 = vmatprep.subr.mxu0 %v1640
  %v1642 = vand.u32 %v1289, 4294901760
  %v1643 = vsub.f32 %v1289, %v1642
  %1644 = vmatpush1.msra.mxu0 %v1643
  %v1645 = vand.u32 %v1288, 4294901760
  %v1646 = vsub.f32 %v1288, %v1645
  %1647 = vmatprep.subr.mxu0 %v1646
  %v1648 = vand.u32 %v1287, 4294901760
  %v1649 = vsub.f32 %v1287, %v1648
  %1650 = vmatpush1.msra.mxu0 %v1649
  %v1651 = vand.u32 %v1286, 4294901760
  %v1652 = vsub.f32 %v1286, %v1651
  %1653 = vmatprep.subr.mxu0 %v1652
  %v1654 = vand.u32 %v1285, 4294901760
  %v1655 = vsub.f32 %v1285, %v1654
  %1656 = vmatpush1.msra.mxu0 %v1655
  %v1657 = vand.u32 %v1284, 4294901760
  %v1658 = vsub.f32 %v1284, %v1657
  %1659 = vmatprep.subr.mxu0 %v1658
  %v1660 = vand.u32 %v1283, 4294901760
  %v1661 = vsub.f32 %v1283, %v1660
  %1662 = vmatpush1.msra.mxu0 %v1661
  %v1663 = vand.u32 %v1282, 4294901760
  %v1664 = vsub.f32 %v1282, %v1663
  %1665 = vmatprep.subr.mxu0 %v1664
  %v1666 = vand.u32 %v1281, 4294901760
  %v1667 = vsub.f32 %v1281, %v1666
  %1668 = vmatpush1.msra.mxu0 %v1667
  %v1669 = vand.u32 %v1280, 4294901760
  %v1670 = vsub.f32 %v1280, %v1669
  %1671 = vmatprep.subr.mxu0 %v1670
  %v1672 = vand.u32 %v1279, 4294901760
  %v1673 = vsub.f32 %v1279, %v1672
  %1674 = vmatpush1.msra.mxu0 %v1673
  %v1675 = vand.u32 %v1278, 4294901760
  %v1676 = vsub.f32 %v1278, %v1675
  %1677 = vmatprep.subr.mxu0 %v1676
  %v1678 = vand.u32 %v1277, 4294901760
  %v1679 = vsub.f32 %v1277, %v1678
  %1680 = vmatpush1.msra.mxu0 %v1679
  %v1681 = vand.u32 %v1276, 4294901760
  %v1682 = vsub.f32 %v1276, %v1681
  %1683 = vmatprep.subr.mxu0 %v1682
  %v1684 = vand.u32 %v1275, 4294901760
  %v1685 = vsub.f32 %v1275, %v1684
  %1686 = vmatpush1.msra.mxu0 %v1685
  %v1687 = vand.u32 %v1274, 4294901760
  %v1688 = vsub.f32 %v1274, %v1687
  %1689 = vmatprep.subr.mxu0 %v1688
  %v1690 = vand.u32 %v1273, 4294901760
  %v1691 = vsub.f32 %v1273, %v1690
  %1692 = vmatpush1.msra.mxu0 %v1691
  %v1693 = vand.u32 %v1272, 4294901760
  %v1694 = vsub.f32 %v1272, %v1693
  %1695 = vmatprep.subr.mxu0 %v1694
  %v1696 = vand.u32 %v1271, 4294901760
  %v1697 = vsub.f32 %v1271, %v1696
  %1698 = vmatpush1.msra.mxu0 %v1697
  %v1699 = vand.u32 %v1270, 4294901760
  %v1700 = vsub.f32 %v1270, %v1699
  %1701 = vmatprep.subr.mxu0 %v1700
  %v1702 = vand.u32 %v1269, 4294901760
  %v1703 = vsub.f32 %v1269, %v1702
  %1704 = vmatpush1.msra.mxu0 %v1703
  %v1705 = vand.u32 %v1268, 4294901760
  %v1706 = vsub.f32 %v1268, %v1705
  %1707 = vmatprep.subr.mxu0 %v1706
  %v1708 = vand.u32 %v1267, 4294901760
  %v1709 = vsub.f32 %v1267, %v1708
  %1710 = vmatpush1.msra.mxu0 %v1709
  %v1711 = vand.u32 %v1266, 4294901760
  %v1712 = vsub.f32 %v1266, %v1711
  %1713 = vmatprep.subr.mxu0 %v1712
  %v1714 = vand.u32 %v1265, 4294901760
  %v1715 = vsub.f32 %v1265, %v1714
  %1716 = vmatpush1.msra.mxu0 %v1715
  %v1717 = vand.u32 %v1264, 4294901760
  %v1718 = vsub.f32 %v1264, %v1717
  %1719 = vmatprep.subr.mxu0 %v1718
  %v1720 = vand.u32 %v1263, 4294901760
  %v1721 = vsub.f32 %v1263, %v1720
  %1722 = vmatpush1.msra.mxu0 %v1721
  %v1723 = vand.u32 %v1262, 4294901760
  %v1724 = vsub.f32 %v1262, %v1723
  %1725 = vmatprep.subr.mxu0 %v1724
  %v1726 = vand.u32 %v1261, 4294901760
  %v1727 = vsub.f32 %v1261, %v1726
  %1728 = vmatpush1.msra.mxu0 %v1727
  %1729 = vmatprep.subr.mxu0 0.0
  %1730 = vmatpush2.msra.mxu0 0.0
  %1731 = vmatprep.subr.mxu0 0.0
  %1732 = vmatpush2.msra.mxu0 0.0
  %1733 = vmatprep.subr.mxu0 0.0
  %1734 = vmatpush2.msra.mxu0 0.0
  %1735 = vmatprep.subr.mxu0 0.0
  %1736 = vmatpush2.msra.mxu0 0.0
  %1737 = vmatprep.subr.mxu0 0.0
  %1738 = vmatpush2.msra.mxu0 0.0
  %1739 = vmatprep.subr.mxu0 0.0
  %1740 = vmatpush2.msra.mxu0 0.0
  %1741 = vmatprep.subr.mxu0 0.0
  %1742 = vmatpush2.msra.mxu0 0.0
  %1743 = vmatprep.subr.mxu0 0.0
  %1744 = vmatpush2.msra.mxu0 0.0
  %1745 = vmatprep.subr.mxu0 0.0
  %1746 = vmatpush2.msra.mxu0 0.0
  %1747 = vmatprep.subr.mxu0 0.0
  %1748 = vmatpush2.msra.mxu0 0.0
  %1749 = vmatprep.subr.mxu0 0.0
  %1750 = vmatpush2.msra.mxu0 0.0
  %1751 = vmatprep.subr.mxu0 0.0
  %1752 = vmatpush2.msra.mxu0 0.0
  %1753 = vmatprep.subr.mxu0 0.0
  %1754 = vmatpush2.msra.mxu0 0.0
  %1755 = vmatprep.subr.mxu0 0.0
  %1756 = vmatpush2.msra.mxu0 0.0
  %1757 = vmatprep.subr.mxu0 0.0
  %1758 = vmatpush2.msra.mxu0 0.0
  %1759 = vmatprep.subr.mxu0 0.0
  %1760 = vmatpush2.msra.mxu0 0.0
  %1761 = vmatprep.mubr.f32.mxu0 0.0
  %v1762 = vand.u32 %v25, 4294901760
  %v1763 = vsub.f32 %v25, %v1762
  %1764 = vmatmul.mubr.f32.gmra.mxu0 %v1763
  %v1765 = vpop.f32.mrf.mxu0
  %v1766 = vadd.f32 %v1629, %v1765
  %v1767 = vpop.f32.mrf.mxu0
  %v1768 = vadd.f32 %v1631, %v1767
  %1769 = vdwg.mxu0
  %v1770 = vand.u32 %v1292, 4294901760
  %1771 = vmatprep.subr.mxu0 %v1770
  %v1772 = vand.u32 %v1291, 4294901760
  %1773 = vmatpush1.msra.mxu0 %v1772
  %v1774 = vand.u32 %v1290, 4294901760
  %1775 = vmatprep.subr.mxu0 %v1774
  %v1776 = vand.u32 %v1289, 4294901760
  %1777 = vmatpush1.msra.mxu0 %v1776
  %v1778 = vand.u32 %v1288, 4294901760
  %1779 = vmatprep.subr.mxu0 %v1778
  %v1780 = vand.u32 %v1287, 4294901760
  %1781 = vmatpush1.msra.mxu0 %v1780
  %v1782 = vand.u32 %v1286, 4294901760
  %1783 = vmatprep.subr.mxu0 %v1782
  %v1784 = vand.u32 %v1285, 4294901760
  %1785 = vmatpush1.msra.mxu0 %v1784
  %v1786 = vand.u32 %v1284, 4294901760
  %1787 = vmatprep.subr.mxu0 %v1786
  %v1788 = vand.u32 %v1283, 4294901760
  %1789 = vmatpush1.msra.mxu0 %v1788
  %v1790 = vand.u32 %v1282, 4294901760
  %1791 = vmatprep.subr.mxu0 %v1790
  %v1792 = vand.u32 %v1281, 4294901760
  %1793 = vmatpush1.msra.mxu0 %v1792
  %v1794 = vand.u32 %v1280, 4294901760
  %1795 = vmatprep.subr.mxu0 %v1794
  %v1796 = vand.u32 %v1279, 4294901760
  %1797 = vmatpush1.msra.mxu0 %v1796
  %v1798 = vand.u32 %v1278, 4294901760
  %1799 = vmatprep.subr.mxu0 %v1798
  %v1800 = vand.u32 %v1277, 4294901760
  %1801 = vmatpush1.msra.mxu0 %v1800
  %v1802 = vand.u32 %v1276, 4294901760
  %1803 = vmatprep.subr.mxu0 %v1802
  %v1804 = vand.u32 %v1275, 4294901760
  %1805 = vmatpush1.msra.mxu0 %v1804
  %v1806 = vand.u32 %v1274, 4294901760
  %1807 = vmatprep.subr.mxu0 %v1806
  %v1808 = vand.u32 %v1273, 4294901760
  %1809 = vmatpush1.msra.mxu0 %v1808
  %v1810 = vand.u32 %v1272, 4294901760
  %1811 = vmatprep.subr.mxu0 %v1810
  %v1812 = vand.u32 %v1271, 4294901760
  %1813 = vmatpush1.msra.mxu0 %v1812
  %v1814 = vand.u32 %v1270, 4294901760
  %1815 = vmatprep.subr.mxu0 %v1814
  %v1816 = vand.u32 %v1269, 4294901760
  %1817 = vmatpush1.msra.mxu0 %v1816
  %v1818 = vand.u32 %v1268, 4294901760
  %1819 = vmatprep.subr.mxu0 %v1818
  %v1820 = vand.u32 %v1267, 4294901760
  %1821 = vmatpush1.msra.mxu0 %v1820
  %v1822 = vand.u32 %v1266, 4294901760
  %1823 = vmatprep.subr.mxu0 %v1822
  %v1824 = vand.u32 %v1265, 4294901760
  %1825 = vmatpush1.msra.mxu0 %v1824
  %v1826 = vand.u32 %v1264, 4294901760
  %1827 = vmatprep.subr.mxu0 %v1826
  %v1828 = vand.u32 %v1263, 4294901760
  %1829 = vmatpush1.msra.mxu0 %v1828
  %v1830 = vand.u32 %v1262, 4294901760
  %1831 = vmatprep.subr.mxu0 %v1830
  %v1832 = vand.u32 %v1261, 4294901760
  %1833 = vmatpush1.msra.mxu0 %v1832
  %1834 = vmatprep.subr.mxu0 0.0
  %1835 = vmatpush2.msra.mxu0 0.0
  %1836 = vmatprep.subr.mxu0 0.0
  %1837 = vmatpush2.msra.mxu0 0.0
  %1838 = vmatprep.subr.mxu0 0.0
  %1839 = vmatpush2.msra.mxu0 0.0
  %1840 = vmatprep.subr.mxu0 0.0
  %1841 = vmatpush2.msra.mxu0 0.0
  %1842 = vmatprep.subr.mxu0 0.0
  %1843 = vmatpush2.msra.mxu0 0.0
  %1844 = vmatprep.subr.mxu0 0.0
  %1845 = vmatpush2.msra.mxu0 0.0
  %1846 = vmatprep.subr.mxu0 0.0
  %1847 = vmatpush2.msra.mxu0 0.0
  %1848 = vmatprep.subr.mxu0 0.0
  %1849 = vmatpush2.msra.mxu0 0.0
  %1850 = vmatprep.subr.mxu0 0.0
  %1851 = vmatpush2.msra.mxu0 0.0
  %1852 = vmatprep.subr.mxu0 0.0
  %1853 = vmatpush2.msra.mxu0 0.0
  %1854 = vmatprep.subr.mxu0 0.0
  %1855 = vmatpush2.msra.mxu0 0.0
  %1856 = vmatprep.subr.mxu0 0.0
  %1857 = vmatpush2.msra.mxu0 0.0
  %1858 = vmatprep.subr.mxu0 0.0
  %1859 = vmatpush2.msra.mxu0 0.0
  %1860 = vmatprep.subr.mxu0 0.0
  %1861 = vmatpush2.msra.mxu0 0.0
  %1862 = vmatprep.subr.mxu0 0.0
  %1863 = vmatpush2.msra.mxu0 0.0
  %1864 = vmatprep.subr.mxu0 0.0
  %1865 = vmatpush2.msra.mxu0 0.0
  %1866 = vmatprep.mubr.f32.mxu0 0.0
  %v1867 = vand.u32 %v25, 4294901760
  %v1868 = vsub.f32 %v25, %v1867
  %v1869 = vand.u32 %v1868, 4294901760
  %1870 = vmatmul.mubr.f32.gmra.mxu0 %v1869
  %v1871 = vpop.f32.mrf.mxu0
  %v1872 = vadd.f32 %v1766, %v1871
  %v1873 = vpop.f32.mrf.mxu0
  %v1874 = vadd.f32 %v1768, %v1873
  %1875 = vdwg.mxu0
  %v1876 = vand.u32 %v1292, 4294901760
  %v1877 = vsub.f32 %v1292, %v1876
  %v1878 = vand.u32 %v1877, 4294901760
  %1879 = vmatprep.subr.mxu0 %v1878
  %v1880 = vand.u32 %v1291, 4294901760
  %v1881 = vsub.f32 %v1291, %v1880
  %v1882 = vand.u32 %v1881, 4294901760
  %1883 = vmatpush1.msra.mxu0 %v1882
  %v1884 = vand.u32 %v1290, 4294901760
  %v1885 = vsub.f32 %v1290, %v1884
  %v1886 = vand.u32 %v1885, 4294901760
  %1887 = vmatprep.subr.mxu0 %v1886
  %v1888 = vand.u32 %v1289, 4294901760
  %v1889 = vsub.f32 %v1289, %v1888
  %v1890 = vand.u32 %v1889, 4294901760
  %1891 = vmatpush1.msra.mxu0 %v1890
  %v1892 = vand.u32 %v1288, 4294901760
  %v1893 = vsub.f32 %v1288, %v1892
  %v1894 = vand.u32 %v1893, 4294901760
  %1895 = vmatprep.subr.mxu0 %v1894
  %v1896 = vand.u32 %v1287, 4294901760
  %v1897 = vsub.f32 %v1287, %v1896
  %v1898 = vand.u32 %v1897, 4294901760
  %1899 = vmatpush1.msra.mxu0 %v1898
  %v1900 = vand.u32 %v1286, 4294901760
  %v1901 = vsub.f32 %v1286, %v1900
  %v1902 = vand.u32 %v1901, 4294901760
  %1903 = vmatprep.subr.mxu0 %v1902
  %v1904 = vand.u32 %v1285, 4294901760
  %v1905 = vsub.f32 %v1285, %v1904
  %v1906 = vand.u32 %v1905, 4294901760
  %1907 = vmatpush1.msra.mxu0 %v1906
  %v1908 = vand.u32 %v1284, 4294901760
  %v1909 = vsub.f32 %v1284, %v1908
  %v1910 = vand.u32 %v1909, 4294901760
  %1911 = vmatprep.subr.mxu0 %v1910
  %v1912 = vand.u32 %v1283, 4294901760
  %v1913 = vsub.f32 %v1283, %v1912
  %v1914 = vand.u32 %v1913, 4294901760
  %1915 = vmatpush1.msra.mxu0 %v1914
  %v1916 = vand.u32 %v1282, 4294901760
  %v1917 = vsub.f32 %v1282, %v1916
  %v1918 = vand.u32 %v1917, 4294901760
  %1919 = vmatprep.subr.mxu0 %v1918
  %v1920 = vand.u32 %v1281, 4294901760
  %v1921 = vsub.f32 %v1281, %v1920
  %v1922 = vand.u32 %v1921, 4294901760
  %1923 = vmatpush1.msra.mxu0 %v1922
  %v1924 = vand.u32 %v1280, 4294901760
  %v1925 = vsub.f32 %v1280, %v1924
  %v1926 = vand.u32 %v1925, 4294901760
  %1927 = vmatprep.subr.mxu0 %v1926
  %v1928 = vand.u32 %v1279, 4294901760
  %v1929 = vsub.f32 %v1279, %v1928
  %v1930 = vand.u32 %v1929, 4294901760
  %1931 = vmatpush1.msra.mxu0 %v1930
  %v1932 = vand.u32 %v1278, 4294901760
  %v1933 = vsub.f32 %v1278, %v1932
  %v1934 = vand.u32 %v1933, 4294901760
  %1935 = vmatprep.subr.mxu0 %v1934
  %v1936 = vand.u32 %v1277, 4294901760
  %v1937 = vsub.f32 %v1277, %v1936
  %v1938 = vand.u32 %v1937, 4294901760
  %1939 = vmatpush1.msra.mxu0 %v1938
  %v1940 = vand.u32 %v1276, 4294901760
  %v1941 = vsub.f32 %v1276, %v1940
  %v1942 = vand.u32 %v1941, 4294901760
  %1943 = vmatprep.subr.mxu0 %v1942
  %v1944 = vand.u32 %v1275, 4294901760
  %v1945 = vsub.f32 %v1275, %v1944
  %v1946 = vand.u32 %v1945, 4294901760
  %1947 = vmatpush1.msra.mxu0 %v1946
  %v1948 = vand.u32 %v1274, 4294901760
  %v1949 = vsub.f32 %v1274, %v1948
  %v1950 = vand.u32 %v1949, 4294901760
  %1951 = vmatprep.subr.mxu0 %v1950
  %v1952 = vand.u32 %v1273, 4294901760
  %v1953 = vsub.f32 %v1273, %v1952
  %v1954 = vand.u32 %v1953, 4294901760
  %1955 = vmatpush1.msra.mxu0 %v1954
  %v1956 = vand.u32 %v1272, 4294901760
  %v1957 = vsub.f32 %v1272, %v1956
  %v1958 = vand.u32 %v1957, 4294901760
  %1959 = vmatprep.subr.mxu0 %v1958
  %v1960 = vand.u32 %v1271, 4294901760
  %v1961 = vsub.f32 %v1271, %v1960
  %v1962 = vand.u32 %v1961, 4294901760
  %1963 = vmatpush1.msra.mxu0 %v1962
  %v1964 = vand.u32 %v1270, 4294901760
  %v1965 = vsub.f32 %v1270, %v1964
  %v1966 = vand.u32 %v1965, 4294901760
  %1967 = vmatprep.subr.mxu0 %v1966
  %v1968 = vand.u32 %v1269, 4294901760
  %v1969 = vsub.f32 %v1269, %v1968
  %v1970 = vand.u32 %v1969, 4294901760
  %1971 = vmatpush1.msra.mxu0 %v1970
  %v1972 = vand.u32 %v1268, 4294901760
  %v1973 = vsub.f32 %v1268, %v1972
  %v1974 = vand.u32 %v1973, 4294901760
  %1975 = vmatprep.subr.mxu0 %v1974
  %v1976 = vand.u32 %v1267, 4294901760
  %v1977 = vsub.f32 %v1267, %v1976
  %v1978 = vand.u32 %v1977, 4294901760
  %1979 = vmatpush1.msra.mxu0 %v1978
  %v1980 = vand.u32 %v1266, 4294901760
  %v1981 = vsub.f32 %v1266, %v1980
  %v1982 = vand.u32 %v1981, 4294901760
  %1983 = vmatprep.subr.mxu0 %v1982
  %v1984 = vand.u32 %v1265, 4294901760
  %v1985 = vsub.f32 %v1265, %v1984
  %v1986 = vand.u32 %v1985, 4294901760
  %1987 = vmatpush1.msra.mxu0 %v1986
  %v1988 = vand.u32 %v1264, 4294901760
  %v1989 = vsub.f32 %v1264, %v1988
  %v1990 = vand.u32 %v1989, 4294901760
  %1991 = vmatprep.subr.mxu0 %v1990
  %v1992 = vand.u32 %v1263, 4294901760
  %v1993 = vsub.f32 %v1263, %v1992
  %v1994 = vand.u32 %v1993, 4294901760
  %1995 = vmatpush1.msra.mxu0 %v1994
  %v1996 = vand.u32 %v1262, 4294901760
  %v1997 = vsub.f32 %v1262, %v1996
  %v1998 = vand.u32 %v1997, 4294901760
  %1999 = vmatprep.subr.mxu0 %v1998
  %v2000 = vand.u32 %v1261, 4294901760
  %v2001 = vsub.f32 %v1261, %v2000
  %v2002 = vand.u32 %v2001, 4294901760
  %2003 = vmatpush1.msra.mxu0 %v2002
  %2004 = vmatprep.subr.mxu0 0.0
  %2005 = vmatpush2.msra.mxu0 0.0
  %2006 = vmatprep.subr.mxu0 0.0
  %2007 = vmatpush2.msra.mxu0 0.0
  %2008 = vmatprep.subr.mxu0 0.0
  %2009 = vmatpush2.msra.mxu0 0.0
  %2010 = vmatprep.subr.mxu0 0.0
  %2011 = vmatpush2.msra.mxu0 0.0
  %2012 = vmatprep.subr.mxu0 0.0
  %2013 = vmatpush2.msra.mxu0 0.0
  %2014 = vmatprep.subr.mxu0 0.0
  %2015 = vmatpush2.msra.mxu0 0.0
  %2016 = vmatprep.subr.mxu0 0.0
  %2017 = vmatpush2.msra.mxu0 0.0
  %2018 = vmatprep.subr.mxu0 0.0
  %2019 = vmatpush2.msra.mxu0 0.0
  %2020 = vmatprep.subr.mxu0 0.0
  %2021 = vmatpush2.msra.mxu0 0.0
  %2022 = vmatprep.subr.mxu0 0.0
  %2023 = vmatpush2.msra.mxu0 0.0
  %2024 = vmatprep.subr.mxu0 0.0
  %2025 = vmatpush2.msra.mxu0 0.0
  %2026 = vmatprep.subr.mxu0 0.0
  %2027 = vmatpush2.msra.mxu0 0.0
  %2028 = vmatprep.subr.mxu0 0.0
  %2029 = vmatpush2.msra.mxu0 0.0
  %2030 = vmatprep.subr.mxu0 0.0
  %2031 = vmatpush2.msra.mxu0 0.0
  %2032 = vmatprep.subr.mxu0 0.0
  %2033 = vmatpush2.msra.mxu0 0.0
  %2034 = vmatprep.subr.mxu0 0.0
  %2035 = vmatpush2.msra.mxu0 0.0
  %2036 = vmatprep.mubr.f32.mxu0 0.0
  %v2037 = vand.u32 %v25, 4294901760
  %2038 = vmatmul.mubr.f32.gmra.mxu0 %v2037
  %v2039 = vpop.f32.mrf.mxu0
  %v2040 = vadd.f32 %v1872, %v2039
  %v2041 = vpop.f32.mrf.mxu0
  %v2042 = vadd.f32 %v1874, %v2041
  %2043 = vdwg.mxu0
  %v2044 = vand.u32 %v1292, 4294901760
  %2045 = vmatprep.subr.mxu0 %v2044
  %v2046 = vand.u32 %v1291, 4294901760
  %2047 = vmatpush1.msra.mxu0 %v2046
  %v2048 = vand.u32 %v1290, 4294901760
  %2049 = vmatprep.subr.mxu0 %v2048
  %v2050 = vand.u32 %v1289, 4294901760
  %2051 = vmatpush1.msra.mxu0 %v2050
  %v2052 = vand.u32 %v1288, 4294901760
  %2053 = vmatprep.subr.mxu0 %v2052
  %v2054 = vand.u32 %v1287, 4294901760
  %2055 = vmatpush1.msra.mxu0 %v2054
  %v2056 = vand.u32 %v1286, 4294901760
  %2057 = vmatprep.subr.mxu0 %v2056
  %v2058 = vand.u32 %v1285, 4294901760
  %2059 = vmatpush1.msra.mxu0 %v2058
  %v2060 = vand.u32 %v1284, 4294901760
  %2061 = vmatprep.subr.mxu0 %v2060
  %v2062 = vand.u32 %v1283, 4294901760
  %2063 = vmatpush1.msra.mxu0 %v2062
  %v2064 = vand.u32 %v1282, 4294901760
  %2065 = vmatprep.subr.mxu0 %v2064
  %v2066 = vand.u32 %v1281, 4294901760
  %2067 = vmatpush1.msra.mxu0 %v2066
  %v2068 = vand.u32 %v1280, 4294901760
  %2069 = vmatprep.subr.mxu0 %v2068
  %v2070 = vand.u32 %v1279, 4294901760
  %2071 = vmatpush1.msra.mxu0 %v2070
  %v2072 = vand.u32 %v1278, 4294901760
  %2073 = vmatprep.subr.mxu0 %v2072
  %v2074 = vand.u32 %v1277, 4294901760
  %2075 = vmatpush1.msra.mxu0 %v2074
  %v2076 = vand.u32 %v1276, 4294901760
  %2077 = vmatprep.subr.mxu0 %v2076
  %v2078 = vand.u32 %v1275, 4294901760
  %2079 = vmatpush1.msra.mxu0 %v2078
  %v2080 = vand.u32 %v1274, 4294901760
  %2081 = vmatprep.subr.mxu0 %v2080
  %v2082 = vand.u32 %v1273, 4294901760
  %2083 = vmatpush1.msra.mxu0 %v2082
  %v2084 = vand.u32 %v1272, 4294901760
  %2085 = vmatprep.subr.mxu0 %v2084
  %v2086 = vand.u32 %v1271, 4294901760
  %2087 = vmatpush1.msra.mxu0 %v2086
  %v2088 = vand.u32 %v1270, 4294901760
  %2089 = vmatprep.subr.mxu0 %v2088
  %v2090 = vand.u32 %v1269, 4294901760
  %2091 = vmatpush1.msra.mxu0 %v2090
  %v2092 = vand.u32 %v1268, 4294901760
  %2093 = vmatprep.subr.mxu0 %v2092
  %v2094 = vand.u32 %v1267, 4294901760
  %2095 = vmatpush1.msra.mxu0 %v2094
  %v2096 = vand.u32 %v1266, 4294901760
  %2097 = vmatprep.subr.mxu0 %v2096
  %v2098 = vand.u32 %v1265, 4294901760
  %2099 = vmatpush1.msra.mxu0 %v2098
  %v2100 = vand.u32 %v1264, 4294901760
  %2101 = vmatprep.subr.mxu0 %v2100
  %v2102 = vand.u32 %v1263, 4294901760
  %2103 = vmatpush1.msra.mxu0 %v2102
  %v2104 = vand.u32 %v1262, 4294901760
  %2105 = vmatprep.subr.mxu0 %v2104
  %v2106 = vand.u32 %v1261, 4294901760
  %2107 = vmatpush1.msra.mxu0 %v2106
  %2108 = vmatprep.subr.mxu0 0.0
  %2109 = vmatpush2.msra.mxu0 0.0
  %2110 = vmatprep.subr.mxu0 0.0
  %2111 = vmatpush2.msra.mxu0 0.0
  %2112 = vmatprep.subr.mxu0 0.0
  %2113 = vmatpush2.msra.mxu0 0.0
  %2114 = vmatprep.subr.mxu0 0.0
  %2115 = vmatpush2.msra.mxu0 0.0
  %2116 = vmatprep.subr.mxu0 0.0
  %2117 = vmatpush2.msra.mxu0 0.0
  %2118 = vmatprep.subr.mxu0 0.0
  %2119 = vmatpush2.msra.mxu0 0.0
  %2120 = vmatprep.subr.mxu0 0.0
  %2121 = vmatpush2.msra.mxu0 0.0
  %2122 = vmatprep.subr.mxu0 0.0
  %2123 = vmatpush2.msra.mxu0 0.0
  %2124 = vmatprep.subr.mxu0 0.0
  %2125 = vmatpush2.msra.mxu0 0.0
  %2126 = vmatprep.subr.mxu0 0.0
  %2127 = vmatpush2.msra.mxu0 0.0
  %2128 = vmatprep.subr.mxu0 0.0
  %2129 = vmatpush2.msra.mxu0 0.0
  %2130 = vmatprep.subr.mxu0 0.0
  %2131 = vmatpush2.msra.mxu0 0.0
  %2132 = vmatprep.subr.mxu0 0.0
  %2133 = vmatpush2.msra.mxu0 0.0
  %2134 = vmatprep.subr.mxu0 0.0
  %2135 = vmatpush2.msra.mxu0 0.0
  %2136 = vmatprep.subr.mxu0 0.0
  %2137 = vmatpush2.msra.mxu0 0.0
  %2138 = vmatprep.subr.mxu0 0.0
  %2139 = vmatpush2.msra.mxu0 0.0
  %2140 = vmatprep.mubr.f32.mxu0 0.0
  %v2141 = vand.u32 %v25, 4294901760
  %2142 = vmatmul.mubr.f32.gmra.mxu0 %v2141
  %v2143 = vpop.f32.mrf.mxu0
  %v2144 = vadd.f32 %v2040, %v2143
  %v2145 = vpop.f32.mrf.mxu0
  %v2146 = vadd.f32 %v2042, %v2145
  %2147 = vdwg.mxu0
  %v2148 = vmax.f32 %v2144, 0.0
  %v2149 = vmax.f32 %v2146, 0.0
  %v2152 = vrot.slane %v2148, 1
  %v2153 = vrot.slane %v2149, 1
  %v2156 = vmul.f32 %v2148, %v2152
  %v2157 = vmul.f32 %v2149, %v2153
  %v2160 = vrot.slane %v2156, 7
  %v2161 = vrot.slane %v2157, 7
  %v2164 = vadd.f32 %v23, %v2160
  %v2165 = vadd.f32 %v24, %v2161
  %v2168 = vrot.slane %v2144, 1
  %v2169 = vrot.slane %v2146, 1
  %v2172 = vadd.f32 %v2164, %v2168
  %v2173 = vadd.f32 %v2165, %v2169
  %v2174 = vmax.f32 %v2172, 0.0
  %v2175 = vmax.f32 %v2173, 0.0
  %v2176 = vand.u32 2147483647, %v2172
  %v2177 = vand.u32 2147483647, %v2173
  %v2178 = vsub.f32 0.0, %v2176
  %v2179 = vsub.f32 0.0, %v2177
  %v2180 = vmul.f32 %v2178, 1.442695
  %v2181 = vpow.pop %v2180
  %v2182 = vmul.f32 %v2179, 1.442695
  %v2183 = vpow.pop %v2182
  %v2184 = vadd.f32 %v2181, 1.0
  %v2185 = vlog2.pop %v2184
  %v2186 = vmul.f32 %v2185, 0.6931472
  %v2187 = vmul.f32 -0.5, %v2181
  %v2188 = vadd.f32 %v2187, 1.0
  %v2189 = vmul.f32 %v2188, %v2181
  %v2190 = vand.u32 2147483647, %v2181
  %vm2191 = vcmp.lt.f32.partialorder %v2190, 0.0004427343
  %v2192 = vsel %vm2191, %v2189, %v2186
  %v2193 = vadd.f32 %v2183, 1.0
  %v2194 = vlog2.pop %v2193
  %v2195 = vmul.f32 %v2194, 0.6931472
  %v2196 = vmul.f32 -0.5, %v2183
  %v2197 = vadd.f32 %v2196, 1.0
  %v2198 = vmul.f32 %v2197, %v2183
  %v2199 = vand.u32 2147483647, %v2183
  %vm2200 = vcmp.lt.f32.partialorder %v2199, 0.0004427343
  %v2201 = vsel %vm2200, %v2198, %v2195
  %v2202 = vadd.f32 %v2174, %v2192
  %v2203 = vadd.f32 %v2175, %v2201
  %v2206 = vcombine.low %v2202, %v2203
  %v2208 = vunpack.c.l.s4 1966171168
  %v2209 = vunpack.c.0.s8 %v2208
  %v2210 = vlaneseq
  %v2211 = vshrl.u32 %v2210, 7
  %v2212 = vsub.s32 %v2209, %v2211
  %v2213 = vrot.slane %v2206, %v2212
  %v2214 = vcombine.high %v2213, %v2213
  %v2216 = vunpack.c.l.s4 1966171168
  %v2217 = vunpack.c.0.s8 %v2216
  %v2218 = vlaneseq
  %v2219 = vshrl.u32 %v2218, 7
  %v2220 = vsub.s32 %v2217, %v2219
  %v2221 = vrot.slane %v2214, %v2220
  %s2223 = scalar_lea.vmem [#allocation2], 1
  %2224 = vst.msk [vmem:[%s2223] ss:$8 sm:$0x3] %vm1122, %v2221
  %2225 = vst.msk [vmem:[%s2223] ss:$8 sm:$0x0] %vm1122, %v2221
  %v2226 = vlaneseq
  %v2227 = vshrl.u32 %v2226, 7
  %v2228 = vsub.s32 2, %v2227
  %v2229 = vrot.slane %v23, %v2228
  %v2230 = vlaneseq
  %v2231 = vshrl.u32 %v2230, 7
  %v2232 = vsub.s32 2, %v2231
  %v2233 = vrot.slane %v24, %v2232
  %v2234 = vld [vmem:[%s1] sm:$0xff]
  %v2235 = vld [vmem:[%s1 + $0x8] sm:$0xff]
  %v2236 = vld [vmem:[%s1 + $0x10] sm:$0xff]
  %v2237 = vld [vmem:[%s1 + $0x18] sm:$0xff]
  %v2238 = vld [vmem:[%s1 + $0x20] sm:$0xff]
  %v2239 = vld [vmem:[%s1 + $0x28] sm:$0xff]
  %v2240 = vld [vmem:[%s1 + $0x30] sm:$0xff]
  %v2241 = vld [vmem:[%s1 + $0x38] sm:$0xff]
  %v2242 = vld [vmem:[%s1 + $0x40] sm:$0xff]
  %v2243 = vld [vmem:[%s1 + $0x48] sm:$0xff]
  %v2244 = vld [vmem:[%s1 + $0x50] sm:$0xff]
  %v2245 = vld [vmem:[%s1 + $0x58] sm:$0xff]
  %v2246 = vld [vmem:[%s1 + $0x60] sm:$0xff]
  %v2247 = vld [vmem:[%s1 + $0x68] sm:$0xff]
  %v2248 = vld [vmem:[%s1 + $0x70] sm:$0xff]
  %v2249 = vld [vmem:[%s1 + $0x78] sm:$0xff]
  %v2250 = vld [vmem:[%s1 + $0x80] sm:$0xff]
  %v2251 = vld [vmem:[%s1 + $0x88] sm:$0xff]
  %v2252 = vld [vmem:[%s1 + $0x90] sm:$0xff]
  %v2253 = vld [vmem:[%s1 + $0x98] sm:$0xff]
  %v2254 = vld [vmem:[%s1 + $0xa0] sm:$0xff]
  %v2255 = vld [vmem:[%s1 + $0xa8] sm:$0xff]
  %v2256 = vld [vmem:[%s1 + $0xb0] sm:$0xff]
  %v2257 = vld [vmem:[%s1 + $0xb8] sm:$0xff]
  %v2258 = vld [vmem:[%s1 + $0xc0] sm:$0xff]
  %v2259 = vld [vmem:[%s1 + $0xc8] sm:$0xff]
  %v2260 = vld [vmem:[%s1 + $0xd0] sm:$0xff]
  %v2261 = vld [vmem:[%s1 + $0xd8] sm:$0xff]
  %v2262 = vld [vmem:[%s1 + $0xe0] sm:$0xff]
  %v2263 = vld [vmem:[%s1 + $0xe8] sm:$0xff]
  %v2264 = vld [vmem:[%s1 + $0xf0] sm:$0xff]
  %v2265 = vld [vmem:[%s1 + $0xf8] sm:$0xff]
  %v2266 = vmul.f32 %v2229, %v2234
  %v2267 = vmul.f32 %v2233, %v2235
  %v2268 = vmul.f32 %v2229, %v2236
  %v2269 = vmul.f32 %v2233, %v2237
  %v2270 = vmul.f32 %v2229, %v2238
  %v2271 = vmul.f32 %v2233, %v2239
  %v2272 = vmul.f32 %v2229, %v2240
  %v2273 = vmul.f32 %v2233, %v2241
  %v2274 = vmul.f32 %v2229, %v2242
  %v2275 = vmul.f32 %v2233, %v2243
  %v2276 = vmul.f32 %v2229, %v2244
  %v2277 = vmul.f32 %v2233, %v2245
  %v2278 = vmul.f32 %v2229, %v2246
  %v2279 = vmul.f32 %v2233, %v2247
  %v2280 = vmul.f32 %v2229, %v2248
  %v2281 = vmul.f32 %v2233, %v2249
  %v2282 = vmul.f32 %v2229, %v2250
  %v2283 = vmul.f32 %v2233, %v2251
  %v2284 = vmul.f32 %v2229, %v2252
  %v2285 = vmul.f32 %v2233, %v2253
  %v2286 = vmul.f32 %v2229, %v2254
  %v2287 = vmul.f32 %v2233, %v2255
  %v2288 = vmul.f32 %v2229, %v2256
  %v2289 = vmul.f32 %v2233, %v2257
  %v2290 = vmul.f32 %v2229, %v2258
  %v2291 = vmul.f32 %v2233, %v2259
  %v2292 = vmul.f32 %v2229, %v2260
  %v2293 = vmul.f32 %v2233, %v2261
  %v2294 = vmul.f32 %v2229, %v2262
  %v2295 = vmul.f32 %v2233, %v2263
  %v2296 = vmul.f32 %v2229, %v2264
  %v2297 = vmul.f32 %v2233, %v2265
  %v2298 = vld [vmem:[%s2] sm:$0xff]
  %v2299 = vld [vmem:[%s2 + $0x8] sm:$0xff]
  %v2300 = vld [vmem:[%s2 + $0x10] sm:$0xff]
  %v2301 = vld [vmem:[%s2 + $0x18] sm:$0xff]
  %v2302 = vld [vmem:[%s2 + $0x20] sm:$0xff]
  %v2303 = vld [vmem:[%s2 + $0x28] sm:$0xff]
  %v2304 = vld [vmem:[%s2 + $0x30] sm:$0xff]
  %v2305 = vld [vmem:[%s2 + $0x38] sm:$0xff]
  %v2306 = vld [vmem:[%s2 + $0x40] sm:$0xff]
  %v2307 = vld [vmem:[%s2 + $0x48] sm:$0xff]
  %v2308 = vld [vmem:[%s2 + $0x50] sm:$0xff]
  %v2309 = vld [vmem:[%s2 + $0x58] sm:$0xff]
  %v2310 = vld [vmem:[%s2 + $0x60] sm:$0xff]
  %v2311 = vld [vmem:[%s2 + $0x68] sm:$0xff]
  %v2312 = vld [vmem:[%s2 + $0x70] sm:$0xff]
  %v2313 = vld [vmem:[%s2 + $0x78] sm:$0xff]
  %v2314 = vld [vmem:[%s2 + $0x80] sm:$0xff]
  %v2315 = vld [vmem:[%s2 + $0x88] sm:$0xff]
  %v2316 = vld [vmem:[%s2 + $0x90] sm:$0xff]
  %v2317 = vld [vmem:[%s2 + $0x98] sm:$0xff]
  %v2318 = vld [vmem:[%s2 + $0xa0] sm:$0xff]
  %v2319 = vld [vmem:[%s2 + $0xa8] sm:$0xff]
  %v2320 = vld [vmem:[%s2 + $0xb0] sm:$0xff]
  %v2321 = vld [vmem:[%s2 + $0xb8] sm:$0xff]
  %v2322 = vld [vmem:[%s2 + $0xc0] sm:$0xff]
  %v2323 = vld [vmem:[%s2 + $0xc8] sm:$0xff]
  %v2324 = vld [vmem:[%s2 + $0xd0] sm:$0xff]
  %v2325 = vld [vmem:[%s2 + $0xd8] sm:$0xff]
  %v2326 = vld [vmem:[%s2 + $0xe0] sm:$0xff]
  %v2327 = vld [vmem:[%s2 + $0xe8] sm:$0xff]
  %v2328 = vld [vmem:[%s2 + $0xf0] sm:$0xff]
  %v2329 = vld [vmem:[%s2 + $0xf8] sm:$0xff]
  %v2330 = vadd.f32 %v2266, %v2298
  %v2331 = vadd.f32 %v2267, %v2299
  %v2332 = vadd.f32 %v2268, %v2300
  %v2333 = vadd.f32 %v2269, %v2301
  %v2334 = vadd.f32 %v2270, %v2302
  %v2335 = vadd.f32 %v2271, %v2303
  %v2336 = vadd.f32 %v2272, %v2304
  %v2337 = vadd.f32 %v2273, %v2305
  %v2338 = vadd.f32 %v2274, %v2306
  %v2339 = vadd.f32 %v2275, %v2307
  %v2340 = vadd.f32 %v2276, %v2308
  %v2341 = vadd.f32 %v2277, %v2309
  %v2342 = vadd.f32 %v2278, %v2310
  %v2343 = vadd.f32 %v2279, %v2311
  %v2344 = vadd.f32 %v2280, %v2312
  %v2345 = vadd.f32 %v2281, %v2313
  %v2346 = vadd.f32 %v2282, %v2314
  %v2347 = vadd.f32 %v2283, %v2315
  %v2348 = vadd.f32 %v2284, %v2316
  %v2349 = vadd.f32 %v2285, %v2317
  %v2350 = vadd.f32 %v2286, %v2318
  %v2351 = vadd.f32 %v2287, %v2319
  %v2352 = vadd.f32 %v2288, %v2320
  %v2353 = vadd.f32 %v2289, %v2321
  %v2354 = vadd.f32 %v2290, %v2322
  %v2355 = vadd.f32 %v2291, %v2323
  %v2356 = vadd.f32 %v2292, %v2324
  %v2357 = vadd.f32 %v2293, %v2325
  %v2358 = vadd.f32 %v2294, %v2326
  %v2359 = vadd.f32 %v2295, %v2327
  %v2360 = vadd.f32 %v2296, %v2328
  %v2361 = vadd.f32 %v2297, %v2329
  %v2362 = vmax.f32 %v2330, 0.0
  %v2363 = vmax.f32 %v2331, 0.0
  %v2364 = vmax.f32 %v2332, 0.0
  %v2365 = vmax.f32 %v2333, 0.0
  %v2366 = vmax.f32 %v2334, 0.0
  %v2367 = vmax.f32 %v2335, 0.0
  %v2368 = vmax.f32 %v2336, 0.0
  %v2369 = vmax.f32 %v2337, 0.0
  %v2370 = vmax.f32 %v2338, 0.0
  %v2371 = vmax.f32 %v2339, 0.0
  %v2372 = vmax.f32 %v2340, 0.0
  %v2373 = vmax.f32 %v2341, 0.0
  %v2374 = vmax.f32 %v2342, 0.0
  %v2375 = vmax.f32 %v2343, 0.0
  %v2376 = vmax.f32 %v2344, 0.0
  %v2377 = vmax.f32 %v2345, 0.0
  %v2378 = vmax.f32 %v2346, 0.0
  %v2379 = vmax.f32 %v2347, 0.0
  %v2380 = vmax.f32 %v2348, 0.0
  %v2381 = vmax.f32 %v2349, 0.0
  %v2382 = vmax.f32 %v2350, 0.0
  %v2383 = vmax.f32 %v2351, 0.0
  %v2384 = vmax.f32 %v2352, 0.0
  %v2385 = vmax.f32 %v2353, 0.0
  %v2386 = vmax.f32 %v2354, 0.0
  %v2387 = vmax.f32 %v2355, 0.0
  %v2388 = vmax.f32 %v2356, 0.0
  %v2389 = vmax.f32 %v2357, 0.0
  %v2390 = vmax.f32 %v2358, 0.0
  %v2391 = vmax.f32 %v2359, 0.0
  %v2392 = vmax.f32 %v2360, 0.0
  %v2393 = vmax.f32 %v2361, 0.0
  %v2394 = vand.u32 %v2393, 4294901760
  %2395 = vmatprep.subr.mxu0 %v2394
  %v2396 = vand.u32 %v2392, 4294901760
  %2397 = vmatpush1.msra.mxu0 %v2396
  %v2398 = vand.u32 %v2391, 4294901760
  %2399 = vmatprep.subr.mxu0 %v2398
  %v2400 = vand.u32 %v2390, 4294901760
  %2401 = vmatpush1.msra.mxu0 %v2400
  %v2402 = vand.u32 %v2389, 4294901760
  %2403 = vmatprep.subr.mxu0 %v2402
  %v2404 = vand.u32 %v2388, 4294901760
  %2405 = vmatpush1.msra.mxu0 %v2404
  %v2406 = vand.u32 %v2387, 4294901760
  %2407 = vmatprep.subr.mxu0 %v2406
  %v2408 = vand.u32 %v2386, 4294901760
  %2409 = vmatpush1.msra.mxu0 %v2408
  %v2410 = vand.u32 %v2385, 4294901760
  %2411 = vmatprep.subr.mxu0 %v2410
  %v2412 = vand.u32 %v2384, 4294901760
  %2413 = vmatpush1.msra.mxu0 %v2412
  %v2414 = vand.u32 %v2383, 4294901760
  %2415 = vmatprep.subr.mxu0 %v2414
  %v2416 = vand.u32 %v2382, 4294901760
  %2417 = vmatpush1.msra.mxu0 %v2416
  %v2418 = vand.u32 %v2381, 4294901760
  %2419 = vmatprep.subr.mxu0 %v2418
  %v2420 = vand.u32 %v2380, 4294901760
  %2421 = vmatpush1.msra.mxu0 %v2420
  %v2422 = vand.u32 %v2379, 4294901760
  %2423 = vmatprep.subr.mxu0 %v2422
  %v2424 = vand.u32 %v2378, 4294901760
  %2425 = vmatpush1.msra.mxu0 %v2424
  %v2426 = vand.u32 %v2377, 4294901760
  %2427 = vmatprep.subr.mxu0 %v2426
  %v2428 = vand.u32 %v2376, 4294901760
  %2429 = vmatpush1.msra.mxu0 %v2428
  %v2430 = vand.u32 %v2375, 4294901760
  %2431 = vmatprep.subr.mxu0 %v2430
  %v2432 = vand.u32 %v2374, 4294901760
  %2433 = vmatpush1.msra.mxu0 %v2432
  %v2434 = vand.u32 %v2373, 4294901760
  %2435 = vmatprep.subr.mxu0 %v2434
  %v2436 = vand.u32 %v2372, 4294901760
  %2437 = vmatpush1.msra.mxu0 %v2436
  %v2438 = vand.u32 %v2371, 4294901760
  %2439 = vmatprep.subr.mxu0 %v2438
  %v2440 = vand.u32 %v2370, 4294901760
  %2441 = vmatpush1.msra.mxu0 %v2440
  %v2442 = vand.u32 %v2369, 4294901760
  %2443 = vmatprep.subr.mxu0 %v2442
  %v2444 = vand.u32 %v2368, 4294901760
  %2445 = vmatpush1.msra.mxu0 %v2444
  %v2446 = vand.u32 %v2367, 4294901760
  %2447 = vmatprep.subr.mxu0 %v2446
  %v2448 = vand.u32 %v2366, 4294901760
  %2449 = vmatpush1.msra.mxu0 %v2448
  %v2450 = vand.u32 %v2365, 4294901760
  %2451 = vmatprep.subr.mxu0 %v2450
  %v2452 = vand.u32 %v2364, 4294901760
  %2453 = vmatpush1.msra.mxu0 %v2452
  %v2454 = vand.u32 %v2363, 4294901760
  %2455 = vmatprep.subr.mxu0 %v2454
  %v2456 = vand.u32 %v2362, 4294901760
  %2457 = vmatpush1.msra.mxu0 %v2456
  %2458 = vmatprep.subr.mxu0 0.0
  %2459 = vmatpush2.msra.mxu0 0.0
  %2460 = vmatprep.subr.mxu0 0.0
  %2461 = vmatpush2.msra.mxu0 0.0
  %2462 = vmatprep.subr.mxu0 0.0
  %2463 = vmatpush2.msra.mxu0 0.0
  %2464 = vmatprep.subr.mxu0 0.0
  %2465 = vmatpush2.msra.mxu0 0.0
  %2466 = vmatprep.subr.mxu0 0.0
  %2467 = vmatpush2.msra.mxu0 0.0
  %2468 = vmatprep.subr.mxu0 0.0
  %2469 = vmatpush2.msra.mxu0 0.0
  %2470 = vmatprep.subr.mxu0 0.0
  %2471 = vmatpush2.msra.mxu0 0.0
  %2472 = vmatprep.subr.mxu0 0.0
  %2473 = vmatpush2.msra.mxu0 0.0
  %2474 = vmatprep.subr.mxu0 0.0
  %2475 = vmatpush2.msra.mxu0 0.0
  %2476 = vmatprep.subr.mxu0 0.0
  %2477 = vmatpush2.msra.mxu0 0.0
  %2478 = vmatprep.subr.mxu0 0.0
  %2479 = vmatpush2.msra.mxu0 0.0
  %2480 = vmatprep.subr.mxu0 0.0
  %2481 = vmatpush2.msra.mxu0 0.0
  %2482 = vmatprep.subr.mxu0 0.0
  %2483 = vmatpush2.msra.mxu0 0.0
  %2484 = vmatprep.subr.mxu0 0.0
  %2485 = vmatpush2.msra.mxu0 0.0
  %2486 = vmatprep.subr.mxu0 0.0
  %2487 = vmatpush2.msra.mxu0 0.0
  %2488 = vmatprep.subr.mxu0 0.0
  %2489 = vmatpush2.msra.mxu0 0.0
  %2490 = vmatprep.mubr.f32.mxu0 0.0
  %v2491 = vand.u32 %v25, 4294901760
  %v2492 = vsub.f32 %v25, %v2491
  %v2493 = vand.u32 %v2492, 4294901760
  %v2494 = vsub.f32 %v2492, %v2493
  %v2495 = vand.u32 %v2494, 4294901760
  %2496 = vmatmul.mubr.f32.gmra.mxu0 %v2495
  %v2497 = vpop.f32.mrf.mxu0
  %v2498 = vadd.f32 %v26, %v2497
  %v2499 = vpop.f32.mrf.mxu0
  %v2500 = vadd.f32 %v27, %v2499
  %2501 = vdwg.mxu0
  %v2502 = vand.u32 %v2393, 4294901760
  %v2503 = vsub.f32 %v2393, %v2502
  %v2504 = vand.u32 %v2503, 4294901760
  %v2505 = vsub.f32 %v2503, %v2504
  %v2506 = vand.u32 %v2505, 4294901760
  %2507 = vmatprep.subr.mxu0 %v2506
  %v2508 = vand.u32 %v2392, 4294901760
  %v2509 = vsub.f32 %v2392, %v2508
  %v2510 = vand.u32 %v2509, 4294901760
  %v2511 = vsub.f32 %v2509, %v2510
  %v2512 = vand.u32 %v2511, 4294901760
  %2513 = vmatpush1.msra.mxu0 %v2512
  %v2514 = vand.u32 %v2391, 4294901760
  %v2515 = vsub.f32 %v2391, %v2514
  %v2516 = vand.u32 %v2515, 4294901760
  %v2517 = vsub.f32 %v2515, %v2516
  %v2518 = vand.u32 %v2517, 4294901760
  %2519 = vmatprep.subr.mxu0 %v2518
  %v2520 = vand.u32 %v2390, 4294901760
  %v2521 = vsub.f32 %v2390, %v2520
  %v2522 = vand.u32 %v2521, 4294901760
  %v2523 = vsub.f32 %v2521, %v2522
  %v2524 = vand.u32 %v2523, 4294901760
  %2525 = vmatpush1.msra.mxu0 %v2524
  %v2526 = vand.u32 %v2389, 4294901760
  %v2527 = vsub.f32 %v2389, %v2526
  %v2528 = vand.u32 %v2527, 4294901760
  %v2529 = vsub.f32 %v2527, %v2528
  %v2530 = vand.u32 %v2529, 4294901760
  %2531 = vmatprep.subr.mxu0 %v2530
  %v2532 = vand.u32 %v2388, 4294901760
  %v2533 = vsub.f32 %v2388, %v2532
  %v2534 = vand.u32 %v2533, 4294901760
  %v2535 = vsub.f32 %v2533, %v2534
  %v2536 = vand.u32 %v2535, 4294901760
  %2537 = vmatpush1.msra.mxu0 %v2536
  %v2538 = vand.u32 %v2387, 4294901760
  %v2539 = vsub.f32 %v2387, %v2538
  %v2540 = vand.u32 %v2539, 4294901760
  %v2541 = vsub.f32 %v2539, %v2540
  %v2542 = vand.u32 %v2541, 4294901760
  %2543 = vmatprep.subr.mxu0 %v2542
  %v2544 = vand.u32 %v2386, 4294901760
  %v2545 = vsub.f32 %v2386, %v2544
  %v2546 = vand.u32 %v2545, 4294901760
  %v2547 = vsub.f32 %v2545, %v2546
  %v2548 = vand.u32 %v2547, 4294901760
  %2549 = vmatpush1.msra.mxu0 %v2548
  %v2550 = vand.u32 %v2385, 4294901760
  %v2551 = vsub.f32 %v2385, %v2550
  %v2552 = vand.u32 %v2551, 4294901760
  %v2553 = vsub.f32 %v2551, %v2552
  %v2554 = vand.u32 %v2553, 4294901760
  %2555 = vmatprep.subr.mxu0 %v2554
  %v2556 = vand.u32 %v2384, 4294901760
  %v2557 = vsub.f32 %v2384, %v2556
  %v2558 = vand.u32 %v2557, 4294901760
  %v2559 = vsub.f32 %v2557, %v2558
  %v2560 = vand.u32 %v2559, 4294901760
  %2561 = vmatpush1.msra.mxu0 %v2560
  %v2562 = vand.u32 %v2383, 4294901760
  %v2563 = vsub.f32 %v2383, %v2562
  %v2564 = vand.u32 %v2563, 4294901760
  %v2565 = vsub.f32 %v2563, %v2564
  %v2566 = vand.u32 %v2565, 4294901760
  %2567 = vmatprep.subr.mxu0 %v2566
  %v2568 = vand.u32 %v2382, 4294901760
  %v2569 = vsub.f32 %v2382, %v2568
  %v2570 = vand.u32 %v2569, 4294901760
  %v2571 = vsub.f32 %v2569, %v2570
  %v2572 = vand.u32 %v2571, 4294901760
  %2573 = vmatpush1.msra.mxu0 %v2572
  %v2574 = vand.u32 %v2381, 4294901760
  %v2575 = vsub.f32 %v2381, %v2574
  %v2576 = vand.u32 %v2575, 4294901760
  %v2577 = vsub.f32 %v2575, %v2576
  %v2578 = vand.u32 %v2577, 4294901760
  %2579 = vmatprep.subr.mxu0 %v2578
  %v2580 = vand.u32 %v2380, 4294901760
  %v2581 = vsub.f32 %v2380, %v2580
  %v2582 = vand.u32 %v2581, 4294901760
  %v2583 = vsub.f32 %v2581, %v2582
  %v2584 = vand.u32 %v2583, 4294901760
  %2585 = vmatpush1.msra.mxu0 %v2584
  %v2586 = vand.u32 %v2379, 4294901760
  %v2587 = vsub.f32 %v2379, %v2586
  %v2588 = vand.u32 %v2587, 4294901760
  %v2589 = vsub.f32 %v2587, %v2588
  %v2590 = vand.u32 %v2589, 4294901760
  %2591 = vmatprep.subr.mxu0 %v2590
  %v2592 = vand.u32 %v2378, 4294901760
  %v2593 = vsub.f32 %v2378, %v2592
  %v2594 = vand.u32 %v2593, 4294901760
  %v2595 = vsub.f32 %v2593, %v2594
  %v2596 = vand.u32 %v2595, 4294901760
  %2597 = vmatpush1.msra.mxu0 %v2596
  %v2598 = vand.u32 %v2377, 4294901760
  %v2599 = vsub.f32 %v2377, %v2598
  %v2600 = vand.u32 %v2599, 4294901760
  %v2601 = vsub.f32 %v2599, %v2600
  %v2602 = vand.u32 %v2601, 4294901760
  %2603 = vmatprep.subr.mxu0 %v2602
  %v2604 = vand.u32 %v2376, 4294901760
  %v2605 = vsub.f32 %v2376, %v2604
  %v2606 = vand.u32 %v2605, 4294901760
  %v2607 = vsub.f32 %v2605, %v2606
  %v2608 = vand.u32 %v2607, 4294901760
  %2609 = vmatpush1.msra.mxu0 %v2608
  %v2610 = vand.u32 %v2375, 4294901760
  %v2611 = vsub.f32 %v2375, %v2610
  %v2612 = vand.u32 %v2611, 4294901760
  %v2613 = vsub.f32 %v2611, %v2612
  %v2614 = vand.u32 %v2613, 4294901760
  %2615 = vmatprep.subr.mxu0 %v2614
  %v2616 = vand.u32 %v2374, 4294901760
  %v2617 = vsub.f32 %v2374, %v2616
  %v2618 = vand.u32 %v2617, 4294901760
  %v2619 = vsub.f32 %v2617, %v2618
  %v2620 = vand.u32 %v2619, 4294901760
  %2621 = vmatpush1.msra.mxu0 %v2620
  %v2622 = vand.u32 %v2373, 4294901760
  %v2623 = vsub.f32 %v2373, %v2622
  %v2624 = vand.u32 %v2623, 4294901760
  %v2625 = vsub.f32 %v2623, %v2624
  %v2626 = vand.u32 %v2625, 4294901760
  %2627 = vmatprep.subr.mxu0 %v2626
  %v2628 = vand.u32 %v2372, 4294901760
  %v2629 = vsub.f32 %v2372, %v2628
  %v2630 = vand.u32 %v2629, 4294901760
  %v2631 = vsub.f32 %v2629, %v2630
  %v2632 = vand.u32 %v2631, 4294901760
  %2633 = vmatpush1.msra.mxu0 %v2632
  %v2634 = vand.u32 %v2371, 4294901760
  %v2635 = vsub.f32 %v2371, %v2634
  %v2636 = vand.u32 %v2635, 4294901760
  %v2637 = vsub.f32 %v2635, %v2636
  %v2638 = vand.u32 %v2637, 4294901760
  %2639 = vmatprep.subr.mxu0 %v2638
  %v2640 = vand.u32 %v2370, 4294901760
  %v2641 = vsub.f32 %v2370, %v2640
  %v2642 = vand.u32 %v2641, 4294901760
  %v2643 = vsub.f32 %v2641, %v2642
  %v2644 = vand.u32 %v2643, 4294901760
  %2645 = vmatpush1.msra.mxu0 %v2644
  %v2646 = vand.u32 %v2369, 4294901760
  %v2647 = vsub.f32 %v2369, %v2646
  %v2648 = vand.u32 %v2647, 4294901760
  %v2649 = vsub.f32 %v2647, %v2648
  %v2650 = vand.u32 %v2649, 4294901760
  %2651 = vmatprep.subr.mxu0 %v2650
  %v2652 = vand.u32 %v2368, 4294901760
  %v2653 = vsub.f32 %v2368, %v2652
  %v2654 = vand.u32 %v2653, 4294901760
  %v2655 = vsub.f32 %v2653, %v2654
  %v2656 = vand.u32 %v2655, 4294901760
  %2657 = vmatpush1.msra.mxu0 %v2656
  %v2658 = vand.u32 %v2367, 4294901760
  %v2659 = vsub.f32 %v2367, %v2658
  %v2660 = vand.u32 %v2659, 4294901760
  %v2661 = vsub.f32 %v2659, %v2660
  %v2662 = vand.u32 %v2661, 4294901760
  %2663 = vmatprep.subr.mxu0 %v2662
  %v2664 = vand.u32 %v2366, 4294901760
  %v2665 = vsub.f32 %v2366, %v2664
  %v2666 = vand.u32 %v2665, 4294901760
  %v2667 = vsub.f32 %v2665, %v2666
  %v2668 = vand.u32 %v2667, 4294901760
  %2669 = vmatpush1.msra.mxu0 %v2668
  %v2670 = vand.u32 %v2365, 4294901760
  %v2671 = vsub.f32 %v2365, %v2670
  %v2672 = vand.u32 %v2671, 4294901760
  %v2673 = vsub.f32 %v2671, %v2672
  %v2674 = vand.u32 %v2673, 4294901760
  %2675 = vmatprep.subr.mxu0 %v2674
  %v2676 = vand.u32 %v2364, 4294901760
  %v2677 = vsub.f32 %v2364, %v2676
  %v2678 = vand.u32 %v2677, 4294901760
  %v2679 = vsub.f32 %v2677, %v2678
  %v2680 = vand.u32 %v2679, 4294901760
  %2681 = vmatpush1.msra.mxu0 %v2680
  %v2682 = vand.u32 %v2363, 4294901760
  %v2683 = vsub.f32 %v2363, %v2682
  %v2684 = vand.u32 %v2683, 4294901760
  %v2685 = vsub.f32 %v2683, %v2684
  %v2686 = vand.u32 %v2685, 4294901760
  %2687 = vmatprep.subr.mxu0 %v2686
  %v2688 = vand.u32 %v2362, 4294901760
  %v2689 = vsub.f32 %v2362, %v2688
  %v2690 = vand.u32 %v2689, 4294901760
  %v2691 = vsub.f32 %v2689, %v2690
  %v2692 = vand.u32 %v2691, 4294901760
  %2693 = vmatpush1.msra.mxu0 %v2692
  %2694 = vmatprep.subr.mxu0 0.0
  %2695 = vmatpush2.msra.mxu0 0.0
  %2696 = vmatprep.subr.mxu0 0.0
  %2697 = vmatpush2.msra.mxu0 0.0
  %2698 = vmatprep.subr.mxu0 0.0
  %2699 = vmatpush2.msra.mxu0 0.0
  %2700 = vmatprep.subr.mxu0 0.0
  %2701 = vmatpush2.msra.mxu0 0.0
  %2702 = vmatprep.subr.mxu0 0.0
  %2703 = vmatpush2.msra.mxu0 0.0
  %2704 = vmatprep.subr.mxu0 0.0
  %2705 = vmatpush2.msra.mxu0 0.0
  %2706 = vmatprep.subr.mxu0 0.0
  %2707 = vmatpush2.msra.mxu0 0.0
  %2708 = vmatprep.subr.mxu0 0.0
  %2709 = vmatpush2.msra.mxu0 0.0
  %2710 = vmatprep.subr.mxu0 0.0
  %2711 = vmatpush2.msra.mxu0 0.0
  %2712 = vmatprep.subr.mxu0 0.0
  %2713 = vmatpush2.msra.mxu0 0.0
  %2714 = vmatprep.subr.mxu0 0.0
  %2715 = vmatpush2.msra.mxu0 0.0
  %2716 = vmatprep.subr.mxu0 0.0
  %2717 = vmatpush2.msra.mxu0 0.0
  %2718 = vmatprep.subr.mxu0 0.0
  %2719 = vmatpush2.msra.mxu0 0.0
  %2720 = vmatprep.subr.mxu0 0.0
  %2721 = vmatpush2.msra.mxu0 0.0
  %2722 = vmatprep.subr.mxu0 0.0
  %2723 = vmatpush2.msra.mxu0 0.0
  %2724 = vmatprep.subr.mxu0 0.0
  %2725 = vmatpush2.msra.mxu0 0.0
  %2726 = vmatprep.mubr.f32.mxu0 0.0
  %v2727 = vand.u32 %v25, 4294901760
  %2728 = vmatmul.mubr.f32.gmra.mxu0 %v2727
  %v2729 = vpop.f32.mrf.mxu0
  %v2730 = vadd.f32 %v2498, %v2729
  %v2731 = vpop.f32.mrf.mxu0
  %v2732 = vadd.f32 %v2500, %v2731
  %2733 = vdwg.mxu0
  %v2734 = vand.u32 %v2393, 4294901760
  %v2735 = vsub.f32 %v2393, %v2734
  %2736 = vmatprep.subr.mxu0 %v2735
  %v2737 = vand.u32 %v2392, 4294901760
  %v2738 = vsub.f32 %v2392, %v2737
  %2739 = vmatpush1.msra.mxu0 %v2738
  %v2740 = vand.u32 %v2391, 4294901760
  %v2741 = vsub.f32 %v2391, %v2740
  %2742 = vmatprep.subr.mxu0 %v2741
  %v2743 = vand.u32 %v2390, 4294901760
  %v2744 = vsub.f32 %v2390, %v2743
  %2745 = vmatpush1.msra.mxu0 %v2744
  %v2746 = vand.u32 %v2389, 4294901760
  %v2747 = vsub.f32 %v2389, %v2746
  %2748 = vmatprep.subr.mxu0 %v2747
  %v2749 = vand.u32 %v2388, 4294901760
  %v2750 = vsub.f32 %v2388, %v2749
  %2751 = vmatpush1.msra.mxu0 %v2750
  %v2752 = vand.u32 %v2387, 4294901760
  %v2753 = vsub.f32 %v2387, %v2752
  %2754 = vmatprep.subr.mxu0 %v2753
  %v2755 = vand.u32 %v2386, 4294901760
  %v2756 = vsub.f32 %v2386, %v2755
  %2757 = vmatpush1.msra.mxu0 %v2756
  %v2758 = vand.u32 %v2385, 4294901760
  %v2759 = vsub.f32 %v2385, %v2758
  %2760 = vmatprep.subr.mxu0 %v2759
  %v2761 = vand.u32 %v2384, 4294901760
  %v2762 = vsub.f32 %v2384, %v2761
  %2763 = vmatpush1.msra.mxu0 %v2762
  %v2764 = vand.u32 %v2383, 4294901760
  %v2765 = vsub.f32 %v2383, %v2764
  %2766 = vmatprep.subr.mxu0 %v2765
  %v2767 = vand.u32 %v2382, 4294901760
  %v2768 = vsub.f32 %v2382, %v2767
  %2769 = vmatpush1.msra.mxu0 %v2768
  %v2770 = vand.u32 %v2381, 4294901760
  %v2771 = vsub.f32 %v2381, %v2770
  %2772 = vmatprep.subr.mxu0 %v2771
  %v2773 = vand.u32 %v2380, 4294901760
  %v2774 = vsub.f32 %v2380, %v2773
  %2775 = vmatpush1.msra.mxu0 %v2774
  %v2776 = vand.u32 %v2379, 4294901760
  %v2777 = vsub.f32 %v2379, %v2776
  %2778 = vmatprep.subr.mxu0 %v2777
  %v2779 = vand.u32 %v2378, 4294901760
  %v2780 = vsub.f32 %v2378, %v2779
  %2781 = vmatpush1.msra.mxu0 %v2780
  %v2782 = vand.u32 %v2377, 4294901760
  %v2783 = vsub.f32 %v2377, %v2782
  %2784 = vmatprep.subr.mxu0 %v2783
  %v2785 = vand.u32 %v2376, 4294901760
  %v2786 = vsub.f32 %v2376, %v2785
  %2787 = vmatpush1.msra.mxu0 %v2786
  %v2788 = vand.u32 %v2375, 4294901760
  %v2789 = vsub.f32 %v2375, %v2788
  %2790 = vmatprep.subr.mxu0 %v2789
  %v2791 = vand.u32 %v2374, 4294901760
  %v2792 = vsub.f32 %v2374, %v2791
  %2793 = vmatpush1.msra.mxu0 %v2792
  %v2794 = vand.u32 %v2373, 4294901760
  %v2795 = vsub.f32 %v2373, %v2794
  %2796 = vmatprep.subr.mxu0 %v2795
  %v2797 = vand.u32 %v2372, 4294901760
  %v2798 = vsub.f32 %v2372, %v2797
  %2799 = vmatpush1.msra.mxu0 %v2798
  %v2800 = vand.u32 %v2371, 4294901760
  %v2801 = vsub.f32 %v2371, %v2800
  %2802 = vmatprep.subr.mxu0 %v2801
  %v2803 = vand.u32 %v2370, 4294901760
  %v2804 = vsub.f32 %v2370, %v2803
  %2805 = vmatpush1.msra.mxu0 %v2804
  %v2806 = vand.u32 %v2369, 4294901760
  %v2807 = vsub.f32 %v2369, %v2806
  %2808 = vmatprep.subr.mxu0 %v2807
  %v2809 = vand.u32 %v2368, 4294901760
  %v2810 = vsub.f32 %v2368, %v2809
  %2811 = vmatpush1.msra.mxu0 %v2810
  %v2812 = vand.u32 %v2367, 4294901760
  %v2813 = vsub.f32 %v2367, %v2812
  %2814 = vmatprep.subr.mxu0 %v2813
  %v2815 = vand.u32 %v2366, 4294901760
  %v2816 = vsub.f32 %v2366, %v2815
  %2817 = vmatpush1.msra.mxu0 %v2816
  %v2818 = vand.u32 %v2365, 4294901760
  %v2819 = vsub.f32 %v2365, %v2818
  %2820 = vmatprep.subr.mxu0 %v2819
  %v2821 = vand.u32 %v2364, 4294901760
  %v2822 = vsub.f32 %v2364, %v2821
  %2823 = vmatpush1.msra.mxu0 %v2822
  %v2824 = vand.u32 %v2363, 4294901760
  %v2825 = vsub.f32 %v2363, %v2824
  %2826 = vmatprep.subr.mxu0 %v2825
  %v2827 = vand.u32 %v2362, 4294901760
  %v2828 = vsub.f32 %v2362, %v2827
  %2829 = vmatpush1.msra.mxu0 %v2828
  %2830 = vmatprep.subr.mxu0 0.0
  %2831 = vmatpush2.msra.mxu0 0.0
  %2832 = vmatprep.subr.mxu0 0.0
  %2833 = vmatpush2.msra.mxu0 0.0
  %2834 = vmatprep.subr.mxu0 0.0
  %2835 = vmatpush2.msra.mxu0 0.0
  %2836 = vmatprep.subr.mxu0 0.0
  %2837 = vmatpush2.msra.mxu0 0.0
  %2838 = vmatprep.subr.mxu0 0.0
  %2839 = vmatpush2.msra.mxu0 0.0
  %2840 = vmatprep.subr.mxu0 0.0
  %2841 = vmatpush2.msra.mxu0 0.0
  %2842 = vmatprep.subr.mxu0 0.0
  %2843 = vmatpush2.msra.mxu0 0.0
  %2844 = vmatprep.subr.mxu0 0.0
  %2845 = vmatpush2.msra.mxu0 0.0
  %2846 = vmatprep.subr.mxu0 0.0
  %2847 = vmatpush2.msra.mxu0 0.0
  %2848 = vmatprep.subr.mxu0 0.0
  %2849 = vmatpush2.msra.mxu0 0.0
  %2850 = vmatprep.subr.mxu0 0.0
  %2851 = vmatpush2.msra.mxu0 0.0
  %2852 = vmatprep.subr.mxu0 0.0
  %2853 = vmatpush2.msra.mxu0 0.0
  %2854 = vmatprep.subr.mxu0 0.0
  %2855 = vmatpush2.msra.mxu0 0.0
  %2856 = vmatprep.subr.mxu0 0.0
  %2857 = vmatpush2.msra.mxu0 0.0
  %2858 = vmatprep.subr.mxu0 0.0
  %2859 = vmatpush2.msra.mxu0 0.0
  %2860 = vmatprep.subr.mxu0 0.0
  %2861 = vmatpush2.msra.mxu0 0.0
  %2862 = vmatprep.mubr.f32.mxu0 0.0
  %v2863 = vand.u32 %v25, 4294901760
  %v2864 = vsub.f32 %v25, %v2863
  %2865 = vmatmul.mubr.f32.gmra.mxu0 %v2864
  %v2866 = vpop.f32.mrf.mxu0
  %v2867 = vadd.f32 %v2730, %v2866
  %v2868 = vpop.f32.mrf.mxu0
  %v2869 = vadd.f32 %v2732, %v2868
  %2870 = vdwg.mxu0
  %v2871 = vand.u32 %v2393, 4294901760
  %2872 = vmatprep.subr.mxu0 %v2871
  %v2873 = vand.u32 %v2392, 4294901760
  %2874 = vmatpush1.msra.mxu0 %v2873
  %v2875 = vand.u32 %v2391, 4294901760
  %2876 = vmatprep.subr.mxu0 %v2875
  %v2877 = vand.u32 %v2390, 4294901760
  %2878 = vmatpush1.msra.mxu0 %v2877
  %v2879 = vand.u32 %v2389, 4294901760
  %2880 = vmatprep.subr.mxu0 %v2879
  %v2881 = vand.u32 %v2388, 4294901760
  %2882 = vmatpush1.msra.mxu0 %v2881
  %v2883 = vand.u32 %v2387, 4294901760
  %2884 = vmatprep.subr.mxu0 %v2883
  %v2885 = vand.u32 %v2386, 4294901760
  %2886 = vmatpush1.msra.mxu0 %v2885
  %v2887 = vand.u32 %v2385, 4294901760
  %2888 = vmatprep.subr.mxu0 %v2887
  %v2889 = vand.u32 %v2384, 4294901760
  %2890 = vmatpush1.msra.mxu0 %v2889
  %v2891 = vand.u32 %v2383, 4294901760
  %2892 = vmatprep.subr.mxu0 %v2891
  %v2893 = vand.u32 %v2382, 4294901760
  %2894 = vmatpush1.msra.mxu0 %v2893
  %v2895 = vand.u32 %v2381, 4294901760
  %2896 = vmatprep.subr.mxu0 %v2895
  %v2897 = vand.u32 %v2380, 4294901760
  %2898 = vmatpush1.msra.mxu0 %v2897
  %v2899 = vand.u32 %v2379, 4294901760
  %2900 = vmatprep.subr.mxu0 %v2899
  %v2901 = vand.u32 %v2378, 4294901760
  %2902 = vmatpush1.msra.mxu0 %v2901
  %v2903 = vand.u32 %v2377, 4294901760
  %2904 = vmatprep.subr.mxu0 %v2903
  %v2905 = vand.u32 %v2376, 4294901760
  %2906 = vmatpush1.msra.mxu0 %v2905
  %v2907 = vand.u32 %v2375, 4294901760
  %2908 = vmatprep.subr.mxu0 %v2907
  %v2909 = vand.u32 %v2374, 4294901760
  %2910 = vmatpush1.msra.mxu0 %v2909
  %v2911 = vand.u32 %v2373, 4294901760
  %2912 = vmatprep.subr.mxu0 %v2911
  %v2913 = vand.u32 %v2372, 4294901760
  %2914 = vmatpush1.msra.mxu0 %v2913
  %v2915 = vand.u32 %v2371, 4294901760
  %2916 = vmatprep.subr.mxu0 %v2915
  %v2917 = vand.u32 %v2370, 4294901760
  %2918 = vmatpush1.msra.mxu0 %v2917
  %v2919 = vand.u32 %v2369, 4294901760
  %2920 = vmatprep.subr.mxu0 %v2919
  %v2921 = vand.u32 %v2368, 4294901760
  %2922 = vmatpush1.msra.mxu0 %v2921
  %v2923 = vand.u32 %v2367, 4294901760
  %2924 = vmatprep.subr.mxu0 %v2923
  %v2925 = vand.u32 %v2366, 4294901760
  %2926 = vmatpush1.msra.mxu0 %v2925
  %v2927 = vand.u32 %v2365, 4294901760
  %2928 = vmatprep.subr.mxu0 %v2927
  %v2929 = vand.u32 %v2364, 4294901760
  %2930 = vmatpush1.msra.mxu0 %v2929
  %v2931 = vand.u32 %v2363, 4294901760
  %2932 = vmatprep.subr.mxu0 %v2931
  %v2933 = vand.u32 %v2362, 4294901760
  %2934 = vmatpush1.msra.mxu0 %v2933
  %2935 = vmatprep.subr.mxu0 0.0
  %2936 = vmatpush2.msra.mxu0 0.0
  %2937 = vmatprep.subr.mxu0 0.0
  %2938 = vmatpush2.msra.mxu0 0.0
  %2939 = vmatprep.subr.mxu0 0.0
  %2940 = vmatpush2.msra.mxu0 0.0
  %2941 = vmatprep.subr.mxu0 0.0
  %2942 = vmatpush2.msra.mxu0 0.0
  %2943 = vmatprep.subr.mxu0 0.0
  %2944 = vmatpush2.msra.mxu0 0.0
  %2945 = vmatprep.subr.mxu0 0.0
  %2946 = vmatpush2.msra.mxu0 0.0
  %2947 = vmatprep.subr.mxu0 0.0
  %2948 = vmatpush2.msra.mxu0 0.0
  %2949 = vmatprep.subr.mxu0 0.0
  %2950 = vmatpush2.msra.mxu0 0.0
  %2951 = vmatprep.subr.mxu0 0.0
  %2952 = vmatpush2.msra.mxu0 0.0
  %2953 = vmatprep.subr.mxu0 0.0
  %2954 = vmatpush2.msra.mxu0 0.0
  %2955 = vmatprep.subr.mxu0 0.0
  %2956 = vmatpush2.msra.mxu0 0.0
  %2957 = vmatprep.subr.mxu0 0.0
  %2958 = vmatpush2.msra.mxu0 0.0
  %2959 = vmatprep.subr.mxu0 0.0
  %2960 = vmatpush2.msra.mxu0 0.0
  %2961 = vmatprep.subr.mxu0 0.0
  %2962 = vmatpush2.msra.mxu0 0.0
  %2963 = vmatprep.subr.mxu0 0.0
  %2964 = vmatpush2.msra.mxu0 0.0
  %2965 = vmatprep.subr.mxu0 0.0
  %2966 = vmatpush2.msra.mxu0 0.0
  %2967 = vmatprep.mubr.f32.mxu0 0.0
  %v2968 = vand.u32 %v25, 4294901760
  %v2969 = vsub.f32 %v25, %v2968
  %v2970 = vand.u32 %v2969, 4294901760
  %2971 = vmatmul.mubr.f32.gmra.mxu0 %v2970
  %v2972 = vpop.f32.mrf.mxu0
  %v2973 = vadd.f32 %v2867, %v2972
  %v2974 = vpop.f32.mrf.mxu0
  %v2975 = vadd.f32 %v2869, %v2974
  %2976 = vdwg.mxu0
  %v2977 = vand.u32 %v2393, 4294901760
  %v2978 = vsub.f32 %v2393, %v2977
  %v2979 = vand.u32 %v2978, 4294901760
  %2980 = vmatprep.subr.mxu0 %v2979
  %v2981 = vand.u32 %v2392, 4294901760
  %v2982 = vsub.f32 %v2392, %v2981
  %v2983 = vand.u32 %v2982, 4294901760
  %2984 = vmatpush1.msra.mxu0 %v2983
  %v2985 = vand.u32 %v2391, 4294901760
  %v2986 = vsub.f32 %v2391, %v2985
  %v2987 = vand.u32 %v2986, 4294901760
  %2988 = vmatprep.subr.mxu0 %v2987
  %v2989 = vand.u32 %v2390, 4294901760
  %v2990 = vsub.f32 %v2390, %v2989
  %v2991 = vand.u32 %v2990, 4294901760
  %2992 = vmatpush1.msra.mxu0 %v2991
  %v2993 = vand.u32 %v2389, 4294901760
  %v2994 = vsub.f32 %v2389, %v2993
  %v2995 = vand.u32 %v2994, 4294901760
  %2996 = vmatprep.subr.mxu0 %v2995
  %v2997 = vand.u32 %v2388, 4294901760
  %v2998 = vsub.f32 %v2388, %v2997
  %v2999 = vand.u32 %v2998, 4294901760
  %3000 = vmatpush1.msra.mxu0 %v2999
  %v3001 = vand.u32 %v2387, 4294901760
  %v3002 = vsub.f32 %v2387, %v3001
  %v3003 = vand.u32 %v3002, 4294901760
  %3004 = vmatprep.subr.mxu0 %v3003
  %v3005 = vand.u32 %v2386, 4294901760
  %v3006 = vsub.f32 %v2386, %v3005
  %v3007 = vand.u32 %v3006, 4294901760
  %3008 = vmatpush1.msra.mxu0 %v3007
  %v3009 = vand.u32 %v2385, 4294901760
  %v3010 = vsub.f32 %v2385, %v3009
  %v3011 = vand.u32 %v3010, 4294901760
  %3012 = vmatprep.subr.mxu0 %v3011
  %v3013 = vand.u32 %v2384, 4294901760
  %v3014 = vsub.f32 %v2384, %v3013
  %v3015 = vand.u32 %v3014, 4294901760
  %3016 = vmatpush1.msra.mxu0 %v3015
  %v3017 = vand.u32 %v2383, 4294901760
  %v3018 = vsub.f32 %v2383, %v3017
  %v3019 = vand.u32 %v3018, 4294901760
  %3020 = vmatprep.subr.mxu0 %v3019
  %v3021 = vand.u32 %v2382, 4294901760
  %v3022 = vsub.f32 %v2382, %v3021
  %v3023 = vand.u32 %v3022, 4294901760
  %3024 = vmatpush1.msra.mxu0 %v3023
  %v3025 = vand.u32 %v2381, 4294901760
  %v3026 = vsub.f32 %v2381, %v3025
  %v3027 = vand.u32 %v3026, 4294901760
  %3028 = vmatprep.subr.mxu0 %v3027
  %v3029 = vand.u32 %v2380, 4294901760
  %v3030 = vsub.f32 %v2380, %v3029
  %v3031 = vand.u32 %v3030, 4294901760
  %3032 = vmatpush1.msra.mxu0 %v3031
  %v3033 = vand.u32 %v2379, 4294901760
  %v3034 = vsub.f32 %v2379, %v3033
  %v3035 = vand.u32 %v3034, 4294901760
  %3036 = vmatprep.subr.mxu0 %v3035
  %v3037 = vand.u32 %v2378, 4294901760
  %v3038 = vsub.f32 %v2378, %v3037
  %v3039 = vand.u32 %v3038, 4294901760
  %3040 = vmatpush1.msra.mxu0 %v3039
  %v3041 = vand.u32 %v2377, 4294901760
  %v3042 = vsub.f32 %v2377, %v3041
  %v3043 = vand.u32 %v3042, 4294901760
  %3044 = vmatprep.subr.mxu0 %v3043
  %v3045 = vand.u32 %v2376, 4294901760
  %v3046 = vsub.f32 %v2376, %v3045
  %v3047 = vand.u32 %v3046, 4294901760
  %3048 = vmatpush1.msra.mxu0 %v3047
  %v3049 = vand.u32 %v2375, 4294901760
  %v3050 = vsub.f32 %v2375, %v3049
  %v3051 = vand.u32 %v3050, 4294901760
  %3052 = vmatprep.subr.mxu0 %v3051
  %v3053 = vand.u32 %v2374, 4294901760
  %v3054 = vsub.f32 %v2374, %v3053
  %v3055 = vand.u32 %v3054, 4294901760
  %3056 = vmatpush1.msra.mxu0 %v3055
  %v3057 = vand.u32 %v2373, 4294901760
  %v3058 = vsub.f32 %v2373, %v3057
  %v3059 = vand.u32 %v3058, 4294901760
  %3060 = vmatprep.subr.mxu0 %v3059
  %v3061 = vand.u32 %v2372, 4294901760
  %v3062 = vsub.f32 %v2372, %v3061
  %v3063 = vand.u32 %v3062, 4294901760
  %3064 = vmatpush1.msra.mxu0 %v3063
  %v3065 = vand.u32 %v2371, 4294901760
  %v3066 = vsub.f32 %v2371, %v3065
  %v3067 = vand.u32 %v3066, 4294901760
  %3068 = vmatprep.subr.mxu0 %v3067
  %v3069 = vand.u32 %v2370, 4294901760
  %v3070 = vsub.f32 %v2370, %v3069
  %v3071 = vand.u32 %v3070, 4294901760
  %3072 = vmatpush1.msra.mxu0 %v3071
  %v3073 = vand.u32 %v2369, 4294901760
  %v3074 = vsub.f32 %v2369, %v3073
  %v3075 = vand.u32 %v3074, 4294901760
  %3076 = vmatprep.subr.mxu0 %v3075
  %v3077 = vand.u32 %v2368, 4294901760
  %v3078 = vsub.f32 %v2368, %v3077
  %v3079 = vand.u32 %v3078, 4294901760
  %3080 = vmatpush1.msra.mxu0 %v3079
  %v3081 = vand.u32 %v2367, 4294901760
  %v3082 = vsub.f32 %v2367, %v3081
  %v3083 = vand.u32 %v3082, 4294901760
  %3084 = vmatprep.subr.mxu0 %v3083
  %v3085 = vand.u32 %v2366, 4294901760
  %v3086 = vsub.f32 %v2366, %v3085
  %v3087 = vand.u32 %v3086, 4294901760
  %3088 = vmatpush1.msra.mxu0 %v3087
  %v3089 = vand.u32 %v2365, 4294901760
  %v3090 = vsub.f32 %v2365, %v3089
  %v3091 = vand.u32 %v3090, 4294901760
  %3092 = vmatprep.subr.mxu0 %v3091
  %v3093 = vand.u32 %v2364, 4294901760
  %v3094 = vsub.f32 %v2364, %v3093
  %v3095 = vand.u32 %v3094, 4294901760
  %3096 = vmatpush1.msra.mxu0 %v3095
  %v3097 = vand.u32 %v2363, 4294901760
  %v3098 = vsub.f32 %v2363, %v3097
  %v3099 = vand.u32 %v3098, 4294901760
  %3100 = vmatprep.subr.mxu0 %v3099
  %v3101 = vand.u32 %v2362, 4294901760
  %v3102 = vsub.f32 %v2362, %v3101
  %v3103 = vand.u32 %v3102, 4294901760
  %3104 = vmatpush1.msra.mxu0 %v3103
  %3105 = vmatprep.subr.mxu0 0.0
  %3106 = vmatpush2.msra.mxu0 0.0
  %3107 = vmatprep.subr.mxu0 0.0
  %3108 = vmatpush2.msra.mxu0 0.0
  %3109 = vmatprep.subr.mxu0 0.0
  %3110 = vmatpush2.msra.mxu0 0.0
  %3111 = vmatprep.subr.mxu0 0.0
  %3112 = vmatpush2.msra.mxu0 0.0
  %3113 = vmatprep.subr.mxu0 0.0
  %3114 = vmatpush2.msra.mxu0 0.0
  %3115 = vmatprep.subr.mxu0 0.0
  %3116 = vmatpush2.msra.mxu0 0.0
  %3117 = vmatprep.subr.mxu0 0.0
  %3118 = vmatpush2.msra.mxu0 0.0
  %3119 = vmatprep.subr.mxu0 0.0
  %3120 = vmatpush2.msra.mxu0 0.0
  %3121 = vmatprep.subr.mxu0 0.0
  %3122 = vmatpush2.msra.mxu0 0.0
  %3123 = vmatprep.subr.mxu0 0.0
  %3124 = vmatpush2.msra.mxu0 0.0
  %3125 = vmatprep.subr.mxu0 0.0
  %3126 = vmatpush2.msra.mxu0 0.0
  %3127 = vmatprep.subr.mxu0 0.0
  %3128 = vmatpush2.msra.mxu0 0.0
  %3129 = vmatprep.subr.mxu0 0.0
  %3130 = vmatpush2.msra.mxu0 0.0
  %3131 = vmatprep.subr.mxu0 0.0
  %3132 = vmatpush2.msra.mxu0 0.0
  %3133 = vmatprep.subr.mxu0 0.0
  %3134 = vmatpush2.msra.mxu0 0.0
  %3135 = vmatprep.subr.mxu0 0.0
  %3136 = vmatpush2.msra.mxu0 0.0
  %3137 = vmatprep.mubr.f32.mxu0 0.0
  %v3138 = vand.u32 %v25, 4294901760
  %3139 = vmatmul.mubr.f32.gmra.mxu0 %v3138
  %v3140 = vpop.f32.mrf.mxu0
  %v3141 = vadd.f32 %v2973, %v3140
  %v3142 = vpop.f32.mrf.mxu0
  %v3143 = vadd.f32 %v2975, %v3142
  %3144 = vdwg.mxu0
  %v3145 = vand.u32 %v2393, 4294901760
  %3146 = vmatprep.subr.mxu0 %v3145
  %v3147 = vand.u32 %v2392, 4294901760
  %3148 = vmatpush1.msra.mxu0 %v3147
  %v3149 = vand.u32 %v2391, 4294901760
  %3150 = vmatprep.subr.mxu0 %v3149
  %v3151 = vand.u32 %v2390, 4294901760
  %3152 = vmatpush1.msra.mxu0 %v3151
  %v3153 = vand.u32 %v2389, 4294901760
  %3154 = vmatprep.subr.mxu0 %v3153
  %v3155 = vand.u32 %v2388, 4294901760
  %3156 = vmatpush1.msra.mxu0 %v3155
  %v3157 = vand.u32 %v2387, 4294901760
  %3158 = vmatprep.subr.mxu0 %v3157
  %v3159 = vand.u32 %v2386, 4294901760
  %3160 = vmatpush1.msra.mxu0 %v3159
  %v3161 = vand.u32 %v2385, 4294901760
  %3162 = vmatprep.subr.mxu0 %v3161
  %v3163 = vand.u32 %v2384, 4294901760
  %3164 = vmatpush1.msra.mxu0 %v3163
  %v3165 = vand.u32 %v2383, 4294901760
  %3166 = vmatprep.subr.mxu0 %v3165
  %v3167 = vand.u32 %v2382, 4294901760
  %3168 = vmatpush1.msra.mxu0 %v3167
  %v3169 = vand.u32 %v2381, 4294901760
  %3170 = vmatprep.subr.mxu0 %v3169
  %v3171 = vand.u32 %v2380, 4294901760
  %3172 = vmatpush1.msra.mxu0 %v3171
  %v3173 = vand.u32 %v2379, 4294901760
  %3174 = vmatprep.subr.mxu0 %v3173
  %v3175 = vand.u32 %v2378, 4294901760
  %3176 = vmatpush1.msra.mxu0 %v3175
  %v3177 = vand.u32 %v2377, 4294901760
  %3178 = vmatprep.subr.mxu0 %v3177
  %v3179 = vand.u32 %v2376, 4294901760
  %3180 = vmatpush1.msra.mxu0 %v3179
  %v3181 = vand.u32 %v2375, 4294901760
  %3182 = vmatprep.subr.mxu0 %v3181
  %v3183 = vand.u32 %v2374, 4294901760
  %3184 = vmatpush1.msra.mxu0 %v3183
  %v3185 = vand.u32 %v2373, 4294901760
  %3186 = vmatprep.subr.mxu0 %v3185
  %v3187 = vand.u32 %v2372, 4294901760
  %3188 = vmatpush1.msra.mxu0 %v3187
  %v3189 = vand.u32 %v2371, 4294901760
  %3190 = vmatprep.subr.mxu0 %v3189
  %v3191 = vand.u32 %v2370, 4294901760
  %3192 = vmatpush1.msra.mxu0 %v3191
  %v3193 = vand.u32 %v2369, 4294901760
  %3194 = vmatprep.subr.mxu0 %v3193
  %v3195 = vand.u32 %v2368, 4294901760
  %3196 = vmatpush1.msra.mxu0 %v3195
  %v3197 = vand.u32 %v2367, 4294901760
  %3198 = vmatprep.subr.mxu0 %v3197
  %v3199 = vand.u32 %v2366, 4294901760
  %3200 = vmatpush1.msra.mxu0 %v3199
  %v3201 = vand.u32 %v2365, 4294901760
  %3202 = vmatprep.subr.mxu0 %v3201
  %v3203 = vand.u32 %v2364, 4294901760
  %3204 = vmatpush1.msra.mxu0 %v3203
  %v3205 = vand.u32 %v2363, 4294901760
  %3206 = vmatprep.subr.mxu0 %v3205
  %v3207 = vand.u32 %v2362, 4294901760
  %3208 = vmatpush1.msra.mxu0 %v3207
  %3209 = vmatprep.subr.mxu0 0.0
  %3210 = vmatpush2.msra.mxu0 0.0
  %3211 = vmatprep.subr.mxu0 0.0
  %3212 = vmatpush2.msra.mxu0 0.0
  %3213 = vmatprep.subr.mxu0 0.0
  %3214 = vmatpush2.msra.mxu0 0.0
  %3215 = vmatprep.subr.mxu0 0.0
  %3216 = vmatpush2.msra.mxu0 0.0
  %3217 = vmatprep.subr.mxu0 0.0
  %3218 = vmatpush2.msra.mxu0 0.0
  %3219 = vmatprep.subr.mxu0 0.0
  %3220 = vmatpush2.msra.mxu0 0.0
  %3221 = vmatprep.subr.mxu0 0.0
  %3222 = vmatpush2.msra.mxu0 0.0
  %3223 = vmatprep.subr.mxu0 0.0
  %3224 = vmatpush2.msra.mxu0 0.0
  %3225 = vmatprep.subr.mxu0 0.0
  %3226 = vmatpush2.msra.mxu0 0.0
  %3227 = vmatprep.subr.mxu0 0.0
  %3228 = vmatpush2.msra.mxu0 0.0
  %3229 = vmatprep.subr.mxu0 0.0
  %3230 = vmatpush2.msra.mxu0 0.0
  %3231 = vmatprep.subr.mxu0 0.0
  %3232 = vmatpush2.msra.mxu0 0.0
  %3233 = vmatprep.subr.mxu0 0.0
  %3234 = vmatpush2.msra.mxu0 0.0
  %3235 = vmatprep.subr.mxu0 0.0
  %3236 = vmatpush2.msra.mxu0 0.0
  %3237 = vmatprep.subr.mxu0 0.0
  %3238 = vmatpush2.msra.mxu0 0.0
  %3239 = vmatprep.subr.mxu0 0.0
  %3240 = vmatpush2.msra.mxu0 0.0
  %3241 = vmatprep.mubr.f32.mxu0 0.0
  %v3242 = vand.u32 %v25, 4294901760
  %3243 = vmatmul.mubr.f32.gmra.mxu0 %v3242
  %v3244 = vpop.f32.mrf.mxu0
  %v3245 = vadd.f32 %v3141, %v3244
  %v3246 = vpop.f32.mrf.mxu0
  %v3247 = vadd.f32 %v3143, %v3246
  %3248 = vdwg.mxu0
  %v3249 = vmax.f32 %v3245, 0.0
  %v3250 = vmax.f32 %v3247, 0.0
  %v3253 = vrot.slane %v3249, 1
  %v3254 = vrot.slane %v3250, 1
  %v3257 = vmul.f32 %v3249, %v3253
  %v3258 = vmul.f32 %v3250, %v3254
  %v3261 = vrot.slane %v3257, 6
  %v3262 = vrot.slane %v3258, 6
  %v3265 = vadd.f32 %v23, %v3261
  %v3266 = vadd.f32 %v24, %v3262
  %v3267 = vadd.f32 %v3265, %v3245
  %v3268 = vadd.f32 %v3266, %v3247
  %v3269 = vmax.f32 %v3267, 0.0
  %v3270 = vmax.f32 %v3268, 0.0
  %v3271 = vand.u32 2147483647, %v3267
  %v3272 = vand.u32 2147483647, %v3268
  %v3273 = vsub.f32 0.0, %v3271
  %v3274 = vsub.f32 0.0, %v3272
  %v3275 = vmul.f32 %v3273, 1.442695
  %v3276 = vpow.pop %v3275
  %v3277 = vmul.f32 %v3274, 1.442695
  %v3278 = vpow.pop %v3277
  %v3279 = vadd.f32 %v3276, 1.0
  %v3280 = vlog2.pop %v3279
  %v3281 = vmul.f32 %v3280, 0.6931472
  %v3282 = vmul.f32 -0.5, %v3276
  %v3283 = vadd.f32 %v3282, 1.0
  %v3284 = vmul.f32 %v3283, %v3276
  %v3285 = vand.u32 2147483647, %v3276
  %vm3286 = vcmp.lt.f32.partialorder %v3285, 0.0004427343
  %v3287 = vsel %vm3286, %v3284, %v3281
  %v3288 = vadd.f32 %v3278, 1.0
  %v3289 = vlog2.pop %v3288
  %v3290 = vmul.f32 %v3289, 0.6931472
  %v3291 = vmul.f32 -0.5, %v3278
  %v3292 = vadd.f32 %v3291, 1.0
  %v3293 = vmul.f32 %v3292, %v3278
  %v3294 = vand.u32 2147483647, %v3278
  %vm3295 = vcmp.lt.f32.partialorder %v3294, 0.0004427343
  %v3296 = vsel %vm3295, %v3293, %v3290
  %v3297 = vadd.f32 %v3269, %v3287
  %v3298 = vadd.f32 %v3270, %v3296
  %v3301 = vcombine.low %v3297, %v3298
  %v3303 = vunpack.c.l.s4 1966171168
  %v3304 = vunpack.c.0.s8 %v3303
  %v3305 = vlaneseq
  %v3306 = vshrl.u32 %v3305, 7
  %v3307 = vsub.s32 %v3304, %v3306
  %v3308 = vrot.slane %v3301, %v3307
  %v3310 = vunpack.c.l.s4 1966171168
  %v3311 = vunpack.c.0.s8 %v3310
  %v3312 = vlaneseq
  %v3313 = vshrl.u32 %v3312, 7
  %v3314 = vsub.s32 %v3311, %v3313
  %v3315 = vrot.slane %v3308, %v3314
  %v3316 = vcombine.high %v3315, %v3315
  %s3318 = scalar_lea.vmem [#allocation2], 2
  %3319 = vst.msk [vmem:[%s3318] ss:$8 sm:$0x3] %vm1122, %v3316
  %3320 = vst.msk [vmem:[%s3318] ss:$8 sm:$0x0] %vm1122, %v3316
  %v3321 = vlaneseq
  %v3322 = vshrl.u32 %v3321, 7
  %v3323 = vsub.s32 3, %v3322
  %v3324 = vrot.slane %v23, %v3323
  %v3325 = vlaneseq
  %v3326 = vshrl.u32 %v3325, 7
  %v3327 = vsub.s32 3, %v3326
  %v3328 = vrot.slane %v24, %v3327
  %v3329 = vld [vmem:[%s1] sm:$0xff]
  %v3330 = vld [vmem:[%s1 + $0x8] sm:$0xff]
  %v3331 = vld [vmem:[%s1 + $0x10] sm:$0xff]
  %v3332 = vld [vmem:[%s1 + $0x18] sm:$0xff]
  %v3333 = vld [vmem:[%s1 + $0x20] sm:$0xff]
  %v3334 = vld [vmem:[%s1 + $0x28] sm:$0xff]
  %v3335 = vld [vmem:[%s1 + $0x30] sm:$0xff]
  %v3336 = vld [vmem:[%s1 + $0x38] sm:$0xff]
  %v3337 = vld [vmem:[%s1 + $0x40] sm:$0xff]
  %v3338 = vld [vmem:[%s1 + $0x48] sm:$0xff]
  %v3339 = vld [vmem:[%s1 + $0x50] sm:$0xff]
  %v3340 = vld [vmem:[%s1 + $0x58] sm:$0xff]
  %v3341 = vld [vmem:[%s1 + $0x60] sm:$0xff]
  %v3342 = vld [vmem:[%s1 + $0x68] sm:$0xff]
  %v3343 = vld [vmem:[%s1 + $0x70] sm:$0xff]
  %v3344 = vld [vmem:[%s1 + $0x78] sm:$0xff]
  %v3345 = vld [vmem:[%s1 + $0x80] sm:$0xff]
  %v3346 = vld [vmem:[%s1 + $0x88] sm:$0xff]
  %v3347 = vld [vmem:[%s1 + $0x90] sm:$0xff]
  %v3348 = vld [vmem:[%s1 + $0x98] sm:$0xff]
  %v3349 = vld [vmem:[%s1 + $0xa0] sm:$0xff]
  %v3350 = vld [vmem:[%s1 + $0xa8] sm:$0xff]
  %v3351 = vld [vmem:[%s1 + $0xb0] sm:$0xff]
  %v3352 = vld [vmem:[%s1 + $0xb8] sm:$0xff]
  %v3353 = vld [vmem:[%s1 + $0xc0] sm:$0xff]
  %v3354 = vld [vmem:[%s1 + $0xc8] sm:$0xff]
  %v3355 = vld [vmem:[%s1 + $0xd0] sm:$0xff]
  %v3356 = vld [vmem:[%s1 + $0xd8] sm:$0xff]
  %v3357 = vld [vmem:[%s1 + $0xe0] sm:$0xff]
  %v3358 = vld [vmem:[%s1 + $0xe8] sm:$0xff]
  %v3359 = vld [vmem:[%s1 + $0xf0] sm:$0xff]
  %v3360 = vld [vmem:[%s1 + $0xf8] sm:$0xff]
  %v3361 = vmul.f32 %v3324, %v3329
  %v3362 = vmul.f32 %v3328, %v3330
  %v3363 = vmul.f32 %v3324, %v3331
  %v3364 = vmul.f32 %v3328, %v3332
  %v3365 = vmul.f32 %v3324, %v3333
  %v3366 = vmul.f32 %v3328, %v3334
  %v3367 = vmul.f32 %v3324, %v3335
  %v3368 = vmul.f32 %v3328, %v3336
  %v3369 = vmul.f32 %v3324, %v3337
  %v3370 = vmul.f32 %v3328, %v3338
  %v3371 = vmul.f32 %v3324, %v3339
  %v3372 = vmul.f32 %v3328, %v3340
  %v3373 = vmul.f32 %v3324, %v3341
  %v3374 = vmul.f32 %v3328, %v3342
  %v3375 = vmul.f32 %v3324, %v3343
  %v3376 = vmul.f32 %v3328, %v3344
  %v3377 = vmul.f32 %v3324, %v3345
  %v3378 = vmul.f32 %v3328, %v3346
  %v3379 = vmul.f32 %v3324, %v3347
  %v3380 = vmul.f32 %v3328, %v3348
  %v3381 = vmul.f32 %v3324, %v3349
  %v3382 = vmul.f32 %v3328, %v3350
  %v3383 = vmul.f32 %v3324, %v3351
  %v3384 = vmul.f32 %v3328, %v3352
  %v3385 = vmul.f32 %v3324, %v3353
  %v3386 = vmul.f32 %v3328, %v3354
  %v3387 = vmul.f32 %v3324, %v3355
  %v3388 = vmul.f32 %v3328, %v3356
  %v3389 = vmul.f32 %v3324, %v3357
  %v3390 = vmul.f32 %v3328, %v3358
  %v3391 = vmul.f32 %v3324, %v3359
  %v3392 = vmul.f32 %v3328, %v3360
  %v3393 = vld [vmem:[%s2] sm:$0xff]
  %v3394 = vld [vmem:[%s2 + $0x8] sm:$0xff]
  %v3395 = vld [vmem:[%s2 + $0x10] sm:$0xff]
  %v3396 = vld [vmem:[%s2 + $0x18] sm:$0xff]
  %v3397 = vld [vmem:[%s2 + $0x20] sm:$0xff]
  %v3398 = vld [vmem:[%s2 + $0x28] sm:$0xff]
  %v3399 = vld [vmem:[%s2 + $0x30] sm:$0xff]
  %v3400 = vld [vmem:[%s2 + $0x38] sm:$0xff]
  %v3401 = vld [vmem:[%s2 + $0x40] sm:$0xff]
  %v3402 = vld [vmem:[%s2 + $0x48] sm:$0xff]
  %v3403 = vld [vmem:[%s2 + $0x50] sm:$0xff]
  %v3404 = vld [vmem:[%s2 + $0x58] sm:$0xff]
  %v3405 = vld [vmem:[%s2 + $0x60] sm:$0xff]
  %v3406 = vld [vmem:[%s2 + $0x68] sm:$0xff]
  %v3407 = vld [vmem:[%s2 + $0x70] sm:$0xff]
  %v3408 = vld [vmem:[%s2 + $0x78] sm:$0xff]
  %v3409 = vld [vmem:[%s2 + $0x80] sm:$0xff]
  %v3410 = vld [vmem:[%s2 + $0x88] sm:$0xff]
  %v3411 = vld [vmem:[%s2 + $0x90] sm:$0xff]
  %v3412 = vld [vmem:[%s2 + $0x98] sm:$0xff]
  %v3413 = vld [vmem:[%s2 + $0xa0] sm:$0xff]
  %v3414 = vld [vmem:[%s2 + $0xa8] sm:$0xff]
  %v3415 = vld [vmem:[%s2 + $0xb0] sm:$0xff]
  %v3416 = vld [vmem:[%s2 + $0xb8] sm:$0xff]
  %v3417 = vld [vmem:[%s2 + $0xc0] sm:$0xff]
  %v3418 = vld [vmem:[%s2 + $0xc8] sm:$0xff]
  %v3419 = vld [vmem:[%s2 + $0xd0] sm:$0xff]
  %v3420 = vld [vmem:[%s2 + $0xd8] sm:$0xff]
  %v3421 = vld [vmem:[%s2 + $0xe0] sm:$0xff]
  %v3422 = vld [vmem:[%s2 + $0xe8] sm:$0xff]
  %v3423 = vld [vmem:[%s2 + $0xf0] sm:$0xff]
  %v3424 = vld [vmem:[%s2 + $0xf8] sm:$0xff]
  %v3425 = vadd.f32 %v3361, %v3393
  %v3426 = vadd.f32 %v3362, %v3394
  %v3427 = vadd.f32 %v3363, %v3395
  %v3428 = vadd.f32 %v3364, %v3396
  %v3429 = vadd.f32 %v3365, %v3397
  %v3430 = vadd.f32 %v3366, %v3398
  %v3431 = vadd.f32 %v3367, %v3399
  %v3432 = vadd.f32 %v3368, %v3400
  %v3433 = vadd.f32 %v3369, %v3401
  %v3434 = vadd.f32 %v3370, %v3402
  %v3435 = vadd.f32 %v3371, %v3403
  %v3436 = vadd.f32 %v3372, %v3404
  %v3437 = vadd.f32 %v3373, %v3405
  %v3438 = vadd.f32 %v3374, %v3406
  %v3439 = vadd.f32 %v3375, %v3407
  %v3440 = vadd.f32 %v3376, %v3408
  %v3441 = vadd.f32 %v3377, %v3409
  %v3442 = vadd.f32 %v3378, %v3410
  %v3443 = vadd.f32 %v3379, %v3411
  %v3444 = vadd.f32 %v3380, %v3412
  %v3445 = vadd.f32 %v3381, %v3413
  %v3446 = vadd.f32 %v3382, %v3414
  %v3447 = vadd.f32 %v3383, %v3415
  %v3448 = vadd.f32 %v3384, %v3416
  %v3449 = vadd.f32 %v3385, %v3417
  %v3450 = vadd.f32 %v3386, %v3418
  %v3451 = vadd.f32 %v3387, %v3419
  %v3452 = vadd.f32 %v3388, %v3420
  %v3453 = vadd.f32 %v3389, %v3421
  %v3454 = vadd.f32 %v3390, %v3422
  %v3455 = vadd.f32 %v3391, %v3423
  %v3456 = vadd.f32 %v3392, %v3424
  %v3457 = vmax.f32 %v3425, 0.0
  %v3458 = vmax.f32 %v3426, 0.0
  %v3459 = vmax.f32 %v3427, 0.0
  %v3460 = vmax.f32 %v3428, 0.0
  %v3461 = vmax.f32 %v3429, 0.0
  %v3462 = vmax.f32 %v3430, 0.0
  %v3463 = vmax.f32 %v3431, 0.0
  %v3464 = vmax.f32 %v3432, 0.0
  %v3465 = vmax.f32 %v3433, 0.0
  %v3466 = vmax.f32 %v3434, 0.0
  %v3467 = vmax.f32 %v3435, 0.0
  %v3468 = vmax.f32 %v3436, 0.0
  %v3469 = vmax.f32 %v3437, 0.0
  %v3470 = vmax.f32 %v3438, 0.0
  %v3471 = vmax.f32 %v3439, 0.0
  %v3472 = vmax.f32 %v3440, 0.0
  %v3473 = vmax.f32 %v3441, 0.0
  %v3474 = vmax.f32 %v3442, 0.0
  %v3475 = vmax.f32 %v3443, 0.0
  %v3476 = vmax.f32 %v3444, 0.0
  %v3477 = vmax.f32 %v3445, 0.0
  %v3478 = vmax.f32 %v3446, 0.0
  %v3479 = vmax.f32 %v3447, 0.0
  %v3480 = vmax.f32 %v3448, 0.0
  %v3481 = vmax.f32 %v3449, 0.0
  %v3482 = vmax.f32 %v3450, 0.0
  %v3483 = vmax.f32 %v3451, 0.0
  %v3484 = vmax.f32 %v3452, 0.0
  %v3485 = vmax.f32 %v3453, 0.0
  %v3486 = vmax.f32 %v3454, 0.0
  %v3487 = vmax.f32 %v3455, 0.0
  %v3488 = vmax.f32 %v3456, 0.0
  %v3489 = vand.u32 %v3488, 4294901760
  %3490 = vmatprep.subr.mxu0 %v3489
  %v3491 = vand.u32 %v3487, 4294901760
  %3492 = vmatpush1.msra.mxu0 %v3491
  %v3493 = vand.u32 %v3486, 4294901760
  %3494 = vmatprep.subr.mxu0 %v3493
  %v3495 = vand.u32 %v3485, 4294901760
  %3496 = vmatpush1.msra.mxu0 %v3495
  %v3497 = vand.u32 %v3484, 4294901760
  %3498 = vmatprep.subr.mxu0 %v3497
  %v3499 = vand.u32 %v3483, 4294901760
  %3500 = vmatpush1.msra.mxu0 %v3499
  %v3501 = vand.u32 %v3482, 4294901760
  %3502 = vmatprep.subr.mxu0 %v3501
  %v3503 = vand.u32 %v3481, 4294901760
  %3504 = vmatpush1.msra.mxu0 %v3503
  %v3505 = vand.u32 %v3480, 4294901760
  %3506 = vmatprep.subr.mxu0 %v3505
  %v3507 = vand.u32 %v3479, 4294901760
  %3508 = vmatpush1.msra.mxu0 %v3507
  %v3509 = vand.u32 %v3478, 4294901760
  %3510 = vmatprep.subr.mxu0 %v3509
  %v3511 = vand.u32 %v3477, 4294901760
  %3512 = vmatpush1.msra.mxu0 %v3511
  %v3513 = vand.u32 %v3476, 4294901760
  %3514 = vmatprep.subr.mxu0 %v3513
  %v3515 = vand.u32 %v3475, 4294901760
  %3516 = vmatpush1.msra.mxu0 %v3515
  %v3517 = vand.u32 %v3474, 4294901760
  %3518 = vmatprep.subr.mxu0 %v3517
  %v3519 = vand.u32 %v3473, 4294901760
  %3520 = vmatpush1.msra.mxu0 %v3519
  %v3521 = vand.u32 %v3472, 4294901760
  %3522 = vmatprep.subr.mxu0 %v3521
  %v3523 = vand.u32 %v3471, 4294901760
  %3524 = vmatpush1.msra.mxu0 %v3523
  %v3525 = vand.u32 %v3470, 4294901760
  %3526 = vmatprep.subr.mxu0 %v3525
  %v3527 = vand.u32 %v3469, 4294901760
  %3528 = vmatpush1.msra.mxu0 %v3527
  %v3529 = vand.u32 %v3468, 4294901760
  %3530 = vmatprep.subr.mxu0 %v3529
  %v3531 = vand.u32 %v3467, 4294901760
  %3532 = vmatpush1.msra.mxu0 %v3531
  %v3533 = vand.u32 %v3466, 4294901760
  %3534 = vmatprep.subr.mxu0 %v3533
  %v3535 = vand.u32 %v3465, 4294901760
  %3536 = vmatpush1.msra.mxu0 %v3535
  %v3537 = vand.u32 %v3464, 4294901760
  %3538 = vmatprep.subr.mxu0 %v3537
  %v3539 = vand.u32 %v3463, 4294901760
  %3540 = vmatpush1.msra.mxu0 %v3539
  %v3541 = vand.u32 %v3462, 4294901760
  %3542 = vmatprep.subr.mxu0 %v3541
  %v3543 = vand.u32 %v3461, 4294901760
  %3544 = vmatpush1.msra.mxu0 %v3543
  %v3545 = vand.u32 %v3460, 4294901760
  %3546 = vmatprep.subr.mxu0 %v3545
  %v3547 = vand.u32 %v3459, 4294901760
  %3548 = vmatpush1.msra.mxu0 %v3547
  %v3549 = vand.u32 %v3458, 4294901760
  %3550 = vmatprep.subr.mxu0 %v3549
  %v3551 = vand.u32 %v3457, 4294901760
  %3552 = vmatpush1.msra.mxu0 %v3551
  %3553 = vmatprep.subr.mxu0 0.0
  %3554 = vmatpush2.msra.mxu0 0.0
  %3555 = vmatprep.subr.mxu0 0.0
  %3556 = vmatpush2.msra.mxu0 0.0
  %3557 = vmatprep.subr.mxu0 0.0
  %3558 = vmatpush2.msra.mxu0 0.0
  %3559 = vmatprep.subr.mxu0 0.0
  %3560 = vmatpush2.msra.mxu0 0.0
  %3561 = vmatprep.subr.mxu0 0.0
  %3562 = vmatpush2.msra.mxu0 0.0
  %3563 = vmatprep.subr.mxu0 0.0
  %3564 = vmatpush2.msra.mxu0 0.0
  %3565 = vmatprep.subr.mxu0 0.0
  %3566 = vmatpush2.msra.mxu0 0.0
  %3567 = vmatprep.subr.mxu0 0.0
  %3568 = vmatpush2.msra.mxu0 0.0
  %3569 = vmatprep.subr.mxu0 0.0
  %3570 = vmatpush2.msra.mxu0 0.0
  %3571 = vmatprep.subr.mxu0 0.0
  %3572 = vmatpush2.msra.mxu0 0.0
  %3573 = vmatprep.subr.mxu0 0.0
  %3574 = vmatpush2.msra.mxu0 0.0
  %3575 = vmatprep.subr.mxu0 0.0
  %3576 = vmatpush2.msra.mxu0 0.0
  %3577 = vmatprep.subr.mxu0 0.0
  %3578 = vmatpush2.msra.mxu0 0.0
  %3579 = vmatprep.subr.mxu0 0.0
  %3580 = vmatpush2.msra.mxu0 0.0
  %3581 = vmatprep.subr.mxu0 0.0
  %3582 = vmatpush2.msra.mxu0 0.0
  %3583 = vmatprep.subr.mxu0 0.0
  %3584 = vmatpush2.msra.mxu0 0.0
  %3585 = vmatprep.mubr.f32.mxu0 0.0
  %v3586 = vand.u32 %v25, 4294901760
  %v3587 = vsub.f32 %v25, %v3586
  %v3588 = vand.u32 %v3587, 4294901760
  %v3589 = vsub.f32 %v3587, %v3588
  %v3590 = vand.u32 %v3589, 4294901760
  %3591 = vmatmul.mubr.f32.gmra.mxu0 %v3590
  %v3592 = vpop.f32.mrf.mxu0
  %v3593 = vadd.f32 %v26, %v3592
  %v3594 = vpop.f32.mrf.mxu0
  %v3595 = vadd.f32 %v27, %v3594
  %3596 = vdwg.mxu0
  %v3597 = vand.u32 %v3488, 4294901760
  %v3598 = vsub.f32 %v3488, %v3597
  %v3599 = vand.u32 %v3598, 4294901760
  %v3600 = vsub.f32 %v3598, %v3599
  %v3601 = vand.u32 %v3600, 4294901760
  %3602 = vmatprep.subr.mxu0 %v3601
  %v3603 = vand.u32 %v3487, 4294901760
  %v3604 = vsub.f32 %v3487, %v3603
  %v3605 = vand.u32 %v3604, 4294901760
  %v3606 = vsub.f32 %v3604, %v3605
  %v3607 = vand.u32 %v3606, 4294901760
  %3608 = vmatpush1.msra.mxu0 %v3607
  %v3609 = vand.u32 %v3486, 4294901760
  %v3610 = vsub.f32 %v3486, %v3609
  %v3611 = vand.u32 %v3610, 4294901760
  %v3612 = vsub.f32 %v3610, %v3611
  %v3613 = vand.u32 %v3612, 4294901760
  %3614 = vmatprep.subr.mxu0 %v3613
  %v3615 = vand.u32 %v3485, 4294901760
  %v3616 = vsub.f32 %v3485, %v3615
  %v3617 = vand.u32 %v3616, 4294901760
  %v3618 = vsub.f32 %v3616, %v3617
  %v3619 = vand.u32 %v3618, 4294901760
  %3620 = vmatpush1.msra.mxu0 %v3619
  %v3621 = vand.u32 %v3484, 4294901760
  %v3622 = vsub.f32 %v3484, %v3621
  %v3623 = vand.u32 %v3622, 4294901760
  %v3624 = vsub.f32 %v3622, %v3623
  %v3625 = vand.u32 %v3624, 4294901760
  %3626 = vmatprep.subr.mxu0 %v3625
  %v3627 = vand.u32 %v3483, 4294901760
  %v3628 = vsub.f32 %v3483, %v3627
  %v3629 = vand.u32 %v3628, 4294901760
  %v3630 = vsub.f32 %v3628, %v3629
  %v3631 = vand.u32 %v3630, 4294901760
  %3632 = vmatpush1.msra.mxu0 %v3631
  %v3633 = vand.u32 %v3482, 4294901760
  %v3634 = vsub.f32 %v3482, %v3633
  %v3635 = vand.u32 %v3634, 4294901760
  %v3636 = vsub.f32 %v3634, %v3635
  %v3637 = vand.u32 %v3636, 4294901760
  %3638 = vmatprep.subr.mxu0 %v3637
  %v3639 = vand.u32 %v3481, 4294901760
  %v3640 = vsub.f32 %v3481, %v3639
  %v3641 = vand.u32 %v3640, 4294901760
  %v3642 = vsub.f32 %v3640, %v3641
  %v3643 = vand.u32 %v3642, 4294901760
  %3644 = vmatpush1.msra.mxu0 %v3643
  %v3645 = vand.u32 %v3480, 4294901760
  %v3646 = vsub.f32 %v3480, %v3645
  %v3647 = vand.u32 %v3646, 4294901760
  %v3648 = vsub.f32 %v3646, %v3647
  %v3649 = vand.u32 %v3648, 4294901760
  %3650 = vmatprep.subr.mxu0 %v3649
  %v3651 = vand.u32 %v3479, 4294901760
  %v3652 = vsub.f32 %v3479, %v3651
  %v3653 = vand.u32 %v3652, 4294901760
  %v3654 = vsub.f32 %v3652, %v3653
  %v3655 = vand.u32 %v3654, 4294901760
  %3656 = vmatpush1.msra.mxu0 %v3655
  %v3657 = vand.u32 %v3478, 4294901760
  %v3658 = vsub.f32 %v3478, %v3657
  %v3659 = vand.u32 %v3658, 4294901760
  %v3660 = vsub.f32 %v3658, %v3659
  %v3661 = vand.u32 %v3660, 4294901760
  %3662 = vmatprep.subr.mxu0 %v3661
  %v3663 = vand.u32 %v3477, 4294901760
  %v3664 = vsub.f32 %v3477, %v3663
  %v3665 = vand.u32 %v3664, 4294901760
  %v3666 = vsub.f32 %v3664, %v3665
  %v3667 = vand.u32 %v3666, 4294901760
  %3668 = vmatpush1.msra.mxu0 %v3667
  %v3669 = vand.u32 %v3476, 4294901760
  %v3670 = vsub.f32 %v3476, %v3669
  %v3671 = vand.u32 %v3670, 4294901760
  %v3672 = vsub.f32 %v3670, %v3671
  %v3673 = vand.u32 %v3672, 4294901760
  %3674 = vmatprep.subr.mxu0 %v3673
  %v3675 = vand.u32 %v3475, 4294901760
  %v3676 = vsub.f32 %v3475, %v3675
  %v3677 = vand.u32 %v3676, 4294901760
  %v3678 = vsub.f32 %v3676, %v3677
  %v3679 = vand.u32 %v3678, 4294901760
  %3680 = vmatpush1.msra.mxu0 %v3679
  %v3681 = vand.u32 %v3474, 4294901760
  %v3682 = vsub.f32 %v3474, %v3681
  %v3683 = vand.u32 %v3682, 4294901760
  %v3684 = vsub.f32 %v3682, %v3683
  %v3685 = vand.u32 %v3684, 4294901760
  %3686 = vmatprep.subr.mxu0 %v3685
  %v3687 = vand.u32 %v3473, 4294901760
  %v3688 = vsub.f32 %v3473, %v3687
  %v3689 = vand.u32 %v3688, 4294901760
  %v3690 = vsub.f32 %v3688, %v3689
  %v3691 = vand.u32 %v3690, 4294901760
  %3692 = vmatpush1.msra.mxu0 %v3691
  %v3693 = vand.u32 %v3472, 4294901760
  %v3694 = vsub.f32 %v3472, %v3693
  %v3695 = vand.u32 %v3694, 4294901760
  %v3696 = vsub.f32 %v3694, %v3695
  %v3697 = vand.u32 %v3696, 4294901760
  %3698 = vmatprep.subr.mxu0 %v3697
  %v3699 = vand.u32 %v3471, 4294901760
  %v3700 = vsub.f32 %v3471, %v3699
  %v3701 = vand.u32 %v3700, 4294901760
  %v3702 = vsub.f32 %v3700, %v3701
  %v3703 = vand.u32 %v3702, 4294901760
  %3704 = vmatpush1.msra.mxu0 %v3703
  %v3705 = vand.u32 %v3470, 4294901760
  %v3706 = vsub.f32 %v3470, %v3705
  %v3707 = vand.u32 %v3706, 4294901760
  %v3708 = vsub.f32 %v3706, %v3707
  %v3709 = vand.u32 %v3708, 4294901760
  %3710 = vmatprep.subr.mxu0 %v3709
  %v3711 = vand.u32 %v3469, 4294901760
  %v3712 = vsub.f32 %v3469, %v3711
  %v3713 = vand.u32 %v3712, 4294901760
  %v3714 = vsub.f32 %v3712, %v3713
  %v3715 = vand.u32 %v3714, 4294901760
  %3716 = vmatpush1.msra.mxu0 %v3715
  %v3717 = vand.u32 %v3468, 4294901760
  %v3718 = vsub.f32 %v3468, %v3717
  %v3719 = vand.u32 %v3718, 4294901760
  %v3720 = vsub.f32 %v3718, %v3719
  %v3721 = vand.u32 %v3720, 4294901760
  %3722 = vmatprep.subr.mxu0 %v3721
  %v3723 = vand.u32 %v3467, 4294901760
  %v3724 = vsub.f32 %v3467, %v3723
  %v3725 = vand.u32 %v3724, 4294901760
  %v3726 = vsub.f32 %v3724, %v3725
  %v3727 = vand.u32 %v3726, 4294901760
  %3728 = vmatpush1.msra.mxu0 %v3727
  %v3729 = vand.u32 %v3466, 4294901760
  %v3730 = vsub.f32 %v3466, %v3729
  %v3731 = vand.u32 %v3730, 4294901760
  %v3732 = vsub.f32 %v3730, %v3731
  %v3733 = vand.u32 %v3732, 4294901760
  %3734 = vmatprep.subr.mxu0 %v3733
  %v3735 = vand.u32 %v3465, 4294901760
  %v3736 = vsub.f32 %v3465, %v3735
  %v3737 = vand.u32 %v3736, 4294901760
  %v3738 = vsub.f32 %v3736, %v3737
  %v3739 = vand.u32 %v3738, 4294901760
  %3740 = vmatpush1.msra.mxu0 %v3739
  %v3741 = vand.u32 %v3464, 4294901760
  %v3742 = vsub.f32 %v3464, %v3741
  %v3743 = vand.u32 %v3742, 4294901760
  %v3744 = vsub.f32 %v3742, %v3743
  %v3745 = vand.u32 %v3744, 4294901760
  %3746 = vmatprep.subr.mxu0 %v3745
  %v3747 = vand.u32 %v3463, 4294901760
  %v3748 = vsub.f32 %v3463, %v3747
  %v3749 = vand.u32 %v3748, 4294901760
  %v3750 = vsub.f32 %v3748, %v3749
  %v3751 = vand.u32 %v3750, 4294901760
  %3752 = vmatpush1.msra.mxu0 %v3751
  %v3753 = vand.u32 %v3462, 4294901760
  %v3754 = vsub.f32 %v3462, %v3753
  %v3755 = vand.u32 %v3754, 4294901760
  %v3756 = vsub.f32 %v3754, %v3755
  %v3757 = vand.u32 %v3756, 4294901760
  %3758 = vmatprep.subr.mxu0 %v3757
  %v3759 = vand.u32 %v3461, 4294901760
  %v3760 = vsub.f32 %v3461, %v3759
  %v3761 = vand.u32 %v3760, 4294901760
  %v3762 = vsub.f32 %v3760, %v3761
  %v3763 = vand.u32 %v3762, 4294901760
  %3764 = vmatpush1.msra.mxu0 %v3763
  %v3765 = vand.u32 %v3460, 4294901760
  %v3766 = vsub.f32 %v3460, %v3765
  %v3767 = vand.u32 %v3766, 4294901760
  %v3768 = vsub.f32 %v3766, %v3767
  %v3769 = vand.u32 %v3768, 4294901760
  %3770 = vmatprep.subr.mxu0 %v3769
  %v3771 = vand.u32 %v3459, 4294901760
  %v3772 = vsub.f32 %v3459, %v3771
  %v3773 = vand.u32 %v3772, 4294901760
  %v3774 = vsub.f32 %v3772, %v3773
  %v3775 = vand.u32 %v3774, 4294901760
  %3776 = vmatpush1.msra.mxu0 %v3775
  %v3777 = vand.u32 %v3458, 4294901760
  %v3778 = vsub.f32 %v3458, %v3777
  %v3779 = vand.u32 %v3778, 4294901760
  %v3780 = vsub.f32 %v3778, %v3779
  %v3781 = vand.u32 %v3780, 4294901760
  %3782 = vmatprep.subr.mxu0 %v3781
  %v3783 = vand.u32 %v3457, 4294901760
  %v3784 = vsub.f32 %v3457, %v3783
  %v3785 = vand.u32 %v3784, 4294901760
  %v3786 = vsub.f32 %v3784, %v3785
  %v3787 = vand.u32 %v3786, 4294901760
  %3788 = vmatpush1.msra.mxu0 %v3787
  %3789 = vmatprep.subr.mxu0 0.0
  %3790 = vmatpush2.msra.mxu0 0.0
  %3791 = vmatprep.subr.mxu0 0.0
  %3792 = vmatpush2.msra.mxu0 0.0
  %3793 = vmatprep.subr.mxu0 0.0
  %3794 = vmatpush2.msra.mxu0 0.0
  %3795 = vmatprep.subr.mxu0 0.0
  %3796 = vmatpush2.msra.mxu0 0.0
  %3797 = vmatprep.subr.mxu0 0.0
  %3798 = vmatpush2.msra.mxu0 0.0
  %3799 = vmatprep.subr.mxu0 0.0
  %3800 = vmatpush2.msra.mxu0 0.0
  %3801 = vmatprep.subr.mxu0 0.0
  %3802 = vmatpush2.msra.mxu0 0.0
  %3803 = vmatprep.subr.mxu0 0.0
  %3804 = vmatpush2.msra.mxu0 0.0
  %3805 = vmatprep.subr.mxu0 0.0
  %3806 = vmatpush2.msra.mxu0 0.0
  %3807 = vmatprep.subr.mxu0 0.0
  %3808 = vmatpush2.msra.mxu0 0.0
  %3809 = vmatprep.subr.mxu0 0.0
  %3810 = vmatpush2.msra.mxu0 0.0
  %3811 = vmatprep.subr.mxu0 0.0
  %3812 = vmatpush2.msra.mxu0 0.0
  %3813 = vmatprep.subr.mxu0 0.0
  %3814 = vmatpush2.msra.mxu0 0.0
  %3815 = vmatprep.subr.mxu0 0.0
  %3816 = vmatpush2.msra.mxu0 0.0
  %3817 = vmatprep.subr.mxu0 0.0
  %3818 = vmatpush2.msra.mxu0 0.0
  %3819 = vmatprep.subr.mxu0 0.0
  %3820 = vmatpush2.msra.mxu0 0.0
  %3821 = vmatprep.mubr.f32.mxu0 0.0
  %v3822 = vand.u32 %v25, 4294901760
  %3823 = vmatmul.mubr.f32.gmra.mxu0 %v3822
  %v3824 = vpop.f32.mrf.mxu0
  %v3825 = vadd.f32 %v3593, %v3824
  %v3826 = vpop.f32.mrf.mxu0
  %v3827 = vadd.f32 %v3595, %v3826
  %3828 = vdwg.mxu0
  %v3829 = vand.u32 %v3488, 4294901760
  %v3830 = vsub.f32 %v3488, %v3829
  %3831 = vmatprep.subr.mxu0 %v3830
  %v3832 = vand.u32 %v3487, 4294901760
  %v3833 = vsub.f32 %v3487, %v3832
  %3834 = vmatpush1.msra.mxu0 %v3833
  %v3835 = vand.u32 %v3486, 4294901760
  %v3836 = vsub.f32 %v3486, %v3835
  %3837 = vmatprep.subr.mxu0 %v3836
  %v3838 = vand.u32 %v3485, 4294901760
  %v3839 = vsub.f32 %v3485, %v3838
  %3840 = vmatpush1.msra.mxu0 %v3839
  %v3841 = vand.u32 %v3484, 4294901760
  %v3842 = vsub.f32 %v3484, %v3841
  %3843 = vmatprep.subr.mxu0 %v3842
  %v3844 = vand.u32 %v3483, 4294901760
  %v3845 = vsub.f32 %v3483, %v3844
  %3846 = vmatpush1.msra.mxu0 %v3845
  %v3847 = vand.u32 %v3482, 4294901760
  %v3848 = vsub.f32 %v3482, %v3847
  %3849 = vmatprep.subr.mxu0 %v3848
  %v3850 = vand.u32 %v3481, 4294901760
  %v3851 = vsub.f32 %v3481, %v3850
  %3852 = vmatpush1.msra.mxu0 %v3851
  %v3853 = vand.u32 %v3480, 4294901760
  %v3854 = vsub.f32 %v3480, %v3853
  %3855 = vmatprep.subr.mxu0 %v3854
  %v3856 = vand.u32 %v3479, 4294901760
  %v3857 = vsub.f32 %v3479, %v3856
  %3858 = vmatpush1.msra.mxu0 %v3857
  %v3859 = vand.u32 %v3478, 4294901760
  %v3860 = vsub.f32 %v3478, %v3859
  %3861 = vmatprep.subr.mxu0 %v3860
  %v3862 = vand.u32 %v3477, 4294901760
  %v3863 = vsub.f32 %v3477, %v3862
  %3864 = vmatpush1.msra.mxu0 %v3863
  %v3865 = vand.u32 %v3476, 4294901760
  %v3866 = vsub.f32 %v3476, %v3865
  %3867 = vmatprep.subr.mxu0 %v3866
  %v3868 = vand.u32 %v3475, 4294901760
  %v3869 = vsub.f32 %v3475, %v3868
  %3870 = vmatpush1.msra.mxu0 %v3869
  %v3871 = vand.u32 %v3474, 4294901760
  %v3872 = vsub.f32 %v3474, %v3871
  %3873 = vmatprep.subr.mxu0 %v3872
  %v3874 = vand.u32 %v3473, 4294901760
  %v3875 = vsub.f32 %v3473, %v3874
  %3876 = vmatpush1.msra.mxu0 %v3875
  %v3877 = vand.u32 %v3472, 4294901760
  %v3878 = vsub.f32 %v3472, %v3877
  %3879 = vmatprep.subr.mxu0 %v3878
  %v3880 = vand.u32 %v3471, 4294901760
  %v3881 = vsub.f32 %v3471, %v3880
  %3882 = vmatpush1.msra.mxu0 %v3881
  %v3883 = vand.u32 %v3470, 4294901760
  %v3884 = vsub.f32 %v3470, %v3883
  %3885 = vmatprep.subr.mxu0 %v3884
  %v3886 = vand.u32 %v3469, 4294901760
  %v3887 = vsub.f32 %v3469, %v3886
  %3888 = vmatpush1.msra.mxu0 %v3887
  %v3889 = vand.u32 %v3468, 4294901760
  %v3890 = vsub.f32 %v3468, %v3889
  %3891 = vmatprep.subr.mxu0 %v3890
  %v3892 = vand.u32 %v3467, 4294901760
  %v3893 = vsub.f32 %v3467, %v3892
  %3894 = vmatpush1.msra.mxu0 %v3893
  %v3895 = vand.u32 %v3466, 4294901760
  %v3896 = vsub.f32 %v3466, %v3895
  %3897 = vmatprep.subr.mxu0 %v3896
  %v3898 = vand.u32 %v3465, 4294901760
  %v3899 = vsub.f32 %v3465, %v3898
  %3900 = vmatpush1.msra.mxu0 %v3899
  %v3901 = vand.u32 %v3464, 4294901760
  %v3902 = vsub.f32 %v3464, %v3901
  %3903 = vmatprep.subr.mxu0 %v3902
  %v3904 = vand.u32 %v3463, 4294901760
  %v3905 = vsub.f32 %v3463, %v3904
  %3906 = vmatpush1.msra.mxu0 %v3905
  %v3907 = vand.u32 %v3462, 4294901760
  %v3908 = vsub.f32 %v3462, %v3907
  %3909 = vmatprep.subr.mxu0 %v3908
  %v3910 = vand.u32 %v3461, 4294901760
  %v3911 = vsub.f32 %v3461, %v3910
  %3912 = vmatpush1.msra.mxu0 %v3911
  %v3913 = vand.u32 %v3460, 4294901760
  %v3914 = vsub.f32 %v3460, %v3913
  %3915 = vmatprep.subr.mxu0 %v3914
  %v3916 = vand.u32 %v3459, 4294901760
  %v3917 = vsub.f32 %v3459, %v3916
  %3918 = vmatpush1.msra.mxu0 %v3917
  %v3919 = vand.u32 %v3458, 4294901760
  %v3920 = vsub.f32 %v3458, %v3919
  %3921 = vmatprep.subr.mxu0 %v3920
  %v3922 = vand.u32 %v3457, 4294901760
  %v3923 = vsub.f32 %v3457, %v3922
  %3924 = vmatpush1.msra.mxu0 %v3923
  %3925 = vmatprep.subr.mxu0 0.0
  %3926 = vmatpush2.msra.mxu0 0.0
  %3927 = vmatprep.subr.mxu0 0.0
  %3928 = vmatpush2.msra.mxu0 0.0
  %3929 = vmatprep.subr.mxu0 0.0
  %3930 = vmatpush2.msra.mxu0 0.0
  %3931 = vmatprep.subr.mxu0 0.0
  %3932 = vmatpush2.msra.mxu0 0.0
  %3933 = vmatprep.subr.mxu0 0.0
  %3934 = vmatpush2.msra.mxu0 0.0
  %3935 = vmatprep.subr.mxu0 0.0
  %3936 = vmatpush2.msra.mxu0 0.0
  %3937 = vmatprep.subr.mxu0 0.0
  %3938 = vmatpush2.msra.mxu0 0.0
  %3939 = vmatprep.subr.mxu0 0.0
  %3940 = vmatpush2.msra.mxu0 0.0
  %3941 = vmatprep.subr.mxu0 0.0
  %3942 = vmatpush2.msra.mxu0 0.0
  %3943 = vmatprep.subr.mxu0 0.0
  %3944 = vmatpush2.msra.mxu0 0.0
  %3945 = vmatprep.subr.mxu0 0.0
  %3946 = vmatpush2.msra.mxu0 0.0
  %3947 = vmatprep.subr.mxu0 0.0
  %3948 = vmatpush2.msra.mxu0 0.0
  %3949 = vmatprep.subr.mxu0 0.0
  %3950 = vmatpush2.msra.mxu0 0.0
  %3951 = vmatprep.subr.mxu0 0.0
  %3952 = vmatpush2.msra.mxu0 0.0
  %3953 = vmatprep.subr.mxu0 0.0
  %3954 = vmatpush2.msra.mxu0 0.0
  %3955 = vmatprep.subr.mxu0 0.0
  %3956 = vmatpush2.msra.mxu0 0.0
  %3957 = vmatprep.mubr.f32.mxu0 0.0
  %v3958 = vand.u32 %v25, 4294901760
  %v3959 = vsub.f32 %v25, %v3958
  %3960 = vmatmul.mubr.f32.gmra.mxu0 %v3959
  %v3961 = vpop.f32.mrf.mxu0
  %v3962 = vadd.f32 %v3825, %v3961
  %v3963 = vpop.f32.mrf.mxu0
  %v3964 = vadd.f32 %v3827, %v3963
  %3965 = vdwg.mxu0
  %v3966 = vand.u32 %v3488, 4294901760
  %3967 = vmatprep.subr.mxu0 %v3966
  %v3968 = vand.u32 %v3487, 4294901760
  %3969 = vmatpush1.msra.mxu0 %v3968
  %v3970 = vand.u32 %v3486, 4294901760
  %3971 = vmatprep.subr.mxu0 %v3970
  %v3972 = vand.u32 %v3485, 4294901760
  %3973 = vmatpush1.msra.mxu0 %v3972
  %v3974 = vand.u32 %v3484, 4294901760
  %3975 = vmatprep.subr.mxu0 %v3974
  %v3976 = vand.u32 %v3483, 4294901760
  %3977 = vmatpush1.msra.mxu0 %v3976
  %v3978 = vand.u32 %v3482, 4294901760
  %3979 = vmatprep.subr.mxu0 %v3978
  %v3980 = vand.u32 %v3481, 4294901760
  %3981 = vmatpush1.msra.mxu0 %v3980
  %v3982 = vand.u32 %v3480, 4294901760
  %3983 = vmatprep.subr.mxu0 %v3982
  %v3984 = vand.u32 %v3479, 4294901760
  %3985 = vmatpush1.msra.mxu0 %v3984
  %v3986 = vand.u32 %v3478, 4294901760
  %3987 = vmatprep.subr.mxu0 %v3986
  %v3988 = vand.u32 %v3477, 4294901760
  %3989 = vmatpush1.msra.mxu0 %v3988
  %v3990 = vand.u32 %v3476, 4294901760
  %3991 = vmatprep.subr.mxu0 %v3990
  %v3992 = vand.u32 %v3475, 4294901760
  %3993 = vmatpush1.msra.mxu0 %v3992
  %v3994 = vand.u32 %v3474, 4294901760
  %3995 = vmatprep.subr.mxu0 %v3994
  %v3996 = vand.u32 %v3473, 4294901760
  %3997 = vmatpush1.msra.mxu0 %v3996
  %v3998 = vand.u32 %v3472, 4294901760
  %3999 = vmatprep.subr.mxu0 %v3998
  %v4000 = vand.u32 %v3471, 4294901760
  %4001 = vmatpush1.msra.mxu0 %v4000
  %v4002 = vand.u32 %v3470, 4294901760
  %4003 = vmatprep.subr.mxu0 %v4002
  %v4004 = vand.u32 %v3469, 4294901760
  %4005 = vmatpush1.msra.mxu0 %v4004
  %v4006 = vand.u32 %v3468, 4294901760
  %4007 = vmatprep.subr.mxu0 %v4006
  %v4008 = vand.u32 %v3467, 4294901760
  %4009 = vmatpush1.msra.mxu0 %v4008
  %v4010 = vand.u32 %v3466, 4294901760
  %4011 = vmatprep.subr.mxu0 %v4010
  %v4012 = vand.u32 %v3465, 4294901760
  %4013 = vmatpush1.msra.mxu0 %v4012
  %v4014 = vand.u32 %v3464, 4294901760
  %4015 = vmatprep.subr.mxu0 %v4014
  %v4016 = vand.u32 %v3463, 4294901760
  %4017 = vmatpush1.msra.mxu0 %v4016
  %v4018 = vand.u32 %v3462, 4294901760
  %4019 = vmatprep.subr.mxu0 %v4018
  %v4020 = vand.u32 %v3461, 4294901760
  %4021 = vmatpush1.msra.mxu0 %v4020
  %v4022 = vand.u32 %v3460, 4294901760
  %4023 = vmatprep.subr.mxu0 %v4022
  %v4024 = vand.u32 %v3459, 4294901760
  %4025 = vmatpush1.msra.mxu0 %v4024
  %v4026 = vand.u32 %v3458, 4294901760
  %4027 = vmatprep.subr.mxu0 %v4026
  %v4028 = vand.u32 %v3457, 4294901760
  %4029 = vmatpush1.msra.mxu0 %v4028
  %4030 = vmatprep.subr.mxu0 0.0
  %4031 = vmatpush2.msra.mxu0 0.0
  %4032 = vmatprep.subr.mxu0 0.0
  %4033 = vmatpush2.msra.mxu0 0.0
  %4034 = vmatprep.subr.mxu0 0.0
  %4035 = vmatpush2.msra.mxu0 0.0
  %4036 = vmatprep.subr.mxu0 0.0
  %4037 = vmatpush2.msra.mxu0 0.0
  %4038 = vmatprep.subr.mxu0 0.0
  %4039 = vmatpush2.msra.mxu0 0.0
  %4040 = vmatprep.subr.mxu0 0.0
  %4041 = vmatpush2.msra.mxu0 0.0
  %4042 = vmatprep.subr.mxu0 0.0
  %4043 = vmatpush2.msra.mxu0 0.0
  %4044 = vmatprep.subr.mxu0 0.0
  %4045 = vmatpush2.msra.mxu0 0.0
  %4046 = vmatprep.subr.mxu0 0.0
  %4047 = vmatpush2.msra.mxu0 0.0
  %4048 = vmatprep.subr.mxu0 0.0
  %4049 = vmatpush2.msra.mxu0 0.0
  %4050 = vmatprep.subr.mxu0 0.0
  %4051 = vmatpush2.msra.mxu0 0.0
  %4052 = vmatprep.subr.mxu0 0.0
  %4053 = vmatpush2.msra.mxu0 0.0
  %4054 = vmatprep.subr.mxu0 0.0
  %4055 = vmatpush2.msra.mxu0 0.0
  %4056 = vmatprep.subr.mxu0 0.0
  %4057 = vmatpush2.msra.mxu0 0.0
  %4058 = vmatprep.subr.mxu0 0.0
  %4059 = vmatpush2.msra.mxu0 0.0
  %4060 = vmatprep.subr.mxu0 0.0
  %4061 = vmatpush2.msra.mxu0 0.0
  %4062 = vmatprep.mubr.f32.mxu0 0.0
  %v4063 = vand.u32 %v25, 4294901760
  %v4064 = vsub.f32 %v25, %v4063
  %v4065 = vand.u32 %v4064, 4294901760
  %4066 = vmatmul.mubr.f32.gmra.mxu0 %v4065
  %v4067 = vpop.f32.mrf.mxu0
  %v4068 = vadd.f32 %v3962, %v4067
  %v4069 = vpop.f32.mrf.mxu0
  %v4070 = vadd.f32 %v3964, %v4069
  %4071 = vdwg.mxu0
  %v4072 = vand.u32 %v3488, 4294901760
  %v4073 = vsub.f32 %v3488, %v4072
  %v4074 = vand.u32 %v4073, 4294901760
  %4075 = vmatprep.subr.mxu0 %v4074
  %v4076 = vand.u32 %v3487, 4294901760
  %v4077 = vsub.f32 %v3487, %v4076
  %v4078 = vand.u32 %v4077, 4294901760
  %4079 = vmatpush1.msra.mxu0 %v4078
  %v4080 = vand.u32 %v3486, 4294901760
  %v4081 = vsub.f32 %v3486, %v4080
  %v4082 = vand.u32 %v4081, 4294901760
  %4083 = vmatprep.subr.mxu0 %v4082
  %v4084 = vand.u32 %v3485, 4294901760
  %v4085 = vsub.f32 %v3485, %v4084
  %v4086 = vand.u32 %v4085, 4294901760
  %4087 = vmatpush1.msra.mxu0 %v4086
  %v4088 = vand.u32 %v3484, 4294901760
  %v4089 = vsub.f32 %v3484, %v4088
  %v4090 = vand.u32 %v4089, 4294901760
  %4091 = vmatprep.subr.mxu0 %v4090
  %v4092 = vand.u32 %v3483, 4294901760
  %v4093 = vsub.f32 %v3483, %v4092
  %v4094 = vand.u32 %v4093, 4294901760
  %4095 = vmatpush1.msra.mxu0 %v4094
  %v4096 = vand.u32 %v3482, 4294901760
  %v4097 = vsub.f32 %v3482, %v4096
  %v4098 = vand.u32 %v4097, 4294901760
  %4099 = vmatprep.subr.mxu0 %v4098
  %v4100 = vand.u32 %v3481, 4294901760
  %v4101 = vsub.f32 %v3481, %v4100
  %v4102 = vand.u32 %v4101, 4294901760
  %4103 = vmatpush1.msra.mxu0 %v4102
  %v4104 = vand.u32 %v3480, 4294901760
  %v4105 = vsub.f32 %v3480, %v4104
  %v4106 = vand.u32 %v4105, 4294901760
  %4107 = vmatprep.subr.mxu0 %v4106
  %v4108 = vand.u32 %v3479, 4294901760
  %v4109 = vsub.f32 %v3479, %v4108
  %v4110 = vand.u32 %v4109, 4294901760
  %4111 = vmatpush1.msra.mxu0 %v4110
  %v4112 = vand.u32 %v3478, 4294901760
  %v4113 = vsub.f32 %v3478, %v4112
  %v4114 = vand.u32 %v4113, 4294901760
  %4115 = vmatprep.subr.mxu0 %v4114
  %v4116 = vand.u32 %v3477, 4294901760
  %v4117 = vsub.f32 %v3477, %v4116
  %v4118 = vand.u32 %v4117, 4294901760
  %4119 = vmatpush1.msra.mxu0 %v4118
  %v4120 = vand.u32 %v3476, 4294901760
  %v4121 = vsub.f32 %v3476, %v4120
  %v4122 = vand.u32 %v4121, 4294901760
  %4123 = vmatprep.subr.mxu0 %v4122
  %v4124 = vand.u32 %v3475, 4294901760
  %v4125 = vsub.f32 %v3475, %v4124
  %v4126 = vand.u32 %v4125, 4294901760
  %4127 = vmatpush1.msra.mxu0 %v4126
  %v4128 = vand.u32 %v3474, 4294901760
  %v4129 = vsub.f32 %v3474, %v4128
  %v4130 = vand.u32 %v4129, 4294901760
  %4131 = vmatprep.subr.mxu0 %v4130
  %v4132 = vand.u32 %v3473, 4294901760
  %v4133 = vsub.f32 %v3473, %v4132
  %v4134 = vand.u32 %v4133, 4294901760
  %4135 = vmatpush1.msra.mxu0 %v4134
  %v4136 = vand.u32 %v3472, 4294901760
  %v4137 = vsub.f32 %v3472, %v4136
  %v4138 = vand.u32 %v4137, 4294901760
  %4139 = vmatprep.subr.mxu0 %v4138
  %v4140 = vand.u32 %v3471, 4294901760
  %v4141 = vsub.f32 %v3471, %v4140
  %v4142 = vand.u32 %v4141, 4294901760
  %4143 = vmatpush1.msra.mxu0 %v4142
  %v4144 = vand.u32 %v3470, 4294901760
  %v4145 = vsub.f32 %v3470, %v4144
  %v4146 = vand.u32 %v4145, 4294901760
  %4147 = vmatprep.subr.mxu0 %v4146
  %v4148 = vand.u32 %v3469, 4294901760
  %v4149 = vsub.f32 %v3469, %v4148
  %v4150 = vand.u32 %v4149, 4294901760
  %4151 = vmatpush1.msra.mxu0 %v4150
  %v4152 = vand.u32 %v3468, 4294901760
  %v4153 = vsub.f32 %v3468, %v4152
  %v4154 = vand.u32 %v4153, 4294901760
  %4155 = vmatprep.subr.mxu0 %v4154
  %v4156 = vand.u32 %v3467, 4294901760
  %v4157 = vsub.f32 %v3467, %v4156
  %v4158 = vand.u32 %v4157, 4294901760
  %4159 = vmatpush1.msra.mxu0 %v4158
  %v4160 = vand.u32 %v3466, 4294901760
  %v4161 = vsub.f32 %v3466, %v4160
  %v4162 = vand.u32 %v4161, 4294901760
  %4163 = vmatprep.subr.mxu0 %v4162
  %v4164 = vand.u32 %v3465, 4294901760
  %v4165 = vsub.f32 %v3465, %v4164
  %v4166 = vand.u32 %v4165, 4294901760
  %4167 = vmatpush1.msra.mxu0 %v4166
  %v4168 = vand.u32 %v3464, 4294901760
  %v4169 = vsub.f32 %v3464, %v4168
  %v4170 = vand.u32 %v4169, 4294901760
  %4171 = vmatprep.subr.mxu0 %v4170
  %v4172 = vand.u32 %v3463, 4294901760
  %v4173 = vsub.f32 %v3463, %v4172
  %v4174 = vand.u32 %v4173, 4294901760
  %4175 = vmatpush1.msra.mxu0 %v4174
  %v4176 = vand.u32 %v3462, 4294901760
  %v4177 = vsub.f32 %v3462, %v4176
  %v4178 = vand.u32 %v4177, 4294901760
  %4179 = vmatprep.subr.mxu0 %v4178
  %v4180 = vand.u32 %v3461, 4294901760
  %v4181 = vsub.f32 %v3461, %v4180
  %v4182 = vand.u32 %v4181, 4294901760
  %4183 = vmatpush1.msra.mxu0 %v4182
  %v4184 = vand.u32 %v3460, 4294901760
  %v4185 = vsub.f32 %v3460, %v4184
  %v4186 = vand.u32 %v4185, 4294901760
  %4187 = vmatprep.subr.mxu0 %v4186
  %v4188 = vand.u32 %v3459, 4294901760
  %v4189 = vsub.f32 %v3459, %v4188
  %v4190 = vand.u32 %v4189, 4294901760
  %4191 = vmatpush1.msra.mxu0 %v4190
  %v4192 = vand.u32 %v3458, 4294901760
  %v4193 = vsub.f32 %v3458, %v4192
  %v4194 = vand.u32 %v4193, 4294901760
  %4195 = vmatprep.subr.mxu0 %v4194
  %v4196 = vand.u32 %v3457, 4294901760
  %v4197 = vsub.f32 %v3457, %v4196
  %v4198 = vand.u32 %v4197, 4294901760
  %4199 = vmatpush1.msra.mxu0 %v4198
  %4200 = vmatprep.subr.mxu0 0.0
  %4201 = vmatpush2.msra.mxu0 0.0
  %4202 = vmatprep.subr.mxu0 0.0
  %4203 = vmatpush2.msra.mxu0 0.0
  %4204 = vmatprep.subr.mxu0 0.0
  %4205 = vmatpush2.msra.mxu0 0.0
  %4206 = vmatprep.subr.mxu0 0.0
  %4207 = vmatpush2.msra.mxu0 0.0
  %4208 = vmatprep.subr.mxu0 0.0
  %4209 = vmatpush2.msra.mxu0 0.0
  %4210 = vmatprep.subr.mxu0 0.0
  %4211 = vmatpush2.msra.mxu0 0.0
  %4212 = vmatprep.subr.mxu0 0.0
  %4213 = vmatpush2.msra.mxu0 0.0
  %4214 = vmatprep.subr.mxu0 0.0
  %4215 = vmatpush2.msra.mxu0 0.0
  %4216 = vmatprep.subr.mxu0 0.0
  %4217 = vmatpush2.msra.mxu0 0.0
  %4218 = vmatprep.subr.mxu0 0.0
  %4219 = vmatpush2.msra.mxu0 0.0
  %4220 = vmatprep.subr.mxu0 0.0
  %4221 = vmatpush2.msra.mxu0 0.0
  %4222 = vmatprep.subr.mxu0 0.0
  %4223 = vmatpush2.msra.mxu0 0.0
  %4224 = vmatprep.subr.mxu0 0.0
  %4225 = vmatpush2.msra.mxu0 0.0
  %4226 = vmatprep.subr.mxu0 0.0
  %4227 = vmatpush2.msra.mxu0 0.0
  %4228 = vmatprep.subr.mxu0 0.0
  %4229 = vmatpush2.msra.mxu0 0.0
  %4230 = vmatprep.subr.mxu0 0.0
  %4231 = vmatpush2.msra.mxu0 0.0
  %4232 = vmatprep.mubr.f32.mxu0 0.0
  %v4233 = vand.u32 %v25, 4294901760
  %4234 = vmatmul.mubr.f32.gmra.mxu0 %v4233
  %v4235 = vpop.f32.mrf.mxu0
  %v4236 = vadd.f32 %v4068, %v4235
  %v4237 = vpop.f32.mrf.mxu0
  %v4238 = vadd.f32 %v4070, %v4237
  %4239 = vdwg.mxu0
  %v4240 = vand.u32 %v3488, 4294901760
  %4241 = vmatprep.subr.mxu0 %v4240
  %v4242 = vand.u32 %v3487, 4294901760
  %4243 = vmatpush1.msra.mxu0 %v4242
  %v4244 = vand.u32 %v3486, 4294901760
  %4245 = vmatprep.subr.mxu0 %v4244
  %v4246 = vand.u32 %v3485, 4294901760
  %4247 = vmatpush1.msra.mxu0 %v4246
  %v4248 = vand.u32 %v3484, 4294901760
  %4249 = vmatprep.subr.mxu0 %v4248
  %v4250 = vand.u32 %v3483, 4294901760
  %4251 = vmatpush1.msra.mxu0 %v4250
  %v4252 = vand.u32 %v3482, 4294901760
  %4253 = vmatprep.subr.mxu0 %v4252
  %v4254 = vand.u32 %v3481, 4294901760
  %4255 = vmatpush1.msra.mxu0 %v4254
  %v4256 = vand.u32 %v3480, 4294901760
  %4257 = vmatprep.subr.mxu0 %v4256
  %v4258 = vand.u32 %v3479, 4294901760
  %4259 = vmatpush1.msra.mxu0 %v4258
  %v4260 = vand.u32 %v3478, 4294901760
  %4261 = vmatprep.subr.mxu0 %v4260
  %v4262 = vand.u32 %v3477, 4294901760
  %4263 = vmatpush1.msra.mxu0 %v4262
  %v4264 = vand.u32 %v3476, 4294901760
  %4265 = vmatprep.subr.mxu0 %v4264
  %v4266 = vand.u32 %v3475, 4294901760
  %4267 = vmatpush1.msra.mxu0 %v4266
  %v4268 = vand.u32 %v3474, 4294901760
  %4269 = vmatprep.subr.mxu0 %v4268
  %v4270 = vand.u32 %v3473, 4294901760
  %4271 = vmatpush1.msra.mxu0 %v4270
  %v4272 = vand.u32 %v3472, 4294901760
  %4273 = vmatprep.subr.mxu0 %v4272
  %v4274 = vand.u32 %v3471, 4294901760
  %4275 = vmatpush1.msra.mxu0 %v4274
  %v4276 = vand.u32 %v3470, 4294901760
  %4277 = vmatprep.subr.mxu0 %v4276
  %v4278 = vand.u32 %v3469, 4294901760
  %4279 = vmatpush1.msra.mxu0 %v4278
  %v4280 = vand.u32 %v3468, 4294901760
  %4281 = vmatprep.subr.mxu0 %v4280
  %v4282 = vand.u32 %v3467, 4294901760
  %4283 = vmatpush1.msra.mxu0 %v4282
  %v4284 = vand.u32 %v3466, 4294901760
  %4285 = vmatprep.subr.mxu0 %v4284
  %v4286 = vand.u32 %v3465, 4294901760
  %4287 = vmatpush1.msra.mxu0 %v4286
  %v4288 = vand.u32 %v3464, 4294901760
  %4289 = vmatprep.subr.mxu0 %v4288
  %v4290 = vand.u32 %v3463, 4294901760
  %4291 = vmatpush1.msra.mxu0 %v4290
  %v4292 = vand.u32 %v3462, 4294901760
  %4293 = vmatprep.subr.mxu0 %v4292
  %v4294 = vand.u32 %v3461, 4294901760
  %4295 = vmatpush1.msra.mxu0 %v4294
  %v4296 = vand.u32 %v3460, 4294901760
  %4297 = vmatprep.subr.mxu0 %v4296
  %v4298 = vand.u32 %v3459, 4294901760
  %4299 = vmatpush1.msra.mxu0 %v4298
  %v4300 = vand.u32 %v3458, 4294901760
  %4301 = vmatprep.subr.mxu0 %v4300
  %v4302 = vand.u32 %v3457, 4294901760
  %4303 = vmatpush1.msra.mxu0 %v4302
  %4304 = vmatprep.subr.mxu0 0.0
  %4305 = vmatpush2.msra.mxu0 0.0
  %4306 = vmatprep.subr.mxu0 0.0
  %4307 = vmatpush2.msra.mxu0 0.0
  %4308 = vmatprep.subr.mxu0 0.0
  %4309 = vmatpush2.msra.mxu0 0.0
  %4310 = vmatprep.subr.mxu0 0.0
  %4311 = vmatpush2.msra.mxu0 0.0
  %4312 = vmatprep.subr.mxu0 0.0
  %4313 = vmatpush2.msra.mxu0 0.0
  %4314 = vmatprep.subr.mxu0 0.0
  %4315 = vmatpush2.msra.mxu0 0.0
  %4316 = vmatprep.subr.mxu0 0.0
  %4317 = vmatpush2.msra.mxu0 0.0
  %4318 = vmatprep.subr.mxu0 0.0
  %4319 = vmatpush2.msra.mxu0 0.0
  %4320 = vmatprep.subr.mxu0 0.0
  %4321 = vmatpush2.msra.mxu0 0.0
  %4322 = vmatprep.subr.mxu0 0.0
  %4323 = vmatpush2.msra.mxu0 0.0
  %4324 = vmatprep.subr.mxu0 0.0
  %4325 = vmatpush2.msra.mxu0 0.0
  %4326 = vmatprep.subr.mxu0 0.0
  %4327 = vmatpush2.msra.mxu0 0.0
  %4328 = vmatprep.subr.mxu0 0.0
  %4329 = vmatpush2.msra.mxu0 0.0
  %4330 = vmatprep.subr.mxu0 0.0
  %4331 = vmatpush2.msra.mxu0 0.0
  %4332 = vmatprep.subr.mxu0 0.0
  %4333 = vmatpush2.msra.mxu0 0.0
  %4334 = vmatprep.subr.mxu0 0.0
  %4335 = vmatpush2.msra.mxu0 0.0
  %4336 = vmatprep.mubr.f32.mxu0 0.0
  %v4337 = vand.u32 %v25, 4294901760
  %4338 = vmatmul.mubr.f32.gmra.mxu0 %v4337
  %v4339 = vpop.f32.mrf.mxu0
  %v4340 = vadd.f32 %v4236, %v4339
  %v4341 = vpop.f32.mrf.mxu0
  %v4342 = vadd.f32 %v4238, %v4341
  %4343 = vdwg.mxu0
  %v4344 = vmax.f32 %v4340, 0.0
  %v4345 = vmax.f32 %v4342, 0.0
  %v4348 = vrot.slane %v4344, 1
  %v4349 = vrot.slane %v4345, 1
  %v4352 = vmul.f32 %v4344, %v4348
  %v4353 = vmul.f32 %v4345, %v4349
  %v4356 = vrot.slane %v4352, 5
  %v4357 = vrot.slane %v4353, 5
  %v4360 = vadd.f32 %v23, %v4356
  %v4361 = vadd.f32 %v24, %v4357
  %v4364 = vrot.slane %v4340, 7
  %v4365 = vrot.slane %v4342, 7
  %v4368 = vadd.f32 %v4360, %v4364
  %v4369 = vadd.f32 %v4361, %v4365
  %v4370 = vmax.f32 %v4368, 0.0
  %v4371 = vmax.f32 %v4369, 0.0
  %v4372 = vand.u32 2147483647, %v4368
  %v4373 = vand.u32 2147483647, %v4369
  %v4374 = vsub.f32 0.0, %v4372
  %v4375 = vsub.f32 0.0, %v4373
  %v4376 = vmul.f32 %v4374, 1.442695
  %v4377 = vpow.pop %v4376
  %v4378 = vmul.f32 %v4375, 1.442695
  %v4379 = vpow.pop %v4378
  %v4380 = vadd.f32 %v4377, 1.0
  %v4381 = vlog2.pop %v4380
  %v4382 = vmul.f32 %v4381, 0.6931472
  %v4383 = vmul.f32 -0.5, %v4377
  %v4384 = vadd.f32 %v4383, 1.0
  %v4385 = vmul.f32 %v4384, %v4377
  %v4386 = vand.u32 2147483647, %v4377
  %vm4387 = vcmp.lt.f32.partialorder %v4386, 0.0004427343
  %v4388 = vsel %vm4387, %v4385, %v4382
  %v4389 = vadd.f32 %v4379, 1.0
  %v4390 = vlog2.pop %v4389
  %v4391 = vmul.f32 %v4390, 0.6931472
  %v4392 = vmul.f32 -0.5, %v4379
  %v4393 = vadd.f32 %v4392, 1.0
  %v4394 = vmul.f32 %v4393, %v4379
  %v4395 = vand.u32 2147483647, %v4379
  %vm4396 = vcmp.lt.f32.partialorder %v4395, 0.0004427343
  %v4397 = vsel %vm4396, %v4394, %v4391
  %v4398 = vadd.f32 %v4370, %v4388
  %v4399 = vadd.f32 %v4371, %v4397
  %v4402 = vcombine.low %v4398, %v4399
  %v4404 = vunpack.c.l.s4 1966171168
  %v4405 = vunpack.c.0.s8 %v4404
  %v4406 = vlaneseq
  %v4407 = vshrl.u32 %v4406, 7
  %v4408 = vsub.s32 %v4405, %v4407
  %v4409 = vrot.slane %v4402, %v4408
  %v4410 = vcombine.high %v4409, %v4409
  %v4412 = vunpack.c.l.s4 1966171168
  %v4413 = vunpack.c.0.s8 %v4412
  %v4414 = vlaneseq
  %v4415 = vshrl.u32 %v4414, 7
  %v4416 = vsub.s32 %v4413, %v4415
  %v4417 = vrot.slane %v4410, %v4416
  %v4418 = vcombine.high %v4417, %v4417
  %s4420 = scalar_lea.vmem [#allocation2], 3
  %4421 = vst.msk [vmem:[%s4420] ss:$8 sm:$0x3] %vm1122, %v4418
  %4422 = vst.msk [vmem:[%s4420] ss:$8 sm:$0x0] %vm1122, %v4418
  %v4423 = vlaneseq
  %v4424 = vshrl.u32 %v4423, 7
  %v4425 = vsub.s32 4, %v4424
  %v4426 = vrot.slane %v23, %v4425
  %v4427 = vlaneseq
  %v4428 = vshrl.u32 %v4427, 7
  %v4429 = vsub.s32 4, %v4428
  %v4430 = vrot.slane %v24, %v4429
  %v4431 = vld [vmem:[%s1] sm:$0xff]
  %v4432 = vld [vmem:[%s1 + $0x8] sm:$0xff]
  %v4433 = vld [vmem:[%s1 + $0x10] sm:$0xff]
  %v4434 = vld [vmem:[%s1 + $0x18] sm:$0xff]
  %v4435 = vld [vmem:[%s1 + $0x20] sm:$0xff]
  %v4436 = vld [vmem:[%s1 + $0x28] sm:$0xff]
  %v4437 = vld [vmem:[%s1 + $0x30] sm:$0xff]
  %v4438 = vld [vmem:[%s1 + $0x38] sm:$0xff]
  %v4439 = vld [vmem:[%s1 + $0x40] sm:$0xff]
  %v4440 = vld [vmem:[%s1 + $0x48] sm:$0xff]
  %v4441 = vld [vmem:[%s1 + $0x50] sm:$0xff]
  %v4442 = vld [vmem:[%s1 + $0x58] sm:$0xff]
  %v4443 = vld [vmem:[%s1 + $0x60] sm:$0xff]
  %v4444 = vld [vmem:[%s1 + $0x68] sm:$0xff]
  %v4445 = vld [vmem:[%s1 + $0x70] sm:$0xff]
  %v4446 = vld [vmem:[%s1 + $0x78] sm:$0xff]
  %v4447 = vld [vmem:[%s1 + $0x80] sm:$0xff]
  %v4448 = vld [vmem:[%s1 + $0x88] sm:$0xff]
  %v4449 = vld [vmem:[%s1 + $0x90] sm:$0xff]
  %v4450 = vld [vmem:[%s1 + $0x98] sm:$0xff]
  %v4451 = vld [vmem:[%s1 + $0xa0] sm:$0xff]
  %v4452 = vld [vmem:[%s1 + $0xa8] sm:$0xff]
  %v4453 = vld [vmem:[%s1 + $0xb0] sm:$0xff]
  %v4454 = vld [vmem:[%s1 + $0xb8] sm:$0xff]
  %v4455 = vld [vmem:[%s1 + $0xc0] sm:$0xff]
  %v4456 = vld [vmem:[%s1 + $0xc8] sm:$0xff]
  %v4457 = vld [vmem:[%s1 + $0xd0] sm:$0xff]
  %v4458 = vld [vmem:[%s1 + $0xd8] sm:$0xff]
  %v4459 = vld [vmem:[%s1 + $0xe0] sm:$0xff]
  %v4460 = vld [vmem:[%s1 + $0xe8] sm:$0xff]
  %v4461 = vld [vmem:[%s1 + $0xf0] sm:$0xff]
  %v4462 = vld [vmem:[%s1 + $0xf8] sm:$0xff]
  %v4463 = vmul.f32 %v4426, %v4431
  %v4464 = vmul.f32 %v4430, %v4432
  %v4465 = vmul.f32 %v4426, %v4433
  %v4466 = vmul.f32 %v4430, %v4434
  %v4467 = vmul.f32 %v4426, %v4435
  %v4468 = vmul.f32 %v4430, %v4436
  %v4469 = vmul.f32 %v4426, %v4437
  %v4470 = vmul.f32 %v4430, %v4438
  %v4471 = vmul.f32 %v4426, %v4439
  %v4472 = vmul.f32 %v4430, %v4440
  %v4473 = vmul.f32 %v4426, %v4441
  %v4474 = vmul.f32 %v4430, %v4442
  %v4475 = vmul.f32 %v4426, %v4443
  %v4476 = vmul.f32 %v4430, %v4444
  %v4477 = vmul.f32 %v4426, %v4445
  %v4478 = vmul.f32 %v4430, %v4446
  %v4479 = vmul.f32 %v4426, %v4447
  %v4480 = vmul.f32 %v4430, %v4448
  %v4481 = vmul.f32 %v4426, %v4449
  %v4482 = vmul.f32 %v4430, %v4450
  %v4483 = vmul.f32 %v4426, %v4451
  %v4484 = vmul.f32 %v4430, %v4452
  %v4485 = vmul.f32 %v4426, %v4453
  %v4486 = vmul.f32 %v4430, %v4454
  %v4487 = vmul.f32 %v4426, %v4455
  %v4488 = vmul.f32 %v4430, %v4456
  %v4489 = vmul.f32 %v4426, %v4457
  %v4490 = vmul.f32 %v4430, %v4458
  %v4491 = vmul.f32 %v4426, %v4459
  %v4492 = vmul.f32 %v4430, %v4460
  %v4493 = vmul.f32 %v4426, %v4461
  %v4494 = vmul.f32 %v4430, %v4462
  %v4495 = vld [vmem:[%s2] sm:$0xff]
  %v4496 = vld [vmem:[%s2 + $0x8] sm:$0xff]
  %v4497 = vld [vmem:[%s2 + $0x10] sm:$0xff]
  %v4498 = vld [vmem:[%s2 + $0x18] sm:$0xff]
  %v4499 = vld [vmem:[%s2 + $0x20] sm:$0xff]
  %v4500 = vld [vmem:[%s2 + $0x28] sm:$0xff]
  %v4501 = vld [vmem:[%s2 + $0x30] sm:$0xff]
  %v4502 = vld [vmem:[%s2 + $0x38] sm:$0xff]
  %v4503 = vld [vmem:[%s2 + $0x40] sm:$0xff]
  %v4504 = vld [vmem:[%s2 + $0x48] sm:$0xff]
  %v4505 = vld [vmem:[%s2 + $0x50] sm:$0xff]
  %v4506 = vld [vmem:[%s2 + $0x58] sm:$0xff]
  %v4507 = vld [vmem:[%s2 + $0x60] sm:$0xff]
  %v4508 = vld [vmem:[%s2 + $0x68] sm:$0xff]
  %v4509 = vld [vmem:[%s2 + $0x70] sm:$0xff]
  %v4510 = vld [vmem:[%s2 + $0x78] sm:$0xff]
  %v4511 = vld [vmem:[%s2 + $0x80] sm:$0xff]
  %v4512 = vld [vmem:[%s2 + $0x88] sm:$0xff]
  %v4513 = vld [vmem:[%s2 + $0x90] sm:$0xff]
  %v4514 = vld [vmem:[%s2 + $0x98] sm:$0xff]
  %v4515 = vld [vmem:[%s2 + $0xa0] sm:$0xff]
  %v4516 = vld [vmem:[%s2 + $0xa8] sm:$0xff]
  %v4517 = vld [vmem:[%s2 + $0xb0] sm:$0xff]
  %v4518 = vld [vmem:[%s2 + $0xb8] sm:$0xff]
  %v4519 = vld [vmem:[%s2 + $0xc0] sm:$0xff]
  %v4520 = vld [vmem:[%s2 + $0xc8] sm:$0xff]
  %v4521 = vld [vmem:[%s2 + $0xd0] sm:$0xff]
  %v4522 = vld [vmem:[%s2 + $0xd8] sm:$0xff]
  %v4523 = vld [vmem:[%s2 + $0xe0] sm:$0xff]
  %v4524 = vld [vmem:[%s2 + $0xe8] sm:$0xff]
  %v4525 = vld [vmem:[%s2 + $0xf0] sm:$0xff]
  %v4526 = vld [vmem:[%s2 + $0xf8] sm:$0xff]
  %v4527 = vadd.f32 %v4463, %v4495
  %v4528 = vadd.f32 %v4464, %v4496
  %v4529 = vadd.f32 %v4465, %v4497
  %v4530 = vadd.f32 %v4466, %v4498
  %v4531 = vadd.f32 %v4467, %v4499
  %v4532 = vadd.f32 %v4468, %v4500
  %v4533 = vadd.f32 %v4469, %v4501
  %v4534 = vadd.f32 %v4470, %v4502
  %v4535 = vadd.f32 %v4471, %v4503
  %v4536 = vadd.f32 %v4472, %v4504
  %v4537 = vadd.f32 %v4473, %v4505
  %v4538 = vadd.f32 %v4474, %v4506
  %v4539 = vadd.f32 %v4475, %v4507
  %v4540 = vadd.f32 %v4476, %v4508
  %v4541 = vadd.f32 %v4477, %v4509
  %v4542 = vadd.f32 %v4478, %v4510
  %v4543 = vadd.f32 %v4479, %v4511
  %v4544 = vadd.f32 %v4480, %v4512
  %v4545 = vadd.f32 %v4481, %v4513
  %v4546 = vadd.f32 %v4482, %v4514
  %v4547 = vadd.f32 %v4483, %v4515
  %v4548 = vadd.f32 %v4484, %v4516
  %v4549 = vadd.f32 %v4485, %v4517
  %v4550 = vadd.f32 %v4486, %v4518
  %v4551 = vadd.f32 %v4487, %v4519
  %v4552 = vadd.f32 %v4488, %v4520
  %v4553 = vadd.f32 %v4489, %v4521
  %v4554 = vadd.f32 %v4490, %v4522
  %v4555 = vadd.f32 %v4491, %v4523
  %v4556 = vadd.f32 %v4492, %v4524
  %v4557 = vadd.f32 %v4493, %v4525
  %v4558 = vadd.f32 %v4494, %v4526
  %v4559 = vmax.f32 %v4527, 0.0
  %v4560 = vmax.f32 %v4528, 0.0
  %v4561 = vmax.f32 %v4529, 0.0
  %v4562 = vmax.f32 %v4530, 0.0
  %v4563 = vmax.f32 %v4531, 0.0
  %v4564 = vmax.f32 %v4532, 0.0
  %v4565 = vmax.f32 %v4533, 0.0
  %v4566 = vmax.f32 %v4534, 0.0
  %v4567 = vmax.f32 %v4535, 0.0
  %v4568 = vmax.f32 %v4536, 0.0
  %v4569 = vmax.f32 %v4537, 0.0
  %v4570 = vmax.f32 %v4538, 0.0
  %v4571 = vmax.f32 %v4539, 0.0
  %v4572 = vmax.f32 %v4540, 0.0
  %v4573 = vmax.f32 %v4541, 0.0
  %v4574 = vmax.f32 %v4542, 0.0
  %v4575 = vmax.f32 %v4543, 0.0
  %v4576 = vmax.f32 %v4544, 0.0
  %v4577 = vmax.f32 %v4545, 0.0
  %v4578 = vmax.f32 %v4546, 0.0
  %v4579 = vmax.f32 %v4547, 0.0
  %v4580 = vmax.f32 %v4548, 0.0
  %v4581 = vmax.f32 %v4549, 0.0
  %v4582 = vmax.f32 %v4550, 0.0
  %v4583 = vmax.f32 %v4551, 0.0
  %v4584 = vmax.f32 %v4552, 0.0
  %v4585 = vmax.f32 %v4553, 0.0
  %v4586 = vmax.f32 %v4554, 0.0
  %v4587 = vmax.f32 %v4555, 0.0
  %v4588 = vmax.f32 %v4556, 0.0
  %v4589 = vmax.f32 %v4557, 0.0
  %v4590 = vmax.f32 %v4558, 0.0
  %v4591 = vand.u32 %v4590, 4294901760
  %4592 = vmatprep.subr.mxu0 %v4591
  %v4593 = vand.u32 %v4589, 4294901760
  %4594 = vmatpush1.msra.mxu0 %v4593
  %v4595 = vand.u32 %v4588, 4294901760
  %4596 = vmatprep.subr.mxu0 %v4595
  %v4597 = vand.u32 %v4587, 4294901760
  %4598 = vmatpush1.msra.mxu0 %v4597
  %v4599 = vand.u32 %v4586, 4294901760
  %4600 = vmatprep.subr.mxu0 %v4599
  %v4601 = vand.u32 %v4585, 4294901760
  %4602 = vmatpush1.msra.mxu0 %v4601
  %v4603 = vand.u32 %v4584, 4294901760
  %4604 = vmatprep.subr.mxu0 %v4603
  %v4605 = vand.u32 %v4583, 4294901760
  %4606 = vmatpush1.msra.mxu0 %v4605
  %v4607 = vand.u32 %v4582, 4294901760
  %4608 = vmatprep.subr.mxu0 %v4607
  %v4609 = vand.u32 %v4581, 4294901760
  %4610 = vmatpush1.msra.mxu0 %v4609
  %v4611 = vand.u32 %v4580, 4294901760
  %4612 = vmatprep.subr.mxu0 %v4611
  %v4613 = vand.u32 %v4579, 4294901760
  %4614 = vmatpush1.msra.mxu0 %v4613
  %v4615 = vand.u32 %v4578, 4294901760
  %4616 = vmatprep.subr.mxu0 %v4615
  %v4617 = vand.u32 %v4577, 4294901760
  %4618 = vmatpush1.msra.mxu0 %v4617
  %v4619 = vand.u32 %v4576, 4294901760
  %4620 = vmatprep.subr.mxu0 %v4619
  %v4621 = vand.u32 %v4575, 4294901760
  %4622 = vmatpush1.msra.mxu0 %v4621
  %v4623 = vand.u32 %v4574, 4294901760
  %4624 = vmatprep.subr.mxu0 %v4623
  %v4625 = vand.u32 %v4573, 4294901760
  %4626 = vmatpush1.msra.mxu0 %v4625
  %v4627 = vand.u32 %v4572, 4294901760
  %4628 = vmatprep.subr.mxu0 %v4627
  %v4629 = vand.u32 %v4571, 4294901760
  %4630 = vmatpush1.msra.mxu0 %v4629
  %v4631 = vand.u32 %v4570, 4294901760
  %4632 = vmatprep.subr.mxu0 %v4631
  %v4633 = vand.u32 %v4569, 4294901760
  %4634 = vmatpush1.msra.mxu0 %v4633
  %v4635 = vand.u32 %v4568, 4294901760
  %4636 = vmatprep.subr.mxu0 %v4635
  %v4637 = vand.u32 %v4567, 4294901760
  %4638 = vmatpush1.msra.mxu0 %v4637
  %v4639 = vand.u32 %v4566, 4294901760
  %4640 = vmatprep.subr.mxu0 %v4639
  %v4641 = vand.u32 %v4565, 4294901760
  %4642 = vmatpush1.msra.mxu0 %v4641
  %v4643 = vand.u32 %v4564, 4294901760
  %4644 = vmatprep.subr.mxu0 %v4643
  %v4645 = vand.u32 %v4563, 4294901760
  %4646 = vmatpush1.msra.mxu0 %v4645
  %v4647 = vand.u32 %v4562, 4294901760
  %4648 = vmatprep.subr.mxu0 %v4647
  %v4649 = vand.u32 %v4561, 4294901760
  %4650 = vmatpush1.msra.mxu0 %v4649
  %v4651 = vand.u32 %v4560, 4294901760
  %4652 = vmatprep.subr.mxu0 %v4651
  %v4653 = vand.u32 %v4559, 4294901760
  %4654 = vmatpush1.msra.mxu0 %v4653
  %4655 = vmatprep.subr.mxu0 0.0
  %4656 = vmatpush2.msra.mxu0 0.0
  %4657 = vmatprep.subr.mxu0 0.0
  %4658 = vmatpush2.msra.mxu0 0.0
  %4659 = vmatprep.subr.mxu0 0.0
  %4660 = vmatpush2.msra.mxu0 0.0
  %4661 = vmatprep.subr.mxu0 0.0
  %4662 = vmatpush2.msra.mxu0 0.0
  %4663 = vmatprep.subr.mxu0 0.0
  %4664 = vmatpush2.msra.mxu0 0.0
  %4665 = vmatprep.subr.mxu0 0.0
  %4666 = vmatpush2.msra.mxu0 0.0
  %4667 = vmatprep.subr.mxu0 0.0
  %4668 = vmatpush2.msra.mxu0 0.0
  %4669 = vmatprep.subr.mxu0 0.0
  %4670 = vmatpush2.msra.mxu0 0.0
  %4671 = vmatprep.subr.mxu0 0.0
  %4672 = vmatpush2.msra.mxu0 0.0
  %4673 = vmatprep.subr.mxu0 0.0
  %4674 = vmatpush2.msra.mxu0 0.0
  %4675 = vmatprep.subr.mxu0 0.0
  %4676 = vmatpush2.msra.mxu0 0.0
  %4677 = vmatprep.subr.mxu0 0.0
  %4678 = vmatpush2.msra.mxu0 0.0
  %4679 = vmatprep.subr.mxu0 0.0
  %4680 = vmatpush2.msra.mxu0 0.0
  %4681 = vmatprep.subr.mxu0 0.0
  %4682 = vmatpush2.msra.mxu0 0.0
  %4683 = vmatprep.subr.mxu0 0.0
  %4684 = vmatpush2.msra.mxu0 0.0
  %4685 = vmatprep.subr.mxu0 0.0
  %4686 = vmatpush2.msra.mxu0 0.0
  %4687 = vmatprep.mubr.f32.mxu0 0.0
  %v4688 = vand.u32 %v25, 4294901760
  %v4689 = vsub.f32 %v25, %v4688
  %v4690 = vand.u32 %v4689, 4294901760
  %v4691 = vsub.f32 %v4689, %v4690
  %v4692 = vand.u32 %v4691, 4294901760
  %4693 = vmatmul.mubr.f32.gmra.mxu0 %v4692
  %v4694 = vpop.f32.mrf.mxu0
  %v4695 = vadd.f32 %v26, %v4694
  %v4696 = vpop.f32.mrf.mxu0
  %v4697 = vadd.f32 %v27, %v4696
  %4698 = vdwg.mxu0
  %v4699 = vand.u32 %v4590, 4294901760
  %v4700 = vsub.f32 %v4590, %v4699
  %v4701 = vand.u32 %v4700, 4294901760
  %v4702 = vsub.f32 %v4700, %v4701
  %v4703 = vand.u32 %v4702, 4294901760
  %4704 = vmatprep.subr.mxu0 %v4703
  %v4705 = vand.u32 %v4589, 4294901760
  %v4706 = vsub.f32 %v4589, %v4705
  %v4707 = vand.u32 %v4706, 4294901760
  %v4708 = vsub.f32 %v4706, %v4707
  %v4709 = vand.u32 %v4708, 4294901760
  %4710 = vmatpush1.msra.mxu0 %v4709
  %v4711 = vand.u32 %v4588, 4294901760
  %v4712 = vsub.f32 %v4588, %v4711
  %v4713 = vand.u32 %v4712, 4294901760
  %v4714 = vsub.f32 %v4712, %v4713
  %v4715 = vand.u32 %v4714, 4294901760
  %4716 = vmatprep.subr.mxu0 %v4715
  %v4717 = vand.u32 %v4587, 4294901760
  %v4718 = vsub.f32 %v4587, %v4717
  %v4719 = vand.u32 %v4718, 4294901760
  %v4720 = vsub.f32 %v4718, %v4719
  %v4721 = vand.u32 %v4720, 4294901760
  %4722 = vmatpush1.msra.mxu0 %v4721
  %v4723 = vand.u32 %v4586, 4294901760
  %v4724 = vsub.f32 %v4586, %v4723
  %v4725 = vand.u32 %v4724, 4294901760
  %v4726 = vsub.f32 %v4724, %v4725
  %v4727 = vand.u32 %v4726, 4294901760
  %4728 = vmatprep.subr.mxu0 %v4727
  %v4729 = vand.u32 %v4585, 4294901760
  %v4730 = vsub.f32 %v4585, %v4729
  %v4731 = vand.u32 %v4730, 4294901760
  %v4732 = vsub.f32 %v4730, %v4731
  %v4733 = vand.u32 %v4732, 4294901760
  %4734 = vmatpush1.msra.mxu0 %v4733
  %v4735 = vand.u32 %v4584, 4294901760
  %v4736 = vsub.f32 %v4584, %v4735
  %v4737 = vand.u32 %v4736, 4294901760
  %v4738 = vsub.f32 %v4736, %v4737
  %v4739 = vand.u32 %v4738, 4294901760
  %4740 = vmatprep.subr.mxu0 %v4739
  %v4741 = vand.u32 %v4583, 4294901760
  %v4742 = vsub.f32 %v4583, %v4741
  %v4743 = vand.u32 %v4742, 4294901760
  %v4744 = vsub.f32 %v4742, %v4743
  %v4745 = vand.u32 %v4744, 4294901760
  %4746 = vmatpush1.msra.mxu0 %v4745
  %v4747 = vand.u32 %v4582, 4294901760
  %v4748 = vsub.f32 %v4582, %v4747
  %v4749 = vand.u32 %v4748, 4294901760
  %v4750 = vsub.f32 %v4748, %v4749
  %v4751 = vand.u32 %v4750, 4294901760
  %4752 = vmatprep.subr.mxu0 %v4751
  %v4753 = vand.u32 %v4581, 4294901760
  %v4754 = vsub.f32 %v4581, %v4753
  %v4755 = vand.u32 %v4754, 4294901760
  %v4756 = vsub.f32 %v4754, %v4755
  %v4757 = vand.u32 %v4756, 4294901760
  %4758 = vmatpush1.msra.mxu0 %v4757
  %v4759 = vand.u32 %v4580, 4294901760
  %v4760 = vsub.f32 %v4580, %v4759
  %v4761 = vand.u32 %v4760, 4294901760
  %v4762 = vsub.f32 %v4760, %v4761
  %v4763 = vand.u32 %v4762, 4294901760
  %4764 = vmatprep.subr.mxu0 %v4763
  %v4765 = vand.u32 %v4579, 4294901760
  %v4766 = vsub.f32 %v4579, %v4765
  %v4767 = vand.u32 %v4766, 4294901760
  %v4768 = vsub.f32 %v4766, %v4767
  %v4769 = vand.u32 %v4768, 4294901760
  %4770 = vmatpush1.msra.mxu0 %v4769
  %v4771 = vand.u32 %v4578, 4294901760
  %v4772 = vsub.f32 %v4578, %v4771
  %v4773 = vand.u32 %v4772, 4294901760
  %v4774 = vsub.f32 %v4772, %v4773
  %v4775 = vand.u32 %v4774, 4294901760
  %4776 = vmatprep.subr.mxu0 %v4775
  %v4777 = vand.u32 %v4577, 4294901760
  %v4778 = vsub.f32 %v4577, %v4777
  %v4779 = vand.u32 %v4778, 4294901760
  %v4780 = vsub.f32 %v4778, %v4779
  %v4781 = vand.u32 %v4780, 4294901760
  %4782 = vmatpush1.msra.mxu0 %v4781
  %v4783 = vand.u32 %v4576, 4294901760
  %v4784 = vsub.f32 %v4576, %v4783
  %v4785 = vand.u32 %v4784, 4294901760
  %v4786 = vsub.f32 %v4784, %v4785
  %v4787 = vand.u32 %v4786, 4294901760
  %4788 = vmatprep.subr.mxu0 %v4787
  %v4789 = vand.u32 %v4575, 4294901760
  %v4790 = vsub.f32 %v4575, %v4789
  %v4791 = vand.u32 %v4790, 4294901760
  %v4792 = vsub.f32 %v4790, %v4791
  %v4793 = vand.u32 %v4792, 4294901760
  %4794 = vmatpush1.msra.mxu0 %v4793
  %v4795 = vand.u32 %v4574, 4294901760
  %v4796 = vsub.f32 %v4574, %v4795
  %v4797 = vand.u32 %v4796, 4294901760
  %v4798 = vsub.f32 %v4796, %v4797
  %v4799 = vand.u32 %v4798, 4294901760
  %4800 = vmatprep.subr.mxu0 %v4799
  %v4801 = vand.u32 %v4573, 4294901760
  %v4802 = vsub.f32 %v4573, %v4801
  %v4803 = vand.u32 %v4802, 4294901760
  %v4804 = vsub.f32 %v4802, %v4803
  %v4805 = vand.u32 %v4804, 4294901760
  %4806 = vmatpush1.msra.mxu0 %v4805
  %v4807 = vand.u32 %v4572, 4294901760
  %v4808 = vsub.f32 %v4572, %v4807
  %v4809 = vand.u32 %v4808, 4294901760
  %v4810 = vsub.f32 %v4808, %v4809
  %v4811 = vand.u32 %v4810, 4294901760
  %4812 = vmatprep.subr.mxu0 %v4811
  %v4813 = vand.u32 %v4571, 4294901760
  %v4814 = vsub.f32 %v4571, %v4813
  %v4815 = vand.u32 %v4814, 4294901760
  %v4816 = vsub.f32 %v4814, %v4815
  %v4817 = vand.u32 %v4816, 4294901760
  %4818 = vmatpush1.msra.mxu0 %v4817
  %v4819 = vand.u32 %v4570, 4294901760
  %v4820 = vsub.f32 %v4570, %v4819
  %v4821 = vand.u32 %v4820, 4294901760
  %v4822 = vsub.f32 %v4820, %v4821
  %v4823 = vand.u32 %v4822, 4294901760
  %4824 = vmatprep.subr.mxu0 %v4823
  %v4825 = vand.u32 %v4569, 4294901760
  %v4826 = vsub.f32 %v4569, %v4825
  %v4827 = vand.u32 %v4826, 4294901760
  %v4828 = vsub.f32 %v4826, %v4827
  %v4829 = vand.u32 %v4828, 4294901760
  %4830 = vmatpush1.msra.mxu0 %v4829
  %v4831 = vand.u32 %v4568, 4294901760
  %v4832 = vsub.f32 %v4568, %v4831
  %v4833 = vand.u32 %v4832, 4294901760
  %v4834 = vsub.f32 %v4832, %v4833
  %v4835 = vand.u32 %v4834, 4294901760
  %4836 = vmatprep.subr.mxu0 %v4835
  %v4837 = vand.u32 %v4567, 4294901760
  %v4838 = vsub.f32 %v4567, %v4837
  %v4839 = vand.u32 %v4838, 4294901760
  %v4840 = vsub.f32 %v4838, %v4839
  %v4841 = vand.u32 %v4840, 4294901760
  %4842 = vmatpush1.msra.mxu0 %v4841
  %v4843 = vand.u32 %v4566, 4294901760
  %v4844 = vsub.f32 %v4566, %v4843
  %v4845 = vand.u32 %v4844, 4294901760
  %v4846 = vsub.f32 %v4844, %v4845
  %v4847 = vand.u32 %v4846, 4294901760
  %4848 = vmatprep.subr.mxu0 %v4847
  %v4849 = vand.u32 %v4565, 4294901760
  %v4850 = vsub.f32 %v4565, %v4849
  %v4851 = vand.u32 %v4850, 4294901760
  %v4852 = vsub.f32 %v4850, %v4851
  %v4853 = vand.u32 %v4852, 4294901760
  %4854 = vmatpush1.msra.mxu0 %v4853
  %v4855 = vand.u32 %v4564, 4294901760
  %v4856 = vsub.f32 %v4564, %v4855
  %v4857 = vand.u32 %v4856, 4294901760
  %v4858 = vsub.f32 %v4856, %v4857
  %v4859 = vand.u32 %v4858, 4294901760
  %4860 = vmatprep.subr.mxu0 %v4859
  %v4861 = vand.u32 %v4563, 4294901760
  %v4862 = vsub.f32 %v4563, %v4861
  %v4863 = vand.u32 %v4862, 4294901760
  %v4864 = vsub.f32 %v4862, %v4863
  %v4865 = vand.u32 %v4864, 4294901760
  %4866 = vmatpush1.msra.mxu0 %v4865
  %v4867 = vand.u32 %v4562, 4294901760
  %v4868 = vsub.f32 %v4562, %v4867
  %v4869 = vand.u32 %v4868, 4294901760
  %v4870 = vsub.f32 %v4868, %v4869
  %v4871 = vand.u32 %v4870, 4294901760
  %4872 = vmatprep.subr.mxu0 %v4871
  %v4873 = vand.u32 %v4561, 4294901760
  %v4874 = vsub.f32 %v4561, %v4873
  %v4875 = vand.u32 %v4874, 4294901760
  %v4876 = vsub.f32 %v4874, %v4875
  %v4877 = vand.u32 %v4876, 4294901760
  %4878 = vmatpush1.msra.mxu0 %v4877
  %v4879 = vand.u32 %v4560, 4294901760
  %v4880 = vsub.f32 %v4560, %v4879
  %v4881 = vand.u32 %v4880, 4294901760
  %v4882 = vsub.f32 %v4880, %v4881
  %v4883 = vand.u32 %v4882, 4294901760
  %4884 = vmatprep.subr.mxu0 %v4883
  %v4885 = vand.u32 %v4559, 4294901760
  %v4886 = vsub.f32 %v4559, %v4885
  %v4887 = vand.u32 %v4886, 4294901760
  %v4888 = vsub.f32 %v4886, %v4887
  %v4889 = vand.u32 %v4888, 4294901760
  %4890 = vmatpush1.msra.mxu0 %v4889
  %4891 = vmatprep.subr.mxu0 0.0
  %4892 = vmatpush2.msra.mxu0 0.0
  %4893 = vmatprep.subr.mxu0 0.0
  %4894 = vmatpush2.msra.mxu0 0.0
  %4895 = vmatprep.subr.mxu0 0.0
  %4896 = vmatpush2.msra.mxu0 0.0
  %4897 = vmatprep.subr.mxu0 0.0
  %4898 = vmatpush2.msra.mxu0 0.0
  %4899 = vmatprep.subr.mxu0 0.0
  %4900 = vmatpush2.msra.mxu0 0.0
  %4901 = vmatprep.subr.mxu0 0.0
  %4902 = vmatpush2.msra.mxu0 0.0
  %4903 = vmatprep.subr.mxu0 0.0
  %4904 = vmatpush2.msra.mxu0 0.0
  %4905 = vmatprep.subr.mxu0 0.0
  %4906 = vmatpush2.msra.mxu0 0.0
  %4907 = vmatprep.subr.mxu0 0.0
  %4908 = vmatpush2.msra.mxu0 0.0
  %4909 = vmatprep.subr.mxu0 0.0
  %4910 = vmatpush2.msra.mxu0 0.0
  %4911 = vmatprep.subr.mxu0 0.0
  %4912 = vmatpush2.msra.mxu0 0.0
  %4913 = vmatprep.subr.mxu0 0.0
  %4914 = vmatpush2.msra.mxu0 0.0
  %4915 = vmatprep.subr.mxu0 0.0
  %4916 = vmatpush2.msra.mxu0 0.0
  %4917 = vmatprep.subr.mxu0 0.0
  %4918 = vmatpush2.msra.mxu0 0.0
  %4919 = vmatprep.subr.mxu0 0.0
  %4920 = vmatpush2.msra.mxu0 0.0
  %4921 = vmatprep.subr.mxu0 0.0
  %4922 = vmatpush2.msra.mxu0 0.0
  %4923 = vmatprep.mubr.f32.mxu0 0.0
  %v4924 = vand.u32 %v25, 4294901760
  %4925 = vmatmul.mubr.f32.gmra.mxu0 %v4924
  %v4926 = vpop.f32.mrf.mxu0
  %v4927 = vadd.f32 %v4695, %v4926
  %v4928 = vpop.f32.mrf.mxu0
  %v4929 = vadd.f32 %v4697, %v4928
  %4930 = vdwg.mxu0
  %v4931 = vand.u32 %v4590, 4294901760
  %v4932 = vsub.f32 %v4590, %v4931
  %4933 = vmatprep.subr.mxu0 %v4932
  %v4934 = vand.u32 %v4589, 4294901760
  %v4935 = vsub.f32 %v4589, %v4934
  %4936 = vmatpush1.msra.mxu0 %v4935
  %v4937 = vand.u32 %v4588, 4294901760
  %v4938 = vsub.f32 %v4588, %v4937
  %4939 = vmatprep.subr.mxu0 %v4938
  %v4940 = vand.u32 %v4587, 4294901760
  %v4941 = vsub.f32 %v4587, %v4940
  %4942 = vmatpush1.msra.mxu0 %v4941
  %v4943 = vand.u32 %v4586, 4294901760
  %v4944 = vsub.f32 %v4586, %v4943
  %4945 = vmatprep.subr.mxu0 %v4944
  %v4946 = vand.u32 %v4585, 4294901760
  %v4947 = vsub.f32 %v4585, %v4946
  %4948 = vmatpush1.msra.mxu0 %v4947
  %v4949 = vand.u32 %v4584, 4294901760
  %v4950 = vsub.f32 %v4584, %v4949
  %4951 = vmatprep.subr.mxu0 %v4950
  %v4952 = vand.u32 %v4583, 4294901760
  %v4953 = vsub.f32 %v4583, %v4952
  %4954 = vmatpush1.msra.mxu0 %v4953
  %v4955 = vand.u32 %v4582, 4294901760
  %v4956 = vsub.f32 %v4582, %v4955
  %4957 = vmatprep.subr.mxu0 %v4956
  %v4958 = vand.u32 %v4581, 4294901760
  %v4959 = vsub.f32 %v4581, %v4958
  %4960 = vmatpush1.msra.mxu0 %v4959
  %v4961 = vand.u32 %v4580, 4294901760
  %v4962 = vsub.f32 %v4580, %v4961
  %4963 = vmatprep.subr.mxu0 %v4962
  %v4964 = vand.u32 %v4579, 4294901760
  %v4965 = vsub.f32 %v4579, %v4964
  %4966 = vmatpush1.msra.mxu0 %v4965
  %v4967 = vand.u32 %v4578, 4294901760
  %v4968 = vsub.f32 %v4578, %v4967
  %4969 = vmatprep.subr.mxu0 %v4968
  %v4970 = vand.u32 %v4577, 4294901760
  %v4971 = vsub.f32 %v4577, %v4970
  %4972 = vmatpush1.msra.mxu0 %v4971
  %v4973 = vand.u32 %v4576, 4294901760
  %v4974 = vsub.f32 %v4576, %v4973
  %4975 = vmatprep.subr.mxu0 %v4974
  %v4976 = vand.u32 %v4575, 4294901760
  %v4977 = vsub.f32 %v4575, %v4976
  %4978 = vmatpush1.msra.mxu0 %v4977
  %v4979 = vand.u32 %v4574, 4294901760
  %v4980 = vsub.f32 %v4574, %v4979
  %4981 = vmatprep.subr.mxu0 %v4980
  %v4982 = vand.u32 %v4573, 4294901760
  %v4983 = vsub.f32 %v4573, %v4982
  %4984 = vmatpush1.msra.mxu0 %v4983
  %v4985 = vand.u32 %v4572, 4294901760
  %v4986 = vsub.f32 %v4572, %v4985
  %4987 = vmatprep.subr.mxu0 %v4986
  %v4988 = vand.u32 %v4571, 4294901760
  %v4989 = vsub.f32 %v4571, %v4988
  %4990 = vmatpush1.msra.mxu0 %v4989
  %v4991 = vand.u32 %v4570, 4294901760
  %v4992 = vsub.f32 %v4570, %v4991
  %4993 = vmatprep.subr.mxu0 %v4992
  %v4994 = vand.u32 %v4569, 4294901760
  %v4995 = vsub.f32 %v4569, %v4994
  %4996 = vmatpush1.msra.mxu0 %v4995
  %v4997 = vand.u32 %v4568, 4294901760
  %v4998 = vsub.f32 %v4568, %v4997
  %4999 = vmatprep.subr.mxu0 %v4998
  %v5000 = vand.u32 %v4567, 4294901760
  %v5001 = vsub.f32 %v4567, %v5000
  %5002 = vmatpush1.msra.mxu0 %v5001
  %v5003 = vand.u32 %v4566, 4294901760
  %v5004 = vsub.f32 %v4566, %v5003
  %5005 = vmatprep.subr.mxu0 %v5004
  %v5006 = vand.u32 %v4565, 4294901760
  %v5007 = vsub.f32 %v4565, %v5006
  %5008 = vmatpush1.msra.mxu0 %v5007
  %v5009 = vand.u32 %v4564, 4294901760
  %v5010 = vsub.f32 %v4564, %v5009
  %5011 = vmatprep.subr.mxu0 %v5010
  %v5012 = vand.u32 %v4563, 4294901760
  %v5013 = vsub.f32 %v4563, %v5012
  %5014 = vmatpush1.msra.mxu0 %v5013
  %v5015 = vand.u32 %v4562, 4294901760
  %v5016 = vsub.f32 %v4562, %v5015
  %5017 = vmatprep.subr.mxu0 %v5016
  %v5018 = vand.u32 %v4561, 4294901760
  %v5019 = vsub.f32 %v4561, %v5018
  %5020 = vmatpush1.msra.mxu0 %v5019
  %v5021 = vand.u32 %v4560, 4294901760
  %v5022 = vsub.f32 %v4560, %v5021
  %5023 = vmatprep.subr.mxu0 %v5022
  %v5024 = vand.u32 %v4559, 4294901760
  %v5025 = vsub.f32 %v4559, %v5024
  %5026 = vmatpush1.msra.mxu0 %v5025
  %5027 = vmatprep.subr.mxu0 0.0
  %5028 = vmatpush2.msra.mxu0 0.0
  %5029 = vmatprep.subr.mxu0 0.0
  %5030 = vmatpush2.msra.mxu0 0.0
  %5031 = vmatprep.subr.mxu0 0.0
  %5032 = vmatpush2.msra.mxu0 0.0
  %5033 = vmatprep.subr.mxu0 0.0
  %5034 = vmatpush2.msra.mxu0 0.0
  %5035 = vmatprep.subr.mxu0 0.0
  %5036 = vmatpush2.msra.mxu0 0.0
  %5037 = vmatprep.subr.mxu0 0.0
  %5038 = vmatpush2.msra.mxu0 0.0
  %5039 = vmatprep.subr.mxu0 0.0
  %5040 = vmatpush2.msra.mxu0 0.0
  %5041 = vmatprep.subr.mxu0 0.0
  %5042 = vmatpush2.msra.mxu0 0.0
  %5043 = vmatprep.subr.mxu0 0.0
  %5044 = vmatpush2.msra.mxu0 0.0
  %5045 = vmatprep.subr.mxu0 0.0
  %5046 = vmatpush2.msra.mxu0 0.0
  %5047 = vmatprep.subr.mxu0 0.0
  %5048 = vmatpush2.msra.mxu0 0.0
  %5049 = vmatprep.subr.mxu0 0.0
  %5050 = vmatpush2.msra.mxu0 0.0
  %5051 = vmatprep.subr.mxu0 0.0
  %5052 = vmatpush2.msra.mxu0 0.0
  %5053 = vmatprep.subr.mxu0 0.0
  %5054 = vmatpush2.msra.mxu0 0.0
  %5055 = vmatprep.subr.mxu0 0.0
  %5056 = vmatpush2.msra.mxu0 0.0
  %5057 = vmatprep.subr.mxu0 0.0
  %5058 = vmatpush2.msra.mxu0 0.0
  %5059 = vmatprep.mubr.f32.mxu0 0.0
  %v5060 = vand.u32 %v25, 4294901760
  %v5061 = vsub.f32 %v25, %v5060
  %5062 = vmatmul.mubr.f32.gmra.mxu0 %v5061
  %v5063 = vpop.f32.mrf.mxu0
  %v5064 = vadd.f32 %v4927, %v5063
  %v5065 = vpop.f32.mrf.mxu0
  %v5066 = vadd.f32 %v4929, %v5065
  %5067 = vdwg.mxu0
  %v5068 = vand.u32 %v4590, 4294901760
  %5069 = vmatprep.subr.mxu0 %v5068
  %v5070 = vand.u32 %v4589, 4294901760
  %5071 = vmatpush1.msra.mxu0 %v5070
  %v5072 = vand.u32 %v4588, 4294901760
  %5073 = vmatprep.subr.mxu0 %v5072
  %v5074 = vand.u32 %v4587, 4294901760
  %5075 = vmatpush1.msra.mxu0 %v5074
  %v5076 = vand.u32 %v4586, 4294901760
  %5077 = vmatprep.subr.mxu0 %v5076
  %v5078 = vand.u32 %v4585, 4294901760
  %5079 = vmatpush1.msra.mxu0 %v5078
  %v5080 = vand.u32 %v4584, 4294901760
  %5081 = vmatprep.subr.mxu0 %v5080
  %v5082 = vand.u32 %v4583, 4294901760
  %5083 = vmatpush1.msra.mxu0 %v5082
  %v5084 = vand.u32 %v4582, 4294901760
  %5085 = vmatprep.subr.mxu0 %v5084
  %v5086 = vand.u32 %v4581, 4294901760
  %5087 = vmatpush1.msra.mxu0 %v5086
  %v5088 = vand.u32 %v4580, 4294901760
  %5089 = vmatprep.subr.mxu0 %v5088
  %v5090 = vand.u32 %v4579, 4294901760
  %5091 = vmatpush1.msra.mxu0 %v5090
  %v5092 = vand.u32 %v4578, 4294901760
  %5093 = vmatprep.subr.mxu0 %v5092
  %v5094 = vand.u32 %v4577, 4294901760
  %5095 = vmatpush1.msra.mxu0 %v5094
  %v5096 = vand.u32 %v4576, 4294901760
  %5097 = vmatprep.subr.mxu0 %v5096
  %v5098 = vand.u32 %v4575, 4294901760
  %5099 = vmatpush1.msra.mxu0 %v5098
  %v5100 = vand.u32 %v4574, 4294901760
  %5101 = vmatprep.subr.mxu0 %v5100
  %v5102 = vand.u32 %v4573, 4294901760
  %5103 = vmatpush1.msra.mxu0 %v5102
  %v5104 = vand.u32 %v4572, 4294901760
  %5105 = vmatprep.subr.mxu0 %v5104
  %v5106 = vand.u32 %v4571, 4294901760
  %5107 = vmatpush1.msra.mxu0 %v5106
  %v5108 = vand.u32 %v4570, 4294901760
  %5109 = vmatprep.subr.mxu0 %v5108
  %v5110 = vand.u32 %v4569, 4294901760
  %5111 = vmatpush1.msra.mxu0 %v5110
  %v5112 = vand.u32 %v4568, 4294901760
  %5113 = vmatprep.subr.mxu0 %v5112
  %v5114 = vand.u32 %v4567, 4294901760
  %5115 = vmatpush1.msra.mxu0 %v5114
  %v5116 = vand.u32 %v4566, 4294901760
  %5117 = vmatprep.subr.mxu0 %v5116
  %v5118 = vand.u32 %v4565, 4294901760
  %5119 = vmatpush1.msra.mxu0 %v5118
  %v5120 = vand.u32 %v4564, 4294901760
  %5121 = vmatprep.subr.mxu0 %v5120
  %v5122 = vand.u32 %v4563, 4294901760
  %5123 = vmatpush1.msra.mxu0 %v5122
  %v5124 = vand.u32 %v4562, 4294901760
  %5125 = vmatprep.subr.mxu0 %v5124
  %v5126 = vand.u32 %v4561, 4294901760
  %5127 = vmatpush1.msra.mxu0 %v5126
  %v5128 = vand.u32 %v4560, 4294901760
  %5129 = vmatprep.subr.mxu0 %v5128
  %v5130 = vand.u32 %v4559, 4294901760
  %5131 = vmatpush1.msra.mxu0 %v5130
  %5132 = vmatprep.subr.mxu0 0.0
  %5133 = vmatpush2.msra.mxu0 0.0
  %5134 = vmatprep.subr.mxu0 0.0
  %5135 = vmatpush2.msra.mxu0 0.0
  %5136 = vmatprep.subr.mxu0 0.0
  %5137 = vmatpush2.msra.mxu0 0.0
  %5138 = vmatprep.subr.mxu0 0.0
  %5139 = vmatpush2.msra.mxu0 0.0
  %5140 = vmatprep.subr.mxu0 0.0
  %5141 = vmatpush2.msra.mxu0 0.0
  %5142 = vmatprep.subr.mxu0 0.0
  %5143 = vmatpush2.msra.mxu0 0.0
  %5144 = vmatprep.subr.mxu0 0.0
  %5145 = vmatpush2.msra.mxu0 0.0
  %5146 = vmatprep.subr.mxu0 0.0
  %5147 = vmatpush2.msra.mxu0 0.0
  %5148 = vmatprep.subr.mxu0 0.0
  %5149 = vmatpush2.msra.mxu0 0.0
  %5150 = vmatprep.subr.mxu0 0.0
  %5151 = vmatpush2.msra.mxu0 0.0
  %5152 = vmatprep.subr.mxu0 0.0
  %5153 = vmatpush2.msra.mxu0 0.0
  %5154 = vmatprep.subr.mxu0 0.0
  %5155 = vmatpush2.msra.mxu0 0.0
  %5156 = vmatprep.subr.mxu0 0.0
  %5157 = vmatpush2.msra.mxu0 0.0
  %5158 = vmatprep.subr.mxu0 0.0
  %5159 = vmatpush2.msra.mxu0 0.0
  %5160 = vmatprep.subr.mxu0 0.0
  %5161 = vmatpush2.msra.mxu0 0.0
  %5162 = vmatprep.subr.mxu0 0.0
  %5163 = vmatpush2.msra.mxu0 0.0
  %5164 = vmatprep.mubr.f32.mxu0 0.0
  %v5165 = vand.u32 %v25, 4294901760
  %v5166 = vsub.f32 %v25, %v5165
  %v5167 = vand.u32 %v5166, 4294901760
  %5168 = vmatmul.mubr.f32.gmra.mxu0 %v5167
  %v5169 = vpop.f32.mrf.mxu0
  %v5170 = vadd.f32 %v5064, %v5169
  %v5171 = vpop.f32.mrf.mxu0
  %v5172 = vadd.f32 %v5066, %v5171
  %5173 = vdwg.mxu0
  %v5174 = vand.u32 %v4590, 4294901760
  %v5175 = vsub.f32 %v4590, %v5174
  %v5176 = vand.u32 %v5175, 4294901760
  %5177 = vmatprep.subr.mxu0 %v5176
  %v5178 = vand.u32 %v4589, 4294901760
  %v5179 = vsub.f32 %v4589, %v5178
  %v5180 = vand.u32 %v5179, 4294901760
  %5181 = vmatpush1.msra.mxu0 %v5180
  %v5182 = vand.u32 %v4588, 4294901760
  %v5183 = vsub.f32 %v4588, %v5182
  %v5184 = vand.u32 %v5183, 4294901760
  %5185 = vmatprep.subr.mxu0 %v5184
  %v5186 = vand.u32 %v4587, 4294901760
  %v5187 = vsub.f32 %v4587, %v5186
  %v5188 = vand.u32 %v5187, 4294901760
  %5189 = vmatpush1.msra.mxu0 %v5188
  %v5190 = vand.u32 %v4586, 4294901760
  %v5191 = vsub.f32 %v4586, %v5190
  %v5192 = vand.u32 %v5191, 4294901760
  %5193 = vmatprep.subr.mxu0 %v5192
  %v5194 = vand.u32 %v4585, 4294901760
  %v5195 = vsub.f32 %v4585, %v5194
  %v5196 = vand.u32 %v5195, 4294901760
  %5197 = vmatpush1.msra.mxu0 %v5196
  %v5198 = vand.u32 %v4584, 4294901760
  %v5199 = vsub.f32 %v4584, %v5198
  %v5200 = vand.u32 %v5199, 4294901760
  %5201 = vmatprep.subr.mxu0 %v5200
  %v5202 = vand.u32 %v4583, 4294901760
  %v5203 = vsub.f32 %v4583, %v5202
  %v5204 = vand.u32 %v5203, 4294901760
  %5205 = vmatpush1.msra.mxu0 %v5204
  %v5206 = vand.u32 %v4582, 4294901760
  %v5207 = vsub.f32 %v4582, %v5206
  %v5208 = vand.u32 %v5207, 4294901760
  %5209 = vmatprep.subr.mxu0 %v5208
  %v5210 = vand.u32 %v4581, 4294901760
  %v5211 = vsub.f32 %v4581, %v5210
  %v5212 = vand.u32 %v5211, 4294901760
  %5213 = vmatpush1.msra.mxu0 %v5212
  %v5214 = vand.u32 %v4580, 4294901760
  %v5215 = vsub.f32 %v4580, %v5214
  %v5216 = vand.u32 %v5215, 4294901760
  %5217 = vmatprep.subr.mxu0 %v5216
  %v5218 = vand.u32 %v4579, 4294901760
  %v5219 = vsub.f32 %v4579, %v5218
  %v5220 = vand.u32 %v5219, 4294901760
  %5221 = vmatpush1.msra.mxu0 %v5220
  %v5222 = vand.u32 %v4578, 4294901760
  %v5223 = vsub.f32 %v4578, %v5222
  %v5224 = vand.u32 %v5223, 4294901760
  %5225 = vmatprep.subr.mxu0 %v5224
  %v5226 = vand.u32 %v4577, 4294901760
  %v5227 = vsub.f32 %v4577, %v5226
  %v5228 = vand.u32 %v5227, 4294901760
  %5229 = vmatpush1.msra.mxu0 %v5228
  %v5230 = vand.u32 %v4576, 4294901760
  %v5231 = vsub.f32 %v4576, %v5230
  %v5232 = vand.u32 %v5231, 4294901760
  %5233 = vmatprep.subr.mxu0 %v5232
  %v5234 = vand.u32 %v4575, 4294901760
  %v5235 = vsub.f32 %v4575, %v5234
  %v5236 = vand.u32 %v5235, 4294901760
  %5237 = vmatpush1.msra.mxu0 %v5236
  %v5238 = vand.u32 %v4574, 4294901760
  %v5239 = vsub.f32 %v4574, %v5238
  %v5240 = vand.u32 %v5239, 4294901760
  %5241 = vmatprep.subr.mxu0 %v5240
  %v5242 = vand.u32 %v4573, 4294901760
  %v5243 = vsub.f32 %v4573, %v5242
  %v5244 = vand.u32 %v5243, 4294901760
  %5245 = vmatpush1.msra.mxu0 %v5244
  %v5246 = vand.u32 %v4572, 4294901760
  %v5247 = vsub.f32 %v4572, %v5246
  %v5248 = vand.u32 %v5247, 4294901760
  %5249 = vmatprep.subr.mxu0 %v5248
  %v5250 = vand.u32 %v4571, 4294901760
  %v5251 = vsub.f32 %v4571, %v5250
  %v5252 = vand.u32 %v5251, 4294901760
  %5253 = vmatpush1.msra.mxu0 %v5252
  %v5254 = vand.u32 %v4570, 4294901760
  %v5255 = vsub.f32 %v4570, %v5254
  %v5256 = vand.u32 %v5255, 4294901760
  %5257 = vmatprep.subr.mxu0 %v5256
  %v5258 = vand.u32 %v4569, 4294901760
  %v5259 = vsub.f32 %v4569, %v5258
  %v5260 = vand.u32 %v5259, 4294901760
  %5261 = vmatpush1.msra.mxu0 %v5260
  %v5262 = vand.u32 %v4568, 4294901760
  %v5263 = vsub.f32 %v4568, %v5262
  %v5264 = vand.u32 %v5263, 4294901760
  %5265 = vmatprep.subr.mxu0 %v5264
  %v5266 = vand.u32 %v4567, 4294901760
  %v5267 = vsub.f32 %v4567, %v5266
  %v5268 = vand.u32 %v5267, 4294901760
  %5269 = vmatpush1.msra.mxu0 %v5268
  %v5270 = vand.u32 %v4566, 4294901760
  %v5271 = vsub.f32 %v4566, %v5270
  %v5272 = vand.u32 %v5271, 4294901760
  %5273 = vmatprep.subr.mxu0 %v5272
  %v5274 = vand.u32 %v4565, 4294901760
  %v5275 = vsub.f32 %v4565, %v5274
  %v5276 = vand.u32 %v5275, 4294901760
  %5277 = vmatpush1.msra.mxu0 %v5276
  %v5278 = vand.u32 %v4564, 4294901760
  %v5279 = vsub.f32 %v4564, %v5278
  %v5280 = vand.u32 %v5279, 4294901760
  %5281 = vmatprep.subr.mxu0 %v5280
  %v5282 = vand.u32 %v4563, 4294901760
  %v5283 = vsub.f32 %v4563, %v5282
  %v5284 = vand.u32 %v5283, 4294901760
  %5285 = vmatpush1.msra.mxu0 %v5284
  %v5286 = vand.u32 %v4562, 4294901760
  %v5287 = vsub.f32 %v4562, %v5286
  %v5288 = vand.u32 %v5287, 4294901760
  %5289 = vmatprep.subr.mxu0 %v5288
  %v5290 = vand.u32 %v4561, 4294901760
  %v5291 = vsub.f32 %v4561, %v5290
  %v5292 = vand.u32 %v5291, 4294901760
  %5293 = vmatpush1.msra.mxu0 %v5292
  %v5294 = vand.u32 %v4560, 4294901760
  %v5295 = vsub.f32 %v4560, %v5294
  %v5296 = vand.u32 %v5295, 4294901760
  %5297 = vmatprep.subr.mxu0 %v5296
  %v5298 = vand.u32 %v4559, 4294901760
  %v5299 = vsub.f32 %v4559, %v5298
  %v5300 = vand.u32 %v5299, 4294901760
  %5301 = vmatpush1.msra.mxu0 %v5300
  %5302 = vmatprep.subr.mxu0 0.0
  %5303 = vmatpush2.msra.mxu0 0.0
  %5304 = vmatprep.subr.mxu0 0.0
  %5305 = vmatpush2.msra.mxu0 0.0
  %5306 = vmatprep.subr.mxu0 0.0
  %5307 = vmatpush2.msra.mxu0 0.0
  %5308 = vmatprep.subr.mxu0 0.0
  %5309 = vmatpush2.msra.mxu0 0.0
  %5310 = vmatprep.subr.mxu0 0.0
  %5311 = vmatpush2.msra.mxu0 0.0
  %5312 = vmatprep.subr.mxu0 0.0
  %5313 = vmatpush2.msra.mxu0 0.0
  %5314 = vmatprep.subr.mxu0 0.0
  %5315 = vmatpush2.msra.mxu0 0.0
  %5316 = vmatprep.subr.mxu0 0.0
  %5317 = vmatpush2.msra.mxu0 0.0
  %5318 = vmatprep.subr.mxu0 0.0
  %5319 = vmatpush2.msra.mxu0 0.0
  %5320 = vmatprep.subr.mxu0 0.0
  %5321 = vmatpush2.msra.mxu0 0.0
  %5322 = vmatprep.subr.mxu0 0.0
  %5323 = vmatpush2.msra.mxu0 0.0
  %5324 = vmatprep.subr.mxu0 0.0
  %5325 = vmatpush2.msra.mxu0 0.0
  %5326 = vmatprep.subr.mxu0 0.0
  %5327 = vmatpush2.msra.mxu0 0.0
  %5328 = vmatprep.subr.mxu0 0.0
  %5329 = vmatpush2.msra.mxu0 0.0
  %5330 = vmatprep.subr.mxu0 0.0
  %5331 = vmatpush2.msra.mxu0 0.0
  %5332 = vmatprep.subr.mxu0 0.0
  %5333 = vmatpush2.msra.mxu0 0.0
  %5334 = vmatprep.mubr.f32.mxu0 0.0
  %v5335 = vand.u32 %v25, 4294901760
  %5336 = vmatmul.mubr.f32.gmra.mxu0 %v5335
  %v5337 = vpop.f32.mrf.mxu0
  %v5338 = vadd.f32 %v5170, %v5337
  %v5339 = vpop.f32.mrf.mxu0
  %v5340 = vadd.f32 %v5172, %v5339
  %5341 = vdwg.mxu0
  %v5342 = vand.u32 %v4590, 4294901760
  %5343 = vmatprep.subr.mxu0 %v5342
  %v5344 = vand.u32 %v4589, 4294901760
  %5345 = vmatpush1.msra.mxu0 %v5344
  %v5346 = vand.u32 %v4588, 4294901760
  %5347 = vmatprep.subr.mxu0 %v5346
  %v5348 = vand.u32 %v4587, 4294901760
  %5349 = vmatpush1.msra.mxu0 %v5348
  %v5350 = vand.u32 %v4586, 4294901760
  %5351 = vmatprep.subr.mxu0 %v5350
  %v5352 = vand.u32 %v4585, 4294901760
  %5353 = vmatpush1.msra.mxu0 %v5352
  %v5354 = vand.u32 %v4584, 4294901760
  %5355 = vmatprep.subr.mxu0 %v5354
  %v5356 = vand.u32 %v4583, 4294901760
  %5357 = vmatpush1.msra.mxu0 %v5356
  %v5358 = vand.u32 %v4582, 4294901760
  %5359 = vmatprep.subr.mxu0 %v5358
  %v5360 = vand.u32 %v4581, 4294901760
  %5361 = vmatpush1.msra.mxu0 %v5360
  %v5362 = vand.u32 %v4580, 4294901760
  %5363 = vmatprep.subr.mxu0 %v5362
  %v5364 = vand.u32 %v4579, 4294901760
  %5365 = vmatpush1.msra.mxu0 %v5364
  %v5366 = vand.u32 %v4578, 4294901760
  %5367 = vmatprep.subr.mxu0 %v5366
  %v5368 = vand.u32 %v4577, 4294901760
  %5369 = vmatpush1.msra.mxu0 %v5368
  %v5370 = vand.u32 %v4576, 4294901760
  %5371 = vmatprep.subr.mxu0 %v5370
  %v5372 = vand.u32 %v4575, 4294901760
  %5373 = vmatpush1.msra.mxu0 %v5372
  %v5374 = vand.u32 %v4574, 4294901760
  %5375 = vmatprep.subr.mxu0 %v5374
  %v5376 = vand.u32 %v4573, 4294901760
  %5377 = vmatpush1.msra.mxu0 %v5376
  %v5378 = vand.u32 %v4572, 4294901760
  %5379 = vmatprep.subr.mxu0 %v5378
  %v5380 = vand.u32 %v4571, 4294901760
  %5381 = vmatpush1.msra.mxu0 %v5380
  %v5382 = vand.u32 %v4570, 4294901760
  %5383 = vmatprep.subr.mxu0 %v5382
  %v5384 = vand.u32 %v4569, 4294901760
  %5385 = vmatpush1.msra.mxu0 %v5384
  %v5386 = vand.u32 %v4568, 4294901760
  %5387 = vmatprep.subr.mxu0 %v5386
  %v5388 = vand.u32 %v4567, 4294901760
  %5389 = vmatpush1.msra.mxu0 %v5388
  %v5390 = vand.u32 %v4566, 4294901760
  %5391 = vmatprep.subr.mxu0 %v5390
  %v5392 = vand.u32 %v4565, 4294901760
  %5393 = vmatpush1.msra.mxu0 %v5392
  %v5394 = vand.u32 %v4564, 4294901760
  %5395 = vmatprep.subr.mxu0 %v5394
  %v5396 = vand.u32 %v4563, 4294901760
  %5397 = vmatpush1.msra.mxu0 %v5396
  %v5398 = vand.u32 %v4562, 4294901760
  %5399 = vmatprep.subr.mxu0 %v5398
  %v5400 = vand.u32 %v4561, 4294901760
  %5401 = vmatpush1.msra.mxu0 %v5400
  %v5402 = vand.u32 %v4560, 4294901760
  %5403 = vmatprep.subr.mxu0 %v5402
  %v5404 = vand.u32 %v4559, 4294901760
  %5405 = vmatpush1.msra.mxu0 %v5404
  %5406 = vmatprep.subr.mxu0 0.0
  %5407 = vmatpush2.msra.mxu0 0.0
  %5408 = vmatprep.subr.mxu0 0.0
  %5409 = vmatpush2.msra.mxu0 0.0
  %5410 = vmatprep.subr.mxu0 0.0
  %5411 = vmatpush2.msra.mxu0 0.0
  %5412 = vmatprep.subr.mxu0 0.0
  %5413 = vmatpush2.msra.mxu0 0.0
  %5414 = vmatprep.subr.mxu0 0.0
  %5415 = vmatpush2.msra.mxu0 0.0
  %5416 = vmatprep.subr.mxu0 0.0
  %5417 = vmatpush2.msra.mxu0 0.0
  %5418 = vmatprep.subr.mxu0 0.0
  %5419 = vmatpush2.msra.mxu0 0.0
  %5420 = vmatprep.subr.mxu0 0.0
  %5421 = vmatpush2.msra.mxu0 0.0
  %5422 = vmatprep.subr.mxu0 0.0
  %5423 = vmatpush2.msra.mxu0 0.0
  %5424 = vmatprep.subr.mxu0 0.0
  %5425 = vmatpush2.msra.mxu0 0.0
  %5426 = vmatprep.subr.mxu0 0.0
  %5427 = vmatpush2.msra.mxu0 0.0
  %5428 = vmatprep.subr.mxu0 0.0
  %5429 = vmatpush2.msra.mxu0 0.0
  %5430 = vmatprep.subr.mxu0 0.0
  %5431 = vmatpush2.msra.mxu0 0.0
  %5432 = vmatprep.subr.mxu0 0.0
  %5433 = vmatpush2.msra.mxu0 0.0
  %5434 = vmatprep.subr.mxu0 0.0
  %5435 = vmatpush2.msra.mxu0 0.0
  %5436 = vmatprep.subr.mxu0 0.0
  %5437 = vmatpush2.msra.mxu0 0.0
  %5438 = vmatprep.mubr.f32.mxu0 0.0
  %v5439 = vand.u32 %v25, 4294901760
  %5440 = vmatmul.mubr.f32.gmra.mxu0 %v5439
  %v5441 = vpop.f32.mrf.mxu0
  %v5442 = vadd.f32 %v5338, %v5441
  %v5443 = vpop.f32.mrf.mxu0
  %v5444 = vadd.f32 %v5340, %v5443
  %5445 = vdwg.mxu0
  %v5446 = vmax.f32 %v5442, 0.0
  %v5447 = vmax.f32 %v5444, 0.0
  %v5450 = vrot.slane %v5446, 1
  %v5451 = vrot.slane %v5447, 1
  %v5454 = vmul.f32 %v5446, %v5450
  %v5455 = vmul.f32 %v5447, %v5451
  %v5458 = vrot.slane %v5454, 4
  %v5459 = vrot.slane %v5455, 4
  %v5462 = vadd.f32 %v23, %v5458
  %v5463 = vadd.f32 %v24, %v5459
  %v5466 = vrot.slane %v5442, 6
  %v5467 = vrot.slane %v5444, 6
  %v5470 = vadd.f32 %v5462, %v5466
  %v5471 = vadd.f32 %v5463, %v5467
  %v5472 = vmax.f32 %v5470, 0.0
  %v5473 = vmax.f32 %v5471, 0.0
  %v5474 = vand.u32 2147483647, %v5470
  %v5475 = vand.u32 2147483647, %v5471
  %v5476 = vsub.f32 0.0, %v5474
  %v5477 = vsub.f32 0.0, %v5475
  %v5478 = vmul.f32 %v5476, 1.442695
  %v5479 = vpow.pop %v5478
  %v5480 = vmul.f32 %v5477, 1.442695
  %v5481 = vpow.pop %v5480
  %v5482 = vadd.f32 %v5479, 1.0
  %v5483 = vlog2.pop %v5482
  %v5484 = vmul.f32 %v5483, 0.6931472
  %v5485 = vmul.f32 -0.5, %v5479
  %v5486 = vadd.f32 %v5485, 1.0
  %v5487 = vmul.f32 %v5486, %v5479
  %v5488 = vand.u32 2147483647, %v5479
  %vm5489 = vcmp.lt.f32.partialorder %v5488, 0.0004427343
  %v5490 = vsel %vm5489, %v5487, %v5484
  %v5491 = vadd.f32 %v5481, 1.0
  %v5492 = vlog2.pop %v5491
  %v5493 = vmul.f32 %v5492, 0.6931472
  %v5494 = vmul.f32 -0.5, %v5481
  %v5495 = vadd.f32 %v5494, 1.0
  %v5496 = vmul.f32 %v5495, %v5481
  %v5497 = vand.u32 2147483647, %v5481
  %vm5498 = vcmp.lt.f32.partialorder %v5497, 0.0004427343
  %v5499 = vsel %vm5498, %v5496, %v5493
  %v5500 = vadd.f32 %v5472, %v5490
  %v5501 = vadd.f32 %v5473, %v5499
  %v5504 = vcombine.high %v5500, %v5501
  %v5506 = vunpack.c.l.s4 1966171168
  %v5507 = vunpack.c.0.s8 %v5506
  %v5508 = vlaneseq
  %v5509 = vshrl.u32 %v5508, 7
  %v5510 = vsub.s32 %v5507, %v5509
  %v5511 = vrot.slane %v5504, %v5510
  %v5513 = vunpack.c.l.s4 1966171168
  %v5514 = vunpack.c.0.s8 %v5513
  %v5515 = vlaneseq
  %v5516 = vshrl.u32 %v5515, 7
  %v5517 = vsub.s32 %v5514, %v5516
  %v5518 = vrot.slane %v5511, %v5517
  %s5520 = scalar_lea.vmem [#allocation2], 4
  %5521 = vst.msk [vmem:[%s5520] ss:$8 sm:$0x3] %vm1122, %v5518
  %5522 = vst.msk [vmem:[%s5520] ss:$8 sm:$0x0] %vm1122, %v5518
  %v5523 = vlaneseq
  %v5524 = vshrl.u32 %v5523, 7
  %v5525 = vsub.s32 5, %v5524
  %v5526 = vrot.slane %v23, %v5525
  %v5527 = vlaneseq
  %v5528 = vshrl.u32 %v5527, 7
  %v5529 = vsub.s32 5, %v5528
  %v5530 = vrot.slane %v24, %v5529
  %v5531 = vld [vmem:[%s1] sm:$0xff]
  %v5532 = vld [vmem:[%s1 + $0x8] sm:$0xff]
  %v5533 = vld [vmem:[%s1 + $0x10] sm:$0xff]
  %v5534 = vld [vmem:[%s1 + $0x18] sm:$0xff]
  %v5535 = vld [vmem:[%s1 + $0x20] sm:$0xff]
  %v5536 = vld [vmem:[%s1 + $0x28] sm:$0xff]
  %v5537 = vld [vmem:[%s1 + $0x30] sm:$0xff]
  %v5538 = vld [vmem:[%s1 + $0x38] sm:$0xff]
  %v5539 = vld [vmem:[%s1 + $0x40] sm:$0xff]
  %v5540 = vld [vmem:[%s1 + $0x48] sm:$0xff]
  %v5541 = vld [vmem:[%s1 + $0x50] sm:$0xff]
  %v5542 = vld [vmem:[%s1 + $0x58] sm:$0xff]
  %v5543 = vld [vmem:[%s1 + $0x60] sm:$0xff]
  %v5544 = vld [vmem:[%s1 + $0x68] sm:$0xff]
  %v5545 = vld [vmem:[%s1 + $0x70] sm:$0xff]
  %v5546 = vld [vmem:[%s1 + $0x78] sm:$0xff]
  %v5547 = vld [vmem:[%s1 + $0x80] sm:$0xff]
  %v5548 = vld [vmem:[%s1 + $0x88] sm:$0xff]
  %v5549 = vld [vmem:[%s1 + $0x90] sm:$0xff]
  %v5550 = vld [vmem:[%s1 + $0x98] sm:$0xff]
  %v5551 = vld [vmem:[%s1 + $0xa0] sm:$0xff]
  %v5552 = vld [vmem:[%s1 + $0xa8] sm:$0xff]
  %v5553 = vld [vmem:[%s1 + $0xb0] sm:$0xff]
  %v5554 = vld [vmem:[%s1 + $0xb8] sm:$0xff]
  %v5555 = vld [vmem:[%s1 + $0xc0] sm:$0xff]
  %v5556 = vld [vmem:[%s1 + $0xc8] sm:$0xff]
  %v5557 = vld [vmem:[%s1 + $0xd0] sm:$0xff]
  %v5558 = vld [vmem:[%s1 + $0xd8] sm:$0xff]
  %v5559 = vld [vmem:[%s1 + $0xe0] sm:$0xff]
  %v5560 = vld [vmem:[%s1 + $0xe8] sm:$0xff]
  %v5561 = vld [vmem:[%s1 + $0xf0] sm:$0xff]
  %v5562 = vld [vmem:[%s1 + $0xf8] sm:$0xff]
  %v5563 = vmul.f32 %v5526, %v5531
  %v5564 = vmul.f32 %v5530, %v5532
  %v5565 = vmul.f32 %v5526, %v5533
  %v5566 = vmul.f32 %v5530, %v5534
  %v5567 = vmul.f32 %v5526, %v5535
  %v5568 = vmul.f32 %v5530, %v5536
  %v5569 = vmul.f32 %v5526, %v5537
  %v5570 = vmul.f32 %v5530, %v5538
  %v5571 = vmul.f32 %v5526, %v5539
  %v5572 = vmul.f32 %v5530, %v5540
  %v5573 = vmul.f32 %v5526, %v5541
  %v5574 = vmul.f32 %v5530, %v5542
  %v5575 = vmul.f32 %v5526, %v5543
  %v5576 = vmul.f32 %v5530, %v5544
  %v5577 = vmul.f32 %v5526, %v5545
  %v5578 = vmul.f32 %v5530, %v5546
  %v5579 = vmul.f32 %v5526, %v5547
  %v5580 = vmul.f32 %v5530, %v5548
  %v5581 = vmul.f32 %v5526, %v5549
  %v5582 = vmul.f32 %v5530, %v5550
  %v5583 = vmul.f32 %v5526, %v5551
  %v5584 = vmul.f32 %v5530, %v5552
  %v5585 = vmul.f32 %v5526, %v5553
  %v5586 = vmul.f32 %v5530, %v5554
  %v5587 = vmul.f32 %v5526, %v5555
  %v5588 = vmul.f32 %v5530, %v5556
  %v5589 = vmul.f32 %v5526, %v5557
  %v5590 = vmul.f32 %v5530, %v5558
  %v5591 = vmul.f32 %v5526, %v5559
  %v5592 = vmul.f32 %v5530, %v5560
  %v5593 = vmul.f32 %v5526, %v5561
  %v5594 = vmul.f32 %v5530, %v5562
  %v5595 = vld [vmem:[%s2] sm:$0xff]
  %v5596 = vld [vmem:[%s2 + $0x8] sm:$0xff]
  %v5597 = vld [vmem:[%s2 + $0x10] sm:$0xff]
  %v5598 = vld [vmem:[%s2 + $0x18] sm:$0xff]
  %v5599 = vld [vmem:[%s2 + $0x20] sm:$0xff]
  %v5600 = vld [vmem:[%s2 + $0x28] sm:$0xff]
  %v5601 = vld [vmem:[%s2 + $0x30] sm:$0xff]
  %v5602 = vld [vmem:[%s2 + $0x38] sm:$0xff]
  %v5603 = vld [vmem:[%s2 + $0x40] sm:$0xff]
  %v5604 = vld [vmem:[%s2 + $0x48] sm:$0xff]
  %v5605 = vld [vmem:[%s2 + $0x50] sm:$0xff]
  %v5606 = vld [vmem:[%s2 + $0x58] sm:$0xff]
  %v5607 = vld [vmem:[%s2 + $0x60] sm:$0xff]
  %v5608 = vld [vmem:[%s2 + $0x68] sm:$0xff]
  %v5609 = vld [vmem:[%s2 + $0x70] sm:$0xff]
  %v5610 = vld [vmem:[%s2 + $0x78] sm:$0xff]
  %v5611 = vld [vmem:[%s2 + $0x80] sm:$0xff]
  %v5612 = vld [vmem:[%s2 + $0x88] sm:$0xff]
  %v5613 = vld [vmem:[%s2 + $0x90] sm:$0xff]
  %v5614 = vld [vmem:[%s2 + $0x98] sm:$0xff]
  %v5615 = vld [vmem:[%s2 + $0xa0] sm:$0xff]
  %v5616 = vld [vmem:[%s2 + $0xa8] sm:$0xff]
  %v5617 = vld [vmem:[%s2 + $0xb0] sm:$0xff]
  %v5618 = vld [vmem:[%s2 + $0xb8] sm:$0xff]
  %v5619 = vld [vmem:[%s2 + $0xc0] sm:$0xff]
  %v5620 = vld [vmem:[%s2 + $0xc8] sm:$0xff]
  %v5621 = vld [vmem:[%s2 + $0xd0] sm:$0xff]
  %v5622 = vld [vmem:[%s2 + $0xd8] sm:$0xff]
  %v5623 = vld [vmem:[%s2 + $0xe0] sm:$0xff]
  %v5624 = vld [vmem:[%s2 + $0xe8] sm:$0xff]
  %v5625 = vld [vmem:[%s2 + $0xf0] sm:$0xff]
  %v5626 = vld [vmem:[%s2 + $0xf8] sm:$0xff]
  %v5627 = vadd.f32 %v5563, %v5595
  %v5628 = vadd.f32 %v5564, %v5596
  %v5629 = vadd.f32 %v5565, %v5597
  %v5630 = vadd.f32 %v5566, %v5598
  %v5631 = vadd.f32 %v5567, %v5599
  %v5632 = vadd.f32 %v5568, %v5600
  %v5633 = vadd.f32 %v5569, %v5601
  %v5634 = vadd.f32 %v5570, %v5602
  %v5635 = vadd.f32 %v5571, %v5603
  %v5636 = vadd.f32 %v5572, %v5604
  %v5637 = vadd.f32 %v5573, %v5605
  %v5638 = vadd.f32 %v5574, %v5606
  %v5639 = vadd.f32 %v5575, %v5607
  %v5640 = vadd.f32 %v5576, %v5608
  %v5641 = vadd.f32 %v5577, %v5609
  %v5642 = vadd.f32 %v5578, %v5610
  %v5643 = vadd.f32 %v5579, %v5611
  %v5644 = vadd.f32 %v5580, %v5612
  %v5645 = vadd.f32 %v5581, %v5613
  %v5646 = vadd.f32 %v5582, %v5614
  %v5647 = vadd.f32 %v5583, %v5615
  %v5648 = vadd.f32 %v5584, %v5616
  %v5649 = vadd.f32 %v5585, %v5617
  %v5650 = vadd.f32 %v5586, %v5618
  %v5651 = vadd.f32 %v5587, %v5619
  %v5652 = vadd.f32 %v5588, %v5620
  %v5653 = vadd.f32 %v5589, %v5621
  %v5654 = vadd.f32 %v5590, %v5622
  %v5655 = vadd.f32 %v5591, %v5623
  %v5656 = vadd.f32 %v5592, %v5624
  %v5657 = vadd.f32 %v5593, %v5625
  %v5658 = vadd.f32 %v5594, %v5626
  %v5659 = vmax.f32 %v5627, 0.0
  %v5660 = vmax.f32 %v5628, 0.0
  %v5661 = vmax.f32 %v5629, 0.0
  %v5662 = vmax.f32 %v5630, 0.0
  %v5663 = vmax.f32 %v5631, 0.0
  %v5664 = vmax.f32 %v5632, 0.0
  %v5665 = vmax.f32 %v5633, 0.0
  %v5666 = vmax.f32 %v5634, 0.0
  %v5667 = vmax.f32 %v5635, 0.0
  %v5668 = vmax.f32 %v5636, 0.0
  %v5669 = vmax.f32 %v5637, 0.0
  %v5670 = vmax.f32 %v5638, 0.0
  %v5671 = vmax.f32 %v5639, 0.0
  %v5672 = vmax.f32 %v5640, 0.0
  %v5673 = vmax.f32 %v5641, 0.0
  %v5674 = vmax.f32 %v5642, 0.0
  %v5675 = vmax.f32 %v5643, 0.0
  %v5676 = vmax.f32 %v5644, 0.0
  %v5677 = vmax.f32 %v5645, 0.0
  %v5678 = vmax.f32 %v5646, 0.0
  %v5679 = vmax.f32 %v5647, 0.0
  %v5680 = vmax.f32 %v5648, 0.0
  %v5681 = vmax.f32 %v5649, 0.0
  %v5682 = vmax.f32 %v5650, 0.0
  %v5683 = vmax.f32 %v5651, 0.0
  %v5684 = vmax.f32 %v5652, 0.0
  %v5685 = vmax.f32 %v5653, 0.0
  %v5686 = vmax.f32 %v5654, 0.0
  %v5687 = vmax.f32 %v5655, 0.0
  %v5688 = vmax.f32 %v5656, 0.0
  %v5689 = vmax.f32 %v5657, 0.0
  %v5690 = vmax.f32 %v5658, 0.0
  %v5691 = vand.u32 %v5690, 4294901760
  %5692 = vmatprep.subr.mxu0 %v5691
  %v5693 = vand.u32 %v5689, 4294901760
  %5694 = vmatpush1.msra.mxu0 %v5693
  %v5695 = vand.u32 %v5688, 4294901760
  %5696 = vmatprep.subr.mxu0 %v5695
  %v5697 = vand.u32 %v5687, 4294901760
  %5698 = vmatpush1.msra.mxu0 %v5697
  %v5699 = vand.u32 %v5686, 4294901760
  %5700 = vmatprep.subr.mxu0 %v5699
  %v5701 = vand.u32 %v5685, 4294901760
  %5702 = vmatpush1.msra.mxu0 %v5701
  %v5703 = vand.u32 %v5684, 4294901760
  %5704 = vmatprep.subr.mxu0 %v5703
  %v5705 = vand.u32 %v5683, 4294901760
  %5706 = vmatpush1.msra.mxu0 %v5705
  %v5707 = vand.u32 %v5682, 4294901760
  %5708 = vmatprep.subr.mxu0 %v5707
  %v5709 = vand.u32 %v5681, 4294901760
  %5710 = vmatpush1.msra.mxu0 %v5709
  %v5711 = vand.u32 %v5680, 4294901760
  %5712 = vmatprep.subr.mxu0 %v5711
  %v5713 = vand.u32 %v5679, 4294901760
  %5714 = vmatpush1.msra.mxu0 %v5713
  %v5715 = vand.u32 %v5678, 4294901760
  %5716 = vmatprep.subr.mxu0 %v5715
  %v5717 = vand.u32 %v5677, 4294901760
  %5718 = vmatpush1.msra.mxu0 %v5717
  %v5719 = vand.u32 %v5676, 4294901760
  %5720 = vmatprep.subr.mxu0 %v5719
  %v5721 = vand.u32 %v5675, 4294901760
  %5722 = vmatpush1.msra.mxu0 %v5721
  %v5723 = vand.u32 %v5674, 4294901760
  %5724 = vmatprep.subr.mxu0 %v5723
  %v5725 = vand.u32 %v5673, 4294901760
  %5726 = vmatpush1.msra.mxu0 %v5725
  %v5727 = vand.u32 %v5672, 4294901760
  %5728 = vmatprep.subr.mxu0 %v5727
  %v5729 = vand.u32 %v5671, 4294901760
  %5730 = vmatpush1.msra.mxu0 %v5729
  %v5731 = vand.u32 %v5670, 4294901760
  %5732 = vmatprep.subr.mxu0 %v5731
  %v5733 = vand.u32 %v5669, 4294901760
  %5734 = vmatpush1.msra.mxu0 %v5733
  %v5735 = vand.u32 %v5668, 4294901760
  %5736 = vmatprep.subr.mxu0 %v5735
  %v5737 = vand.u32 %v5667, 4294901760
  %5738 = vmatpush1.msra.mxu0 %v5737
  %v5739 = vand.u32 %v5666, 4294901760
  %5740 = vmatprep.subr.mxu0 %v5739
  %v5741 = vand.u32 %v5665, 4294901760
  %5742 = vmatpush1.msra.mxu0 %v5741
  %v5743 = vand.u32 %v5664, 4294901760
  %5744 = vmatprep.subr.mxu0 %v5743
  %v5745 = vand.u32 %v5663, 4294901760
  %5746 = vmatpush1.msra.mxu0 %v5745
  %v5747 = vand.u32 %v5662, 4294901760
  %5748 = vmatprep.subr.mxu0 %v5747
  %v5749 = vand.u32 %v5661, 4294901760
  %5750 = vmatpush1.msra.mxu0 %v5749
  %v5751 = vand.u32 %v5660, 4294901760
  %5752 = vmatprep.subr.mxu0 %v5751
  %v5753 = vand.u32 %v5659, 4294901760
  %5754 = vmatpush1.msra.mxu0 %v5753
  %5755 = vmatprep.subr.mxu0 0.0
  %5756 = vmatpush2.msra.mxu0 0.0
  %5757 = vmatprep.subr.mxu0 0.0
  %5758 = vmatpush2.msra.mxu0 0.0
  %5759 = vmatprep.subr.mxu0 0.0
  %5760 = vmatpush2.msra.mxu0 0.0
  %5761 = vmatprep.subr.mxu0 0.0
  %5762 = vmatpush2.msra.mxu0 0.0
  %5763 = vmatprep.subr.mxu0 0.0
  %5764 = vmatpush2.msra.mxu0 0.0
  %5765 = vmatprep.subr.mxu0 0.0
  %5766 = vmatpush2.msra.mxu0 0.0
  %5767 = vmatprep.subr.mxu0 0.0
  %5768 = vmatpush2.msra.mxu0 0.0
  %5769 = vmatprep.subr.mxu0 0.0
  %5770 = vmatpush2.msra.mxu0 0.0
  %5771 = vmatprep.subr.mxu0 0.0
  %5772 = vmatpush2.msra.mxu0 0.0
  %5773 = vmatprep.subr.mxu0 0.0
  %5774 = vmatpush2.msra.mxu0 0.0
  %5775 = vmatprep.subr.mxu0 0.0
  %5776 = vmatpush2.msra.mxu0 0.0
  %5777 = vmatprep.subr.mxu0 0.0
  %5778 = vmatpush2.msra.mxu0 0.0
  %5779 = vmatprep.subr.mxu0 0.0
  %5780 = vmatpush2.msra.mxu0 0.0
  %5781 = vmatprep.subr.mxu0 0.0
  %5782 = vmatpush2.msra.mxu0 0.0
  %5783 = vmatprep.subr.mxu0 0.0
  %5784 = vmatpush2.msra.mxu0 0.0
  %5785 = vmatprep.subr.mxu0 0.0
  %5786 = vmatpush2.msra.mxu0 0.0
  %5787 = vmatprep.mubr.f32.mxu0 0.0
  %v5788 = vand.u32 %v25, 4294901760
  %v5789 = vsub.f32 %v25, %v5788
  %v5790 = vand.u32 %v5789, 4294901760
  %v5791 = vsub.f32 %v5789, %v5790
  %v5792 = vand.u32 %v5791, 4294901760
  %5793 = vmatmul.mubr.f32.gmra.mxu0 %v5792
  %v5794 = vpop.f32.mrf.mxu0
  %v5795 = vadd.f32 %v26, %v5794
  %v5796 = vpop.f32.mrf.mxu0
  %v5797 = vadd.f32 %v27, %v5796
  %5798 = vdwg.mxu0
  %v5799 = vand.u32 %v5690, 4294901760
  %v5800 = vsub.f32 %v5690, %v5799
  %v5801 = vand.u32 %v5800, 4294901760
  %v5802 = vsub.f32 %v5800, %v5801
  %v5803 = vand.u32 %v5802, 4294901760
  %5804 = vmatprep.subr.mxu0 %v5803
  %v5805 = vand.u32 %v5689, 4294901760
  %v5806 = vsub.f32 %v5689, %v5805
  %v5807 = vand.u32 %v5806, 4294901760
  %v5808 = vsub.f32 %v5806, %v5807
  %v5809 = vand.u32 %v5808, 4294901760
  %5810 = vmatpush1.msra.mxu0 %v5809
  %v5811 = vand.u32 %v5688, 4294901760
  %v5812 = vsub.f32 %v5688, %v5811
  %v5813 = vand.u32 %v5812, 4294901760
  %v5814 = vsub.f32 %v5812, %v5813
  %v5815 = vand.u32 %v5814, 4294901760
  %5816 = vmatprep.subr.mxu0 %v5815
  %v5817 = vand.u32 %v5687, 4294901760
  %v5818 = vsub.f32 %v5687, %v5817
  %v5819 = vand.u32 %v5818, 4294901760
  %v5820 = vsub.f32 %v5818, %v5819
  %v5821 = vand.u32 %v5820, 4294901760
  %5822 = vmatpush1.msra.mxu0 %v5821
  %v5823 = vand.u32 %v5686, 4294901760
  %v5824 = vsub.f32 %v5686, %v5823
  %v5825 = vand.u32 %v5824, 4294901760
  %v5826 = vsub.f32 %v5824, %v5825
  %v5827 = vand.u32 %v5826, 4294901760
  %5828 = vmatprep.subr.mxu0 %v5827
  %v5829 = vand.u32 %v5685, 4294901760
  %v5830 = vsub.f32 %v5685, %v5829
  %v5831 = vand.u32 %v5830, 4294901760
  %v5832 = vsub.f32 %v5830, %v5831
  %v5833 = vand.u32 %v5832, 4294901760
  %5834 = vmatpush1.msra.mxu0 %v5833
  %v5835 = vand.u32 %v5684, 4294901760
  %v5836 = vsub.f32 %v5684, %v5835
  %v5837 = vand.u32 %v5836, 4294901760
  %v5838 = vsub.f32 %v5836, %v5837
  %v5839 = vand.u32 %v5838, 4294901760
  %5840 = vmatprep.subr.mxu0 %v5839
  %v5841 = vand.u32 %v5683, 4294901760
  %v5842 = vsub.f32 %v5683, %v5841
  %v5843 = vand.u32 %v5842, 4294901760
  %v5844 = vsub.f32 %v5842, %v5843
  %v5845 = vand.u32 %v5844, 4294901760
  %5846 = vmatpush1.msra.mxu0 %v5845
  %v5847 = vand.u32 %v5682, 4294901760
  %v5848 = vsub.f32 %v5682, %v5847
  %v5849 = vand.u32 %v5848, 4294901760
  %v5850 = vsub.f32 %v5848, %v5849
  %v5851 = vand.u32 %v5850, 4294901760
  %5852 = vmatprep.subr.mxu0 %v5851
  %v5853 = vand.u32 %v5681, 4294901760
  %v5854 = vsub.f32 %v5681, %v5853
  %v5855 = vand.u32 %v5854, 4294901760
  %v5856 = vsub.f32 %v5854, %v5855
  %v5857 = vand.u32 %v5856, 4294901760
  %5858 = vmatpush1.msra.mxu0 %v5857
  %v5859 = vand.u32 %v5680, 4294901760
  %v5860 = vsub.f32 %v5680, %v5859
  %v5861 = vand.u32 %v5860, 4294901760
  %v5862 = vsub.f32 %v5860, %v5861
  %v5863 = vand.u32 %v5862, 4294901760
  %5864 = vmatprep.subr.mxu0 %v5863
  %v5865 = vand.u32 %v5679, 4294901760
  %v5866 = vsub.f32 %v5679, %v5865
  %v5867 = vand.u32 %v5866, 4294901760
  %v5868 = vsub.f32 %v5866, %v5867
  %v5869 = vand.u32 %v5868, 4294901760
  %5870 = vmatpush1.msra.mxu0 %v5869
  %v5871 = vand.u32 %v5678, 4294901760
  %v5872 = vsub.f32 %v5678, %v5871
  %v5873 = vand.u32 %v5872, 4294901760
  %v5874 = vsub.f32 %v5872, %v5873
  %v5875 = vand.u32 %v5874, 4294901760
  %5876 = vmatprep.subr.mxu0 %v5875
  %v5877 = vand.u32 %v5677, 4294901760
  %v5878 = vsub.f32 %v5677, %v5877
  %v5879 = vand.u32 %v5878, 4294901760
  %v5880 = vsub.f32 %v5878, %v5879
  %v5881 = vand.u32 %v5880, 4294901760
  %5882 = vmatpush1.msra.mxu0 %v5881
  %v5883 = vand.u32 %v5676, 4294901760
  %v5884 = vsub.f32 %v5676, %v5883
  %v5885 = vand.u32 %v5884, 4294901760
  %v5886 = vsub.f32 %v5884, %v5885
  %v5887 = vand.u32 %v5886, 4294901760
  %5888 = vmatprep.subr.mxu0 %v5887
  %v5889 = vand.u32 %v5675, 4294901760
  %v5890 = vsub.f32 %v5675, %v5889
  %v5891 = vand.u32 %v5890, 4294901760
  %v5892 = vsub.f32 %v5890, %v5891
  %v5893 = vand.u32 %v5892, 4294901760
  %5894 = vmatpush1.msra.mxu0 %v5893
  %v5895 = vand.u32 %v5674, 4294901760
  %v5896 = vsub.f32 %v5674, %v5895
  %v5897 = vand.u32 %v5896, 4294901760
  %v5898 = vsub.f32 %v5896, %v5897
  %v5899 = vand.u32 %v5898, 4294901760
  %5900 = vmatprep.subr.mxu0 %v5899
  %v5901 = vand.u32 %v5673, 4294901760
  %v5902 = vsub.f32 %v5673, %v5901
  %v5903 = vand.u32 %v5902, 4294901760
  %v5904 = vsub.f32 %v5902, %v5903
  %v5905 = vand.u32 %v5904, 4294901760
  %5906 = vmatpush1.msra.mxu0 %v5905
  %v5907 = vand.u32 %v5672, 4294901760
  %v5908 = vsub.f32 %v5672, %v5907
  %v5909 = vand.u32 %v5908, 4294901760
  %v5910 = vsub.f32 %v5908, %v5909
  %v5911 = vand.u32 %v5910, 4294901760
  %5912 = vmatprep.subr.mxu0 %v5911
  %v5913 = vand.u32 %v5671, 4294901760
  %v5914 = vsub.f32 %v5671, %v5913
  %v5915 = vand.u32 %v5914, 4294901760
  %v5916 = vsub.f32 %v5914, %v5915
  %v5917 = vand.u32 %v5916, 4294901760
  %5918 = vmatpush1.msra.mxu0 %v5917
  %v5919 = vand.u32 %v5670, 4294901760
  %v5920 = vsub.f32 %v5670, %v5919
  %v5921 = vand.u32 %v5920, 4294901760
  %v5922 = vsub.f32 %v5920, %v5921
  %v5923 = vand.u32 %v5922, 4294901760
  %5924 = vmatprep.subr.mxu0 %v5923
  %v5925 = vand.u32 %v5669, 4294901760
  %v5926 = vsub.f32 %v5669, %v5925
  %v5927 = vand.u32 %v5926, 4294901760
  %v5928 = vsub.f32 %v5926, %v5927
  %v5929 = vand.u32 %v5928, 4294901760
  %5930 = vmatpush1.msra.mxu0 %v5929
  %v5931 = vand.u32 %v5668, 4294901760
  %v5932 = vsub.f32 %v5668, %v5931
  %v5933 = vand.u32 %v5932, 4294901760
  %v5934 = vsub.f32 %v5932, %v5933
  %v5935 = vand.u32 %v5934, 4294901760
  %5936 = vmatprep.subr.mxu0 %v5935
  %v5937 = vand.u32 %v5667, 4294901760
  %v5938 = vsub.f32 %v5667, %v5937
  %v5939 = vand.u32 %v5938, 4294901760
  %v5940 = vsub.f32 %v5938, %v5939
  %v5941 = vand.u32 %v5940, 4294901760
  %5942 = vmatpush1.msra.mxu0 %v5941
  %v5943 = vand.u32 %v5666, 4294901760
  %v5944 = vsub.f32 %v5666, %v5943
  %v5945 = vand.u32 %v5944, 4294901760
  %v5946 = vsub.f32 %v5944, %v5945
  %v5947 = vand.u32 %v5946, 4294901760
  %5948 = vmatprep.subr.mxu0 %v5947
  %v5949 = vand.u32 %v5665, 4294901760
  %v5950 = vsub.f32 %v5665, %v5949
  %v5951 = vand.u32 %v5950, 4294901760
  %v5952 = vsub.f32 %v5950, %v5951
  %v5953 = vand.u32 %v5952, 4294901760
  %5954 = vmatpush1.msra.mxu0 %v5953
  %v5955 = vand.u32 %v5664, 4294901760
  %v5956 = vsub.f32 %v5664, %v5955
  %v5957 = vand.u32 %v5956, 4294901760
  %v5958 = vsub.f32 %v5956, %v5957
  %v5959 = vand.u32 %v5958, 4294901760
  %5960 = vmatprep.subr.mxu0 %v5959
  %v5961 = vand.u32 %v5663, 4294901760
  %v5962 = vsub.f32 %v5663, %v5961
  %v5963 = vand.u32 %v5962, 4294901760
  %v5964 = vsub.f32 %v5962, %v5963
  %v5965 = vand.u32 %v5964, 4294901760
  %5966 = vmatpush1.msra.mxu0 %v5965
  %v5967 = vand.u32 %v5662, 4294901760
  %v5968 = vsub.f32 %v5662, %v5967
  %v5969 = vand.u32 %v5968, 4294901760
  %v5970 = vsub.f32 %v5968, %v5969
  %v5971 = vand.u32 %v5970, 4294901760
  %5972 = vmatprep.subr.mxu0 %v5971
  %v5973 = vand.u32 %v5661, 4294901760
  %v5974 = vsub.f32 %v5661, %v5973
  %v5975 = vand.u32 %v5974, 4294901760
  %v5976 = vsub.f32 %v5974, %v5975
  %v5977 = vand.u32 %v5976, 4294901760
  %5978 = vmatpush1.msra.mxu0 %v5977
  %v5979 = vand.u32 %v5660, 4294901760
  %v5980 = vsub.f32 %v5660, %v5979
  %v5981 = vand.u32 %v5980, 4294901760
  %v5982 = vsub.f32 %v5980, %v5981
  %v5983 = vand.u32 %v5982, 4294901760
  %5984 = vmatprep.subr.mxu0 %v5983
  %v5985 = vand.u32 %v5659, 4294901760
  %v5986 = vsub.f32 %v5659, %v5985
  %v5987 = vand.u32 %v5986, 4294901760
  %v5988 = vsub.f32 %v5986, %v5987
  %v5989 = vand.u32 %v5988, 4294901760
  %5990 = vmatpush1.msra.mxu0 %v5989
  %5991 = vmatprep.subr.mxu0 0.0
  %5992 = vmatpush2.msra.mxu0 0.0
  %5993 = vmatprep.subr.mxu0 0.0
  %5994 = vmatpush2.msra.mxu0 0.0
  %5995 = vmatprep.subr.mxu0 0.0
  %5996 = vmatpush2.msra.mxu0 0.0
  %5997 = vmatprep.subr.mxu0 0.0
  %5998 = vmatpush2.msra.mxu0 0.0
  %5999 = vmatprep.subr.mxu0 0.0
  %6000 = vmatpush2.msra.mxu0 0.0
  %6001 = vmatprep.subr.mxu0 0.0
  %6002 = vmatpush2.msra.mxu0 0.0
  %6003 = vmatprep.subr.mxu0 0.0
  %6004 = vmatpush2.msra.mxu0 0.0
  %6005 = vmatprep.subr.mxu0 0.0
  %6006 = vmatpush2.msra.mxu0 0.0
  %6007 = vmatprep.subr.mxu0 0.0
  %6008 = vmatpush2.msra.mxu0 0.0
  %6009 = vmatprep.subr.mxu0 0.0
  %6010 = vmatpush2.msra.mxu0 0.0
  %6011 = vmatprep.subr.mxu0 0.0
  %6012 = vmatpush2.msra.mxu0 0.0
  %6013 = vmatprep.subr.mxu0 0.0
  %6014 = vmatpush2.msra.mxu0 0.0
  %6015 = vmatprep.subr.mxu0 0.0
  %6016 = vmatpush2.msra.mxu0 0.0
  %6017 = vmatprep.subr.mxu0 0.0
  %6018 = vmatpush2.msra.mxu0 0.0
  %6019 = vmatprep.subr.mxu0 0.0
  %6020 = vmatpush2.msra.mxu0 0.0
  %6021 = vmatprep.subr.mxu0 0.0
  %6022 = vmatpush2.msra.mxu0 0.0
  %6023 = vmatprep.mubr.f32.mxu0 0.0
  %v6024 = vand.u32 %v25, 4294901760
  %6025 = vmatmul.mubr.f32.gmra.mxu0 %v6024
  %v6026 = vpop.f32.mrf.mxu0
  %v6027 = vadd.f32 %v5795, %v6026
  %v6028 = vpop.f32.mrf.mxu0
  %v6029 = vadd.f32 %v5797, %v6028
  %6030 = vdwg.mxu0
  %v6031 = vand.u32 %v5690, 4294901760
  %v6032 = vsub.f32 %v5690, %v6031
  %6033 = vmatprep.subr.mxu0 %v6032
  %v6034 = vand.u32 %v5689, 4294901760
  %v6035 = vsub.f32 %v5689, %v6034
  %6036 = vmatpush1.msra.mxu0 %v6035
  %v6037 = vand.u32 %v5688, 4294901760
  %v6038 = vsub.f32 %v5688, %v6037
  %6039 = vmatprep.subr.mxu0 %v6038
  %v6040 = vand.u32 %v5687, 4294901760
  %v6041 = vsub.f32 %v5687, %v6040
  %6042 = vmatpush1.msra.mxu0 %v6041
  %v6043 = vand.u32 %v5686, 4294901760
  %v6044 = vsub.f32 %v5686, %v6043
  %6045 = vmatprep.subr.mxu0 %v6044
  %v6046 = vand.u32 %v5685, 4294901760
  %v6047 = vsub.f32 %v5685, %v6046
  %6048 = vmatpush1.msra.mxu0 %v6047
  %v6049 = vand.u32 %v5684, 4294901760
  %v6050 = vsub.f32 %v5684, %v6049
  %6051 = vmatprep.subr.mxu0 %v6050
  %v6052 = vand.u32 %v5683, 4294901760
  %v6053 = vsub.f32 %v5683, %v6052
  %6054 = vmatpush1.msra.mxu0 %v6053
  %v6055 = vand.u32 %v5682, 4294901760
  %v6056 = vsub.f32 %v5682, %v6055
  %6057 = vmatprep.subr.mxu0 %v6056
  %v6058 = vand.u32 %v5681, 4294901760
  %v6059 = vsub.f32 %v5681, %v6058
  %6060 = vmatpush1.msra.mxu0 %v6059
  %v6061 = vand.u32 %v5680, 4294901760
  %v6062 = vsub.f32 %v5680, %v6061
  %6063 = vmatprep.subr.mxu0 %v6062
  %v6064 = vand.u32 %v5679, 4294901760
  %v6065 = vsub.f32 %v5679, %v6064
  %6066 = vmatpush1.msra.mxu0 %v6065
  %v6067 = vand.u32 %v5678, 4294901760
  %v6068 = vsub.f32 %v5678, %v6067
  %6069 = vmatprep.subr.mxu0 %v6068
  %v6070 = vand.u32 %v5677, 4294901760
  %v6071 = vsub.f32 %v5677, %v6070
  %6072 = vmatpush1.msra.mxu0 %v6071
  %v6073 = vand.u32 %v5676, 4294901760
  %v6074 = vsub.f32 %v5676, %v6073
  %6075 = vmatprep.subr.mxu0 %v6074
  %v6076 = vand.u32 %v5675, 4294901760
  %v6077 = vsub.f32 %v5675, %v6076
  %6078 = vmatpush1.msra.mxu0 %v6077
  %v6079 = vand.u32 %v5674, 4294901760
  %v6080 = vsub.f32 %v5674, %v6079
  %6081 = vmatprep.subr.mxu0 %v6080
  %v6082 = vand.u32 %v5673, 4294901760
  %v6083 = vsub.f32 %v5673, %v6082
  %6084 = vmatpush1.msra.mxu0 %v6083
  %v6085 = vand.u32 %v5672, 4294901760
  %v6086 = vsub.f32 %v5672, %v6085
  %6087 = vmatprep.subr.mxu0 %v6086
  %v6088 = vand.u32 %v5671, 4294901760
  %v6089 = vsub.f32 %v5671, %v6088
  %6090 = vmatpush1.msra.mxu0 %v6089
  %v6091 = vand.u32 %v5670, 4294901760
  %v6092 = vsub.f32 %v5670, %v6091
  %6093 = vmatprep.subr.mxu0 %v6092
  %v6094 = vand.u32 %v5669, 4294901760
  %v6095 = vsub.f32 %v5669, %v6094
  %6096 = vmatpush1.msra.mxu0 %v6095
  %v6097 = vand.u32 %v5668, 4294901760
  %v6098 = vsub.f32 %v5668, %v6097
  %6099 = vmatprep.subr.mxu0 %v6098
  %v6100 = vand.u32 %v5667, 4294901760
  %v6101 = vsub.f32 %v5667, %v6100
  %6102 = vmatpush1.msra.mxu0 %v6101
  %v6103 = vand.u32 %v5666, 4294901760
  %v6104 = vsub.f32 %v5666, %v6103
  %6105 = vmatprep.subr.mxu0 %v6104
  %v6106 = vand.u32 %v5665, 4294901760
  %v6107 = vsub.f32 %v5665, %v6106
  %6108 = vmatpush1.msra.mxu0 %v6107
  %v6109 = vand.u32 %v5664, 4294901760
  %v6110 = vsub.f32 %v5664, %v6109
  %6111 = vmatprep.subr.mxu0 %v6110
  %v6112 = vand.u32 %v5663, 4294901760
  %v6113 = vsub.f32 %v5663, %v6112
  %6114 = vmatpush1.msra.mxu0 %v6113
  %v6115 = vand.u32 %v5662, 4294901760
  %v6116 = vsub.f32 %v5662, %v6115
  %6117 = vmatprep.subr.mxu0 %v6116
  %v6118 = vand.u32 %v5661, 4294901760
  %v6119 = vsub.f32 %v5661, %v6118
  %6120 = vmatpush1.msra.mxu0 %v6119
  %v6121 = vand.u32 %v5660, 4294901760
  %v6122 = vsub.f32 %v5660, %v6121
  %6123 = vmatprep.subr.mxu0 %v6122
  %v6124 = vand.u32 %v5659, 4294901760
  %v6125 = vsub.f32 %v5659, %v6124
  %6126 = vmatpush1.msra.mxu0 %v6125
  %6127 = vmatprep.subr.mxu0 0.0
  %6128 = vmatpush2.msra.mxu0 0.0
  %6129 = vmatprep.subr.mxu0 0.0
  %6130 = vmatpush2.msra.mxu0 0.0
  %6131 = vmatprep.subr.mxu0 0.0
  %6132 = vmatpush2.msra.mxu0 0.0
  %6133 = vmatprep.subr.mxu0 0.0
  %6134 = vmatpush2.msra.mxu0 0.0
  %6135 = vmatprep.subr.mxu0 0.0
  %6136 = vmatpush2.msra.mxu0 0.0
  %6137 = vmatprep.subr.mxu0 0.0
  %6138 = vmatpush2.msra.mxu0 0.0
  %6139 = vmatprep.subr.mxu0 0.0
  %6140 = vmatpush2.msra.mxu0 0.0
  %6141 = vmatprep.subr.mxu0 0.0
  %6142 = vmatpush2.msra.mxu0 0.0
  %6143 = vmatprep.subr.mxu0 0.0
  %6144 = vmatpush2.msra.mxu0 0.0
  %6145 = vmatprep.subr.mxu0 0.0
  %6146 = vmatpush2.msra.mxu0 0.0
  %6147 = vmatprep.subr.mxu0 0.0
  %6148 = vmatpush2.msra.mxu0 0.0
  %6149 = vmatprep.subr.mxu0 0.0
  %6150 = vmatpush2.msra.mxu0 0.0
  %6151 = vmatprep.subr.mxu0 0.0
  %6152 = vmatpush2.msra.mxu0 0.0
  %6153 = vmatprep.subr.mxu0 0.0
  %6154 = vmatpush2.msra.mxu0 0.0
  %6155 = vmatprep.subr.mxu0 0.0
  %6156 = vmatpush2.msra.mxu0 0.0
  %6157 = vmatprep.subr.mxu0 0.0
  %6158 = vmatpush2.msra.mxu0 0.0
  %6159 = vmatprep.mubr.f32.mxu0 0.0
  %v6160 = vand.u32 %v25, 4294901760
  %v6161 = vsub.f32 %v25, %v6160
  %6162 = vmatmul.mubr.f32.gmra.mxu0 %v6161
  %v6163 = vpop.f32.mrf.mxu0
  %v6164 = vadd.f32 %v6027, %v6163
  %v6165 = vpop.f32.mrf.mxu0
  %v6166 = vadd.f32 %v6029, %v6165
  %6167 = vdwg.mxu0
  %v6168 = vand.u32 %v5690, 4294901760
  %6169 = vmatprep.subr.mxu0 %v6168
  %v6170 = vand.u32 %v5689, 4294901760
  %6171 = vmatpush1.msra.mxu0 %v6170
  %v6172 = vand.u32 %v5688, 4294901760
  %6173 = vmatprep.subr.mxu0 %v6172
  %v6174 = vand.u32 %v5687, 4294901760
  %6175 = vmatpush1.msra.mxu0 %v6174
  %v6176 = vand.u32 %v5686, 4294901760
  %6177 = vmatprep.subr.mxu0 %v6176
  %v6178 = vand.u32 %v5685, 4294901760
  %6179 = vmatpush1.msra.mxu0 %v6178
  %v6180 = vand.u32 %v5684, 4294901760
  %6181 = vmatprep.subr.mxu0 %v6180
  %v6182 = vand.u32 %v5683, 4294901760
  %6183 = vmatpush1.msra.mxu0 %v6182
  %v6184 = vand.u32 %v5682, 4294901760
  %6185 = vmatprep.subr.mxu0 %v6184
  %v6186 = vand.u32 %v5681, 4294901760
  %6187 = vmatpush1.msra.mxu0 %v6186
  %v6188 = vand.u32 %v5680, 4294901760
  %6189 = vmatprep.subr.mxu0 %v6188
  %v6190 = vand.u32 %v5679, 4294901760
  %6191 = vmatpush1.msra.mxu0 %v6190
  %v6192 = vand.u32 %v5678, 4294901760
  %6193 = vmatprep.subr.mxu0 %v6192
  %v6194 = vand.u32 %v5677, 4294901760
  %6195 = vmatpush1.msra.mxu0 %v6194
  %v6196 = vand.u32 %v5676, 4294901760
  %6197 = vmatprep.subr.mxu0 %v6196
  %v6198 = vand.u32 %v5675, 4294901760
  %6199 = vmatpush1.msra.mxu0 %v6198
  %v6200 = vand.u32 %v5674, 4294901760
  %6201 = vmatprep.subr.mxu0 %v6200
  %v6202 = vand.u32 %v5673, 4294901760
  %6203 = vmatpush1.msra.mxu0 %v6202
  %v6204 = vand.u32 %v5672, 4294901760
  %6205 = vmatprep.subr.mxu0 %v6204
  %v6206 = vand.u32 %v5671, 4294901760
  %6207 = vmatpush1.msra.mxu0 %v6206
  %v6208 = vand.u32 %v5670, 4294901760
  %6209 = vmatprep.subr.mxu0 %v6208
  %v6210 = vand.u32 %v5669, 4294901760
  %6211 = vmatpush1.msra.mxu0 %v6210
  %v6212 = vand.u32 %v5668, 4294901760
  %6213 = vmatprep.subr.mxu0 %v6212
  %v6214 = vand.u32 %v5667, 4294901760
  %6215 = vmatpush1.msra.mxu0 %v6214
  %v6216 = vand.u32 %v5666, 4294901760
  %6217 = vmatprep.subr.mxu0 %v6216
  %v6218 = vand.u32 %v5665, 4294901760
  %6219 = vmatpush1.msra.mxu0 %v6218
  %v6220 = vand.u32 %v5664, 4294901760
  %6221 = vmatprep.subr.mxu0 %v6220
  %v6222 = vand.u32 %v5663, 4294901760
  %6223 = vmatpush1.msra.mxu0 %v6222
  %v6224 = vand.u32 %v5662, 4294901760
  %6225 = vmatprep.subr.mxu0 %v6224
  %v6226 = vand.u32 %v5661, 4294901760
  %6227 = vmatpush1.msra.mxu0 %v6226
  %v6228 = vand.u32 %v5660, 4294901760
  %6229 = vmatprep.subr.mxu0 %v6228
  %v6230 = vand.u32 %v5659, 4294901760
  %6231 = vmatpush1.msra.mxu0 %v6230
  %6232 = vmatprep.subr.mxu0 0.0
  %6233 = vmatpush2.msra.mxu0 0.0
  %6234 = vmatprep.subr.mxu0 0.0
  %6235 = vmatpush2.msra.mxu0 0.0
  %6236 = vmatprep.subr.mxu0 0.0
  %6237 = vmatpush2.msra.mxu0 0.0
  %6238 = vmatprep.subr.mxu0 0.0
  %6239 = vmatpush2.msra.mxu0 0.0
  %6240 = vmatprep.subr.mxu0 0.0
  %6241 = vmatpush2.msra.mxu0 0.0
  %6242 = vmatprep.subr.mxu0 0.0
  %6243 = vmatpush2.msra.mxu0 0.0
  %6244 = vmatprep.subr.mxu0 0.0
  %6245 = vmatpush2.msra.mxu0 0.0
  %6246 = vmatprep.subr.mxu0 0.0
  %6247 = vmatpush2.msra.mxu0 0.0
  %6248 = vmatprep.subr.mxu0 0.0
  %6249 = vmatpush2.msra.mxu0 0.0
  %6250 = vmatprep.subr.mxu0 0.0
  %6251 = vmatpush2.msra.mxu0 0.0
  %6252 = vmatprep.subr.mxu0 0.0
  %6253 = vmatpush2.msra.mxu0 0.0
  %6254 = vmatprep.subr.mxu0 0.0
  %6255 = vmatpush2.msra.mxu0 0.0
  %6256 = vmatprep.subr.mxu0 0.0
  %6257 = vmatpush2.msra.mxu0 0.0
  %6258 = vmatprep.subr.mxu0 0.0
  %6259 = vmatpush2.msra.mxu0 0.0
  %6260 = vmatprep.subr.mxu0 0.0
  %6261 = vmatpush2.msra.mxu0 0.0
  %6262 = vmatprep.subr.mxu0 0.0
  %6263 = vmatpush2.msra.mxu0 0.0
  %6264 = vmatprep.mubr.f32.mxu0 0.0
  %v6265 = vand.u32 %v25, 4294901760
  %v6266 = vsub.f32 %v25, %v6265
  %v6267 = vand.u32 %v6266, 4294901760
  %6268 = vmatmul.mubr.f32.gmra.mxu0 %v6267
  %v6269 = vpop.f32.mrf.mxu0
  %v6270 = vadd.f32 %v6164, %v6269
  %v6271 = vpop.f32.mrf.mxu0
  %v6272 = vadd.f32 %v6166, %v6271
  %6273 = vdwg.mxu0
  %v6274 = vand.u32 %v5690, 4294901760
  %v6275 = vsub.f32 %v5690, %v6274
  %v6276 = vand.u32 %v6275, 4294901760
  %6277 = vmatprep.subr.mxu0 %v6276
  %v6278 = vand.u32 %v5689, 4294901760
  %v6279 = vsub.f32 %v5689, %v6278
  %v6280 = vand.u32 %v6279, 4294901760
  %6281 = vmatpush1.msra.mxu0 %v6280
  %v6282 = vand.u32 %v5688, 4294901760
  %v6283 = vsub.f32 %v5688, %v6282
  %v6284 = vand.u32 %v6283, 4294901760
  %6285 = vmatprep.subr.mxu0 %v6284
  %v6286 = vand.u32 %v5687, 4294901760
  %v6287 = vsub.f32 %v5687, %v6286
  %v6288 = vand.u32 %v6287, 4294901760
  %6289 = vmatpush1.msra.mxu0 %v6288
  %v6290 = vand.u32 %v5686, 4294901760
  %v6291 = vsub.f32 %v5686, %v6290
  %v6292 = vand.u32 %v6291, 4294901760
  %6293 = vmatprep.subr.mxu0 %v6292
  %v6294 = vand.u32 %v5685, 4294901760
  %v6295 = vsub.f32 %v5685, %v6294
  %v6296 = vand.u32 %v6295, 4294901760
  %6297 = vmatpush1.msra.mxu0 %v6296
  %v6298 = vand.u32 %v5684, 4294901760
  %v6299 = vsub.f32 %v5684, %v6298
  %v6300 = vand.u32 %v6299, 4294901760
  %6301 = vmatprep.subr.mxu0 %v6300
  %v6302 = vand.u32 %v5683, 4294901760
  %v6303 = vsub.f32 %v5683, %v6302
  %v6304 = vand.u32 %v6303, 4294901760
  %6305 = vmatpush1.msra.mxu0 %v6304
  %v6306 = vand.u32 %v5682, 4294901760
  %v6307 = vsub.f32 %v5682, %v6306
  %v6308 = vand.u32 %v6307, 4294901760
  %6309 = vmatprep.subr.mxu0 %v6308
  %v6310 = vand.u32 %v5681, 4294901760
  %v6311 = vsub.f32 %v5681, %v6310
  %v6312 = vand.u32 %v6311, 4294901760
  %6313 = vmatpush1.msra.mxu0 %v6312
  %v6314 = vand.u32 %v5680, 4294901760
  %v6315 = vsub.f32 %v5680, %v6314
  %v6316 = vand.u32 %v6315, 4294901760
  %6317 = vmatprep.subr.mxu0 %v6316
  %v6318 = vand.u32 %v5679, 4294901760
  %v6319 = vsub.f32 %v5679, %v6318
  %v6320 = vand.u32 %v6319, 4294901760
  %6321 = vmatpush1.msra.mxu0 %v6320
  %v6322 = vand.u32 %v5678, 4294901760
  %v6323 = vsub.f32 %v5678, %v6322
  %v6324 = vand.u32 %v6323, 4294901760
  %6325 = vmatprep.subr.mxu0 %v6324
  %v6326 = vand.u32 %v5677, 4294901760
  %v6327 = vsub.f32 %v5677, %v6326
  %v6328 = vand.u32 %v6327, 4294901760
  %6329 = vmatpush1.msra.mxu0 %v6328
  %v6330 = vand.u32 %v5676, 4294901760
  %v6331 = vsub.f32 %v5676, %v6330
  %v6332 = vand.u32 %v6331, 4294901760
  %6333 = vmatprep.subr.mxu0 %v6332
  %v6334 = vand.u32 %v5675, 4294901760
  %v6335 = vsub.f32 %v5675, %v6334
  %v6336 = vand.u32 %v6335, 4294901760
  %6337 = vmatpush1.msra.mxu0 %v6336
  %v6338 = vand.u32 %v5674, 4294901760
  %v6339 = vsub.f32 %v5674, %v6338
  %v6340 = vand.u32 %v6339, 4294901760
  %6341 = vmatprep.subr.mxu0 %v6340
  %v6342 = vand.u32 %v5673, 4294901760
  %v6343 = vsub.f32 %v5673, %v6342
  %v6344 = vand.u32 %v6343, 4294901760
  %6345 = vmatpush1.msra.mxu0 %v6344
  %v6346 = vand.u32 %v5672, 4294901760
  %v6347 = vsub.f32 %v5672, %v6346
  %v6348 = vand.u32 %v6347, 4294901760
  %6349 = vmatprep.subr.mxu0 %v6348
  %v6350 = vand.u32 %v5671, 4294901760
  %v6351 = vsub.f32 %v5671, %v6350
  %v6352 = vand.u32 %v6351, 4294901760
  %6353 = vmatpush1.msra.mxu0 %v6352
  %v6354 = vand.u32 %v5670, 4294901760
  %v6355 = vsub.f32 %v5670, %v6354
  %v6356 = vand.u32 %v6355, 4294901760
  %6357 = vmatprep.subr.mxu0 %v6356
  %v6358 = vand.u32 %v5669, 4294901760
  %v6359 = vsub.f32 %v5669, %v6358
  %v6360 = vand.u32 %v6359, 4294901760
  %6361 = vmatpush1.msra.mxu0 %v6360
  %v6362 = vand.u32 %v5668, 4294901760
  %v6363 = vsub.f32 %v5668, %v6362
  %v6364 = vand.u32 %v6363, 4294901760
  %6365 = vmatprep.subr.mxu0 %v6364
  %v6366 = vand.u32 %v5667, 4294901760
  %v6367 = vsub.f32 %v5667, %v6366
  %v6368 = vand.u32 %v6367, 4294901760
  %6369 = vmatpush1.msra.mxu0 %v6368
  %v6370 = vand.u32 %v5666, 4294901760
  %v6371 = vsub.f32 %v5666, %v6370
  %v6372 = vand.u32 %v6371, 4294901760
  %6373 = vmatprep.subr.mxu0 %v6372
  %v6374 = vand.u32 %v5665, 4294901760
  %v6375 = vsub.f32 %v5665, %v6374
  %v6376 = vand.u32 %v6375, 4294901760
  %6377 = vmatpush1.msra.mxu0 %v6376
  %v6378 = vand.u32 %v5664, 4294901760
  %v6379 = vsub.f32 %v5664, %v6378
  %v6380 = vand.u32 %v6379, 4294901760
  %6381 = vmatprep.subr.mxu0 %v6380
  %v6382 = vand.u32 %v5663, 4294901760
  %v6383 = vsub.f32 %v5663, %v6382
  %v6384 = vand.u32 %v6383, 4294901760
  %6385 = vmatpush1.msra.mxu0 %v6384
  %v6386 = vand.u32 %v5662, 4294901760
  %v6387 = vsub.f32 %v5662, %v6386
  %v6388 = vand.u32 %v6387, 4294901760
  %6389 = vmatprep.subr.mxu0 %v6388
  %v6390 = vand.u32 %v5661, 4294901760
  %v6391 = vsub.f32 %v5661, %v6390
  %v6392 = vand.u32 %v6391, 4294901760
  %6393 = vmatpush1.msra.mxu0 %v6392
  %v6394 = vand.u32 %v5660, 4294901760
  %v6395 = vsub.f32 %v5660, %v6394
  %v6396 = vand.u32 %v6395, 4294901760
  %6397 = vmatprep.subr.mxu0 %v6396
  %v6398 = vand.u32 %v5659, 4294901760
  %v6399 = vsub.f32 %v5659, %v6398
  %v6400 = vand.u32 %v6399, 4294901760
  %6401 = vmatpush1.msra.mxu0 %v6400
  %6402 = vmatprep.subr.mxu0 0.0
  %6403 = vmatpush2.msra.mxu0 0.0
  %6404 = vmatprep.subr.mxu0 0.0
  %6405 = vmatpush2.msra.mxu0 0.0
  %6406 = vmatprep.subr.mxu0 0.0
  %6407 = vmatpush2.msra.mxu0 0.0
  %6408 = vmatprep.subr.mxu0 0.0
  %6409 = vmatpush2.msra.mxu0 0.0
  %6410 = vmatprep.subr.mxu0 0.0
  %6411 = vmatpush2.msra.mxu0 0.0
  %6412 = vmatprep.subr.mxu0 0.0
  %6413 = vmatpush2.msra.mxu0 0.0
  %6414 = vmatprep.subr.mxu0 0.0
  %6415 = vmatpush2.msra.mxu0 0.0
  %6416 = vmatprep.subr.mxu0 0.0
  %6417 = vmatpush2.msra.mxu0 0.0
  %6418 = vmatprep.subr.mxu0 0.0
  %6419 = vmatpush2.msra.mxu0 0.0
  %6420 = vmatprep.subr.mxu0 0.0
  %6421 = vmatpush2.msra.mxu0 0.0
  %6422 = vmatprep.subr.mxu0 0.0
  %6423 = vmatpush2.msra.mxu0 0.0
  %6424 = vmatprep.subr.mxu0 0.0
  %6425 = vmatpush2.msra.mxu0 0.0
  %6426 = vmatprep.subr.mxu0 0.0
  %6427 = vmatpush2.msra.mxu0 0.0
  %6428 = vmatprep.subr.mxu0 0.0
  %6429 = vmatpush2.msra.mxu0 0.0
  %6430 = vmatprep.subr.mxu0 0.0
  %6431 = vmatpush2.msra.mxu0 0.0
  %6432 = vmatprep.subr.mxu0 0.0
  %6433 = vmatpush2.msra.mxu0 0.0
  %6434 = vmatprep.mubr.f32.mxu0 0.0
  %v6435 = vand.u32 %v25, 4294901760
  %6436 = vmatmul.mubr.f32.gmra.mxu0 %v6435
  %v6437 = vpop.f32.mrf.mxu0
  %v6438 = vadd.f32 %v6270, %v6437
  %v6439 = vpop.f32.mrf.mxu0
  %v6440 = vadd.f32 %v6272, %v6439
  %6441 = vdwg.mxu0
  %v6442 = vand.u32 %v5690, 4294901760
  %6443 = vmatprep.subr.mxu0 %v6442
  %v6444 = vand.u32 %v5689, 4294901760
  %6445 = vmatpush1.msra.mxu0 %v6444
  %v6446 = vand.u32 %v5688, 4294901760
  %6447 = vmatprep.subr.mxu0 %v6446
  %v6448 = vand.u32 %v5687, 4294901760
  %6449 = vmatpush1.msra.mxu0 %v6448
  %v6450 = vand.u32 %v5686, 4294901760
  %6451 = vmatprep.subr.mxu0 %v6450
  %v6452 = vand.u32 %v5685, 4294901760
  %6453 = vmatpush1.msra.mxu0 %v6452
  %v6454 = vand.u32 %v5684, 4294901760
  %6455 = vmatprep.subr.mxu0 %v6454
  %v6456 = vand.u32 %v5683, 4294901760
  %6457 = vmatpush1.msra.mxu0 %v6456
  %v6458 = vand.u32 %v5682, 4294901760
  %6459 = vmatprep.subr.mxu0 %v6458
  %v6460 = vand.u32 %v5681, 4294901760
  %6461 = vmatpush1.msra.mxu0 %v6460
  %v6462 = vand.u32 %v5680, 4294901760
  %6463 = vmatprep.subr.mxu0 %v6462
  %v6464 = vand.u32 %v5679, 4294901760
  %6465 = vmatpush1.msra.mxu0 %v6464
  %v6466 = vand.u32 %v5678, 4294901760
  %6467 = vmatprep.subr.mxu0 %v6466
  %v6468 = vand.u32 %v5677, 4294901760
  %6469 = vmatpush1.msra.mxu0 %v6468
  %v6470 = vand.u32 %v5676, 4294901760
  %6471 = vmatprep.subr.mxu0 %v6470
  %v6472 = vand.u32 %v5675, 4294901760
  %6473 = vmatpush1.msra.mxu0 %v6472
  %v6474 = vand.u32 %v5674, 4294901760
  %6475 = vmatprep.subr.mxu0 %v6474
  %v6476 = vand.u32 %v5673, 4294901760
  %6477 = vmatpush1.msra.mxu0 %v6476
  %v6478 = vand.u32 %v5672, 4294901760
  %6479 = vmatprep.subr.mxu0 %v6478
  %v6480 = vand.u32 %v5671, 4294901760
  %6481 = vmatpush1.msra.mxu0 %v6480
  %v6482 = vand.u32 %v5670, 4294901760
  %6483 = vmatprep.subr.mxu0 %v6482
  %v6484 = vand.u32 %v5669, 4294901760
  %6485 = vmatpush1.msra.mxu0 %v6484
  %v6486 = vand.u32 %v5668, 4294901760
  %6487 = vmatprep.subr.mxu0 %v6486
  %v6488 = vand.u32 %v5667, 4294901760
  %6489 = vmatpush1.msra.mxu0 %v6488
  %v6490 = vand.u32 %v5666, 4294901760
  %6491 = vmatprep.subr.mxu0 %v6490
  %v6492 = vand.u32 %v5665, 4294901760
  %6493 = vmatpush1.msra.mxu0 %v6492
  %v6494 = vand.u32 %v5664, 4294901760
  %6495 = vmatprep.subr.mxu0 %v6494
  %v6496 = vand.u32 %v5663, 4294901760
  %6497 = vmatpush1.msra.mxu0 %v6496
  %v6498 = vand.u32 %v5662, 4294901760
  %6499 = vmatprep.subr.mxu0 %v6498
  %v6500 = vand.u32 %v5661, 4294901760
  %6501 = vmatpush1.msra.mxu0 %v6500
  %v6502 = vand.u32 %v5660, 4294901760
  %6503 = vmatprep.subr.mxu0 %v6502
  %v6504 = vand.u32 %v5659, 4294901760
  %6505 = vmatpush1.msra.mxu0 %v6504
  %6506 = vmatprep.subr.mxu0 0.0
  %6507 = vmatpush2.msra.mxu0 0.0
  %6508 = vmatprep.subr.mxu0 0.0
  %6509 = vmatpush2.msra.mxu0 0.0
  %6510 = vmatprep.subr.mxu0 0.0
  %6511 = vmatpush2.msra.mxu0 0.0
  %6512 = vmatprep.subr.mxu0 0.0
  %6513 = vmatpush2.msra.mxu0 0.0
  %6514 = vmatprep.subr.mxu0 0.0
  %6515 = vmatpush2.msra.mxu0 0.0
  %6516 = vmatprep.subr.mxu0 0.0
  %6517 = vmatpush2.msra.mxu0 0.0
  %6518 = vmatprep.subr.mxu0 0.0
  %6519 = vmatpush2.msra.mxu0 0.0
  %6520 = vmatprep.subr.mxu0 0.0
  %6521 = vmatpush2.msra.mxu0 0.0
  %6522 = vmatprep.subr.mxu0 0.0
  %6523 = vmatpush2.msra.mxu0 0.0
  %6524 = vmatprep.subr.mxu0 0.0
  %6525 = vmatpush2.msra.mxu0 0.0
  %6526 = vmatprep.subr.mxu0 0.0
  %6527 = vmatpush2.msra.mxu0 0.0
  %6528 = vmatprep.subr.mxu0 0.0
  %6529 = vmatpush2.msra.mxu0 0.0
  %6530 = vmatprep.subr.mxu0 0.0
  %6531 = vmatpush2.msra.mxu0 0.0
  %6532 = vmatprep.subr.mxu0 0.0
  %6533 = vmatpush2.msra.mxu0 0.0
  %6534 = vmatprep.subr.mxu0 0.0
  %6535 = vmatpush2.msra.mxu0 0.0
  %6536 = vmatprep.subr.mxu0 0.0
  %6537 = vmatpush2.msra.mxu0 0.0
  %6538 = vmatprep.mubr.f32.mxu0 0.0
  %v6539 = vand.u32 %v25, 4294901760
  %6540 = vmatmul.mubr.f32.gmra.mxu0 %v6539
  %v6541 = vpop.f32.mrf.mxu0
  %v6542 = vadd.f32 %v6438, %v6541
  %v6543 = vpop.f32.mrf.mxu0
  %v6544 = vadd.f32 %v6440, %v6543
  %6545 = vdwg.mxu0
  %v6546 = vmax.f32 %v6542, 0.0
  %v6547 = vmax.f32 %v6544, 0.0
  %v6550 = vrot.slane %v6546, 1
  %v6551 = vrot.slane %v6547, 1
  %v6554 = vmul.f32 %v6546, %v6550
  %v6555 = vmul.f32 %v6547, %v6551
  %v6558 = vrot.slane %v6554, 3
  %v6559 = vrot.slane %v6555, 3
  %v6562 = vadd.f32 %v23, %v6558
  %v6563 = vadd.f32 %v24, %v6559
  %v6566 = vrot.slane %v6542, 5
  %v6567 = vrot.slane %v6544, 5
  %v6570 = vadd.f32 %v6562, %v6566
  %v6571 = vadd.f32 %v6563, %v6567
  %v6572 = vmax.f32 %v6570, 0.0
  %v6573 = vmax.f32 %v6571, 0.0
  %v6574 = vand.u32 2147483647, %v6570
  %v6575 = vand.u32 2147483647, %v6571
  %v6576 = vsub.f32 0.0, %v6574
  %v6577 = vsub.f32 0.0, %v6575
  %v6578 = vmul.f32 %v6576, 1.442695
  %v6579 = vpow.pop %v6578
  %v6580 = vmul.f32 %v6577, 1.442695
  %v6581 = vpow.pop %v6580
  %v6582 = vadd.f32 %v6579, 1.0
  %v6583 = vlog2.pop %v6582
  %v6584 = vmul.f32 %v6583, 0.6931472
  %v6585 = vmul.f32 -0.5, %v6579
  %v6586 = vadd.f32 %v6585, 1.0
  %v6587 = vmul.f32 %v6586, %v6579
  %v6588 = vand.u32 2147483647, %v6579
  %vm6589 = vcmp.lt.f32.partialorder %v6588, 0.0004427343
  %v6590 = vsel %vm6589, %v6587, %v6584
  %v6591 = vadd.f32 %v6581, 1.0
  %v6592 = vlog2.pop %v6591
  %v6593 = vmul.f32 %v6592, 0.6931472
  %v6594 = vmul.f32 -0.5, %v6581
  %v6595 = vadd.f32 %v6594, 1.0
  %v6596 = vmul.f32 %v6595, %v6581
  %v6597 = vand.u32 2147483647, %v6581
  %vm6598 = vcmp.lt.f32.partialorder %v6597, 0.0004427343
  %v6599 = vsel %vm6598, %v6596, %v6593
  %v6600 = vadd.f32 %v6572, %v6590
  %v6601 = vadd.f32 %v6573, %v6599
  %v6604 = vcombine.high %v6600, %v6601
  %v6606 = vunpack.c.l.s4 1966171168
  %v6607 = vunpack.c.0.s8 %v6606
  %v6608 = vlaneseq
  %v6609 = vshrl.u32 %v6608, 7
  %v6610 = vsub.s32 %v6607, %v6609
  %v6611 = vrot.slane %v6604, %v6610
  %v6612 = vcombine.high %v6611, %v6611
  %v6614 = vunpack.c.l.s4 1966171168
  %v6615 = vunpack.c.0.s8 %v6614
  %v6616 = vlaneseq
  %v6617 = vshrl.u32 %v6616, 7
  %v6618 = vsub.s32 %v6615, %v6617
  %v6619 = vrot.slane %v6612, %v6618
  %s6621 = scalar_lea.vmem [#allocation2], 5
  %6622 = vst.msk [vmem:[%s6621] ss:$8 sm:$0x3] %vm1122, %v6619
  %6623 = vst.msk [vmem:[%s6621] ss:$8 sm:$0x0] %vm1122, %v6619
  %v6624 = vlaneseq
  %v6625 = vshrl.u32 %v6624, 7
  %v6626 = vsub.s32 6, %v6625
  %v6627 = vrot.slane %v23, %v6626
  %v6628 = vlaneseq
  %v6629 = vshrl.u32 %v6628, 7
  %v6630 = vsub.s32 6, %v6629
  %v6631 = vrot.slane %v24, %v6630
  %v6632 = vld [vmem:[%s1] sm:$0xff]
  %v6633 = vld [vmem:[%s1 + $0x8] sm:$0xff]
  %v6634 = vld [vmem:[%s1 + $0x10] sm:$0xff]
  %v6635 = vld [vmem:[%s1 + $0x18] sm:$0xff]
  %v6636 = vld [vmem:[%s1 + $0x20] sm:$0xff]
  %v6637 = vld [vmem:[%s1 + $0x28] sm:$0xff]
  %v6638 = vld [vmem:[%s1 + $0x30] sm:$0xff]
  %v6639 = vld [vmem:[%s1 + $0x38] sm:$0xff]
  %v6640 = vld [vmem:[%s1 + $0x40] sm:$0xff]
  %v6641 = vld [vmem:[%s1 + $0x48] sm:$0xff]
  %v6642 = vld [vmem:[%s1 + $0x50] sm:$0xff]
  %v6643 = vld [vmem:[%s1 + $0x58] sm:$0xff]
  %v6644 = vld [vmem:[%s1 + $0x60] sm:$0xff]
  %v6645 = vld [vmem:[%s1 + $0x68] sm:$0xff]
  %v6646 = vld [vmem:[%s1 + $0x70] sm:$0xff]
  %v6647 = vld [vmem:[%s1 + $0x78] sm:$0xff]
  %v6648 = vld [vmem:[%s1 + $0x80] sm:$0xff]
  %v6649 = vld [vmem:[%s1 + $0x88] sm:$0xff]
  %v6650 = vld [vmem:[%s1 + $0x90] sm:$0xff]
  %v6651 = vld [vmem:[%s1 + $0x98] sm:$0xff]
  %v6652 = vld [vmem:[%s1 + $0xa0] sm:$0xff]
  %v6653 = vld [vmem:[%s1 + $0xa8] sm:$0xff]
  %v6654 = vld [vmem:[%s1 + $0xb0] sm:$0xff]
  %v6655 = vld [vmem:[%s1 + $0xb8] sm:$0xff]
  %v6656 = vld [vmem:[%s1 + $0xc0] sm:$0xff]
  %v6657 = vld [vmem:[%s1 + $0xc8] sm:$0xff]
  %v6658 = vld [vmem:[%s1 + $0xd0] sm:$0xff]
  %v6659 = vld [vmem:[%s1 + $0xd8] sm:$0xff]
  %v6660 = vld [vmem:[%s1 + $0xe0] sm:$0xff]
  %v6661 = vld [vmem:[%s1 + $0xe8] sm:$0xff]
  %v6662 = vld [vmem:[%s1 + $0xf0] sm:$0xff]
  %v6663 = vld [vmem:[%s1 + $0xf8] sm:$0xff]
  %v6664 = vmul.f32 %v6627, %v6632
  %v6665 = vmul.f32 %v6631, %v6633
  %v6666 = vmul.f32 %v6627, %v6634
  %v6667 = vmul.f32 %v6631, %v6635
  %v6668 = vmul.f32 %v6627, %v6636
  %v6669 = vmul.f32 %v6631, %v6637
  %v6670 = vmul.f32 %v6627, %v6638
  %v6671 = vmul.f32 %v6631, %v6639
  %v6672 = vmul.f32 %v6627, %v6640
  %v6673 = vmul.f32 %v6631, %v6641
  %v6674 = vmul.f32 %v6627, %v6642
  %v6675 = vmul.f32 %v6631, %v6643
  %v6676 = vmul.f32 %v6627, %v6644
  %v6677 = vmul.f32 %v6631, %v6645
  %v6678 = vmul.f32 %v6627, %v6646
  %v6679 = vmul.f32 %v6631, %v6647
  %v6680 = vmul.f32 %v6627, %v6648
  %v6681 = vmul.f32 %v6631, %v6649
  %v6682 = vmul.f32 %v6627, %v6650
  %v6683 = vmul.f32 %v6631, %v6651
  %v6684 = vmul.f32 %v6627, %v6652
  %v6685 = vmul.f32 %v6631, %v6653
  %v6686 = vmul.f32 %v6627, %v6654
  %v6687 = vmul.f32 %v6631, %v6655
  %v6688 = vmul.f32 %v6627, %v6656
  %v6689 = vmul.f32 %v6631, %v6657
  %v6690 = vmul.f32 %v6627, %v6658
  %v6691 = vmul.f32 %v6631, %v6659
  %v6692 = vmul.f32 %v6627, %v6660
  %v6693 = vmul.f32 %v6631, %v6661
  %v6694 = vmul.f32 %v6627, %v6662
  %v6695 = vmul.f32 %v6631, %v6663
  %v6696 = vld [vmem:[%s2] sm:$0xff]
  %v6697 = vld [vmem:[%s2 + $0x8] sm:$0xff]
  %v6698 = vld [vmem:[%s2 + $0x10] sm:$0xff]
  %v6699 = vld [vmem:[%s2 + $0x18] sm:$0xff]
  %v6700 = vld [vmem:[%s2 + $0x20] sm:$0xff]
  %v6701 = vld [vmem:[%s2 + $0x28] sm:$0xff]
  %v6702 = vld [vmem:[%s2 + $0x30] sm:$0xff]
  %v6703 = vld [vmem:[%s2 + $0x38] sm:$0xff]
  %v6704 = vld [vmem:[%s2 + $0x40] sm:$0xff]
  %v6705 = vld [vmem:[%s2 + $0x48] sm:$0xff]
  %v6706 = vld [vmem:[%s2 + $0x50] sm:$0xff]
  %v6707 = vld [vmem:[%s2 + $0x58] sm:$0xff]
  %v6708 = vld [vmem:[%s2 + $0x60] sm:$0xff]
  %v6709 = vld [vmem:[%s2 + $0x68] sm:$0xff]
  %v6710 = vld [vmem:[%s2 + $0x70] sm:$0xff]
  %v6711 = vld [vmem:[%s2 + $0x78] sm:$0xff]
  %v6712 = vld [vmem:[%s2 + $0x80] sm:$0xff]
  %v6713 = vld [vmem:[%s2 + $0x88] sm:$0xff]
  %v6714 = vld [vmem:[%s2 + $0x90] sm:$0xff]
  %v6715 = vld [vmem:[%s2 + $0x98] sm:$0xff]
  %v6716 = vld [vmem:[%s2 + $0xa0] sm:$0xff]
  %v6717 = vld [vmem:[%s2 + $0xa8] sm:$0xff]
  %v6718 = vld [vmem:[%s2 + $0xb0] sm:$0xff]
  %v6719 = vld [vmem:[%s2 + $0xb8] sm:$0xff]
  %v6720 = vld [vmem:[%s2 + $0xc0] sm:$0xff]
  %v6721 = vld [vmem:[%s2 + $0xc8] sm:$0xff]
  %v6722 = vld [vmem:[%s2 + $0xd0] sm:$0xff]
  %v6723 = vld [vmem:[%s2 + $0xd8] sm:$0xff]
  %v6724 = vld [vmem:[%s2 + $0xe0] sm:$0xff]
  %v6725 = vld [vmem:[%s2 + $0xe8] sm:$0xff]
  %v6726 = vld [vmem:[%s2 + $0xf0] sm:$0xff]
  %v6727 = vld [vmem:[%s2 + $0xf8] sm:$0xff]
  %v6728 = vadd.f32 %v6664, %v6696
  %v6729 = vadd.f32 %v6665, %v6697
  %v6730 = vadd.f32 %v6666, %v6698
  %v6731 = vadd.f32 %v6667, %v6699
  %v6732 = vadd.f32 %v6668, %v6700
  %v6733 = vadd.f32 %v6669, %v6701
  %v6734 = vadd.f32 %v6670, %v6702
  %v6735 = vadd.f32 %v6671, %v6703
  %v6736 = vadd.f32 %v6672, %v6704
  %v6737 = vadd.f32 %v6673, %v6705
  %v6738 = vadd.f32 %v6674, %v6706
  %v6739 = vadd.f32 %v6675, %v6707
  %v6740 = vadd.f32 %v6676, %v6708
  %v6741 = vadd.f32 %v6677, %v6709
  %v6742 = vadd.f32 %v6678, %v6710
  %v6743 = vadd.f32 %v6679, %v6711
  %v6744 = vadd.f32 %v6680, %v6712
  %v6745 = vadd.f32 %v6681, %v6713
  %v6746 = vadd.f32 %v6682, %v6714
  %v6747 = vadd.f32 %v6683, %v6715
  %v6748 = vadd.f32 %v6684, %v6716
  %v6749 = vadd.f32 %v6685, %v6717
  %v6750 = vadd.f32 %v6686, %v6718
  %v6751 = vadd.f32 %v6687, %v6719
  %v6752 = vadd.f32 %v6688, %v6720
  %v6753 = vadd.f32 %v6689, %v6721
  %v6754 = vadd.f32 %v6690, %v6722
  %v6755 = vadd.f32 %v6691, %v6723
  %v6756 = vadd.f32 %v6692, %v6724
  %v6757 = vadd.f32 %v6693, %v6725
  %v6758 = vadd.f32 %v6694, %v6726
  %v6759 = vadd.f32 %v6695, %v6727
  %v6760 = vmax.f32 %v6728, 0.0
  %v6761 = vmax.f32 %v6729, 0.0
  %v6762 = vmax.f32 %v6730, 0.0
  %v6763 = vmax.f32 %v6731, 0.0
  %v6764 = vmax.f32 %v6732, 0.0
  %v6765 = vmax.f32 %v6733, 0.0
  %v6766 = vmax.f32 %v6734, 0.0
  %v6767 = vmax.f32 %v6735, 0.0
  %v6768 = vmax.f32 %v6736, 0.0
  %v6769 = vmax.f32 %v6737, 0.0
  %v6770 = vmax.f32 %v6738, 0.0
  %v6771 = vmax.f32 %v6739, 0.0
  %v6772 = vmax.f32 %v6740, 0.0
  %v6773 = vmax.f32 %v6741, 0.0
  %v6774 = vmax.f32 %v6742, 0.0
  %v6775 = vmax.f32 %v6743, 0.0
  %v6776 = vmax.f32 %v6744, 0.0
  %v6777 = vmax.f32 %v6745, 0.0
  %v6778 = vmax.f32 %v6746, 0.0
  %v6779 = vmax.f32 %v6747, 0.0
  %v6780 = vmax.f32 %v6748, 0.0
  %v6781 = vmax.f32 %v6749, 0.0
  %v6782 = vmax.f32 %v6750, 0.0
  %v6783 = vmax.f32 %v6751, 0.0
  %v6784 = vmax.f32 %v6752, 0.0
  %v6785 = vmax.f32 %v6753, 0.0
  %v6786 = vmax.f32 %v6754, 0.0
  %v6787 = vmax.f32 %v6755, 0.0
  %v6788 = vmax.f32 %v6756, 0.0
  %v6789 = vmax.f32 %v6757, 0.0
  %v6790 = vmax.f32 %v6758, 0.0
  %v6791 = vmax.f32 %v6759, 0.0
  %v6792 = vand.u32 %v6791, 4294901760
  %6793 = vmatprep.subr.mxu0 %v6792
  %v6794 = vand.u32 %v6790, 4294901760
  %6795 = vmatpush1.msra.mxu0 %v6794
  %v6796 = vand.u32 %v6789, 4294901760
  %6797 = vmatprep.subr.mxu0 %v6796
  %v6798 = vand.u32 %v6788, 4294901760
  %6799 = vmatpush1.msra.mxu0 %v6798
  %v6800 = vand.u32 %v6787, 4294901760
  %6801 = vmatprep.subr.mxu0 %v6800
  %v6802 = vand.u32 %v6786, 4294901760
  %6803 = vmatpush1.msra.mxu0 %v6802
  %v6804 = vand.u32 %v6785, 4294901760
  %6805 = vmatprep.subr.mxu0 %v6804
  %v6806 = vand.u32 %v6784, 4294901760
  %6807 = vmatpush1.msra.mxu0 %v6806
  %v6808 = vand.u32 %v6783, 4294901760
  %6809 = vmatprep.subr.mxu0 %v6808
  %v6810 = vand.u32 %v6782, 4294901760
  %6811 = vmatpush1.msra.mxu0 %v6810
  %v6812 = vand.u32 %v6781, 4294901760
  %6813 = vmatprep.subr.mxu0 %v6812
  %v6814 = vand.u32 %v6780, 4294901760
  %6815 = vmatpush1.msra.mxu0 %v6814
  %v6816 = vand.u32 %v6779, 4294901760
  %6817 = vmatprep.subr.mxu0 %v6816
  %v6818 = vand.u32 %v6778, 4294901760
  %6819 = vmatpush1.msra.mxu0 %v6818
  %v6820 = vand.u32 %v6777, 4294901760
  %6821 = vmatprep.subr.mxu0 %v6820
  %v6822 = vand.u32 %v6776, 4294901760
  %6823 = vmatpush1.msra.mxu0 %v6822
  %v6824 = vand.u32 %v6775, 4294901760
  %6825 = vmatprep.subr.mxu0 %v6824
  %v6826 = vand.u32 %v6774, 4294901760
  %6827 = vmatpush1.msra.mxu0 %v6826
  %v6828 = vand.u32 %v6773, 4294901760
  %6829 = vmatprep.subr.mxu0 %v6828
  %v6830 = vand.u32 %v6772, 4294901760
  %6831 = vmatpush1.msra.mxu0 %v6830
  %v6832 = vand.u32 %v6771, 4294901760
  %6833 = vmatprep.subr.mxu0 %v6832
  %v6834 = vand.u32 %v6770, 4294901760
  %6835 = vmatpush1.msra.mxu0 %v6834
  %v6836 = vand.u32 %v6769, 4294901760
  %6837 = vmatprep.subr.mxu0 %v6836
  %v6838 = vand.u32 %v6768, 4294901760
  %6839 = vmatpush1.msra.mxu0 %v6838
  %v6840 = vand.u32 %v6767, 4294901760
  %6841 = vmatprep.subr.mxu0 %v6840
  %v6842 = vand.u32 %v6766, 4294901760
  %6843 = vmatpush1.msra.mxu0 %v6842
  %v6844 = vand.u32 %v6765, 4294901760
  %6845 = vmatprep.subr.mxu0 %v6844
  %v6846 = vand.u32 %v6764, 4294901760
  %6847 = vmatpush1.msra.mxu0 %v6846
  %v6848 = vand.u32 %v6763, 4294901760
  %6849 = vmatprep.subr.mxu0 %v6848
  %v6850 = vand.u32 %v6762, 4294901760
  %6851 = vmatpush1.msra.mxu0 %v6850
  %v6852 = vand.u32 %v6761, 4294901760
  %6853 = vmatprep.subr.mxu0 %v6852
  %v6854 = vand.u32 %v6760, 4294901760
  %6855 = vmatpush1.msra.mxu0 %v6854
  %6856 = vmatprep.subr.mxu0 0.0
  %6857 = vmatpush2.msra.mxu0 0.0
  %6858 = vmatprep.subr.mxu0 0.0
  %6859 = vmatpush2.msra.mxu0 0.0
  %6860 = vmatprep.subr.mxu0 0.0
  %6861 = vmatpush2.msra.mxu0 0.0
  %6862 = vmatprep.subr.mxu0 0.0
  %6863 = vmatpush2.msra.mxu0 0.0
  %6864 = vmatprep.subr.mxu0 0.0
  %6865 = vmatpush2.msra.mxu0 0.0
  %6866 = vmatprep.subr.mxu0 0.0
  %6867 = vmatpush2.msra.mxu0 0.0
  %6868 = vmatprep.subr.mxu0 0.0
  %6869 = vmatpush2.msra.mxu0 0.0
  %6870 = vmatprep.subr.mxu0 0.0
  %6871 = vmatpush2.msra.mxu0 0.0
  %6872 = vmatprep.subr.mxu0 0.0
  %6873 = vmatpush2.msra.mxu0 0.0
  %6874 = vmatprep.subr.mxu0 0.0
  %6875 = vmatpush2.msra.mxu0 0.0
  %6876 = vmatprep.subr.mxu0 0.0
  %6877 = vmatpush2.msra.mxu0 0.0
  %6878 = vmatprep.subr.mxu0 0.0
  %6879 = vmatpush2.msra.mxu0 0.0
  %6880 = vmatprep.subr.mxu0 0.0
  %6881 = vmatpush2.msra.mxu0 0.0
  %6882 = vmatprep.subr.mxu0 0.0
  %6883 = vmatpush2.msra.mxu0 0.0
  %6884 = vmatprep.subr.mxu0 0.0
  %6885 = vmatpush2.msra.mxu0 0.0
  %6886 = vmatprep.subr.mxu0 0.0
  %6887 = vmatpush2.msra.mxu0 0.0
  %6888 = vmatprep.mubr.f32.mxu0 0.0
  %v6889 = vand.u32 %v25, 4294901760
  %v6890 = vsub.f32 %v25, %v6889
  %v6891 = vand.u32 %v6890, 4294901760
  %v6892 = vsub.f32 %v6890, %v6891
  %v6893 = vand.u32 %v6892, 4294901760
  %6894 = vmatmul.mubr.f32.gmra.mxu0 %v6893
  %v6895 = vpop.f32.mrf.mxu0
  %v6896 = vadd.f32 %v26, %v6895
  %v6897 = vpop.f32.mrf.mxu0
  %v6898 = vadd.f32 %v27, %v6897
  %6899 = vdwg.mxu0
  %v6900 = vand.u32 %v6791, 4294901760
  %v6901 = vsub.f32 %v6791, %v6900
  %v6902 = vand.u32 %v6901, 4294901760
  %v6903 = vsub.f32 %v6901, %v6902
  %v6904 = vand.u32 %v6903, 4294901760
  %6905 = vmatprep.subr.mxu0 %v6904
  %v6906 = vand.u32 %v6790, 4294901760
  %v6907 = vsub.f32 %v6790, %v6906
  %v6908 = vand.u32 %v6907, 4294901760
  %v6909 = vsub.f32 %v6907, %v6908
  %v6910 = vand.u32 %v6909, 4294901760
  %6911 = vmatpush1.msra.mxu0 %v6910
  %v6912 = vand.u32 %v6789, 4294901760
  %v6913 = vsub.f32 %v6789, %v6912
  %v6914 = vand.u32 %v6913, 4294901760
  %v6915 = vsub.f32 %v6913, %v6914
  %v6916 = vand.u32 %v6915, 4294901760
  %6917 = vmatprep.subr.mxu0 %v6916
  %v6918 = vand.u32 %v6788, 4294901760
  %v6919 = vsub.f32 %v6788, %v6918
  %v6920 = vand.u32 %v6919, 4294901760
  %v6921 = vsub.f32 %v6919, %v6920
  %v6922 = vand.u32 %v6921, 4294901760
  %6923 = vmatpush1.msra.mxu0 %v6922
  %v6924 = vand.u32 %v6787, 4294901760
  %v6925 = vsub.f32 %v6787, %v6924
  %v6926 = vand.u32 %v6925, 4294901760
  %v6927 = vsub.f32 %v6925, %v6926
  %v6928 = vand.u32 %v6927, 4294901760
  %6929 = vmatprep.subr.mxu0 %v6928
  %v6930 = vand.u32 %v6786, 4294901760
  %v6931 = vsub.f32 %v6786, %v6930
  %v6932 = vand.u32 %v6931, 4294901760
  %v6933 = vsub.f32 %v6931, %v6932
  %v6934 = vand.u32 %v6933, 4294901760
  %6935 = vmatpush1.msra.mxu0 %v6934
  %v6936 = vand.u32 %v6785, 4294901760
  %v6937 = vsub.f32 %v6785, %v6936
  %v6938 = vand.u32 %v6937, 4294901760
  %v6939 = vsub.f32 %v6937, %v6938
  %v6940 = vand.u32 %v6939, 4294901760
  %6941 = vmatprep.subr.mxu0 %v6940
  %v6942 = vand.u32 %v6784, 4294901760
  %v6943 = vsub.f32 %v6784, %v6942
  %v6944 = vand.u32 %v6943, 4294901760
  %v6945 = vsub.f32 %v6943, %v6944
  %v6946 = vand.u32 %v6945, 4294901760
  %6947 = vmatpush1.msra.mxu0 %v6946
  %v6948 = vand.u32 %v6783, 4294901760
  %v6949 = vsub.f32 %v6783, %v6948
  %v6950 = vand.u32 %v6949, 4294901760
  %v6951 = vsub.f32 %v6949, %v6950
  %v6952 = vand.u32 %v6951, 4294901760
  %6953 = vmatprep.subr.mxu0 %v6952
  %v6954 = vand.u32 %v6782, 4294901760
  %v6955 = vsub.f32 %v6782, %v6954
  %v6956 = vand.u32 %v6955, 4294901760
  %v6957 = vsub.f32 %v6955, %v6956
  %v6958 = vand.u32 %v6957, 4294901760
  %6959 = vmatpush1.msra.mxu0 %v6958
  %v6960 = vand.u32 %v6781, 4294901760
  %v6961 = vsub.f32 %v6781, %v6960
  %v6962 = vand.u32 %v6961, 4294901760
  %v6963 = vsub.f32 %v6961, %v6962
  %v6964 = vand.u32 %v6963, 4294901760
  %6965 = vmatprep.subr.mxu0 %v6964
  %v6966 = vand.u32 %v6780, 4294901760
  %v6967 = vsub.f32 %v6780, %v6966
  %v6968 = vand.u32 %v6967, 4294901760
  %v6969 = vsub.f32 %v6967, %v6968
  %v6970 = vand.u32 %v6969, 4294901760
  %6971 = vmatpush1.msra.mxu0 %v6970
  %v6972 = vand.u32 %v6779, 4294901760
  %v6973 = vsub.f32 %v6779, %v6972
  %v6974 = vand.u32 %v6973, 4294901760
  %v6975 = vsub.f32 %v6973, %v6974
  %v6976 = vand.u32 %v6975, 4294901760
  %6977 = vmatprep.subr.mxu0 %v6976
  %v6978 = vand.u32 %v6778, 4294901760
  %v6979 = vsub.f32 %v6778, %v6978
  %v6980 = vand.u32 %v6979, 4294901760
  %v6981 = vsub.f32 %v6979, %v6980
  %v6982 = vand.u32 %v6981, 4294901760
  %6983 = vmatpush1.msra.mxu0 %v6982
  %v6984 = vand.u32 %v6777, 4294901760
  %v6985 = vsub.f32 %v6777, %v6984
  %v6986 = vand.u32 %v6985, 4294901760
  %v6987 = vsub.f32 %v6985, %v6986
  %v6988 = vand.u32 %v6987, 4294901760
  %6989 = vmatprep.subr.mxu0 %v6988
  %v6990 = vand.u32 %v6776, 4294901760
  %v6991 = vsub.f32 %v6776, %v6990
  %v6992 = vand.u32 %v6991, 4294901760
  %v6993 = vsub.f32 %v6991, %v6992
  %v6994 = vand.u32 %v6993, 4294901760
  %6995 = vmatpush1.msra.mxu0 %v6994
  %v6996 = vand.u32 %v6775, 4294901760
  %v6997 = vsub.f32 %v6775, %v6996
  %v6998 = vand.u32 %v6997, 4294901760
  %v6999 = vsub.f32 %v6997, %v6998
  %v7000 = vand.u32 %v6999, 4294901760
  %7001 = vmatprep.subr.mxu0 %v7000
  %v7002 = vand.u32 %v6774, 4294901760
  %v7003 = vsub.f32 %v6774, %v7002
  %v7004 = vand.u32 %v7003, 4294901760
  %v7005 = vsub.f32 %v7003, %v7004
  %v7006 = vand.u32 %v7005, 4294901760
  %7007 = vmatpush1.msra.mxu0 %v7006
  %v7008 = vand.u32 %v6773, 4294901760
  %v7009 = vsub.f32 %v6773, %v7008
  %v7010 = vand.u32 %v7009, 4294901760
  %v7011 = vsub.f32 %v7009, %v7010
  %v7012 = vand.u32 %v7011, 4294901760
  %7013 = vmatprep.subr.mxu0 %v7012
  %v7014 = vand.u32 %v6772, 4294901760
  %v7015 = vsub.f32 %v6772, %v7014
  %v7016 = vand.u32 %v7015, 4294901760
  %v7017 = vsub.f32 %v7015, %v7016
  %v7018 = vand.u32 %v7017, 4294901760
  %7019 = vmatpush1.msra.mxu0 %v7018
  %v7020 = vand.u32 %v6771, 4294901760
  %v7021 = vsub.f32 %v6771, %v7020
  %v7022 = vand.u32 %v7021, 4294901760
  %v7023 = vsub.f32 %v7021, %v7022
  %v7024 = vand.u32 %v7023, 4294901760
  %7025 = vmatprep.subr.mxu0 %v7024
  %v7026 = vand.u32 %v6770, 4294901760
  %v7027 = vsub.f32 %v6770, %v7026
  %v7028 = vand.u32 %v7027, 4294901760
  %v7029 = vsub.f32 %v7027, %v7028
  %v7030 = vand.u32 %v7029, 4294901760
  %7031 = vmatpush1.msra.mxu0 %v7030
  %v7032 = vand.u32 %v6769, 4294901760
  %v7033 = vsub.f32 %v6769, %v7032
  %v7034 = vand.u32 %v7033, 4294901760
  %v7035 = vsub.f32 %v7033, %v7034
  %v7036 = vand.u32 %v7035, 4294901760
  %7037 = vmatprep.subr.mxu0 %v7036
  %v7038 = vand.u32 %v6768, 4294901760
  %v7039 = vsub.f32 %v6768, %v7038
  %v7040 = vand.u32 %v7039, 4294901760
  %v7041 = vsub.f32 %v7039, %v7040
  %v7042 = vand.u32 %v7041, 4294901760
  %7043 = vmatpush1.msra.mxu0 %v7042
  %v7044 = vand.u32 %v6767, 4294901760
  %v7045 = vsub.f32 %v6767, %v7044
  %v7046 = vand.u32 %v7045, 4294901760
  %v7047 = vsub.f32 %v7045, %v7046
  %v7048 = vand.u32 %v7047, 4294901760
  %7049 = vmatprep.subr.mxu0 %v7048
  %v7050 = vand.u32 %v6766, 4294901760
  %v7051 = vsub.f32 %v6766, %v7050
  %v7052 = vand.u32 %v7051, 4294901760
  %v7053 = vsub.f32 %v7051, %v7052
  %v7054 = vand.u32 %v7053, 4294901760
  %7055 = vmatpush1.msra.mxu0 %v7054
  %v7056 = vand.u32 %v6765, 4294901760
  %v7057 = vsub.f32 %v6765, %v7056
  %v7058 = vand.u32 %v7057, 4294901760
  %v7059 = vsub.f32 %v7057, %v7058
  %v7060 = vand.u32 %v7059, 4294901760
  %7061 = vmatprep.subr.mxu0 %v7060
  %v7062 = vand.u32 %v6764, 4294901760
  %v7063 = vsub.f32 %v6764, %v7062
  %v7064 = vand.u32 %v7063, 4294901760
  %v7065 = vsub.f32 %v7063, %v7064
  %v7066 = vand.u32 %v7065, 4294901760
  %7067 = vmatpush1.msra.mxu0 %v7066
  %v7068 = vand.u32 %v6763, 4294901760
  %v7069 = vsub.f32 %v6763, %v7068
  %v7070 = vand.u32 %v7069, 4294901760
  %v7071 = vsub.f32 %v7069, %v7070
  %v7072 = vand.u32 %v7071, 4294901760
  %7073 = vmatprep.subr.mxu0 %v7072
  %v7074 = vand.u32 %v6762, 4294901760
  %v7075 = vsub.f32 %v6762, %v7074
  %v7076 = vand.u32 %v7075, 4294901760
  %v7077 = vsub.f32 %v7075, %v7076
  %v7078 = vand.u32 %v7077, 4294901760
  %7079 = vmatpush1.msra.mxu0 %v7078
  %v7080 = vand.u32 %v6761, 4294901760
  %v7081 = vsub.f32 %v6761, %v7080
  %v7082 = vand.u32 %v7081, 4294901760
  %v7083 = vsub.f32 %v7081, %v7082
  %v7084 = vand.u32 %v7083, 4294901760
  %7085 = vmatprep.subr.mxu0 %v7084
  %v7086 = vand.u32 %v6760, 4294901760
  %v7087 = vsub.f32 %v6760, %v7086
  %v7088 = vand.u32 %v7087, 4294901760
  %v7089 = vsub.f32 %v7087, %v7088
  %v7090 = vand.u32 %v7089, 4294901760
  %7091 = vmatpush1.msra.mxu0 %v7090
  %7092 = vmatprep.subr.mxu0 0.0
  %7093 = vmatpush2.msra.mxu0 0.0
  %7094 = vmatprep.subr.mxu0 0.0
  %7095 = vmatpush2.msra.mxu0 0.0
  %7096 = vmatprep.subr.mxu0 0.0
  %7097 = vmatpush2.msra.mxu0 0.0
  %7098 = vmatprep.subr.mxu0 0.0
  %7099 = vmatpush2.msra.mxu0 0.0
  %7100 = vmatprep.subr.mxu0 0.0
  %7101 = vmatpush2.msra.mxu0 0.0
  %7102 = vmatprep.subr.mxu0 0.0
  %7103 = vmatpush2.msra.mxu0 0.0
  %7104 = vmatprep.subr.mxu0 0.0
  %7105 = vmatpush2.msra.mxu0 0.0
  %7106 = vmatprep.subr.mxu0 0.0
  %7107 = vmatpush2.msra.mxu0 0.0
  %7108 = vmatprep.subr.mxu0 0.0
  %7109 = vmatpush2.msra.mxu0 0.0
  %7110 = vmatprep.subr.mxu0 0.0
  %7111 = vmatpush2.msra.mxu0 0.0
  %7112 = vmatprep.subr.mxu0 0.0
  %7113 = vmatpush2.msra.mxu0 0.0
  %7114 = vmatprep.subr.mxu0 0.0
  %7115 = vmatpush2.msra.mxu0 0.0
  %7116 = vmatprep.subr.mxu0 0.0
  %7117 = vmatpush2.msra.mxu0 0.0
  %7118 = vmatprep.subr.mxu0 0.0
  %7119 = vmatpush2.msra.mxu0 0.0
  %7120 = vmatprep.subr.mxu0 0.0
  %7121 = vmatpush2.msra.mxu0 0.0
  %7122 = vmatprep.subr.mxu0 0.0
  %7123 = vmatpush2.msra.mxu0 0.0
  %7124 = vmatprep.mubr.f32.mxu0 0.0
  %v7125 = vand.u32 %v25, 4294901760
  %7126 = vmatmul.mubr.f32.gmra.mxu0 %v7125
  %v7127 = vpop.f32.mrf.mxu0
  %v7128 = vadd.f32 %v6896, %v7127
  %v7129 = vpop.f32.mrf.mxu0
  %v7130 = vadd.f32 %v6898, %v7129
  %7131 = vdwg.mxu0
  %v7132 = vand.u32 %v6791, 4294901760
  %v7133 = vsub.f32 %v6791, %v7132
  %7134 = vmatprep.subr.mxu0 %v7133
  %v7135 = vand.u32 %v6790, 4294901760
  %v7136 = vsub.f32 %v6790, %v7135
  %7137 = vmatpush1.msra.mxu0 %v7136
  %v7138 = vand.u32 %v6789, 4294901760
  %v7139 = vsub.f32 %v6789, %v7138
  %7140 = vmatprep.subr.mxu0 %v7139
  %v7141 = vand.u32 %v6788, 4294901760
  %v7142 = vsub.f32 %v6788, %v7141
  %7143 = vmatpush1.msra.mxu0 %v7142
  %v7144 = vand.u32 %v6787, 4294901760
  %v7145 = vsub.f32 %v6787, %v7144
  %7146 = vmatprep.subr.mxu0 %v7145
  %v7147 = vand.u32 %v6786, 4294901760
  %v7148 = vsub.f32 %v6786, %v7147
  %7149 = vmatpush1.msra.mxu0 %v7148
  %v7150 = vand.u32 %v6785, 4294901760
  %v7151 = vsub.f32 %v6785, %v7150
  %7152 = vmatprep.subr.mxu0 %v7151
  %v7153 = vand.u32 %v6784, 4294901760
  %v7154 = vsub.f32 %v6784, %v7153
  %7155 = vmatpush1.msra.mxu0 %v7154
  %v7156 = vand.u32 %v6783, 4294901760
  %v7157 = vsub.f32 %v6783, %v7156
  %7158 = vmatprep.subr.mxu0 %v7157
  %v7159 = vand.u32 %v6782, 4294901760
  %v7160 = vsub.f32 %v6782, %v7159
  %7161 = vmatpush1.msra.mxu0 %v7160
  %v7162 = vand.u32 %v6781, 4294901760
  %v7163 = vsub.f32 %v6781, %v7162
  %7164 = vmatprep.subr.mxu0 %v7163
  %v7165 = vand.u32 %v6780, 4294901760
  %v7166 = vsub.f32 %v6780, %v7165
  %7167 = vmatpush1.msra.mxu0 %v7166
  %v7168 = vand.u32 %v6779, 4294901760
  %v7169 = vsub.f32 %v6779, %v7168
  %7170 = vmatprep.subr.mxu0 %v7169
  %v7171 = vand.u32 %v6778, 4294901760
  %v7172 = vsub.f32 %v6778, %v7171
  %7173 = vmatpush1.msra.mxu0 %v7172
  %v7174 = vand.u32 %v6777, 4294901760
  %v7175 = vsub.f32 %v6777, %v7174
  %7176 = vmatprep.subr.mxu0 %v7175
  %v7177 = vand.u32 %v6776, 4294901760
  %v7178 = vsub.f32 %v6776, %v7177
  %7179 = vmatpush1.msra.mxu0 %v7178
  %v7180 = vand.u32 %v6775, 4294901760
  %v7181 = vsub.f32 %v6775, %v7180
  %7182 = vmatprep.subr.mxu0 %v7181
  %v7183 = vand.u32 %v6774, 4294901760
  %v7184 = vsub.f32 %v6774, %v7183
  %7185 = vmatpush1.msra.mxu0 %v7184
  %v7186 = vand.u32 %v6773, 4294901760
  %v7187 = vsub.f32 %v6773, %v7186
  %7188 = vmatprep.subr.mxu0 %v7187
  %v7189 = vand.u32 %v6772, 4294901760
  %v7190 = vsub.f32 %v6772, %v7189
  %7191 = vmatpush1.msra.mxu0 %v7190
  %v7192 = vand.u32 %v6771, 4294901760
  %v7193 = vsub.f32 %v6771, %v7192
  %7194 = vmatprep.subr.mxu0 %v7193
  %v7195 = vand.u32 %v6770, 4294901760
  %v7196 = vsub.f32 %v6770, %v7195
  %7197 = vmatpush1.msra.mxu0 %v7196
  %v7198 = vand.u32 %v6769, 4294901760
  %v7199 = vsub.f32 %v6769, %v7198
  %7200 = vmatprep.subr.mxu0 %v7199
  %v7201 = vand.u32 %v6768, 4294901760
  %v7202 = vsub.f32 %v6768, %v7201
  %7203 = vmatpush1.msra.mxu0 %v7202
  %v7204 = vand.u32 %v6767, 4294901760
  %v7205 = vsub.f32 %v6767, %v7204
  %7206 = vmatprep.subr.mxu0 %v7205
  %v7207 = vand.u32 %v6766, 4294901760
  %v7208 = vsub.f32 %v6766, %v7207
  %7209 = vmatpush1.msra.mxu0 %v7208
  %v7210 = vand.u32 %v6765, 4294901760
  %v7211 = vsub.f32 %v6765, %v7210
  %7212 = vmatprep.subr.mxu0 %v7211
  %v7213 = vand.u32 %v6764, 4294901760
  %v7214 = vsub.f32 %v6764, %v7213
  %7215 = vmatpush1.msra.mxu0 %v7214
  %v7216 = vand.u32 %v6763, 4294901760
  %v7217 = vsub.f32 %v6763, %v7216
  %7218 = vmatprep.subr.mxu0 %v7217
  %v7219 = vand.u32 %v6762, 4294901760
  %v7220 = vsub.f32 %v6762, %v7219
  %7221 = vmatpush1.msra.mxu0 %v7220
  %v7222 = vand.u32 %v6761, 4294901760
  %v7223 = vsub.f32 %v6761, %v7222
  %7224 = vmatprep.subr.mxu0 %v7223
  %v7225 = vand.u32 %v6760, 4294901760
  %v7226 = vsub.f32 %v6760, %v7225
  %7227 = vmatpush1.msra.mxu0 %v7226
  %7228 = vmatprep.subr.mxu0 0.0
  %7229 = vmatpush2.msra.mxu0 0.0
  %7230 = vmatprep.subr.mxu0 0.0
  %7231 = vmatpush2.msra.mxu0 0.0
  %7232 = vmatprep.subr.mxu0 0.0
  %7233 = vmatpush2.msra.mxu0 0.0
  %7234 = vmatprep.subr.mxu0 0.0
  %7235 = vmatpush2.msra.mxu0 0.0
  %7236 = vmatprep.subr.mxu0 0.0
  %7237 = vmatpush2.msra.mxu0 0.0
  %7238 = vmatprep.subr.mxu0 0.0
  %7239 = vmatpush2.msra.mxu0 0.0
  %7240 = vmatprep.subr.mxu0 0.0
  %7241 = vmatpush2.msra.mxu0 0.0
  %7242 = vmatprep.subr.mxu0 0.0
  %7243 = vmatpush2.msra.mxu0 0.0
  %7244 = vmatprep.subr.mxu0 0.0
  %7245 = vmatpush2.msra.mxu0 0.0
  %7246 = vmatprep.subr.mxu0 0.0
  %7247 = vmatpush2.msra.mxu0 0.0
  %7248 = vmatprep.subr.mxu0 0.0
  %7249 = vmatpush2.msra.mxu0 0.0
  %7250 = vmatprep.subr.mxu0 0.0
  %7251 = vmatpush2.msra.mxu0 0.0
  %7252 = vmatprep.subr.mxu0 0.0
  %7253 = vmatpush2.msra.mxu0 0.0
  %7254 = vmatprep.subr.mxu0 0.0
  %7255 = vmatpush2.msra.mxu0 0.0
  %7256 = vmatprep.subr.mxu0 0.0
  %7257 = vmatpush2.msra.mxu0 0.0
  %7258 = vmatprep.subr.mxu0 0.0
  %7259 = vmatpush2.msra.mxu0 0.0
  %7260 = vmatprep.mubr.f32.mxu0 0.0
  %v7261 = vand.u32 %v25, 4294901760
  %v7262 = vsub.f32 %v25, %v7261
  %7263 = vmatmul.mubr.f32.gmra.mxu0 %v7262
  %v7264 = vpop.f32.mrf.mxu0
  %v7265 = vadd.f32 %v7128, %v7264
  %v7266 = vpop.f32.mrf.mxu0
  %v7267 = vadd.f32 %v7130, %v7266
  %7268 = vdwg.mxu0
  %v7269 = vand.u32 %v6791, 4294901760
  %7270 = vmatprep.subr.mxu0 %v7269
  %v7271 = vand.u32 %v6790, 4294901760
  %7272 = vmatpush1.msra.mxu0 %v7271
  %v7273 = vand.u32 %v6789, 4294901760
  %7274 = vmatprep.subr.mxu0 %v7273
  %v7275 = vand.u32 %v6788, 4294901760
  %7276 = vmatpush1.msra.mxu0 %v7275
  %v7277 = vand.u32 %v6787, 4294901760
  %7278 = vmatprep.subr.mxu0 %v7277
  %v7279 = vand.u32 %v6786, 4294901760
  %7280 = vmatpush1.msra.mxu0 %v7279
  %v7281 = vand.u32 %v6785, 4294901760
  %7282 = vmatprep.subr.mxu0 %v7281
  %v7283 = vand.u32 %v6784, 4294901760
  %7284 = vmatpush1.msra.mxu0 %v7283
  %v7285 = vand.u32 %v6783, 4294901760
  %7286 = vmatprep.subr.mxu0 %v7285
  %v7287 = vand.u32 %v6782, 4294901760
  %7288 = vmatpush1.msra.mxu0 %v7287
  %v7289 = vand.u32 %v6781, 4294901760
  %7290 = vmatprep.subr.mxu0 %v7289
  %v7291 = vand.u32 %v6780, 4294901760
  %7292 = vmatpush1.msra.mxu0 %v7291
  %v7293 = vand.u32 %v6779, 4294901760
  %7294 = vmatprep.subr.mxu0 %v7293
  %v7295 = vand.u32 %v6778, 4294901760
  %7296 = vmatpush1.msra.mxu0 %v7295
  %v7297 = vand.u32 %v6777, 4294901760
  %7298 = vmatprep.subr.mxu0 %v7297
  %v7299 = vand.u32 %v6776, 4294901760
  %7300 = vmatpush1.msra.mxu0 %v7299
  %v7301 = vand.u32 %v6775, 4294901760
  %7302 = vmatprep.subr.mxu0 %v7301
  %v7303 = vand.u32 %v6774, 4294901760
  %7304 = vmatpush1.msra.mxu0 %v7303
  %v7305 = vand.u32 %v6773, 4294901760
  %7306 = vmatprep.subr.mxu0 %v7305
  %v7307 = vand.u32 %v6772, 4294901760
  %7308 = vmatpush1.msra.mxu0 %v7307
  %v7309 = vand.u32 %v6771, 4294901760
  %7310 = vmatprep.subr.mxu0 %v7309
  %v7311 = vand.u32 %v6770, 4294901760
  %7312 = vmatpush1.msra.mxu0 %v7311
  %v7313 = vand.u32 %v6769, 4294901760
  %7314 = vmatprep.subr.mxu0 %v7313
  %v7315 = vand.u32 %v6768, 4294901760
  %7316 = vmatpush1.msra.mxu0 %v7315
  %v7317 = vand.u32 %v6767, 4294901760
  %7318 = vmatprep.subr.mxu0 %v7317
  %v7319 = vand.u32 %v6766, 4294901760
  %7320 = vmatpush1.msra.mxu0 %v7319
  %v7321 = vand.u32 %v6765, 4294901760
  %7322 = vmatprep.subr.mxu0 %v7321
  %v7323 = vand.u32 %v6764, 4294901760
  %7324 = vmatpush1.msra.mxu0 %v7323
  %v7325 = vand.u32 %v6763, 4294901760
  %7326 = vmatprep.subr.mxu0 %v7325
  %v7327 = vand.u32 %v6762, 4294901760
  %7328 = vmatpush1.msra.mxu0 %v7327
  %v7329 = vand.u32 %v6761, 4294901760
  %7330 = vmatprep.subr.mxu0 %v7329
  %v7331 = vand.u32 %v6760, 4294901760
  %7332 = vmatpush1.msra.mxu0 %v7331
  %7333 = vmatprep.subr.mxu0 0.0
  %7334 = vmatpush2.msra.mxu0 0.0
  %7335 = vmatprep.subr.mxu0 0.0
  %7336 = vmatpush2.msra.mxu0 0.0
  %7337 = vmatprep.subr.mxu0 0.0
  %7338 = vmatpush2.msra.mxu0 0.0
  %7339 = vmatprep.subr.mxu0 0.0
  %7340 = vmatpush2.msra.mxu0 0.0
  %7341 = vmatprep.subr.mxu0 0.0
  %7342 = vmatpush2.msra.mxu0 0.0
  %7343 = vmatprep.subr.mxu0 0.0
  %7344 = vmatpush2.msra.mxu0 0.0
  %7345 = vmatprep.subr.mxu0 0.0
  %7346 = vmatpush2.msra.mxu0 0.0
  %7347 = vmatprep.subr.mxu0 0.0
  %7348 = vmatpush2.msra.mxu0 0.0
  %7349 = vmatprep.subr.mxu0 0.0
  %7350 = vmatpush2.msra.mxu0 0.0
  %7351 = vmatprep.subr.mxu0 0.0
  %7352 = vmatpush2.msra.mxu0 0.0
  %7353 = vmatprep.subr.mxu0 0.0
  %7354 = vmatpush2.msra.mxu0 0.0
  %7355 = vmatprep.subr.mxu0 0.0
  %7356 = vmatpush2.msra.mxu0 0.0
  %7357 = vmatprep.subr.mxu0 0.0
  %7358 = vmatpush2.msra.mxu0 0.0
  %7359 = vmatprep.subr.mxu0 0.0
  %7360 = vmatpush2.msra.mxu0 0.0
  %7361 = vmatprep.subr.mxu0 0.0
  %7362 = vmatpush2.msra.mxu0 0.0
  %7363 = vmatprep.subr.mxu0 0.0
  %7364 = vmatpush2.msra.mxu0 0.0
  %7365 = vmatprep.mubr.f32.mxu0 0.0
  %v7366 = vand.u32 %v25, 4294901760
  %v7367 = vsub.f32 %v25, %v7366
  %v7368 = vand.u32 %v7367, 4294901760
  %7369 = vmatmul.mubr.f32.gmra.mxu0 %v7368
  %v7370 = vpop.f32.mrf.mxu0
  %v7371 = vadd.f32 %v7265, %v7370
  %v7372 = vpop.f32.mrf.mxu0
  %v7373 = vadd.f32 %v7267, %v7372
  %7374 = vdwg.mxu0
  %v7375 = vand.u32 %v6791, 4294901760
  %v7376 = vsub.f32 %v6791, %v7375
  %v7377 = vand.u32 %v7376, 4294901760
  %7378 = vmatprep.subr.mxu0 %v7377
  %v7379 = vand.u32 %v6790, 4294901760
  %v7380 = vsub.f32 %v6790, %v7379
  %v7381 = vand.u32 %v7380, 4294901760
  %7382 = vmatpush1.msra.mxu0 %v7381
  %v7383 = vand.u32 %v6789, 4294901760
  %v7384 = vsub.f32 %v6789, %v7383
  %v7385 = vand.u32 %v7384, 4294901760
  %7386 = vmatprep.subr.mxu0 %v7385
  %v7387 = vand.u32 %v6788, 4294901760
  %v7388 = vsub.f32 %v6788, %v7387
  %v7389 = vand.u32 %v7388, 4294901760
  %7390 = vmatpush1.msra.mxu0 %v7389
  %v7391 = vand.u32 %v6787, 4294901760
  %v7392 = vsub.f32 %v6787, %v7391
  %v7393 = vand.u32 %v7392, 4294901760
  %7394 = vmatprep.subr.mxu0 %v7393
  %v7395 = vand.u32 %v6786, 4294901760
  %v7396 = vsub.f32 %v6786, %v7395
  %v7397 = vand.u32 %v7396, 4294901760
  %7398 = vmatpush1.msra.mxu0 %v7397
  %v7399 = vand.u32 %v6785, 4294901760
  %v7400 = vsub.f32 %v6785, %v7399
  %v7401 = vand.u32 %v7400, 4294901760
  %7402 = vmatprep.subr.mxu0 %v7401
  %v7403 = vand.u32 %v6784, 4294901760
  %v7404 = vsub.f32 %v6784, %v7403
  %v7405 = vand.u32 %v7404, 4294901760
  %7406 = vmatpush1.msra.mxu0 %v7405
  %v7407 = vand.u32 %v6783, 4294901760
  %v7408 = vsub.f32 %v6783, %v7407
  %v7409 = vand.u32 %v7408, 4294901760
  %7410 = vmatprep.subr.mxu0 %v7409
  %v7411 = vand.u32 %v6782, 4294901760
  %v7412 = vsub.f32 %v6782, %v7411
  %v7413 = vand.u32 %v7412, 4294901760
  %7414 = vmatpush1.msra.mxu0 %v7413
  %v7415 = vand.u32 %v6781, 4294901760
  %v7416 = vsub.f32 %v6781, %v7415
  %v7417 = vand.u32 %v7416, 4294901760
  %7418 = vmatprep.subr.mxu0 %v7417
  %v7419 = vand.u32 %v6780, 4294901760
  %v7420 = vsub.f32 %v6780, %v7419
  %v7421 = vand.u32 %v7420, 4294901760
  %7422 = vmatpush1.msra.mxu0 %v7421
  %v7423 = vand.u32 %v6779, 4294901760
  %v7424 = vsub.f32 %v6779, %v7423
  %v7425 = vand.u32 %v7424, 4294901760
  %7426 = vmatprep.subr.mxu0 %v7425
  %v7427 = vand.u32 %v6778, 4294901760
  %v7428 = vsub.f32 %v6778, %v7427
  %v7429 = vand.u32 %v7428, 4294901760
  %7430 = vmatpush1.msra.mxu0 %v7429
  %v7431 = vand.u32 %v6777, 4294901760
  %v7432 = vsub.f32 %v6777, %v7431
  %v7433 = vand.u32 %v7432, 4294901760
  %7434 = vmatprep.subr.mxu0 %v7433
  %v7435 = vand.u32 %v6776, 4294901760
  %v7436 = vsub.f32 %v6776, %v7435
  %v7437 = vand.u32 %v7436, 4294901760
  %7438 = vmatpush1.msra.mxu0 %v7437
  %v7439 = vand.u32 %v6775, 4294901760
  %v7440 = vsub.f32 %v6775, %v7439
  %v7441 = vand.u32 %v7440, 4294901760
  %7442 = vmatprep.subr.mxu0 %v7441
  %v7443 = vand.u32 %v6774, 4294901760
  %v7444 = vsub.f32 %v6774, %v7443
  %v7445 = vand.u32 %v7444, 4294901760
  %7446 = vmatpush1.msra.mxu0 %v7445
  %v7447 = vand.u32 %v6773, 4294901760
  %v7448 = vsub.f32 %v6773, %v7447
  %v7449 = vand.u32 %v7448, 4294901760
  %7450 = vmatprep.subr.mxu0 %v7449
  %v7451 = vand.u32 %v6772, 4294901760
  %v7452 = vsub.f32 %v6772, %v7451
  %v7453 = vand.u32 %v7452, 4294901760
  %7454 = vmatpush1.msra.mxu0 %v7453
  %v7455 = vand.u32 %v6771, 4294901760
  %v7456 = vsub.f32 %v6771, %v7455
  %v7457 = vand.u32 %v7456, 4294901760
  %7458 = vmatprep.subr.mxu0 %v7457
  %v7459 = vand.u32 %v6770, 4294901760
  %v7460 = vsub.f32 %v6770, %v7459
  %v7461 = vand.u32 %v7460, 4294901760
  %7462 = vmatpush1.msra.mxu0 %v7461
  %v7463 = vand.u32 %v6769, 4294901760
  %v7464 = vsub.f32 %v6769, %v7463
  %v7465 = vand.u32 %v7464, 4294901760
  %7466 = vmatprep.subr.mxu0 %v7465
  %v7467 = vand.u32 %v6768, 4294901760
  %v7468 = vsub.f32 %v6768, %v7467
  %v7469 = vand.u32 %v7468, 4294901760
  %7470 = vmatpush1.msra.mxu0 %v7469
  %v7471 = vand.u32 %v6767, 4294901760
  %v7472 = vsub.f32 %v6767, %v7471
  %v7473 = vand.u32 %v7472, 4294901760
  %7474 = vmatprep.subr.mxu0 %v7473
  %v7475 = vand.u32 %v6766, 4294901760
  %v7476 = vsub.f32 %v6766, %v7475
  %v7477 = vand.u32 %v7476, 4294901760
  %7478 = vmatpush1.msra.mxu0 %v7477
  %v7479 = vand.u32 %v6765, 4294901760
  %v7480 = vsub.f32 %v6765, %v7479
  %v7481 = vand.u32 %v7480, 4294901760
  %7482 = vmatprep.subr.mxu0 %v7481
  %v7483 = vand.u32 %v6764, 4294901760
  %v7484 = vsub.f32 %v6764, %v7483
  %v7485 = vand.u32 %v7484, 4294901760
  %7486 = vmatpush1.msra.mxu0 %v7485
  %v7487 = vand.u32 %v6763, 4294901760
  %v7488 = vsub.f32 %v6763, %v7487
  %v7489 = vand.u32 %v7488, 4294901760
  %7490 = vmatprep.subr.mxu0 %v7489
  %v7491 = vand.u32 %v6762, 4294901760
  %v7492 = vsub.f32 %v6762, %v7491
  %v7493 = vand.u32 %v7492, 4294901760
  %7494 = vmatpush1.msra.mxu0 %v7493
  %v7495 = vand.u32 %v6761, 4294901760
  %v7496 = vsub.f32 %v6761, %v7495
  %v7497 = vand.u32 %v7496, 4294901760
  %7498 = vmatprep.subr.mxu0 %v7497
  %v7499 = vand.u32 %v6760, 4294901760
  %v7500 = vsub.f32 %v6760, %v7499
  %v7501 = vand.u32 %v7500, 4294901760
  %7502 = vmatpush1.msra.mxu0 %v7501
  %7503 = vmatprep.subr.mxu0 0.0
  %7504 = vmatpush2.msra.mxu0 0.0
  %7505 = vmatprep.subr.mxu0 0.0
  %7506 = vmatpush2.msra.mxu0 0.0
  %7507 = vmatprep.subr.mxu0 0.0
  %7508 = vmatpush2.msra.mxu0 0.0
  %7509 = vmatprep.subr.mxu0 0.0
  %7510 = vmatpush2.msra.mxu0 0.0
  %7511 = vmatprep.subr.mxu0 0.0
  %7512 = vmatpush2.msra.mxu0 0.0
  %7513 = vmatprep.subr.mxu0 0.0
  %7514 = vmatpush2.msra.mxu0 0.0
  %7515 = vmatprep.subr.mxu0 0.0
  %7516 = vmatpush2.msra.mxu0 0.0
  %7517 = vmatprep.subr.mxu0 0.0
  %7518 = vmatpush2.msra.mxu0 0.0
  %7519 = vmatprep.subr.mxu0 0.0
  %7520 = vmatpush2.msra.mxu0 0.0
  %7521 = vmatprep.subr.mxu0 0.0
  %7522 = vmatpush2.msra.mxu0 0.0
  %7523 = vmatprep.subr.mxu0 0.0
  %7524 = vmatpush2.msra.mxu0 0.0
  %7525 = vmatprep.subr.mxu0 0.0
  %7526 = vmatpush2.msra.mxu0 0.0
  %7527 = vmatprep.subr.mxu0 0.0
  %7528 = vmatpush2.msra.mxu0 0.0
  %7529 = vmatprep.subr.mxu0 0.0
  %7530 = vmatpush2.msra.mxu0 0.0
  %7531 = vmatprep.subr.mxu0 0.0
  %7532 = vmatpush2.msra.mxu0 0.0
  %7533 = vmatprep.subr.mxu0 0.0
  %7534 = vmatpush2.msra.mxu0 0.0
  %7535 = vmatprep.mubr.f32.mxu0 0.0
  %v7536 = vand.u32 %v25, 4294901760
  %7537 = vmatmul.mubr.f32.gmra.mxu0 %v7536
  %v7538 = vpop.f32.mrf.mxu0
  %v7539 = vadd.f32 %v7371, %v7538
  %v7540 = vpop.f32.mrf.mxu0
  %v7541 = vadd.f32 %v7373, %v7540
  %7542 = vdwg.mxu0
  %v7543 = vand.u32 %v6791, 4294901760
  %7544 = vmatprep.subr.mxu0 %v7543
  %v7545 = vand.u32 %v6790, 4294901760
  %7546 = vmatpush1.msra.mxu0 %v7545
  %v7547 = vand.u32 %v6789, 4294901760
  %7548 = vmatprep.subr.mxu0 %v7547
  %v7549 = vand.u32 %v6788, 4294901760
  %7550 = vmatpush1.msra.mxu0 %v7549
  %v7551 = vand.u32 %v6787, 4294901760
  %7552 = vmatprep.subr.mxu0 %v7551
  %v7553 = vand.u32 %v6786, 4294901760
  %7554 = vmatpush1.msra.mxu0 %v7553
  %v7555 = vand.u32 %v6785, 4294901760
  %7556 = vmatprep.subr.mxu0 %v7555
  %v7557 = vand.u32 %v6784, 4294901760
  %7558 = vmatpush1.msra.mxu0 %v7557
  %v7559 = vand.u32 %v6783, 4294901760
  %7560 = vmatprep.subr.mxu0 %v7559
  %v7561 = vand.u32 %v6782, 4294901760
  %7562 = vmatpush1.msra.mxu0 %v7561
  %v7563 = vand.u32 %v6781, 4294901760
  %7564 = vmatprep.subr.mxu0 %v7563
  %v7565 = vand.u32 %v6780, 4294901760
  %7566 = vmatpush1.msra.mxu0 %v7565
  %v7567 = vand.u32 %v6779, 4294901760
  %7568 = vmatprep.subr.mxu0 %v7567
  %v7569 = vand.u32 %v6778, 4294901760
  %7570 = vmatpush1.msra.mxu0 %v7569
  %v7571 = vand.u32 %v6777, 4294901760
  %7572 = vmatprep.subr.mxu0 %v7571
  %v7573 = vand.u32 %v6776, 4294901760
  %7574 = vmatpush1.msra.mxu0 %v7573
  %v7575 = vand.u32 %v6775, 4294901760
  %7576 = vmatprep.subr.mxu0 %v7575
  %v7577 = vand.u32 %v6774, 4294901760
  %7578 = vmatpush1.msra.mxu0 %v7577
  %v7579 = vand.u32 %v6773, 4294901760
  %7580 = vmatprep.subr.mxu0 %v7579
  %v7581 = vand.u32 %v6772, 4294901760
  %7582 = vmatpush1.msra.mxu0 %v7581
  %v7583 = vand.u32 %v6771, 4294901760
  %7584 = vmatprep.subr.mxu0 %v7583
  %v7585 = vand.u32 %v6770, 4294901760
  %7586 = vmatpush1.msra.mxu0 %v7585
  %v7587 = vand.u32 %v6769, 4294901760
  %7588 = vmatprep.subr.mxu0 %v7587
  %v7589 = vand.u32 %v6768, 4294901760
  %7590 = vmatpush1.msra.mxu0 %v7589
  %v7591 = vand.u32 %v6767, 4294901760
  %7592 = vmatprep.subr.mxu0 %v7591
  %v7593 = vand.u32 %v6766, 4294901760
  %7594 = vmatpush1.msra.mxu0 %v7593
  %v7595 = vand.u32 %v6765, 4294901760
  %7596 = vmatprep.subr.mxu0 %v7595
  %v7597 = vand.u32 %v6764, 4294901760
  %7598 = vmatpush1.msra.mxu0 %v7597
  %v7599 = vand.u32 %v6763, 4294901760
  %7600 = vmatprep.subr.mxu0 %v7599
  %v7601 = vand.u32 %v6762, 4294901760
  %7602 = vmatpush1.msra.mxu0 %v7601
  %v7603 = vand.u32 %v6761, 4294901760
  %7604 = vmatprep.subr.mxu0 %v7603
  %v7605 = vand.u32 %v6760, 4294901760
  %7606 = vmatpush1.msra.mxu0 %v7605
  %7607 = vmatprep.subr.mxu0 0.0
  %7608 = vmatpush2.msra.mxu0 0.0
  %7609 = vmatprep.subr.mxu0 0.0
  %7610 = vmatpush2.msra.mxu0 0.0
  %7611 = vmatprep.subr.mxu0 0.0
  %7612 = vmatpush2.msra.mxu0 0.0
  %7613 = vmatprep.subr.mxu0 0.0
  %7614 = vmatpush2.msra.mxu0 0.0
  %7615 = vmatprep.subr.mxu0 0.0
  %7616 = vmatpush2.msra.mxu0 0.0
  %7617 = vmatprep.subr.mxu0 0.0
  %7618 = vmatpush2.msra.mxu0 0.0
  %7619 = vmatprep.subr.mxu0 0.0
  %7620 = vmatpush2.msra.mxu0 0.0
  %7621 = vmatprep.subr.mxu0 0.0
  %7622 = vmatpush2.msra.mxu0 0.0
  %7623 = vmatprep.subr.mxu0 0.0
  %7624 = vmatpush2.msra.mxu0 0.0
  %7625 = vmatprep.subr.mxu0 0.0
  %7626 = vmatpush2.msra.mxu0 0.0
  %7627 = vmatprep.subr.mxu0 0.0
  %7628 = vmatpush2.msra.mxu0 0.0
  %7629 = vmatprep.subr.mxu0 0.0
  %7630 = vmatpush2.msra.mxu0 0.0
  %7631 = vmatprep.subr.mxu0 0.0
  %7632 = vmatpush2.msra.mxu0 0.0
  %7633 = vmatprep.subr.mxu0 0.0
  %7634 = vmatpush2.msra.mxu0 0.0
  %7635 = vmatprep.subr.mxu0 0.0
  %7636 = vmatpush2.msra.mxu0 0.0
  %7637 = vmatprep.subr.mxu0 0.0
  %7638 = vmatpush2.msra.mxu0 0.0
  %7639 = vmatprep.mubr.f32.mxu0 0.0
  %v7640 = vand.u32 %v25, 4294901760
  %7641 = vmatmul.mubr.f32.gmra.mxu0 %v7640
  %v7642 = vpop.f32.mrf.mxu0
  %v7643 = vadd.f32 %v7539, %v7642
  %v7644 = vpop.f32.mrf.mxu0
  %v7645 = vadd.f32 %v7541, %v7644
  %7646 = vdwg.mxu0
  %v7647 = vmax.f32 %v7643, 0.0
  %v7648 = vmax.f32 %v7645, 0.0
  %v7651 = vrot.slane %v7647, 1
  %v7652 = vrot.slane %v7648, 1
  %v7655 = vmul.f32 %v7647, %v7651
  %v7656 = vmul.f32 %v7648, %v7652
  %v7659 = vrot.slane %v7655, 2
  %v7660 = vrot.slane %v7656, 2
  %v7663 = vadd.f32 %v23, %v7659
  %v7664 = vadd.f32 %v24, %v7660
  %v7667 = vrot.slane %v7643, 4
  %v7668 = vrot.slane %v7645, 4
  %v7671 = vadd.f32 %v7663, %v7667
  %v7672 = vadd.f32 %v7664, %v7668
  %v7673 = vmax.f32 %v7671, 0.0
  %v7674 = vmax.f32 %v7672, 0.0
  %v7675 = vand.u32 2147483647, %v7671
  %v7676 = vand.u32 2147483647, %v7672
  %v7677 = vsub.f32 0.0, %v7675
  %v7678 = vsub.f32 0.0, %v7676
  %v7679 = vmul.f32 %v7677, 1.442695
  %v7680 = vpow.pop %v7679
  %v7681 = vmul.f32 %v7678, 1.442695
  %v7682 = vpow.pop %v7681
  %v7683 = vadd.f32 %v7680, 1.0
  %v7684 = vlog2.pop %v7683
  %v7685 = vmul.f32 %v7684, 0.6931472
  %v7686 = vmul.f32 -0.5, %v7680
  %v7687 = vadd.f32 %v7686, 1.0
  %v7688 = vmul.f32 %v7687, %v7680
  %v7689 = vand.u32 2147483647, %v7680
  %vm7690 = vcmp.lt.f32.partialorder %v7689, 0.0004427343
  %v7691 = vsel %vm7690, %v7688, %v7685
  %v7692 = vadd.f32 %v7682, 1.0
  %v7693 = vlog2.pop %v7692
  %v7694 = vmul.f32 %v7693, 0.6931472
  %v7695 = vmul.f32 -0.5, %v7682
  %v7696 = vadd.f32 %v7695, 1.0
  %v7697 = vmul.f32 %v7696, %v7682
  %v7698 = vand.u32 2147483647, %v7682
  %vm7699 = vcmp.lt.f32.partialorder %v7698, 0.0004427343
  %v7700 = vsel %vm7699, %v7697, %v7694
  %v7701 = vadd.f32 %v7673, %v7691
  %v7702 = vadd.f32 %v7674, %v7700
  %v7705 = vcombine.high %v7701, %v7702
  %v7707 = vunpack.c.l.s4 1966171168
  %v7708 = vunpack.c.0.s8 %v7707
  %v7709 = vlaneseq
  %v7710 = vshrl.u32 %v7709, 7
  %v7711 = vsub.s32 %v7708, %v7710
  %v7712 = vrot.slane %v7705, %v7711
  %v7714 = vunpack.c.l.s4 1966171168
  %v7715 = vunpack.c.0.s8 %v7714
  %v7716 = vlaneseq
  %v7717 = vshrl.u32 %v7716, 7
  %v7718 = vsub.s32 %v7715, %v7717
  %v7719 = vrot.slane %v7712, %v7718
  %v7720 = vcombine.high %v7719, %v7719
  %s7722 = scalar_lea.vmem [#allocation2], 6
  %7723 = vst.msk [vmem:[%s7722] ss:$8 sm:$0x3] %vm1122, %v7720
  %7724 = vst.msk [vmem:[%s7722] ss:$8 sm:$0x0] %vm1122, %v7720
  %v7725 = vlaneseq
  %v7726 = vshrl.u32 %v7725, 7
  %v7727 = vsub.s32 7, %v7726
  %v7728 = vrot.slane %v23, %v7727
  %v7729 = vlaneseq
  %v7730 = vshrl.u32 %v7729, 7
  %v7731 = vsub.s32 7, %v7730
  %v7732 = vrot.slane %v24, %v7731
  %v7733 = vld [vmem:[%s1] sm:$0xff]
  %v7734 = vld [vmem:[%s1 + $0x8] sm:$0xff]
  %v7735 = vld [vmem:[%s1 + $0x10] sm:$0xff]
  %v7736 = vld [vmem:[%s1 + $0x18] sm:$0xff]
  %v7737 = vld [vmem:[%s1 + $0x20] sm:$0xff]
  %v7738 = vld [vmem:[%s1 + $0x28] sm:$0xff]
  %v7739 = vld [vmem:[%s1 + $0x30] sm:$0xff]
  %v7740 = vld [vmem:[%s1 + $0x38] sm:$0xff]
  %v7741 = vld [vmem:[%s1 + $0x40] sm:$0xff]
  %v7742 = vld [vmem:[%s1 + $0x48] sm:$0xff]
  %v7743 = vld [vmem:[%s1 + $0x50] sm:$0xff]
  %v7744 = vld [vmem:[%s1 + $0x58] sm:$0xff]
  %v7745 = vld [vmem:[%s1 + $0x60] sm:$0xff]
  %v7746 = vld [vmem:[%s1 + $0x68] sm:$0xff]
  %v7747 = vld [vmem:[%s1 + $0x70] sm:$0xff]
  %v7748 = vld [vmem:[%s1 + $0x78] sm:$0xff]
  %v7749 = vld [vmem:[%s1 + $0x80] sm:$0xff]
  %v7750 = vld [vmem:[%s1 + $0x88] sm:$0xff]
  %v7751 = vld [vmem:[%s1 + $0x90] sm:$0xff]
  %v7752 = vld [vmem:[%s1 + $0x98] sm:$0xff]
  %v7753 = vld [vmem:[%s1 + $0xa0] sm:$0xff]
  %v7754 = vld [vmem:[%s1 + $0xa8] sm:$0xff]
  %v7755 = vld [vmem:[%s1 + $0xb0] sm:$0xff]
  %v7756 = vld [vmem:[%s1 + $0xb8] sm:$0xff]
  %v7757 = vld [vmem:[%s1 + $0xc0] sm:$0xff]
  %v7758 = vld [vmem:[%s1 + $0xc8] sm:$0xff]
  %v7759 = vld [vmem:[%s1 + $0xd0] sm:$0xff]
  %v7760 = vld [vmem:[%s1 + $0xd8] sm:$0xff]
  %v7761 = vld [vmem:[%s1 + $0xe0] sm:$0xff]
  %v7762 = vld [vmem:[%s1 + $0xe8] sm:$0xff]
  %v7763 = vld [vmem:[%s1 + $0xf0] sm:$0xff]
  %v7764 = vld [vmem:[%s1 + $0xf8] sm:$0xff]
  %v7765 = vmul.f32 %v7728, %v7733
  %v7766 = vmul.f32 %v7732, %v7734
  %v7767 = vmul.f32 %v7728, %v7735
  %v7768 = vmul.f32 %v7732, %v7736
  %v7769 = vmul.f32 %v7728, %v7737
  %v7770 = vmul.f32 %v7732, %v7738
  %v7771 = vmul.f32 %v7728, %v7739
  %v7772 = vmul.f32 %v7732, %v7740
  %v7773 = vmul.f32 %v7728, %v7741
  %v7774 = vmul.f32 %v7732, %v7742
  %v7775 = vmul.f32 %v7728, %v7743
  %v7776 = vmul.f32 %v7732, %v7744
  %v7777 = vmul.f32 %v7728, %v7745
  %v7778 = vmul.f32 %v7732, %v7746
  %v7779 = vmul.f32 %v7728, %v7747
  %v7780 = vmul.f32 %v7732, %v7748
  %v7781 = vmul.f32 %v7728, %v7749
  %v7782 = vmul.f32 %v7732, %v7750
  %v7783 = vmul.f32 %v7728, %v7751
  %v7784 = vmul.f32 %v7732, %v7752
  %v7785 = vmul.f32 %v7728, %v7753
  %v7786 = vmul.f32 %v7732, %v7754
  %v7787 = vmul.f32 %v7728, %v7755
  %v7788 = vmul.f32 %v7732, %v7756
  %v7789 = vmul.f32 %v7728, %v7757
  %v7790 = vmul.f32 %v7732, %v7758
  %v7791 = vmul.f32 %v7728, %v7759
  %v7792 = vmul.f32 %v7732, %v7760
  %v7793 = vmul.f32 %v7728, %v7761
  %v7794 = vmul.f32 %v7732, %v7762
  %v7795 = vmul.f32 %v7728, %v7763
  %v7796 = vmul.f32 %v7732, %v7764
  %v7797 = vld [vmem:[%s2] sm:$0xff]
  %v7798 = vld [vmem:[%s2 + $0x8] sm:$0xff]
  %v7799 = vld [vmem:[%s2 + $0x10] sm:$0xff]
  %v7800 = vld [vmem:[%s2 + $0x18] sm:$0xff]
  %v7801 = vld [vmem:[%s2 + $0x20] sm:$0xff]
  %v7802 = vld [vmem:[%s2 + $0x28] sm:$0xff]
  %v7803 = vld [vmem:[%s2 + $0x30] sm:$0xff]
  %v7804 = vld [vmem:[%s2 + $0x38] sm:$0xff]
  %v7805 = vld [vmem:[%s2 + $0x40] sm:$0xff]
  %v7806 = vld [vmem:[%s2 + $0x48] sm:$0xff]
  %v7807 = vld [vmem:[%s2 + $0x50] sm:$0xff]
  %v7808 = vld [vmem:[%s2 + $0x58] sm:$0xff]
  %v7809 = vld [vmem:[%s2 + $0x60] sm:$0xff]
  %v7810 = vld [vmem:[%s2 + $0x68] sm:$0xff]
  %v7811 = vld [vmem:[%s2 + $0x70] sm:$0xff]
  %v7812 = vld [vmem:[%s2 + $0x78] sm:$0xff]
  %v7813 = vld [vmem:[%s2 + $0x80] sm:$0xff]
  %v7814 = vld [vmem:[%s2 + $0x88] sm:$0xff]
  %v7815 = vld [vmem:[%s2 + $0x90] sm:$0xff]
  %v7816 = vld [vmem:[%s2 + $0x98] sm:$0xff]
  %v7817 = vld [vmem:[%s2 + $0xa0] sm:$0xff]
  %v7818 = vld [vmem:[%s2 + $0xa8] sm:$0xff]
  %v7819 = vld [vmem:[%s2 + $0xb0] sm:$0xff]
  %v7820 = vld [vmem:[%s2 + $0xb8] sm:$0xff]
  %v7821 = vld [vmem:[%s2 + $0xc0] sm:$0xff]
  %v7822 = vld [vmem:[%s2 + $0xc8] sm:$0xff]
  %v7823 = vld [vmem:[%s2 + $0xd0] sm:$0xff]
  %v7824 = vld [vmem:[%s2 + $0xd8] sm:$0xff]
  %v7825 = vld [vmem:[%s2 + $0xe0] sm:$0xff]
  %v7826 = vld [vmem:[%s2 + $0xe8] sm:$0xff]
  %v7827 = vld [vmem:[%s2 + $0xf0] sm:$0xff]
  %v7828 = vld [vmem:[%s2 + $0xf8] sm:$0xff]
  %v7829 = vadd.f32 %v7765, %v7797
  %v7830 = vadd.f32 %v7766, %v7798
  %v7831 = vadd.f32 %v7767, %v7799
  %v7832 = vadd.f32 %v7768, %v7800
  %v7833 = vadd.f32 %v7769, %v7801
  %v7834 = vadd.f32 %v7770, %v7802
  %v7835 = vadd.f32 %v7771, %v7803
  %v7836 = vadd.f32 %v7772, %v7804
  %v7837 = vadd.f32 %v7773, %v7805
  %v7838 = vadd.f32 %v7774, %v7806
  %v7839 = vadd.f32 %v7775, %v7807
  %v7840 = vadd.f32 %v7776, %v7808
  %v7841 = vadd.f32 %v7777, %v7809
  %v7842 = vadd.f32 %v7778, %v7810
  %v7843 = vadd.f32 %v7779, %v7811
  %v7844 = vadd.f32 %v7780, %v7812
  %v7845 = vadd.f32 %v7781, %v7813
  %v7846 = vadd.f32 %v7782, %v7814
  %v7847 = vadd.f32 %v7783, %v7815
  %v7848 = vadd.f32 %v7784, %v7816
  %v7849 = vadd.f32 %v7785, %v7817
  %v7850 = vadd.f32 %v7786, %v7818
  %v7851 = vadd.f32 %v7787, %v7819
  %v7852 = vadd.f32 %v7788, %v7820
  %v7853 = vadd.f32 %v7789, %v7821
  %v7854 = vadd.f32 %v7790, %v7822
  %v7855 = vadd.f32 %v7791, %v7823
  %v7856 = vadd.f32 %v7792, %v7824
  %v7857 = vadd.f32 %v7793, %v7825
  %v7858 = vadd.f32 %v7794, %v7826
  %v7859 = vadd.f32 %v7795, %v7827
  %v7860 = vadd.f32 %v7796, %v7828
  %v7861 = vmax.f32 %v7829, 0.0
  %v7862 = vmax.f32 %v7830, 0.0
  %v7863 = vmax.f32 %v7831, 0.0
  %v7864 = vmax.f32 %v7832, 0.0
  %v7865 = vmax.f32 %v7833, 0.0
  %v7866 = vmax.f32 %v7834, 0.0
  %v7867 = vmax.f32 %v7835, 0.0
  %v7868 = vmax.f32 %v7836, 0.0
  %v7869 = vmax.f32 %v7837, 0.0
  %v7870 = vmax.f32 %v7838, 0.0
  %v7871 = vmax.f32 %v7839, 0.0
  %v7872 = vmax.f32 %v7840, 0.0
  %v7873 = vmax.f32 %v7841, 0.0
  %v7874 = vmax.f32 %v7842, 0.0
  %v7875 = vmax.f32 %v7843, 0.0
  %v7876 = vmax.f32 %v7844, 0.0
  %v7877 = vmax.f32 %v7845, 0.0
  %v7878 = vmax.f32 %v7846, 0.0
  %v7879 = vmax.f32 %v7847, 0.0
  %v7880 = vmax.f32 %v7848, 0.0
  %v7881 = vmax.f32 %v7849, 0.0
  %v7882 = vmax.f32 %v7850, 0.0
  %v7883 = vmax.f32 %v7851, 0.0
  %v7884 = vmax.f32 %v7852, 0.0
  %v7885 = vmax.f32 %v7853, 0.0
  %v7886 = vmax.f32 %v7854, 0.0
  %v7887 = vmax.f32 %v7855, 0.0
  %v7888 = vmax.f32 %v7856, 0.0
  %v7889 = vmax.f32 %v7857, 0.0
  %v7890 = vmax.f32 %v7858, 0.0
  %v7891 = vmax.f32 %v7859, 0.0
  %v7892 = vmax.f32 %v7860, 0.0
  %v7893 = vand.u32 %v7892, 4294901760
  %7894 = vmatprep.subr.mxu0 %v7893
  %v7895 = vand.u32 %v7891, 4294901760
  %7896 = vmatpush1.msra.mxu0 %v7895
  %v7897 = vand.u32 %v7890, 4294901760
  %7898 = vmatprep.subr.mxu0 %v7897
  %v7899 = vand.u32 %v7889, 4294901760
  %7900 = vmatpush1.msra.mxu0 %v7899
  %v7901 = vand.u32 %v7888, 4294901760
  %7902 = vmatprep.subr.mxu0 %v7901
  %v7903 = vand.u32 %v7887, 4294901760
  %7904 = vmatpush1.msra.mxu0 %v7903
  %v7905 = vand.u32 %v7886, 4294901760
  %7906 = vmatprep.subr.mxu0 %v7905
  %v7907 = vand.u32 %v7885, 4294901760
  %7908 = vmatpush1.msra.mxu0 %v7907
  %v7909 = vand.u32 %v7884, 4294901760
  %7910 = vmatprep.subr.mxu0 %v7909
  %v7911 = vand.u32 %v7883, 4294901760
  %7912 = vmatpush1.msra.mxu0 %v7911
  %v7913 = vand.u32 %v7882, 4294901760
  %7914 = vmatprep.subr.mxu0 %v7913
  %v7915 = vand.u32 %v7881, 4294901760
  %7916 = vmatpush1.msra.mxu0 %v7915
  %v7917 = vand.u32 %v7880, 4294901760
  %7918 = vmatprep.subr.mxu0 %v7917
  %v7919 = vand.u32 %v7879, 4294901760
  %7920 = vmatpush1.msra.mxu0 %v7919
  %v7921 = vand.u32 %v7878, 4294901760
  %7922 = vmatprep.subr.mxu0 %v7921
  %v7923 = vand.u32 %v7877, 4294901760
  %7924 = vmatpush1.msra.mxu0 %v7923
  %v7925 = vand.u32 %v7876, 4294901760
  %7926 = vmatprep.subr.mxu0 %v7925
  %v7927 = vand.u32 %v7875, 4294901760
  %7928 = vmatpush1.msra.mxu0 %v7927
  %v7929 = vand.u32 %v7874, 4294901760
  %7930 = vmatprep.subr.mxu0 %v7929
  %v7931 = vand.u32 %v7873, 4294901760
  %7932 = vmatpush1.msra.mxu0 %v7931
  %v7933 = vand.u32 %v7872, 4294901760
  %7934 = vmatprep.subr.mxu0 %v7933
  %v7935 = vand.u32 %v7871, 4294901760
  %7936 = vmatpush1.msra.mxu0 %v7935
  %v7937 = vand.u32 %v7870, 4294901760
  %7938 = vmatprep.subr.mxu0 %v7937
  %v7939 = vand.u32 %v7869, 4294901760
  %7940 = vmatpush1.msra.mxu0 %v7939
  %v7941 = vand.u32 %v7868, 4294901760
  %7942 = vmatprep.subr.mxu0 %v7941
  %v7943 = vand.u32 %v7867, 4294901760
  %7944 = vmatpush1.msra.mxu0 %v7943
  %v7945 = vand.u32 %v7866, 4294901760
  %7946 = vmatprep.subr.mxu0 %v7945
  %v7947 = vand.u32 %v7865, 4294901760
  %7948 = vmatpush1.msra.mxu0 %v7947
  %v7949 = vand.u32 %v7864, 4294901760
  %7950 = vmatprep.subr.mxu0 %v7949
  %v7951 = vand.u32 %v7863, 4294901760
  %7952 = vmatpush1.msra.mxu0 %v7951
  %v7953 = vand.u32 %v7862, 4294901760
  %7954 = vmatprep.subr.mxu0 %v7953
  %v7955 = vand.u32 %v7861, 4294901760
  %7956 = vmatpush1.msra.mxu0 %v7955
  %7957 = vmatprep.subr.mxu0 0.0
  %7958 = vmatpush2.msra.mxu0 0.0
  %7959 = vmatprep.subr.mxu0 0.0
  %7960 = vmatpush2.msra.mxu0 0.0
  %7961 = vmatprep.subr.mxu0 0.0
  %7962 = vmatpush2.msra.mxu0 0.0
  %7963 = vmatprep.subr.mxu0 0.0
  %7964 = vmatpush2.msra.mxu0 0.0
  %7965 = vmatprep.subr.mxu0 0.0
  %7966 = vmatpush2.msra.mxu0 0.0
  %7967 = vmatprep.subr.mxu0 0.0
  %7968 = vmatpush2.msra.mxu0 0.0
  %7969 = vmatprep.subr.mxu0 0.0
  %7970 = vmatpush2.msra.mxu0 0.0
  %7971 = vmatprep.subr.mxu0 0.0
  %7972 = vmatpush2.msra.mxu0 0.0
  %7973 = vmatprep.subr.mxu0 0.0
  %7974 = vmatpush2.msra.mxu0 0.0
  %7975 = vmatprep.subr.mxu0 0.0
  %7976 = vmatpush2.msra.mxu0 0.0
  %7977 = vmatprep.subr.mxu0 0.0
  %7978 = vmatpush2.msra.mxu0 0.0
  %7979 = vmatprep.subr.mxu0 0.0
  %7980 = vmatpush2.msra.mxu0 0.0
  %7981 = vmatprep.subr.mxu0 0.0
  %7982 = vmatpush2.msra.mxu0 0.0
  %7983 = vmatprep.subr.mxu0 0.0
  %7984 = vmatpush2.msra.mxu0 0.0
  %7985 = vmatprep.subr.mxu0 0.0
  %7986 = vmatpush2.msra.mxu0 0.0
  %7987 = vmatprep.subr.mxu0 0.0
  %7988 = vmatpush2.msra.mxu0 0.0
  %7989 = vmatprep.mubr.f32.mxu0 0.0
  %v7990 = vand.u32 %v25, 4294901760
  %v7991 = vsub.f32 %v25, %v7990
  %v7992 = vand.u32 %v7991, 4294901760
  %v7993 = vsub.f32 %v7991, %v7992
  %v7994 = vand.u32 %v7993, 4294901760
  %7995 = vmatmul.mubr.f32.gmra.mxu0 %v7994
  %v7996 = vpop.f32.mrf.mxu0
  %v7997 = vadd.f32 %v26, %v7996
  %v7998 = vpop.f32.mrf.mxu0
  %v7999 = vadd.f32 %v27, %v7998
  %8000 = vdwg.mxu0
  %v8001 = vand.u32 %v7892, 4294901760
  %v8002 = vsub.f32 %v7892, %v8001
  %v8003 = vand.u32 %v8002, 4294901760
  %v8004 = vsub.f32 %v8002, %v8003
  %v8005 = vand.u32 %v8004, 4294901760
  %8006 = vmatprep.subr.mxu0 %v8005
  %v8007 = vand.u32 %v7891, 4294901760
  %v8008 = vsub.f32 %v7891, %v8007
  %v8009 = vand.u32 %v8008, 4294901760
  %v8010 = vsub.f32 %v8008, %v8009
  %v8011 = vand.u32 %v8010, 4294901760
  %8012 = vmatpush1.msra.mxu0 %v8011
  %v8013 = vand.u32 %v7890, 4294901760
  %v8014 = vsub.f32 %v7890, %v8013
  %v8015 = vand.u32 %v8014, 4294901760
  %v8016 = vsub.f32 %v8014, %v8015
  %v8017 = vand.u32 %v8016, 4294901760
  %8018 = vmatprep.subr.mxu0 %v8017
  %v8019 = vand.u32 %v7889, 4294901760
  %v8020 = vsub.f32 %v7889, %v8019
  %v8021 = vand.u32 %v8020, 4294901760
  %v8022 = vsub.f32 %v8020, %v8021
  %v8023 = vand.u32 %v8022, 4294901760
  %8024 = vmatpush1.msra.mxu0 %v8023
  %v8025 = vand.u32 %v7888, 4294901760
  %v8026 = vsub.f32 %v7888, %v8025
  %v8027 = vand.u32 %v8026, 4294901760
  %v8028 = vsub.f32 %v8026, %v8027
  %v8029 = vand.u32 %v8028, 4294901760
  %8030 = vmatprep.subr.mxu0 %v8029
  %v8031 = vand.u32 %v7887, 4294901760
  %v8032 = vsub.f32 %v7887, %v8031
  %v8033 = vand.u32 %v8032, 4294901760
  %v8034 = vsub.f32 %v8032, %v8033
  %v8035 = vand.u32 %v8034, 4294901760
  %8036 = vmatpush1.msra.mxu0 %v8035
  %v8037 = vand.u32 %v7886, 4294901760
  %v8038 = vsub.f32 %v7886, %v8037
  %v8039 = vand.u32 %v8038, 4294901760
  %v8040 = vsub.f32 %v8038, %v8039
  %v8041 = vand.u32 %v8040, 4294901760
  %8042 = vmatprep.subr.mxu0 %v8041
  %v8043 = vand.u32 %v7885, 4294901760
  %v8044 = vsub.f32 %v7885, %v8043
  %v8045 = vand.u32 %v8044, 4294901760
  %v8046 = vsub.f32 %v8044, %v8045
  %v8047 = vand.u32 %v8046, 4294901760
  %8048 = vmatpush1.msra.mxu0 %v8047
  %v8049 = vand.u32 %v7884, 4294901760
  %v8050 = vsub.f32 %v7884, %v8049
  %v8051 = vand.u32 %v8050, 4294901760
  %v8052 = vsub.f32 %v8050, %v8051
  %v8053 = vand.u32 %v8052, 4294901760
  %8054 = vmatprep.subr.mxu0 %v8053
  %v8055 = vand.u32 %v7883, 4294901760
  %v8056 = vsub.f32 %v7883, %v8055
  %v8057 = vand.u32 %v8056, 4294901760
  %v8058 = vsub.f32 %v8056, %v8057
  %v8059 = vand.u32 %v8058, 4294901760
  %8060 = vmatpush1.msra.mxu0 %v8059
  %v8061 = vand.u32 %v7882, 4294901760
  %v8062 = vsub.f32 %v7882, %v8061
  %v8063 = vand.u32 %v8062, 4294901760
  %v8064 = vsub.f32 %v8062, %v8063
  %v8065 = vand.u32 %v8064, 4294901760
  %8066 = vmatprep.subr.mxu0 %v8065
  %v8067 = vand.u32 %v7881, 4294901760
  %v8068 = vsub.f32 %v7881, %v8067
  %v8069 = vand.u32 %v8068, 4294901760
  %v8070 = vsub.f32 %v8068, %v8069
  %v8071 = vand.u32 %v8070, 4294901760
  %8072 = vmatpush1.msra.mxu0 %v8071
  %v8073 = vand.u32 %v7880, 4294901760
  %v8074 = vsub.f32 %v7880, %v8073
  %v8075 = vand.u32 %v8074, 4294901760
  %v8076 = vsub.f32 %v8074, %v8075
  %v8077 = vand.u32 %v8076, 4294901760
  %8078 = vmatprep.subr.mxu0 %v8077
  %v8079 = vand.u32 %v7879, 4294901760
  %v8080 = vsub.f32 %v7879, %v8079
  %v8081 = vand.u32 %v8080, 4294901760
  %v8082 = vsub.f32 %v8080, %v8081
  %v8083 = vand.u32 %v8082, 4294901760
  %8084 = vmatpush1.msra.mxu0 %v8083
  %v8085 = vand.u32 %v7878, 4294901760
  %v8086 = vsub.f32 %v7878, %v8085
  %v8087 = vand.u32 %v8086, 4294901760
  %v8088 = vsub.f32 %v8086, %v8087
  %v8089 = vand.u32 %v8088, 4294901760
  %8090 = vmatprep.subr.mxu0 %v8089
  %v8091 = vand.u32 %v7877, 4294901760
  %v8092 = vsub.f32 %v7877, %v8091
  %v8093 = vand.u32 %v8092, 4294901760
  %v8094 = vsub.f32 %v8092, %v8093
  %v8095 = vand.u32 %v8094, 4294901760
  %8096 = vmatpush1.msra.mxu0 %v8095
  %v8097 = vand.u32 %v7876, 4294901760
  %v8098 = vsub.f32 %v7876, %v8097
  %v8099 = vand.u32 %v8098, 4294901760
  %v8100 = vsub.f32 %v8098, %v8099
  %v8101 = vand.u32 %v8100, 4294901760
  %8102 = vmatprep.subr.mxu0 %v8101
  %v8103 = vand.u32 %v7875, 4294901760
  %v8104 = vsub.f32 %v7875, %v8103
  %v8105 = vand.u32 %v8104, 4294901760
  %v8106 = vsub.f32 %v8104, %v8105
  %v8107 = vand.u32 %v8106, 4294901760
  %8108 = vmatpush1.msra.mxu0 %v8107
  %v8109 = vand.u32 %v7874, 4294901760
  %v8110 = vsub.f32 %v7874, %v8109
  %v8111 = vand.u32 %v8110, 4294901760
  %v8112 = vsub.f32 %v8110, %v8111
  %v8113 = vand.u32 %v8112, 4294901760
  %8114 = vmatprep.subr.mxu0 %v8113
  %v8115 = vand.u32 %v7873, 4294901760
  %v8116 = vsub.f32 %v7873, %v8115
  %v8117 = vand.u32 %v8116, 4294901760
  %v8118 = vsub.f32 %v8116, %v8117
  %v8119 = vand.u32 %v8118, 4294901760
  %8120 = vmatpush1.msra.mxu0 %v8119
  %v8121 = vand.u32 %v7872, 4294901760
  %v8122 = vsub.f32 %v7872, %v8121
  %v8123 = vand.u32 %v8122, 4294901760
  %v8124 = vsub.f32 %v8122, %v8123
  %v8125 = vand.u32 %v8124, 4294901760
  %8126 = vmatprep.subr.mxu0 %v8125
  %v8127 = vand.u32 %v7871, 4294901760
  %v8128 = vsub.f32 %v7871, %v8127
  %v8129 = vand.u32 %v8128, 4294901760
  %v8130 = vsub.f32 %v8128, %v8129
  %v8131 = vand.u32 %v8130, 4294901760
  %8132 = vmatpush1.msra.mxu0 %v8131
  %v8133 = vand.u32 %v7870, 4294901760
  %v8134 = vsub.f32 %v7870, %v8133
  %v8135 = vand.u32 %v8134, 4294901760
  %v8136 = vsub.f32 %v8134, %v8135
  %v8137 = vand.u32 %v8136, 4294901760
  %8138 = vmatprep.subr.mxu0 %v8137
  %v8139 = vand.u32 %v7869, 4294901760
  %v8140 = vsub.f32 %v7869, %v8139
  %v8141 = vand.u32 %v8140, 4294901760
  %v8142 = vsub.f32 %v8140, %v8141
  %v8143 = vand.u32 %v8142, 4294901760
  %8144 = vmatpush1.msra.mxu0 %v8143
  %v8145 = vand.u32 %v7868, 4294901760
  %v8146 = vsub.f32 %v7868, %v8145
  %v8147 = vand.u32 %v8146, 4294901760
  %v8148 = vsub.f32 %v8146, %v8147
  %v8149 = vand.u32 %v8148, 4294901760
  %8150 = vmatprep.subr.mxu0 %v8149
  %v8151 = vand.u32 %v7867, 4294901760
  %v8152 = vsub.f32 %v7867, %v8151
  %v8153 = vand.u32 %v8152, 4294901760
  %v8154 = vsub.f32 %v8152, %v8153
  %v8155 = vand.u32 %v8154, 4294901760
  %8156 = vmatpush1.msra.mxu0 %v8155
  %v8157 = vand.u32 %v7866, 4294901760
  %v8158 = vsub.f32 %v7866, %v8157
  %v8159 = vand.u32 %v8158, 4294901760
  %v8160 = vsub.f32 %v8158, %v8159
  %v8161 = vand.u32 %v8160, 4294901760
  %8162 = vmatprep.subr.mxu0 %v8161
  %v8163 = vand.u32 %v7865, 4294901760
  %v8164 = vsub.f32 %v7865, %v8163
  %v8165 = vand.u32 %v8164, 4294901760
  %v8166 = vsub.f32 %v8164, %v8165
  %v8167 = vand.u32 %v8166, 4294901760
  %8168 = vmatpush1.msra.mxu0 %v8167
  %v8169 = vand.u32 %v7864, 4294901760
  %v8170 = vsub.f32 %v7864, %v8169
  %v8171 = vand.u32 %v8170, 4294901760
  %v8172 = vsub.f32 %v8170, %v8171
  %v8173 = vand.u32 %v8172, 4294901760
  %8174 = vmatprep.subr.mxu0 %v8173
  %v8175 = vand.u32 %v7863, 4294901760
  %v8176 = vsub.f32 %v7863, %v8175
  %v8177 = vand.u32 %v8176, 4294901760
  %v8178 = vsub.f32 %v8176, %v8177
  %v8179 = vand.u32 %v8178, 4294901760
  %8180 = vmatpush1.msra.mxu0 %v8179
  %v8181 = vand.u32 %v7862, 4294901760
  %v8182 = vsub.f32 %v7862, %v8181
  %v8183 = vand.u32 %v8182, 4294901760
  %v8184 = vsub.f32 %v8182, %v8183
  %v8185 = vand.u32 %v8184, 4294901760
  %8186 = vmatprep.subr.mxu0 %v8185
  %v8187 = vand.u32 %v7861, 4294901760
  %v8188 = vsub.f32 %v7861, %v8187
  %v8189 = vand.u32 %v8188, 4294901760
  %v8190 = vsub.f32 %v8188, %v8189
  %v8191 = vand.u32 %v8190, 4294901760
  %8192 = vmatpush1.msra.mxu0 %v8191
  %8193 = vmatprep.subr.mxu0 0.0
  %8194 = vmatpush2.msra.mxu0 0.0
  %8195 = vmatprep.subr.mxu0 0.0
  %8196 = vmatpush2.msra.mxu0 0.0
  %8197 = vmatprep.subr.mxu0 0.0
  %8198 = vmatpush2.msra.mxu0 0.0
  %8199 = vmatprep.subr.mxu0 0.0
  %8200 = vmatpush2.msra.mxu0 0.0
  %8201 = vmatprep.subr.mxu0 0.0
  %8202 = vmatpush2.msra.mxu0 0.0
  %8203 = vmatprep.subr.mxu0 0.0
  %8204 = vmatpush2.msra.mxu0 0.0
  %8205 = vmatprep.subr.mxu0 0.0
  %8206 = vmatpush2.msra.mxu0 0.0
  %8207 = vmatprep.subr.mxu0 0.0
  %8208 = vmatpush2.msra.mxu0 0.0
  %8209 = vmatprep.subr.mxu0 0.0
  %8210 = vmatpush2.msra.mxu0 0.0
  %8211 = vmatprep.subr.mxu0 0.0
  %8212 = vmatpush2.msra.mxu0 0.0
  %8213 = vmatprep.subr.mxu0 0.0
  %8214 = vmatpush2.msra.mxu0 0.0
  %8215 = vmatprep.subr.mxu0 0.0
  %8216 = vmatpush2.msra.mxu0 0.0
  %8217 = vmatprep.subr.mxu0 0.0
  %8218 = vmatpush2.msra.mxu0 0.0
  %8219 = vmatprep.subr.mxu0 0.0
  %8220 = vmatpush2.msra.mxu0 0.0
  %8221 = vmatprep.subr.mxu0 0.0
  %8222 = vmatpush2.msra.mxu0 0.0
  %8223 = vmatprep.subr.mxu0 0.0
  %8224 = vmatpush2.msra.mxu0 0.0
  %8225 = vmatprep.mubr.f32.mxu0 0.0
  %v8226 = vand.u32 %v25, 4294901760
  %8227 = vmatmul.mubr.f32.gmra.mxu0 %v8226
  %v8228 = vpop.f32.mrf.mxu0
  %v8229 = vadd.f32 %v7997, %v8228
  %v8230 = vpop.f32.mrf.mxu0
  %v8231 = vadd.f32 %v7999, %v8230
  %8232 = vdwg.mxu0
  %v8233 = vand.u32 %v7892, 4294901760
  %v8234 = vsub.f32 %v7892, %v8233
  %8235 = vmatprep.subr.mxu0 %v8234
  %v8236 = vand.u32 %v7891, 4294901760
  %v8237 = vsub.f32 %v7891, %v8236
  %8238 = vmatpush1.msra.mxu0 %v8237
  %v8239 = vand.u32 %v7890, 4294901760
  %v8240 = vsub.f32 %v7890, %v8239
  %8241 = vmatprep.subr.mxu0 %v8240
  %v8242 = vand.u32 %v7889, 4294901760
  %v8243 = vsub.f32 %v7889, %v8242
  %8244 = vmatpush1.msra.mxu0 %v8243
  %v8245 = vand.u32 %v7888, 4294901760
  %v8246 = vsub.f32 %v7888, %v8245
  %8247 = vmatprep.subr.mxu0 %v8246
  %v8248 = vand.u32 %v7887, 4294901760
  %v8249 = vsub.f32 %v7887, %v8248
  %8250 = vmatpush1.msra.mxu0 %v8249
  %v8251 = vand.u32 %v7886, 4294901760
  %v8252 = vsub.f32 %v7886, %v8251
  %8253 = vmatprep.subr.mxu0 %v8252
  %v8254 = vand.u32 %v7885, 4294901760
  %v8255 = vsub.f32 %v7885, %v8254
  %8256 = vmatpush1.msra.mxu0 %v8255
  %v8257 = vand.u32 %v7884, 4294901760
  %v8258 = vsub.f32 %v7884, %v8257
  %8259 = vmatprep.subr.mxu0 %v8258
  %v8260 = vand.u32 %v7883, 4294901760
  %v8261 = vsub.f32 %v7883, %v8260
  %8262 = vmatpush1.msra.mxu0 %v8261
  %v8263 = vand.u32 %v7882, 4294901760
  %v8264 = vsub.f32 %v7882, %v8263
  %8265 = vmatprep.subr.mxu0 %v8264
  %v8266 = vand.u32 %v7881, 4294901760
  %v8267 = vsub.f32 %v7881, %v8266
  %8268 = vmatpush1.msra.mxu0 %v8267
  %v8269 = vand.u32 %v7880, 4294901760
  %v8270 = vsub.f32 %v7880, %v8269
  %8271 = vmatprep.subr.mxu0 %v8270
  %v8272 = vand.u32 %v7879, 4294901760
  %v8273 = vsub.f32 %v7879, %v8272
  %8274 = vmatpush1.msra.mxu0 %v8273
  %v8275 = vand.u32 %v7878, 4294901760
  %v8276 = vsub.f32 %v7878, %v8275
  %8277 = vmatprep.subr.mxu0 %v8276
  %v8278 = vand.u32 %v7877, 4294901760
  %v8279 = vsub.f32 %v7877, %v8278
  %8280 = vmatpush1.msra.mxu0 %v8279
  %v8281 = vand.u32 %v7876, 4294901760
  %v8282 = vsub.f32 %v7876, %v8281
  %8283 = vmatprep.subr.mxu0 %v8282
  %v8284 = vand.u32 %v7875, 4294901760
  %v8285 = vsub.f32 %v7875, %v8284
  %8286 = vmatpush1.msra.mxu0 %v8285
  %v8287 = vand.u32 %v7874, 4294901760
  %v8288 = vsub.f32 %v7874, %v8287
  %8289 = vmatprep.subr.mxu0 %v8288
  %v8290 = vand.u32 %v7873, 4294901760
  %v8291 = vsub.f32 %v7873, %v8290
  %8292 = vmatpush1.msra.mxu0 %v8291
  %v8293 = vand.u32 %v7872, 4294901760
  %v8294 = vsub.f32 %v7872, %v8293
  %8295 = vmatprep.subr.mxu0 %v8294
  %v8296 = vand.u32 %v7871, 4294901760
  %v8297 = vsub.f32 %v7871, %v8296
  %8298 = vmatpush1.msra.mxu0 %v8297
  %v8299 = vand.u32 %v7870, 4294901760
  %v8300 = vsub.f32 %v7870, %v8299
  %8301 = vmatprep.subr.mxu0 %v8300
  %v8302 = vand.u32 %v7869, 4294901760
  %v8303 = vsub.f32 %v7869, %v8302
  %8304 = vmatpush1.msra.mxu0 %v8303
  %v8305 = vand.u32 %v7868, 4294901760
  %v8306 = vsub.f32 %v7868, %v8305
  %8307 = vmatprep.subr.mxu0 %v8306
  %v8308 = vand.u32 %v7867, 4294901760
  %v8309 = vsub.f32 %v7867, %v8308
  %8310 = vmatpush1.msra.mxu0 %v8309
  %v8311 = vand.u32 %v7866, 4294901760
  %v8312 = vsub.f32 %v7866, %v8311
  %8313 = vmatprep.subr.mxu0 %v8312
  %v8314 = vand.u32 %v7865, 4294901760
  %v8315 = vsub.f32 %v7865, %v8314
  %8316 = vmatpush1.msra.mxu0 %v8315
  %v8317 = vand.u32 %v7864, 4294901760
  %v8318 = vsub.f32 %v7864, %v8317
  %8319 = vmatprep.subr.mxu0 %v8318
  %v8320 = vand.u32 %v7863, 4294901760
  %v8321 = vsub.f32 %v7863, %v8320
  %8322 = vmatpush1.msra.mxu0 %v8321
  %v8323 = vand.u32 %v7862, 4294901760
  %v8324 = vsub.f32 %v7862, %v8323
  %8325 = vmatprep.subr.mxu0 %v8324
  %v8326 = vand.u32 %v7861, 4294901760
  %v8327 = vsub.f32 %v7861, %v8326
  %8328 = vmatpush1.msra.mxu0 %v8327
  %8329 = vmatprep.subr.mxu0 0.0
  %8330 = vmatpush2.msra.mxu0 0.0
  %8331 = vmatprep.subr.mxu0 0.0
  %8332 = vmatpush2.msra.mxu0 0.0
  %8333 = vmatprep.subr.mxu0 0.0
  %8334 = vmatpush2.msra.mxu0 0.0
  %8335 = vmatprep.subr.mxu0 0.0
  %8336 = vmatpush2.msra.mxu0 0.0
  %8337 = vmatprep.subr.mxu0 0.0
  %8338 = vmatpush2.msra.mxu0 0.0
  %8339 = vmatprep.subr.mxu0 0.0
  %8340 = vmatpush2.msra.mxu0 0.0
  %8341 = vmatprep.subr.mxu0 0.0
  %8342 = vmatpush2.msra.mxu0 0.0
  %8343 = vmatprep.subr.mxu0 0.0
  %8344 = vmatpush2.msra.mxu0 0.0
  %8345 = vmatprep.subr.mxu0 0.0
  %8346 = vmatpush2.msra.mxu0 0.0
  %8347 = vmatprep.subr.mxu0 0.0
  %8348 = vmatpush2.msra.mxu0 0.0
  %8349 = vmatprep.subr.mxu0 0.0
  %8350 = vmatpush2.msra.mxu0 0.0
  %8351 = vmatprep.subr.mxu0 0.0
  %8352 = vmatpush2.msra.mxu0 0.0
  %8353 = vmatprep.subr.mxu0 0.0
  %8354 = vmatpush2.msra.mxu0 0.0
  %8355 = vmatprep.subr.mxu0 0.0
  %8356 = vmatpush2.msra.mxu0 0.0
  %8357 = vmatprep.subr.mxu0 0.0
  %8358 = vmatpush2.msra.mxu0 0.0
  %8359 = vmatprep.subr.mxu0 0.0
  %8360 = vmatpush2.msra.mxu0 0.0
  %8361 = vmatprep.mubr.f32.mxu0 0.0
  %v8362 = vand.u32 %v25, 4294901760
  %v8363 = vsub.f32 %v25, %v8362
  %8364 = vmatmul.mubr.f32.gmra.mxu0 %v8363
  %v8365 = vpop.f32.mrf.mxu0
  %v8366 = vadd.f32 %v8229, %v8365
  %v8367 = vpop.f32.mrf.mxu0
  %v8368 = vadd.f32 %v8231, %v8367
  %8369 = vdwg.mxu0
  %v8370 = vand.u32 %v7892, 4294901760
  %8371 = vmatprep.subr.mxu0 %v8370
  %v8372 = vand.u32 %v7891, 4294901760
  %8373 = vmatpush1.msra.mxu0 %v8372
  %v8374 = vand.u32 %v7890, 4294901760
  %8375 = vmatprep.subr.mxu0 %v8374
  %v8376 = vand.u32 %v7889, 4294901760
  %8377 = vmatpush1.msra.mxu0 %v8376
  %v8378 = vand.u32 %v7888, 4294901760
  %8379 = vmatprep.subr.mxu0 %v8378
  %v8380 = vand.u32 %v7887, 4294901760
  %8381 = vmatpush1.msra.mxu0 %v8380
  %v8382 = vand.u32 %v7886, 4294901760
  %8383 = vmatprep.subr.mxu0 %v8382
  %v8384 = vand.u32 %v7885, 4294901760
  %8385 = vmatpush1.msra.mxu0 %v8384
  %v8386 = vand.u32 %v7884, 4294901760
  %8387 = vmatprep.subr.mxu0 %v8386
  %v8388 = vand.u32 %v7883, 4294901760
  %8389 = vmatpush1.msra.mxu0 %v8388
  %v8390 = vand.u32 %v7882, 4294901760
  %8391 = vmatprep.subr.mxu0 %v8390
  %v8392 = vand.u32 %v7881, 4294901760
  %8393 = vmatpush1.msra.mxu0 %v8392
  %v8394 = vand.u32 %v7880, 4294901760
  %8395 = vmatprep.subr.mxu0 %v8394
  %v8396 = vand.u32 %v7879, 4294901760
  %8397 = vmatpush1.msra.mxu0 %v8396
  %v8398 = vand.u32 %v7878, 4294901760
  %8399 = vmatprep.subr.mxu0 %v8398
  %v8400 = vand.u32 %v7877, 4294901760
  %8401 = vmatpush1.msra.mxu0 %v8400
  %v8402 = vand.u32 %v7876, 4294901760
  %8403 = vmatprep.subr.mxu0 %v8402
  %v8404 = vand.u32 %v7875, 4294901760
  %8405 = vmatpush1.msra.mxu0 %v8404
  %v8406 = vand.u32 %v7874, 4294901760
  %8407 = vmatprep.subr.mxu0 %v8406
  %v8408 = vand.u32 %v7873, 4294901760
  %8409 = vmatpush1.msra.mxu0 %v8408
  %v8410 = vand.u32 %v7872, 4294901760
  %8411 = vmatprep.subr.mxu0 %v8410
  %v8412 = vand.u32 %v7871, 4294901760
  %8413 = vmatpush1.msra.mxu0 %v8412
  %v8414 = vand.u32 %v7870, 4294901760
  %8415 = vmatprep.subr.mxu0 %v8414
  %v8416 = vand.u32 %v7869, 4294901760
  %8417 = vmatpush1.msra.mxu0 %v8416
  %v8418 = vand.u32 %v7868, 4294901760
  %8419 = vmatprep.subr.mxu0 %v8418
  %v8420 = vand.u32 %v7867, 4294901760
  %8421 = vmatpush1.msra.mxu0 %v8420
  %v8422 = vand.u32 %v7866, 4294901760
  %8423 = vmatprep.subr.mxu0 %v8422
  %v8424 = vand.u32 %v7865, 4294901760
  %8425 = vmatpush1.msra.mxu0 %v8424
  %v8426 = vand.u32 %v7864, 4294901760
  %8427 = vmatprep.subr.mxu0 %v8426
  %v8428 = vand.u32 %v7863, 4294901760
  %8429 = vmatpush1.msra.mxu0 %v8428
  %v8430 = vand.u32 %v7862, 4294901760
  %8431 = vmatprep.subr.mxu0 %v8430
  %v8432 = vand.u32 %v7861, 4294901760
  %8433 = vmatpush1.msra.mxu0 %v8432
  %8434 = vmatprep.subr.mxu0 0.0
  %8435 = vmatpush2.msra.mxu0 0.0
  %8436 = vmatprep.subr.mxu0 0.0
  %8437 = vmatpush2.msra.mxu0 0.0
  %8438 = vmatprep.subr.mxu0 0.0
  %8439 = vmatpush2.msra.mxu0 0.0
  %8440 = vmatprep.subr.mxu0 0.0
  %8441 = vmatpush2.msra.mxu0 0.0
  %8442 = vmatprep.subr.mxu0 0.0
  %8443 = vmatpush2.msra.mxu0 0.0
  %8444 = vmatprep.subr.mxu0 0.0
  %8445 = vmatpush2.msra.mxu0 0.0
  %8446 = vmatprep.subr.mxu0 0.0
  %8447 = vmatpush2.msra.mxu0 0.0
  %8448 = vmatprep.subr.mxu0 0.0
  %8449 = vmatpush2.msra.mxu0 0.0
  %8450 = vmatprep.subr.mxu0 0.0
  %8451 = vmatpush2.msra.mxu0 0.0
  %8452 = vmatprep.subr.mxu0 0.0
  %8453 = vmatpush2.msra.mxu0 0.0
  %8454 = vmatprep.subr.mxu0 0.0
  %8455 = vmatpush2.msra.mxu0 0.0
  %8456 = vmatprep.subr.mxu0 0.0
  %8457 = vmatpush2.msra.mxu0 0.0
  %8458 = vmatprep.subr.mxu0 0.0
  %8459 = vmatpush2.msra.mxu0 0.0
  %8460 = vmatprep.subr.mxu0 0.0
  %8461 = vmatpush2.msra.mxu0 0.0
  %8462 = vmatprep.subr.mxu0 0.0
  %8463 = vmatpush2.msra.mxu0 0.0
  %8464 = vmatprep.subr.mxu0 0.0
  %8465 = vmatpush2.msra.mxu0 0.0
  %8466 = vmatprep.mubr.f32.mxu0 0.0
  %v8467 = vand.u32 %v25, 4294901760
  %v8468 = vsub.f32 %v25, %v8467
  %v8469 = vand.u32 %v8468, 4294901760
  %8470 = vmatmul.mubr.f32.gmra.mxu0 %v8469
  %v8471 = vpop.f32.mrf.mxu0
  %v8472 = vadd.f32 %v8366, %v8471
  %v8473 = vpop.f32.mrf.mxu0
  %v8474 = vadd.f32 %v8368, %v8473
  %8475 = vdwg.mxu0
  %v8476 = vand.u32 %v7892, 4294901760
  %v8477 = vsub.f32 %v7892, %v8476
  %v8478 = vand.u32 %v8477, 4294901760
  %8479 = vmatprep.subr.mxu0 %v8478
  %v8480 = vand.u32 %v7891, 4294901760
  %v8481 = vsub.f32 %v7891, %v8480
  %v8482 = vand.u32 %v8481, 4294901760
  %8483 = vmatpush1.msra.mxu0 %v8482
  %v8484 = vand.u32 %v7890, 4294901760
  %v8485 = vsub.f32 %v7890, %v8484
  %v8486 = vand.u32 %v8485, 4294901760
  %8487 = vmatprep.subr.mxu0 %v8486
  %v8488 = vand.u32 %v7889, 4294901760
  %v8489 = vsub.f32 %v7889, %v8488
  %v8490 = vand.u32 %v8489, 4294901760
  %8491 = vmatpush1.msra.mxu0 %v8490
  %v8492 = vand.u32 %v7888, 4294901760
  %v8493 = vsub.f32 %v7888, %v8492
  %v8494 = vand.u32 %v8493, 4294901760
  %8495 = vmatprep.subr.mxu0 %v8494
  %v8496 = vand.u32 %v7887, 4294901760
  %v8497 = vsub.f32 %v7887, %v8496
  %v8498 = vand.u32 %v8497, 4294901760
  %8499 = vmatpush1.msra.mxu0 %v8498
  %v8500 = vand.u32 %v7886, 4294901760
  %v8501 = vsub.f32 %v7886, %v8500
  %v8502 = vand.u32 %v8501, 4294901760
  %8503 = vmatprep.subr.mxu0 %v8502
  %v8504 = vand.u32 %v7885, 4294901760
  %v8505 = vsub.f32 %v7885, %v8504
  %v8506 = vand.u32 %v8505, 4294901760
  %8507 = vmatpush1.msra.mxu0 %v8506
  %v8508 = vand.u32 %v7884, 4294901760
  %v8509 = vsub.f32 %v7884, %v8508
  %v8510 = vand.u32 %v8509, 4294901760
  %8511 = vmatprep.subr.mxu0 %v8510
  %v8512 = vand.u32 %v7883, 4294901760
  %v8513 = vsub.f32 %v7883, %v8512
  %v8514 = vand.u32 %v8513, 4294901760
  %8515 = vmatpush1.msra.mxu0 %v8514
  %v8516 = vand.u32 %v7882, 4294901760
  %v8517 = vsub.f32 %v7882, %v8516
  %v8518 = vand.u32 %v8517, 4294901760
  %8519 = vmatprep.subr.mxu0 %v8518
  %v8520 = vand.u32 %v7881, 4294901760
  %v8521 = vsub.f32 %v7881, %v8520
  %v8522 = vand.u32 %v8521, 4294901760
  %8523 = vmatpush1.msra.mxu0 %v8522
  %v8524 = vand.u32 %v7880, 4294901760
  %v8525 = vsub.f32 %v7880, %v8524
  %v8526 = vand.u32 %v8525, 4294901760
  %8527 = vmatprep.subr.mxu0 %v8526
  %v8528 = vand.u32 %v7879, 4294901760
  %v8529 = vsub.f32 %v7879, %v8528
  %v8530 = vand.u32 %v8529, 4294901760
  %8531 = vmatpush1.msra.mxu0 %v8530
  %v8532 = vand.u32 %v7878, 4294901760
  %v8533 = vsub.f32 %v7878, %v8532
  %v8534 = vand.u32 %v8533, 4294901760
  %8535 = vmatprep.subr.mxu0 %v8534
  %v8536 = vand.u32 %v7877, 4294901760
  %v8537 = vsub.f32 %v7877, %v8536
  %v8538 = vand.u32 %v8537, 4294901760
  %8539 = vmatpush1.msra.mxu0 %v8538
  %v8540 = vand.u32 %v7876, 4294901760
  %v8541 = vsub.f32 %v7876, %v8540
  %v8542 = vand.u32 %v8541, 4294901760
  %8543 = vmatprep.subr.mxu0 %v8542
  %v8544 = vand.u32 %v7875, 4294901760
  %v8545 = vsub.f32 %v7875, %v8544
  %v8546 = vand.u32 %v8545, 4294901760
  %8547 = vmatpush1.msra.mxu0 %v8546
  %v8548 = vand.u32 %v7874, 4294901760
  %v8549 = vsub.f32 %v7874, %v8548
  %v8550 = vand.u32 %v8549, 4294901760
  %8551 = vmatprep.subr.mxu0 %v8550
  %v8552 = vand.u32 %v7873, 4294901760
  %v8553 = vsub.f32 %v7873, %v8552
  %v8554 = vand.u32 %v8553, 4294901760
  %8555 = vmatpush1.msra.mxu0 %v8554
  %v8556 = vand.u32 %v7872, 4294901760
  %v8557 = vsub.f32 %v7872, %v8556
  %v8558 = vand.u32 %v8557, 4294901760
  %8559 = vmatprep.subr.mxu0 %v8558
  %v8560 = vand.u32 %v7871, 4294901760
  %v8561 = vsub.f32 %v7871, %v8560
  %v8562 = vand.u32 %v8561, 4294901760
  %8563 = vmatpush1.msra.mxu0 %v8562
  %v8564 = vand.u32 %v7870, 4294901760
  %v8565 = vsub.f32 %v7870, %v8564
  %v8566 = vand.u32 %v8565, 4294901760
  %8567 = vmatprep.subr.mxu0 %v8566
  %v8568 = vand.u32 %v7869, 4294901760
  %v8569 = vsub.f32 %v7869, %v8568
  %v8570 = vand.u32 %v8569, 4294901760
  %8571 = vmatpush1.msra.mxu0 %v8570
  %v8572 = vand.u32 %v7868, 4294901760
  %v8573 = vsub.f32 %v7868, %v8572
  %v8574 = vand.u32 %v8573, 4294901760
  %8575 = vmatprep.subr.mxu0 %v8574
  %v8576 = vand.u32 %v7867, 4294901760
  %v8577 = vsub.f32 %v7867, %v8576
  %v8578 = vand.u32 %v8577, 4294901760
  %8579 = vmatpush1.msra.mxu0 %v8578
  %v8580 = vand.u32 %v7866, 4294901760
  %v8581 = vsub.f32 %v7866, %v8580
  %v8582 = vand.u32 %v8581, 4294901760
  %8583 = vmatprep.subr.mxu0 %v8582
  %v8584 = vand.u32 %v7865, 4294901760
  %v8585 = vsub.f32 %v7865, %v8584
  %v8586 = vand.u32 %v8585, 4294901760
  %8587 = vmatpush1.msra.mxu0 %v8586
  %v8588 = vand.u32 %v7864, 4294901760
  %v8589 = vsub.f32 %v7864, %v8588
  %v8590 = vand.u32 %v8589, 4294901760
  %8591 = vmatprep.subr.mxu0 %v8590
  %v8592 = vand.u32 %v7863, 4294901760
  %v8593 = vsub.f32 %v7863, %v8592
  %v8594 = vand.u32 %v8593, 4294901760
  %8595 = vmatpush1.msra.mxu0 %v8594
  %v8596 = vand.u32 %v7862, 4294901760
  %v8597 = vsub.f32 %v7862, %v8596
  %v8598 = vand.u32 %v8597, 4294901760
  %8599 = vmatprep.subr.mxu0 %v8598
  %v8600 = vand.u32 %v7861, 4294901760
  %v8601 = vsub.f32 %v7861, %v8600
  %v8602 = vand.u32 %v8601, 4294901760
  %8603 = vmatpush1.msra.mxu0 %v8602
  %8604 = vmatprep.subr.mxu0 0.0
  %8605 = vmatpush2.msra.mxu0 0.0
  %8606 = vmatprep.subr.mxu0 0.0
  %8607 = vmatpush2.msra.mxu0 0.0
  %8608 = vmatprep.subr.mxu0 0.0
  %8609 = vmatpush2.msra.mxu0 0.0
  %8610 = vmatprep.subr.mxu0 0.0
  %8611 = vmatpush2.msra.mxu0 0.0
  %8612 = vmatprep.subr.mxu0 0.0
  %8613 = vmatpush2.msra.mxu0 0.0
  %8614 = vmatprep.subr.mxu0 0.0
  %8615 = vmatpush2.msra.mxu0 0.0
  %8616 = vmatprep.subr.mxu0 0.0
  %8617 = vmatpush2.msra.mxu0 0.0
  %8618 = vmatprep.subr.mxu0 0.0
  %8619 = vmatpush2.msra.mxu0 0.0
  %8620 = vmatprep.subr.mxu0 0.0
  %8621 = vmatpush2.msra.mxu0 0.0
  %8622 = vmatprep.subr.mxu0 0.0
  %8623 = vmatpush2.msra.mxu0 0.0
  %8624 = vmatprep.subr.mxu0 0.0
  %8625 = vmatpush2.msra.mxu0 0.0
  %8626 = vmatprep.subr.mxu0 0.0
  %8627 = vmatpush2.msra.mxu0 0.0
  %8628 = vmatprep.subr.mxu0 0.0
  %8629 = vmatpush2.msra.mxu0 0.0
  %8630 = vmatprep.subr.mxu0 0.0
  %8631 = vmatpush2.msra.mxu0 0.0
  %8632 = vmatprep.subr.mxu0 0.0
  %8633 = vmatpush2.msra.mxu0 0.0
  %8634 = vmatprep.subr.mxu0 0.0
  %8635 = vmatpush2.msra.mxu0 0.0
  %8636 = vmatprep.mubr.f32.mxu0 0.0
  %v8637 = vand.u32 %v25, 4294901760
  %8638 = vmatmul.mubr.f32.gmra.mxu0 %v8637
  %v8639 = vpop.f32.mrf.mxu0
  %v8640 = vadd.f32 %v8472, %v8639
  %v8641 = vpop.f32.mrf.mxu0
  %v8642 = vadd.f32 %v8474, %v8641
  %8643 = vdwg.mxu0
  %v8644 = vand.u32 %v7892, 4294901760
  %8645 = vmatprep.subr.mxu0 %v8644
  %v8646 = vand.u32 %v7891, 4294901760
  %8647 = vmatpush1.msra.mxu0 %v8646
  %v8648 = vand.u32 %v7890, 4294901760
  %8649 = vmatprep.subr.mxu0 %v8648
  %v8650 = vand.u32 %v7889, 4294901760
  %8651 = vmatpush1.msra.mxu0 %v8650
  %v8652 = vand.u32 %v7888, 4294901760
  %8653 = vmatprep.subr.mxu0 %v8652
  %v8654 = vand.u32 %v7887, 4294901760
  %8655 = vmatpush1.msra.mxu0 %v8654
  %v8656 = vand.u32 %v7886, 4294901760
  %8657 = vmatprep.subr.mxu0 %v8656
  %v8658 = vand.u32 %v7885, 4294901760
  %8659 = vmatpush1.msra.mxu0 %v8658
  %v8660 = vand.u32 %v7884, 4294901760
  %8661 = vmatprep.subr.mxu0 %v8660
  %v8662 = vand.u32 %v7883, 4294901760
  %8663 = vmatpush1.msra.mxu0 %v8662
  %v8664 = vand.u32 %v7882, 4294901760
  %8665 = vmatprep.subr.mxu0 %v8664
  %v8666 = vand.u32 %v7881, 4294901760
  %8667 = vmatpush1.msra.mxu0 %v8666
  %v8668 = vand.u32 %v7880, 4294901760
  %8669 = vmatprep.subr.mxu0 %v8668
  %v8670 = vand.u32 %v7879, 4294901760
  %8671 = vmatpush1.msra.mxu0 %v8670
  %v8672 = vand.u32 %v7878, 4294901760
  %8673 = vmatprep.subr.mxu0 %v8672
  %v8674 = vand.u32 %v7877, 4294901760
  %8675 = vmatpush1.msra.mxu0 %v8674
  %v8676 = vand.u32 %v7876, 4294901760
  %8677 = vmatprep.subr.mxu0 %v8676
  %v8678 = vand.u32 %v7875, 4294901760
  %8679 = vmatpush1.msra.mxu0 %v8678
  %v8680 = vand.u32 %v7874, 4294901760
  %8681 = vmatprep.subr.mxu0 %v8680
  %v8682 = vand.u32 %v7873, 4294901760
  %8683 = vmatpush1.msra.mxu0 %v8682
  %v8684 = vand.u32 %v7872, 4294901760
  %8685 = vmatprep.subr.mxu0 %v8684
  %v8686 = vand.u32 %v7871, 4294901760
  %8687 = vmatpush1.msra.mxu0 %v8686
  %v8688 = vand.u32 %v7870, 4294901760
  %8689 = vmatprep.subr.mxu0 %v8688
  %v8690 = vand.u32 %v7869, 4294901760
  %8691 = vmatpush1.msra.mxu0 %v8690
  %v8692 = vand.u32 %v7868, 4294901760
  %8693 = vmatprep.subr.mxu0 %v8692
  %v8694 = vand.u32 %v7867, 4294901760
  %8695 = vmatpush1.msra.mxu0 %v8694
  %v8696 = vand.u32 %v7866, 4294901760
  %8697 = vmatprep.subr.mxu0 %v8696
  %v8698 = vand.u32 %v7865, 4294901760
  %8699 = vmatpush1.msra.mxu0 %v8698
  %v8700 = vand.u32 %v7864, 4294901760
  %8701 = vmatprep.subr.mxu0 %v8700
  %v8702 = vand.u32 %v7863, 4294901760
  %8703 = vmatpush1.msra.mxu0 %v8702
  %v8704 = vand.u32 %v7862, 4294901760
  %8705 = vmatprep.subr.mxu0 %v8704
  %v8706 = vand.u32 %v7861, 4294901760
  %8707 = vmatpush1.msra.mxu0 %v8706
  %8708 = vmatprep.subr.mxu0 0.0
  %8709 = vmatpush2.msra.mxu0 0.0
  %8710 = vmatprep.subr.mxu0 0.0
  %8711 = vmatpush2.msra.mxu0 0.0
  %8712 = vmatprep.subr.mxu0 0.0
  %8713 = vmatpush2.msra.mxu0 0.0
  %8714 = vmatprep.subr.mxu0 0.0
  %8715 = vmatpush2.msra.mxu0 0.0
  %8716 = vmatprep.subr.mxu0 0.0
  %8717 = vmatpush2.msra.mxu0 0.0
  %8718 = vmatprep.subr.mxu0 0.0
  %8719 = vmatpush2.msra.mxu0 0.0
  %8720 = vmatprep.subr.mxu0 0.0
  %8721 = vmatpush2.msra.mxu0 0.0
  %8722 = vmatprep.subr.mxu0 0.0
  %8723 = vmatpush2.msra.mxu0 0.0
  %8724 = vmatprep.subr.mxu0 0.0
  %8725 = vmatpush2.msra.mxu0 0.0
  %8726 = vmatprep.subr.mxu0 0.0
  %8727 = vmatpush2.msra.mxu0 0.0
  %8728 = vmatprep.subr.mxu0 0.0
  %8729 = vmatpush2.msra.mxu0 0.0
  %8730 = vmatprep.subr.mxu0 0.0
  %8731 = vmatpush2.msra.mxu0 0.0
  %8732 = vmatprep.subr.mxu0 0.0
  %8733 = vmatpush2.msra.mxu0 0.0
  %8734 = vmatprep.subr.mxu0 0.0
  %8735 = vmatpush2.msra.mxu0 0.0
  %8736 = vmatprep.subr.mxu0 0.0
  %8737 = vmatpush2.msra.mxu0 0.0
  %8738 = vmatprep.subr.mxu0 0.0
  %8739 = vmatpush2.msra.mxu0 0.0
  %8740 = vmatprep.mubr.f32.mxu0 0.0
  %v8741 = vand.u32 %v25, 4294901760
  %8742 = vmatmul.mubr.f32.gmra.mxu0 %v8741
  %v8743 = vpop.f32.mrf.mxu0
  %v8744 = vadd.f32 %v8640, %v8743
  %v8745 = vpop.f32.mrf.mxu0
  %v8746 = vadd.f32 %v8642, %v8745
  %8747 = vdwg.mxu0
  %v8748 = vmax.f32 %v8744, 0.0
  %v8749 = vmax.f32 %v8746, 0.0
  %v8752 = vrot.slane %v8748, 1
  %v8753 = vrot.slane %v8749, 1
  %v8756 = vmul.f32 %v8748, %v8752
  %v8757 = vmul.f32 %v8749, %v8753
  %v8760 = vrot.slane %v8756, 1
  %v8761 = vrot.slane %v8757, 1
  %v8764 = vadd.f32 %v23, %v8760
  %v8765 = vadd.f32 %v24, %v8761
  %v8768 = vrot.slane %v8744, 3
  %v8769 = vrot.slane %v8746, 3
  %v8772 = vadd.f32 %v8764, %v8768
  %v8773 = vadd.f32 %v8765, %v8769
  %v8774 = vmax.f32 %v8772, 0.0
  %v8775 = vmax.f32 %v8773, 0.0
  %v8776 = vand.u32 2147483647, %v8772
  %v8777 = vand.u32 2147483647, %v8773
  %v8778 = vsub.f32 0.0, %v8776
  %v8779 = vsub.f32 0.0, %v8777
  %v8780 = vmul.f32 %v8778, 1.442695
  %v8781 = vpow.pop %v8780
  %v8782 = vmul.f32 %v8779, 1.442695
  %v8783 = vpow.pop %v8782
  %v8784 = vadd.f32 %v8781, 1.0
  %v8785 = vlog2.pop %v8784
  %v8786 = vmul.f32 %v8785, 0.6931472
  %v8787 = vmul.f32 -0.5, %v8781
  %v8788 = vadd.f32 %v8787, 1.0
  %v8789 = vmul.f32 %v8788, %v8781
  %v8790 = vand.u32 2147483647, %v8781
  %vm8791 = vcmp.lt.f32.partialorder %v8790, 0.0004427343
  %v8792 = vsel %vm8791, %v8789, %v8786
  %v8793 = vadd.f32 %v8783, 1.0
  %v8794 = vlog2.pop %v8793
  %v8795 = vmul.f32 %v8794, 0.6931472
  %v8796 = vmul.f32 -0.5, %v8783
  %v8797 = vadd.f32 %v8796, 1.0
  %v8798 = vmul.f32 %v8797, %v8783
  %v8799 = vand.u32 2147483647, %v8783
  %vm8800 = vcmp.lt.f32.partialorder %v8799, 0.0004427343
  %v8801 = vsel %vm8800, %v8798, %v8795
  %v8802 = vadd.f32 %v8774, %v8792
  %v8803 = vadd.f32 %v8775, %v8801
  %v8806 = vcombine.high %v8802, %v8803
  %v8808 = vunpack.c.l.s4 1966171168
  %v8809 = vunpack.c.0.s8 %v8808
  %v8810 = vlaneseq
  %v8811 = vshrl.u32 %v8810, 7
  %v8812 = vsub.s32 %v8809, %v8811
  %v8813 = vrot.slane %v8806, %v8812
  %v8814 = vcombine.high %v8813, %v8813
  %v8816 = vunpack.c.l.s4 1966171168
  %v8817 = vunpack.c.0.s8 %v8816
  %v8818 = vlaneseq
  %v8819 = vshrl.u32 %v8818, 7
  %v8820 = vsub.s32 %v8817, %v8819
  %v8821 = vrot.slane %v8814, %v8820
  %v8822 = vcombine.high %v8821, %v8821
  %s8824 = scalar_lea.vmem [#allocation2], 7
  %8825 = vst.msk [vmem:[%s8824] ss:$8 sm:$0x3] %vm1122, %v8822
  %8826 = vst.msk [vmem:[%s8824] ss:$8 sm:$0x0] %vm1122, %v8822
  %v8827 = vld [vmem:[#allocation2] sm:$0xff]
  %v8828 = vld [vmem:[#allocation2 + $0x8] sm:$0xff]
  %s8829 = smul.addr %s20, 8
  %s8830 = scalar_lea.vmem %s5, %s8829
  %8831 = vst [vmem:[%s8830] sm:$0xff] %v8827
  %8832 = vst [vmem:[%s8830 + $0x8] sm:$0xff] %v8828
  // Predicated region
  $region22: #{kicc_forward.1} parent=0 // pred_check
    _
  $region23: #{kicc_forward.1} parent=0 // pred_check_branch
    %8834 = sbr.rel (0) target = $region25
  $region24: #{kicc_forward.1} parent=0 // pred_region
    _
  $region25: #{kicc_forward.1} parent=0 // pred_fallthru
    _
  // Predicated region
  $region26: #{kicc_forward.1} parent=0 // pred_check
    _
  $region27: #{kicc_forward.1} parent=0 // pred_check_branch
    %8836 = sbr.rel (0) target = $region29
  $region28: #{kicc_forward.1} parent=0 // pred_region
    _
  $region29: #{kicc_forward.1} parent=0 // pred_fallthru
    _

</llo_original>
